<compile_context>
chip_gen: v7x
topology: tpu7x:2x2x1
jax: 0.10.0
libtpu: 0.0.40
codegen_flags: <defaults>
</compile_context>

<pallas_src>
import math
import functools

import jax
import jax.numpy as jnp
from jax import lax
from jax.experimental import pallas as pl
from jax.experimental.pallas import tpu as pltpu


def _mala_kernel(noise_ref, logu_ref, q0_ref, a_ref, q_ref, g_scr, s_scr, *,
                 step_size, inverse_temperature, steps_per_chunk, unroll,
                 fused_quadratic):
    """Runs `steps_per_chunk` MALA steps for one batch tile per grid iteration."""
    c = pl.program_id(1)                      # step-chunk index ("arbitrary")
    dt = step_size
    beta = inverse_temperature

    A = a_ref[...]                            # (dim, dim) bf16, VMEM resident

    def grad_e(q):
        # E(q) = 0.5 * q A q^T  (A symmetric)  =>  grad E(q) = q @ A
        return jnp.dot(q.astype(A.dtype), A, preferred_element_type=jnp.float32)

    def row_stat(q, g):
        if fused_quadratic:
            return jnp.sum(g * g, axis=-1, keepdims=True)        # ||grad E||^2
        return 0.5 * jnp.sum(g * q, axis=-1, keepdims=True)      # E(q)

    @pl.when(c == 0)
    def _init():
        q0 = q0_ref[...]
        g0 = grad_e(q0)
        q_ref[...] = q0
        g_scr[...] = g0
        s_scr[...] = row_stat(q0, g0)

    def body(i, carry):
        q, g, s = carry
        # Euler-Maruyama proposal (noise already scaled by sqrt(2*dt/beta)).
        q_prop = q - dt * g + noise_ref[i].astype(jnp.float32)
        g_prop = grad_e(q_prop)
        s_prop = row_stat(q_prop, g_prop)

        if fused_quadratic:
            # Quadratic-energy collapse of eq. 2.38:
            #   exp_inp = -0.25 * beta * dt * (||g'||^2 - ||g||^2)
            exp_inp = (-0.25 * beta * dt) * (s_prop - s)
        else:
            d = q_prop - q
            hastings = jnp.sum((dt * (g_prop - g) - 2.0 * d) * (g_prop + g),
                               axis=-1, keepdims=True)
            exp_inp = -beta * (s_prop - s) - 0.25 * beta * hastings

        # u <= min(1, exp(exp_inp))  <=>  log(u) <= exp_inp   (overflow-safe)
        accept = logu_ref[i] <= exp_inp       # (TB, 1), broadcasts over dim
        q_new = jnp.where(accept, q_prop, q)
        g_new = jnp.where(accept, g_prop, g)
        s_new = jnp.where(accept, s_prop, s)
        return q_new, g_new, s_new

    q, g, s = lax.fori_loop(0, steps_per_chunk, body,
                            (q_ref[...], g_scr[...], s_scr[...]),
                            unroll=unroll)
    q_ref[...] = q
    g_scr[...] = g
    s_scr[...] = s


def mal_sampler_forward(key, A, *, batch_size, steps=1000, step_size=0.01,
                        inverse_temperature=1.0, init_mean=0.0, init_std=2.0,
                        batch_tile=None, steps_per_chunk=None,
                        fused_quadratic_acceptance=True):
    """Pallas equivalent of MALSampler.forward(batch_size, steps, step_size)."""
    dim = A.shape[0]
    assert A.shape == (dim, dim)
    assert steps >= 1

    dt = float(step_size)
    beta = float(inverse_temperature)
    noise_scale = math.sqrt(2.0 * dt / beta)

    # --- batch tiling: one big tile on single-TC chips (v5e/v6e); on v7x pass
    #     batch_tile = batch_size // 2 to shard the parallel axis on 2 TCs. ---
    if batch_tile is None:
        batch_tile = batch_size
    assert batch_size % batch_tile == 0
    assert batch_tile == batch_size or batch_tile % 8 == 0
    num_tiles = batch_size // batch_tile

    # --- step chunking: amortize ~0.35us/grid-step overhead and batch DMAs ---
    if steps_per_chunk is None:
        steps_per_chunk = max(1, min(32, steps))
        # Keep the double-buffered per-chunk noise slab comfortably in VMEM.
        while (steps_per_chunk > 1 and
               2 * steps_per_chunk * batch_tile * dim * 2 > (24 << 20)):
            steps_per_chunk //= 2
    num_chunks = pl.cdiv(steps, steps_per_chunk)
    padded_steps = num_chunks * steps_per_chunk

    # --- host-side RNG (deterministic, reproducible) -------------------------
    k_init, k_noise, k_u = jax.random.split(key, 3)
    # DiagonalGaussianDistribution(dim, mean=0, stddev=2) initial sample.
    q0 = init_mean + init_std * jax.random.normal(
        k_init, (batch_size, dim), dtype=jnp.float32)
    # Proposal noise, pre-scaled and stored as bf16 to halve HBM traffic.
    noise = (noise_scale * jax.random.normal(
        k_noise, (num_chunks, steps_per_chunk, batch_size, dim),
        dtype=jnp.float32)).astype(jnp.bfloat16)
    # Acceptance threshold log(u), precomputed host-side; padded tail -> +inf.
    u = jax.random.uniform(
        k_u, (num_chunks, steps_per_chunk, batch_size, 1), dtype=jnp.float32)
    logu = jnp.log(jnp.maximum(u, jnp.float32(1e-37)))
    step_idx = jnp.arange(padded_steps).reshape(num_chunks, steps_per_chunk, 1, 1)
    logu = jnp.where(step_idx < steps, logu, jnp.inf)

    # bf16 A: 2-3x MXU throughput vs f32 and half the VMEM residency.
    A_bf16 = A.astype(jnp.bfloat16)

    kernel = functools.partial(
        _mala_kernel,
        step_size=dt,
        inverse_temperature=beta,
        steps_per_chunk=int(steps_per_chunk),
        unroll=bool(steps_per_chunk <= 32),
        fused_quadratic=bool(fused_quadratic_acceptance))

    try:
        phys_vmem = int(pltpu.get_tpu_info().vmem_capacity_bytes)
    except Exception:
        phys_vmem = 64 << 20                     # conservative fallback

    def vmem_estimate(a_buffers):
        tb_pad = ((batch_tile + 7) // 8) * 8
        est = a_buffers * dim * dim * 2                       # resident A (bf16)
        est += 2 * steps_per_chunk * batch_tile * dim * 2     # noise blocks
        est += 2 * steps_per_chunk * tb_pad * 128 * 4         # logu blocks (lane-padded)
        est += 2 * batch_tile * dim * 4                       # q0 blocks
        est += 2 * batch_tile * dim * 4                       # output q blocks
        est += batch_tile * dim * 4 + tb_pad * 128 * 4        # scratch g, s
        est += 6 * batch_tile * dim * 4                       # loop temporaries
        return est + (2 << 20)

    def make_call(single_buffer_a):
        if single_buffer_a:
            # A's block index never changes -> no need to double-buffer it.
            a_spec = pl.BlockSpec((dim, dim), lambda b, c: (0, 0),
                                  pipeline_mode=pl.Buffered(1))
        else:
            a_spec = pl.BlockSpec((dim, dim), lambda b, c: (0, 0))
        grid_spec = pltpu.PrefetchScalarGridSpec(
            num_scalar_prefetch=0,
            grid=(num_tiles, num_chunks),
            in_specs=[
                # per-chunk pre-scaled bf16 noise slab
                pl.BlockSpec((None, steps_per_chunk, batch_tile, dim),
                             lambda b, c: (c, 0, b, 0)),
                # per-chunk acceptance threshold log(u)
                pl.BlockSpec((None, steps_per_chunk, batch_tile, 1),
                             lambda b, c: (c, 0, b, 0)),
                # initial sample, fetched once per batch tile
                pl.BlockSpec((batch_tile, dim), lambda b, c: (b, 0)),
                # energy matrix A, VMEM resident for the whole chain
                a_spec,
            ],
            out_specs=pl.BlockSpec((batch_tile, dim), lambda b, c: (b, 0)),
            scratch_shapes=[
                pltpu.VMEM((batch_tile, dim), jnp.float32),   # carried grad E(q)
                pltpu.VMEM((batch_tile, 1), jnp.float32),     # carried row stat
            ],
        )
        vmem_limit = int(min(max(vmem_estimate(1 if single_buffer_a else 2),
                                 32 << 20),
                             int(phys_vmem * 0.9)))
        return pl.pallas_call(
            kernel,
            out_shape=jax.ShapeDtypeStruct((batch_size, dim), jnp.float32),
            grid_spec=grid_spec,
            compiler_params=pltpu.CompilerParams(
                dimension_semantics=("parallel", "arbitrary"),
                vmem_limit_bytes=vmem_limit),
        )

    try:
        return make_call(True)(noise, logu, q0, A_bf16)
    except Exception:
        # Fallback if single-buffered pipeline_mode is unsupported: default 2x buffering.
        return make_call(False)(noise, logu, q0, A_bf16)


if __name__ == "__main__":
    batch, dim = 8, 128          # batch multiple of 8, dim multiple of 128
    steps, step_size, beta = 50, 0.01, 1.0

    key = jax.random.PRNGKey(0)
    k_a, k_run = jax.random.split(key)

    # Deterministic symmetric PSD energy matrix (stands in for energy_function).
    W = jax.random.normal(k_a, (dim, dim), dtype=jnp.float32)
    A = (W @ W.T) / dim + jnp.eye(dim, dtype=jnp.float32)

    q = mal_sampler_forward(k_run, A, batch_size=batch, steps=steps,
                            step_size=step_size, inverse_temperature=beta)
    q = jax.block_until_ready(q)

    assert q.shape == (batch, dim) and q.dtype == jnp.float32
    assert bool(jnp.all(jnp.isfinite(q)))
    print("KERNEL_OK")
</pallas_src>

<mosaic_0001>
module attributes {stable_mosaic.version = 11 : i64} {
  func.func @_mala_kernel(%arg0: i32, %arg1: i32, %arg2: memref<1x32x8x128xbf16, #tpu.memory_space<vmem>>, %arg3: memref<1x32x8x1xf32, #tpu.memory_space<vmem>>, %arg4: memref<8x128xf32, #tpu.memory_space<vmem>>, %arg5: memref<128x128xbf16, #tpu.memory_space<vmem>>, %arg6: memref<8x128xf32, #tpu.memory_space<vmem>>, %arg7: memref<8x128xf32, #tpu.memory_space<vmem>>, %arg8: memref<8x1xf32, #tpu.memory_space<vmem>>) attributes {dimension_semantics = [#tpu.dimension_semantics<parallel>, #tpu.dimension_semantics<arbitrary>], iteration_bounds = array<i64: 1, 2>, scalar_prefetch = 0 : i64, scratch_operands = 2 : i64, tpu.core_type = #tpu.core_type<tc>, window_params = [{transform_indices = @transform_0, window_bounds = array<i64: 1, 32, 8, 128>}, {transform_indices = @transform_1, window_bounds = array<i64: 1, 32, 8, 1>}, {transform_indices = @transform_2, window_bounds = array<i64: 8, 128>}, {pipeline_mode = #tpu.pipeline_mode<synchronous>, transform_indices = @transform_3, window_bounds = array<i64: 128, 128>}, {transform_indices = @transform_4, window_bounds = array<i64: 8, 128>}]} {
    %c0 = arith.constant 0 : index
    %c0_0 = arith.constant 0 : index
    %0 = vector.load %arg5[%c0, %c0_0] : memref<128x128xbf16, #tpu.memory_space<vmem>>, vector<128x128xbf16>
    %c0_i32 = arith.constant 0 : i32
    %1 = arith.cmpi eq, %arg1, %c0_i32 : i32
    %2 = arith.extui %1 : i1 to i32
    %c0_i32_1 = arith.constant 0 : i32
    %3 = arith.cmpi ne, %2, %c0_i32_1 : i32
    scf.if %3 {
      %c0_334 = arith.constant 0 : index
      %c0_335 = arith.constant 0 : index
      %874 = vector.load %arg4[%c0_334, %c0_335] : memref<8x128xf32, #tpu.memory_space<vmem>>, vector<8x128xf32>
      %875 = arith.truncf %874 : vector<8x128xf32> to vector<8x128xbf16>
      %cst_336 = arith.constant dense<0.000000e+00> : vector<8x128xf32>
      %876 = tpu.matmul %875, %0, %cst_336 {dimension_numbers = #tpu.dot_dimension_numbers<[1], [0], [0], [1], [0, 0, 1, 1], [], []>} : vector<8x128xbf16>, vector<128x128xbf16>, vector<8x128xf32> -> vector<8x128xf32>
      %c0_337 = arith.constant 0 : index
      %c0_338 = arith.constant 0 : index
      %877 = vector.load %arg6[%c0_337, %c0_338] : memref<8x128xf32, #tpu.memory_space<vmem>>, vector<8x128xf32>
      tpu.vector_store %arg6[%c0_337, %c0_338], %874 {strides = array<i32>} : memref<8x128xf32, #tpu.memory_space<vmem>>, vector<8x128xf32>,
      %c0_339 = arith.constant 0 : index
      %c0_340 = arith.constant 0 : index
      %878 = vector.load %arg7[%c0_339, %c0_340] : memref<8x128xf32, #tpu.memory_space<vmem>>, vector<8x128xf32>
      tpu.vector_store %arg7[%c0_339, %c0_340], %876 {strides = array<i32>} : memref<8x128xf32, #tpu.memory_space<vmem>>, vector<8x128xf32>,
      %879 = arith.mulf %876, %876 : vector<8x128xf32>
      %cst_341 = arith.constant dense<0.000000e+00> : vector<8xf32>
      %880 = vector.multi_reduction <add>, %879, %cst_341 [1] : vector<8x128xf32> to vector<8xf32>
      %881 = vector.shape_cast %880 : vector<8xf32> to vector<8x1xf32>
      %c0_342 = arith.constant 0 : index
      %c0_343 = arith.constant 0 : index
      %882 = vector.load %arg8[%c0_342, %c0_343] : memref<8x1xf32, #tpu.memory_space<vmem>>, vector<8x1xf32>
      tpu.vector_store %arg8[%c0_342, %c0_343], %881 {strides = array<i32>} : memref<8x1xf32, #tpu.memory_space<vmem>>, vector<8x1xf32>,
    } else {
    }
    %c0_2 = arith.constant 0 : index
    %c0_3 = arith.constant 0 : index
    %4 = vector.load %arg6[%c0_2, %c0_3] : memref<8x128xf32, #tpu.memory_space<vmem>>, vector<8x128xf32>
    %c0_4 = arith.constant 0 : index
    %c0_5 = arith.constant 0 : index
    %5 = vector.load %arg7[%c0_4, %c0_5] : memref<8x128xf32, #tpu.memory_space<vmem>>, vector<8x128xf32>
    %c0_6 = arith.constant 0 : index
    %c0_7 = arith.constant 0 : index
    %6 = vector.load %arg8[%c0_6, %c0_7] : memref<8x1xf32, #tpu.memory_space<vmem>>, vector<8x1xf32>
    %c0_i32_8 = arith.constant 0 : i32
    %cst = arith.constant 0.00999999977 : f32
    %7 = vector.broadcast %cst : f32 to vector<8x128xf32>
    %8 = arith.mulf %7, %5 : vector<8x128xf32>
    %9 = arith.subf %4, %8 : vector<8x128xf32>
    %c0_9 = arith.constant 0 : index
    %10 = arith.index_cast %c0_i32_8 : i32 to index
    %c0_10 = arith.constant 0 : index
    %c0_11 = arith.constant 0 : index
    %11 = vector.load %arg2[%c0_9, %10, %c0_10, %c0_11] : memref<1x32x8x128xbf16, #tpu.memory_space<vmem>>, vector<1x1x8x128xbf16>
    %12 = vector.shape_cast %11 : vector<1x1x8x128xbf16> to vector<8x128xbf16>
    %13 = arith.extf %12 : vector<8x128xbf16> to vector<8x128xf32>
    %14 = arith.addf %9, %13 : vector<8x128xf32>
    %15 = arith.truncf %14 : vector<8x128xf32> to vector<8x128xbf16>
    %cst_12 = arith.constant dense<0.000000e+00> : vector<8x128xf32>
    %16 = tpu.matmul %15, %0, %cst_12 {dimension_numbers = #tpu.dot_dimension_numbers<[1], [0], [0], [1], [0, 0, 1, 1], [], []>} : vector<8x128xbf16>, vector<128x128xbf16>, vector<8x128xf32> -> vector<8x128xf32>
    %17 = arith.mulf %16, %16 : vector<8x128xf32>
    %cst_13 = arith.constant dense<0.000000e+00> : vector<8xf32>
    %18 = vector.multi_reduction <add>, %17, %cst_13 [1] : vector<8x128xf32> to vector<8xf32>
    %19 = vector.shape_cast %18 : vector<8xf32> to vector<8x1xf32>
    %20 = arith.subf %19, %6 : vector<8x1xf32>
    %cst_14 = arith.constant -2.500000e-03 : f32
    %21 = vector.broadcast %cst_14 : f32 to vector<8x1xf32>
    %22 = arith.mulf %21, %20 : vector<8x1xf32>
    %c0_15 = arith.constant 0 : index
    %23 = arith.index_cast %c0_i32_8 : i32 to index
    %c0_16 = arith.constant 0 : index
    %c0_17 = arith.constant 0 : index
    %24 = vector.load %arg3[%c0_15, %23, %c0_16, %c0_17] : memref<1x32x8x1xf32, #tpu.memory_space<vmem>>, vector<1x1x8x1xf32>
    %25 = vector.shape_cast %24 : vector<1x1x8x1xf32> to vector<8x1xf32>
    %26 = arith.cmpf ole, %25, %22 : vector<8x1xf32>
    %27 = vector.shape_cast %26 : vector<8x1xi1> to vector<8x1xi1>
    %28 = vector.broadcast %27 : vector<8x1xi1> to vector<8x128xi1>
    %29 = arith.select %28, %14, %4 : vector<8x128xi1>, vector<8x128xf32>
    %30 = vector.shape_cast %26 : vector<8x1xi1> to vector<8x1xi1>
    %31 = vector.broadcast %30 : vector<8x1xi1> to vector<8x128xi1>
    %32 = arith.select %31, %16, %5 : vector<8x128xi1>, vector<8x128xf32>
    %33 = arith.select %26, %19, %6 : vector<8x1xi1>, vector<8x1xf32>
    %c1_i32 = arith.constant 1 : i32
    %cst_18 = arith.constant 0.00999999977 : f32
    %34 = vector.broadcast %cst_18 : f32 to vector<8x128xf32>
    %35 = arith.mulf %34, %32 : vector<8x128xf32>
    %36 = arith.subf %29, %35 : vector<8x128xf32>
    %c0_19 = arith.constant 0 : index
    %37 = arith.index_cast %c1_i32 : i32 to index
    %c0_20 = arith.constant 0 : index
    %c0_21 = arith.constant 0 : index
    %38 = vector.load %arg2[%c0_19, %37, %c0_20, %c0_21] : memref<1x32x8x128xbf16, #tpu.memory_space<vmem>>, vector<1x1x8x128xbf16>
    %39 = vector.shape_cast %38 : vector<1x1x8x128xbf16> to vector<8x128xbf16>
    %40 = arith.extf %39 : vector<8x128xbf16> to vector<8x128xf32>
    %41 = arith.addf %36, %40 : vector<8x128xf32>
    %42 = arith.truncf %41 : vector<8x128xf32> to vector<8x128xbf16>
    %cst_22 = arith.constant dense<0.000000e+00> : vector<8x128xf32>
    %43 = tpu.matmul %42, %0, %cst_22 {dimension_numbers = #tpu.dot_dimension_numbers<[1], [0], [0], [1], [0, 0, 1, 1], [], []>} : vector<8x128xbf16>, vector<128x128xbf16>, vector<8x128xf32> -> vector<8x128xf32>
    %44 = arith.mulf %43, %43 : vector<8x128xf32>
    %cst_23 = arith.constant dense<0.000000e+00> : vector<8xf32>
    %45 = vector.multi_reduction <add>, %44, %cst_23 [1] : vector<8x128xf32> to vector<8xf32>
    %46 = vector.shape_cast %45 : vector<8xf32> to vector<8x1xf32>
    %47 = arith.subf %46, %33 : vector<8x1xf32>
    %cst_24 = arith.constant -2.500000e-03 : f32
    %48 = vector.broadcast %cst_24 : f32 to vector<8x1xf32>
    %49 = arith.mulf %48, %47 : vector<8x1xf32>
    %c0_25 = arith.constant 0 : index
    %50 = arith.index_cast %c1_i32 : i32 to index
    %c0_26 = arith.constant 0 : index
    %c0_27 = arith.constant 0 : index
    %51 = vector.load %arg3[%c0_25, %50, %c0_26, %c0_27] : memref<1x32x8x1xf32, #tpu.memory_space<vmem>>, vector<1x1x8x1xf32>
    %52 = vector.shape_cast %51 : vector<1x1x8x1xf32> to vector<8x1xf32>
    %53 = arith.cmpf ole, %52, %49 : vector<8x1xf32>
    %54 = vector.shape_cast %53 : vector<8x1xi1> to vector<8x1xi1>
    %55 = vector.broadcast %54 : vector<8x1xi1> to vector<8x128xi1>
    %56 = arith.select %55, %41, %29 : vector<8x128xi1>, vector<8x128xf32>
    %57 = vector.shape_cast %53 : vector<8x1xi1> to vector<8x1xi1>
    %58 = vector.broadcast %57 : vector<8x1xi1> to vector<8x128xi1>
    %59 = arith.select %58, %43, %32 : vector<8x128xi1>, vector<8x128xf32>
    %60 = arith.select %53, %46, %33 : vector<8x1xi1>, vector<8x1xf32>
    %c2_i32 = arith.constant 2 : i32
    %cst_28 = arith.constant 0.00999999977 : f32
    %61 = vector.broadcast %cst_28 : f32 to vector<8x128xf32>
    %62 = arith.mulf %61, %59 : vector<8x128xf32>
    %63 = arith.subf %56, %62 : vector<8x128xf32>
    %c0_29 = arith.constant 0 : index
    %64 = arith.index_cast %c2_i32 : i32 to index
    %c0_30 = arith.constant 0 : index
    %c0_31 = arith.constant 0 : index
    %65 = vector.load %arg2[%c0_29, %64, %c0_30, %c0_31] : memref<1x32x8x128xbf16, #tpu.memory_space<vmem>>, vector<1x1x8x128xbf16>
    %66 = vector.shape_cast %65 : vector<1x1x8x128xbf16> to vector<8x128xbf16>
    %67 = arith.extf %66 : vector<8x128xbf16> to vector<8x128xf32>
    %68 = arith.addf %63, %67 : vector<8x128xf32>
    %69 = arith.truncf %68 : vector<8x128xf32> to vector<8x128xbf16>
    %cst_32 = arith.constant dense<0.000000e+00> : vector<8x128xf32>
    %70 = tpu.matmul %69, %0, %cst_32 {dimension_numbers = #tpu.dot_dimension_numbers<[1], [0], [0], [1], [0, 0, 1, 1], [], []>} : vector<8x128xbf16>, vector<128x128xbf16>, vector<8x128xf32> -> vector<8x128xf32>
    %71 = arith.mulf %70, %70 : vector<8x128xf32>
    %cst_33 = arith.constant dense<0.000000e+00> : vector<8xf32>
    %72 = vector.multi_reduction <add>, %71, %cst_33 [1] : vector<8x128xf32> to vector<8xf32>
    %73 = vector.shape_cast %72 : vector<8xf32> to vector<8x1xf32>
    %74 = arith.subf %73, %60 : vector<8x1xf32>
    %cst_34 = arith.constant -2.500000e-03 : f32
    %75 = vector.broadcast %cst_34 : f32 to vector<8x1xf32>
    %76 = arith.mulf %75, %74 : vector<8x1xf32>
    %c0_35 = arith.constant 0 : index
    %77 = arith.index_cast %c2_i32 : i32 to index
    %c0_36 = arith.constant 0 : index
    %c0_37 = arith.constant 0 : index
    %78 = vector.load %arg3[%c0_35, %77, %c0_36, %c0_37] : memref<1x32x8x1xf32, #tpu.memory_space<vmem>>, vector<1x1x8x1xf32>
    %79 = vector.shape_cast %78 : vector<1x1x8x1xf32> to vector<8x1xf32>
    %80 = arith.cmpf ole, %79, %76 : vector<8x1xf32>
    %81 = vector.shape_cast %80 : vector<8x1xi1> to vector<8x1xi1>
    %82 = vector.broadcast %81 : vector<8x1xi1> to vector<8x128xi1>
    %83 = arith.select %82, %68, %56 : vector<8x128xi1>, vector<8x128xf32>
    %84 = vector.shape_cast %80 : vector<8x1xi1> to vector<8x1xi1>
    %85 = vector.broadcast %84 : vector<8x1xi1> to vector<8x128xi1>
    %86 = arith.select %85, %70, %59 : vector<8x128xi1>, vector<8x128xf32>
    %87 = arith.select %80, %73, %60 : vector<8x1xi1>, vector<8x1xf32>
    %c3_i32 = arith.constant 3 : i32
    %cst_38 = arith.constant 0.00999999977 : f32
    %88 = vector.broadcast %cst_38 : f32 to vector<8x128xf32>
    %89 = arith.mulf %88, %86 : vector<8x128xf32>
    %90 = arith.subf %83, %89 : vector<8x128xf32>
    %c0_39 = arith.constant 0 : index
    %91 = arith.index_cast %c3_i32 : i32 to index
    %c0_40 = arith.constant 0 : index
    %c0_41 = arith.constant 0 : index
    %92 = vector.load %arg2[%c0_39, %91, %c0_40, %c0_41] : memref<1x32x8x128xbf16, #tpu.memory_space<vmem>>, vector<1x1x8x128xbf16>
    %93 = vector.shape_cast %92 : vector<1x1x8x128xbf16> to vector<8x128xbf16>
    %94 = arith.extf %93 : vector<8x128xbf16> to vector<8x128xf32>
    %95 = arith.addf %90, %94 : vector<8x128xf32>
    %96 = arith.truncf %95 : vector<8x128xf32> to vector<8x128xbf16>
    %cst_42 = arith.constant dense<0.000000e+00> : vector<8x128xf32>
    %97 = tpu.matmul %96, %0, %cst_42 {dimension_numbers = #tpu.dot_dimension_numbers<[1], [0], [0], [1], [0, 0, 1, 1], [], []>} : vector<8x128xbf16>, vector<128x128xbf16>, vector<8x128xf32> -> vector<8x128xf32>
    %98 = arith.mulf %97, %97 : vector<8x128xf32>
    %cst_43 = arith.constant dense<0.000000e+00> : vector<8xf32>
    %99 = vector.multi_reduction <add>, %98, %cst_43 [1] : vector<8x128xf32> to vector<8xf32>
    %100 = vector.shape_cast %99 : vector<8xf32> to vector<8x1xf32>
    %101 = arith.subf %100, %87 : vector<8x1xf32>
    %cst_44 = arith.constant -2.500000e-03 : f32
    %102 = vector.broadcast %cst_44 : f32 to vector<8x1xf32>
    %103 = arith.mulf %102, %101 : vector<8x1xf32>
    %c0_45 = arith.constant 0 : index
    %104 = arith.index_cast %c3_i32 : i32 to index
    %c0_46 = arith.constant 0 : index
    %c0_47 = arith.constant 0 : index
    %105 = vector.load %arg3[%c0_45, %104, %c0_46, %c0_47] : memref<1x32x8x1xf32, #tpu.memory_space<vmem>>, vector<1x1x8x1xf32>
    %106 = vector.shape_cast %105 : vector<1x1x8x1xf32> to vector<8x1xf32>
    %107 = arith.cmpf ole, %106, %103 : vector<8x1xf32>
    %108 = vector.shape_cast %107 : vector<8x1xi1> to vector<8x1xi1>
    %109 = vector.broadcast %108 : vector<8x1xi1> to vector<8x128xi1>
    %110 = arith.select %109, %95, %83 : vector<8x128xi1>, vector<8x128xf32>
    %111 = vector.shape_cast %107 : vector<8x1xi1> to vector<8x1xi1>
    %112 = vector.broadcast %111 : vector<8x1xi1> to vector<8x128xi1>
    %113 = arith.select %112, %97, %86 : vector<8x128xi1>, vector<8x128xf32>
    %114 = arith.select %107, %100, %87 : vector<8x1xi1>, vector<8x1xf32>
    %c4_i32 = arith.constant 4 : i32
    %cst_48 = arith.constant 0.00999999977 : f32
    %115 = vector.broadcast %cst_48 : f32 to vector<8x128xf32>
    %116 = arith.mulf %115, %113 : vector<8x128xf32>
    %117 = arith.subf %110, %116 : vector<8x128xf32>
    %c0_49 = arith.constant 0 : index
    %118 = arith.index_cast %c4_i32 : i32 to index
    %c0_50 = arith.constant 0 : index
    %c0_51 = arith.constant 0 : index
    %119 = vector.load %arg2[%c0_49, %118, %c0_50, %c0_51] : memref<1x32x8x128xbf16, #tpu.memory_space<vmem>>, vector<1x1x8x128xbf16>
    %120 = vector.shape_cast %119 : vector<1x1x8x128xbf16> to vector<8x128xbf16>
    %121 = arith.extf %120 : vector<8x128xbf16> to vector<8x128xf32>
    %122 = arith.addf %117, %121 : vector<8x128xf32>
    %123 = arith.truncf %122 : vector<8x128xf32> to vector<8x128xbf16>
    %cst_52 = arith.constant dense<0.000000e+00> : vector<8x128xf32>
    %124 = tpu.matmul %123, %0, %cst_52 {dimension_numbers = #tpu.dot_dimension_numbers<[1], [0], [0], [1], [0, 0, 1, 1], [], []>} : vector<8x128xbf16>, vector<128x128xbf16>, vector<8x128xf32> -> vector<8x128xf32>
    %125 = arith.mulf %124, %124 : vector<8x128xf32>
    %cst_53 = arith.constant dense<0.000000e+00> : vector<8xf32>
    %126 = vector.multi_reduction <add>, %125, %cst_53 [1] : vector<8x128xf32> to vector<8xf32>
    %127 = vector.shape_cast %126 : vector<8xf32> to vector<8x1xf32>
    %128 = arith.subf %127, %114 : vector<8x1xf32>
    %cst_54 = arith.constant -2.500000e-03 : f32
    %129 = vector.broadcast %cst_54 : f32 to vector<8x1xf32>
    %130 = arith.mulf %129, %128 : vector<8x1xf32>
    %c0_55 = arith.constant 0 : index
    %131 = arith.index_cast %c4_i32 : i32 to index
    %c0_56 = arith.constant 0 : index
    %c0_57 = arith.constant 0 : index
    %132 = vector.load %arg3[%c0_55, %131, %c0_56, %c0_57] : memref<1x32x8x1xf32, #tpu.memory_space<vmem>>, vector<1x1x8x1xf32>
    %133 = vector.shape_cast %132 : vector<1x1x8x1xf32> to vector<8x1xf32>
    %134 = arith.cmpf ole, %133, %130 : vector<8x1xf32>
    %135 = vector.shape_cast %134 : vector<8x1xi1> to vector<8x1xi1>
    %136 = vector.broadcast %135 : vector<8x1xi1> to vector<8x128xi1>
    %137 = arith.select %136, %122, %110 : vector<8x128xi1>, vector<8x128xf32>
    %138 = vector.shape_cast %134 : vector<8x1xi1> to vector<8x1xi1>
    %139 = vector.broadcast %138 : vector<8x1xi1> to vector<8x128xi1>
    %140 = arith.select %139, %124, %113 : vector<8x128xi1>, vector<8x128xf32>
    %141 = arith.select %134, %127, %114 : vector<8x1xi1>, vector<8x1xf32>
    %c5_i32 = arith.constant 5 : i32
    %cst_58 = arith.constant 0.00999999977 : f32
    %142 = vector.broadcast %cst_58 : f32 to vector<8x128xf32>
    %143 = arith.mulf %142, %140 : vector<8x128xf32>
    %144 = arith.subf %137, %143 : vector<8x128xf32>
    %c0_59 = arith.constant 0 : index
    %145 = arith.index_cast %c5_i32 : i32 to index
    %c0_60 = arith.constant 0 : index
    %c0_61 = arith.constant 0 : index
    %146 = vector.load %arg2[%c0_59, %145, %c0_60, %c0_61] : memref<1x32x8x128xbf16, #tpu.memory_space<vmem>>, vector<1x1x8x128xbf16>
    %147 = vector.shape_cast %146 : vector<1x1x8x128xbf16> to vector<8x128xbf16>
    %148 = arith.extf %147 : vector<8x128xbf16> to vector<8x128xf32>
    %149 = arith.addf %144, %148 : vector<8x128xf32>
    %150 = arith.truncf %149 : vector<8x128xf32> to vector<8x128xbf16>
    %cst_62 = arith.constant dense<0.000000e+00> : vector<8x128xf32>
    %151 = tpu.matmul %150, %0, %cst_62 {dimension_numbers = #tpu.dot_dimension_numbers<[1], [0], [0], [1], [0, 0, 1, 1], [], []>} : vector<8x128xbf16>, vector<128x128xbf16>, vector<8x128xf32> -> vector<8x128xf32>
    %152 = arith.mulf %151, %151 : vector<8x128xf32>
    %cst_63 = arith.constant dense<0.000000e+00> : vector<8xf32>
    %153 = vector.multi_reduction <add>, %152, %cst_63 [1] : vector<8x128xf32> to vector<8xf32>
    %154 = vector.shape_cast %153 : vector<8xf32> to vector<8x1xf32>
    %155 = arith.subf %154, %141 : vector<8x1xf32>
    %cst_64 = arith.constant -2.500000e-03 : f32
    %156 = vector.broadcast %cst_64 : f32 to vector<8x1xf32>
    %157 = arith.mulf %156, %155 : vector<8x1xf32>
    %c0_65 = arith.constant 0 : index
    %158 = arith.index_cast %c5_i32 : i32 to index
    %c0_66 = arith.constant 0 : index
    %c0_67 = arith.constant 0 : index
    %159 = vector.load %arg3[%c0_65, %158, %c0_66, %c0_67] : memref<1x32x8x1xf32, #tpu.memory_space<vmem>>, vector<1x1x8x1xf32>
    %160 = vector.shape_cast %159 : vector<1x1x8x1xf32> to vector<8x1xf32>
    %161 = arith.cmpf ole, %160, %157 : vector<8x1xf32>
    %162 = vector.shape_cast %161 : vector<8x1xi1> to vector<8x1xi1>
    %163 = vector.broadcast %162 : vector<8x1xi1> to vector<8x128xi1>
    %164 = arith.select %163, %149, %137 : vector<8x128xi1>, vector<8x128xf32>
    %165 = vector.shape_cast %161 : vector<8x1xi1> to vector<8x1xi1>
    %166 = vector.broadcast %165 : vector<8x1xi1> to vector<8x128xi1>
    %167 = arith.select %166, %151, %140 : vector<8x128xi1>, vector<8x128xf32>
    %168 = arith.select %161, %154, %141 : vector<8x1xi1>, vector<8x1xf32>
    %c6_i32 = arith.constant 6 : i32
    %cst_68 = arith.constant 0.00999999977 : f32
    %169 = vector.broadcast %cst_68 : f32 to vector<8x128xf32>
    %170 = arith.mulf %169, %167 : vector<8x128xf32>
    %171 = arith.subf %164, %170 : vector<8x128xf32>
    %c0_69 = arith.constant 0 : index
    %172 = arith.index_cast %c6_i32 : i32 to index
    %c0_70 = arith.constant 0 : index
    %c0_71 = arith.constant 0 : index
    %173 = vector.load %arg2[%c0_69, %172, %c0_70, %c0_71] : memref<1x32x8x128xbf16, #tpu.memory_space<vmem>>, vector<1x1x8x128xbf16>
    %174 = vector.shape_cast %173 : vector<1x1x8x128xbf16> to vector<8x128xbf16>
    %175 = arith.extf %174 : vector<8x128xbf16> to vector<8x128xf32>
    %176 = arith.addf %171, %175 : vector<8x128xf32>
    %177 = arith.truncf %176 : vector<8x128xf32> to vector<8x128xbf16>
    %cst_72 = arith.constant dense<0.000000e+00> : vector<8x128xf32>
    %178 = tpu.matmul %177, %0, %cst_72 {dimension_numbers = #tpu.dot_dimension_numbers<[1], [0], [0], [1], [0, 0, 1, 1], [], []>} : vector<8x128xbf16>, vector<128x128xbf16>, vector<8x128xf32> -> vector<8x128xf32>
    %179 = arith.mulf %178, %178 : vector<8x128xf32>
    %cst_73 = arith.constant dense<0.000000e+00> : vector<8xf32>
    %180 = vector.multi_reduction <add>, %179, %cst_73 [1] : vector<8x128xf32> to vector<8xf32>
    %181 = vector.shape_cast %180 : vector<8xf32> to vector<8x1xf32>
    %182 = arith.subf %181, %168 : vector<8x1xf32>
    %cst_74 = arith.constant -2.500000e-03 : f32
    %183 = vector.broadcast %cst_74 : f32 to vector<8x1xf32>
    %184 = arith.mulf %183, %182 : vector<8x1xf32>
    %c0_75 = arith.constant 0 : index
    %185 = arith.index_cast %c6_i32 : i32 to index
    %c0_76 = arith.constant 0 : index
    %c0_77 = arith.constant 0 : index
    %186 = vector.load %arg3[%c0_75, %185, %c0_76, %c0_77] : memref<1x32x8x1xf32, #tpu.memory_space<vmem>>, vector<1x1x8x1xf32>
    %187 = vector.shape_cast %186 : vector<1x1x8x1xf32> to vector<8x1xf32>
    %188 = arith.cmpf ole, %187, %184 : vector<8x1xf32>
    %189 = vector.shape_cast %188 : vector<8x1xi1> to vector<8x1xi1>
    %190 = vector.broadcast %189 : vector<8x1xi1> to vector<8x128xi1>
    %191 = arith.select %190, %176, %164 : vector<8x128xi1>, vector<8x128xf32>
    %192 = vector.shape_cast %188 : vector<8x1xi1> to vector<8x1xi1>
    %193 = vector.broadcast %192 : vector<8x1xi1> to vector<8x128xi1>
    %194 = arith.select %193, %178, %167 : vector<8x128xi1>, vector<8x128xf32>
    %195 = arith.select %188, %181, %168 : vector<8x1xi1>, vector<8x1xf32>
    %c7_i32 = arith.constant 7 : i32
    %cst_78 = arith.constant 0.00999999977 : f32
    %196 = vector.broadcast %cst_78 : f32 to vector<8x128xf32>
    %197 = arith.mulf %196, %194 : vector<8x128xf32>
    %198 = arith.subf %191, %197 : vector<8x128xf32>
    %c0_79 = arith.constant 0 : index
    %199 = arith.index_cast %c7_i32 : i32 to index
    %c0_80 = arith.constant 0 : index
    %c0_81 = arith.constant 0 : index
    %200 = vector.load %arg2[%c0_79, %199, %c0_80, %c0_81] : memref<1x32x8x128xbf16, #tpu.memory_space<vmem>>, vector<1x1x8x128xbf16>
    %201 = vector.shape_cast %200 : vector<1x1x8x128xbf16> to vector<8x128xbf16>
    %202 = arith.extf %201 : vector<8x128xbf16> to vector<8x128xf32>
    %203 = arith.addf %198, %202 : vector<8x128xf32>
    %204 = arith.truncf %203 : vector<8x128xf32> to vector<8x128xbf16>
    %cst_82 = arith.constant dense<0.000000e+00> : vector<8x128xf32>
    %205 = tpu.matmul %204, %0, %cst_82 {dimension_numbers = #tpu.dot_dimension_numbers<[1], [0], [0], [1], [0, 0, 1, 1], [], []>} : vector<8x128xbf16>, vector<128x128xbf16>, vector<8x128xf32> -> vector<8x128xf32>
    %206 = arith.mulf %205, %205 : vector<8x128xf32>
    %cst_83 = arith.constant dense<0.000000e+00> : vector<8xf32>
    %207 = vector.multi_reduction <add>, %206, %cst_83 [1] : vector<8x128xf32> to vector<8xf32>
    %208 = vector.shape_cast %207 : vector<8xf32> to vector<8x1xf32>
    %209 = arith.subf %208, %195 : vector<8x1xf32>
    %cst_84 = arith.constant -2.500000e-03 : f32
    %210 = vector.broadcast %cst_84 : f32 to vector<8x1xf32>
    %211 = arith.mulf %210, %209 : vector<8x1xf32>
    %c0_85 = arith.constant 0 : index
    %212 = arith.index_cast %c7_i32 : i32 to index
    %c0_86 = arith.constant 0 : index
    %c0_87 = arith.constant 0 : index
    %213 = vector.load %arg3[%c0_85, %212, %c0_86, %c0_87] : memref<1x32x8x1xf32, #tpu.memory_space<vmem>>, vector<1x1x8x1xf32>
    %214 = vector.shape_cast %213 : vector<1x1x8x1xf32> to vector<8x1xf32>
    %215 = arith.cmpf ole, %214, %211 : vector<8x1xf32>
    %216 = vector.shape_cast %215 : vector<8x1xi1> to vector<8x1xi1>
    %217 = vector.broadcast %216 : vector<8x1xi1> to vector<8x128xi1>
    %218 = arith.select %217, %203, %191 : vector<8x128xi1>, vector<8x128xf32>
    %219 = vector.shape_cast %215 : vector<8x1xi1> to vector<8x1xi1>
    %220 = vector.broadcast %219 : vector<8x1xi1> to vector<8x128xi1>
    %221 = arith.select %220, %205, %194 : vector<8x128xi1>, vector<8x128xf32>
    %222 = arith.select %215, %208, %195 : vector<8x1xi1>, vector<8x1xf32>
    %c8_i32 = arith.constant 8 : i32
    %cst_88 = arith.constant 0.00999999977 : f32
    %223 = vector.broadcast %cst_88 : f32 to vector<8x128xf32>
    %224 = arith.mulf %223, %221 : vector<8x128xf32>
    %225 = arith.subf %218, %224 : vector<8x128xf32>
    %c0_89 = arith.constant 0 : index
    %226 = arith.index_cast %c8_i32 : i32 to index
    %c0_90 = arith.constant 0 : index
    %c0_91 = arith.constant 0 : index
    %227 = vector.load %arg2[%c0_89, %226, %c0_90, %c0_91] : memref<1x32x8x128xbf16, #tpu.memory_space<vmem>>, vector<1x1x8x128xbf16>
    %228 = vector.shape_cast %227 : vector<1x1x8x128xbf16> to vector<8x128xbf16>
    %229 = arith.extf %228 : vector<8x128xbf16> to vector<8x128xf32>
    %230 = arith.addf %225, %229 : vector<8x128xf32>
    %231 = arith.truncf %230 : vector<8x128xf32> to vector<8x128xbf16>
    %cst_92 = arith.constant dense<0.000000e+00> : vector<8x128xf32>
    %232 = tpu.matmul %231, %0, %cst_92 {dimension_numbers = #tpu.dot_dimension_numbers<[1], [0], [0], [1], [0, 0, 1, 1], [], []>} : vector<8x128xbf16>, vector<128x128xbf16>, vector<8x128xf32> -> vector<8x128xf32>
    %233 = arith.mulf %232, %232 : vector<8x128xf32>
    %cst_93 = arith.constant dense<0.000000e+00> : vector<8xf32>
    %234 = vector.multi_reduction <add>, %233, %cst_93 [1] : vector<8x128xf32> to vector<8xf32>
    %235 = vector.shape_cast %234 : vector<8xf32> to vector<8x1xf32>
    %236 = arith.subf %235, %222 : vector<8x1xf32>
    %cst_94 = arith.constant -2.500000e-03 : f32
    %237 = vector.broadcast %cst_94 : f32 to vector<8x1xf32>
    %238 = arith.mulf %237, %236 : vector<8x1xf32>
    %c0_95 = arith.constant 0 : index
    %239 = arith.index_cast %c8_i32 : i32 to index
    %c0_96 = arith.constant 0 : index
    %c0_97 = arith.constant 0 : index
    %240 = vector.load %arg3[%c0_95, %239, %c0_96, %c0_97] : memref<1x32x8x1xf32, #tpu.memory_space<vmem>>, vector<1x1x8x1xf32>
    %241 = vector.shape_cast %240 : vector<1x1x8x1xf32> to vector<8x1xf32>
    %242 = arith.cmpf ole, %241, %238 : vector<8x1xf32>
    %243 = vector.shape_cast %242 : vector<8x1xi1> to vector<8x1xi1>
    %244 = vector.broadcast %243 : vector<8x1xi1> to vector<8x128xi1>
    %245 = arith.select %244, %230, %218 : vector<8x128xi1>, vector<8x128xf32>
    %246 = vector.shape_cast %242 : vector<8x1xi1> to vector<8x1xi1>
    %247 = vector.broadcast %246 : vector<8x1xi1> to vector<8x128xi1>
    %248 = arith.select %247, %232, %221 : vector<8x128xi1>, vector<8x128xf32>
    %249 = arith.select %242, %235, %222 : vector<8x1xi1>, vector<8x1xf32>
    %c9_i32 = arith.constant 9 : i32
    %cst_98 = arith.constant 0.00999999977 : f32
    %250 = vector.broadcast %cst_98 : f32 to vector<8x128xf32>
    %251 = arith.mulf %250, %248 : vector<8x128xf32>
    %252 = arith.subf %245, %251 : vector<8x128xf32>
    %c0_99 = arith.constant 0 : index
    %253 = arith.index_cast %c9_i32 : i32 to index
    %c0_100 = arith.constant 0 : index
    %c0_101 = arith.constant 0 : index
    %254 = vector.load %arg2[%c0_99, %253, %c0_100, %c0_101] : memref<1x32x8x128xbf16, #tpu.memory_space<vmem>>, vector<1x1x8x128xbf16>
    %255 = vector.shape_cast %254 : vector<1x1x8x128xbf16> to vector<8x128xbf16>
    %256 = arith.extf %255 : vector<8x128xbf16> to vector<8x128xf32>
    %257 = arith.addf %252, %256 : vector<8x128xf32>
    %258 = arith.truncf %257 : vector<8x128xf32> to vector<8x128xbf16>
    %cst_102 = arith.constant dense<0.000000e+00> : vector<8x128xf32>
    %259 = tpu.matmul %258, %0, %cst_102 {dimension_numbers = #tpu.dot_dimension_numbers<[1], [0], [0], [1], [0, 0, 1, 1], [], []>} : vector<8x128xbf16>, vector<128x128xbf16>, vector<8x128xf32> -> vector<8x128xf32>
    %260 = arith.mulf %259, %259 : vector<8x128xf32>
    %cst_103 = arith.constant dense<0.000000e+00> : vector<8xf32>
    %261 = vector.multi_reduction <add>, %260, %cst_103 [1] : vector<8x128xf32> to vector<8xf32>
    %262 = vector.shape_cast %261 : vector<8xf32> to vector<8x1xf32>
    %263 = arith.subf %262, %249 : vector<8x1xf32>
    %cst_104 = arith.constant -2.500000e-03 : f32
    %264 = vector.broadcast %cst_104 : f32 to vector<8x1xf32>
    %265 = arith.mulf %264, %263 : vector<8x1xf32>
    %c0_105 = arith.constant 0 : index
    %266 = arith.index_cast %c9_i32 : i32 to index
    %c0_106 = arith.constant 0 : index
    %c0_107 = arith.constant 0 : index
    %267 = vector.load %arg3[%c0_105, %266, %c0_106, %c0_107] : memref<1x32x8x1xf32, #tpu.memory_space<vmem>>, vector<1x1x8x1xf32>
    %268 = vector.shape_cast %267 : vector<1x1x8x1xf32> to vector<8x1xf32>
    %269 = arith.cmpf ole, %268, %265 : vector<8x1xf32>
    %270 = vector.shape_cast %269 : vector<8x1xi1> to vector<8x1xi1>
    %271 = vector.broadcast %270 : vector<8x1xi1> to vector<8x128xi1>
    %272 = arith.select %271, %257, %245 : vector<8x128xi1>, vector<8x128xf32>
    %273 = vector.shape_cast %269 : vector<8x1xi1> to vector<8x1xi1>
    %274 = vector.broadcast %273 : vector<8x1xi1> to vector<8x128xi1>
    %275 = arith.select %274, %259, %248 : vector<8x128xi1>, vector<8x128xf32>
    %276 = arith.select %269, %262, %249 : vector<8x1xi1>, vector<8x1xf32>
    %c10_i32 = arith.constant 10 : i32
    %cst_108 = arith.constant 0.00999999977 : f32
    %277 = vector.broadcast %cst_108 : f32 to vector<8x128xf32>
    %278 = arith.mulf %277, %275 : vector<8x128xf32>
    %279 = arith.subf %272, %278 : vector<8x128xf32>
    %c0_109 = arith.constant 0 : index
    %280 = arith.index_cast %c10_i32 : i32 to index
    %c0_110 = arith.constant 0 : index
    %c0_111 = arith.constant 0 : index
    %281 = vector.load %arg2[%c0_109, %280, %c0_110, %c0_111] : memref<1x32x8x128xbf16, #tpu.memory_space<vmem>>, vector<1x1x8x128xbf16>
    %282 = vector.shape_cast %281 : vector<1x1x8x128xbf16> to vector<8x128xbf16>
    %283 = arith.extf %282 : vector<8x128xbf16> to vector<8x128xf32>
    %284 = arith.addf %279, %283 : vector<8x128xf32>
    %285 = arith.truncf %284 : vector<8x128xf32> to vector<8x128xbf16>
    %cst_112 = arith.constant dense<0.000000e+00> : vector<8x128xf32>
    %286 = tpu.matmul %285, %0, %cst_112 {dimension_numbers = #tpu.dot_dimension_numbers<[1], [0], [0], [1], [0, 0, 1, 1], [], []>} : vector<8x128xbf16>, vector<128x128xbf16>, vector<8x128xf32> -> vector<8x128xf32>
    %287 = arith.mulf %286, %286 : vector<8x128xf32>
    %cst_113 = arith.constant dense<0.000000e+00> : vector<8xf32>
    %288 = vector.multi_reduction <add>, %287, %cst_113 [1] : vector<8x128xf32> to vector<8xf32>
    %289 = vector.shape_cast %288 : vector<8xf32> to vector<8x1xf32>
    %290 = arith.subf %289, %276 : vector<8x1xf32>
    %cst_114 = arith.constant -2.500000e-03 : f32
    %291 = vector.broadcast %cst_114 : f32 to vector<8x1xf32>
    %292 = arith.mulf %291, %290 : vector<8x1xf32>
    %c0_115 = arith.constant 0 : index
    %293 = arith.index_cast %c10_i32 : i32 to index
    %c0_116 = arith.constant 0 : index
    %c0_117 = arith.constant 0 : index
    %294 = vector.load %arg3[%c0_115, %293, %c0_116, %c0_117] : memref<1x32x8x1xf32, #tpu.memory_space<vmem>>, vector<1x1x8x1xf32>
    %295 = vector.shape_cast %294 : vector<1x1x8x1xf32> to vector<8x1xf32>
    %296 = arith.cmpf ole, %295, %292 : vector<8x1xf32>
    %297 = vector.shape_cast %296 : vector<8x1xi1> to vector<8x1xi1>
    %298 = vector.broadcast %297 : vector<8x1xi1> to vector<8x128xi1>
    %299 = arith.select %298, %284, %272 : vector<8x128xi1>, vector<8x128xf32>
    %300 = vector.shape_cast %296 : vector<8x1xi1> to vector<8x1xi1>
    %301 = vector.broadcast %300 : vector<8x1xi1> to vector<8x128xi1>
    %302 = arith.select %301, %286, %275 : vector<8x128xi1>, vector<8x128xf32>
    %303 = arith.select %296, %289, %276 : vector<8x1xi1>, vector<8x1xf32>
    %c11_i32 = arith.constant 11 : i32
    %cst_118 = arith.constant 0.00999999977 : f32
    %304 = vector.broadcast %cst_118 : f32 to vector<8x128xf32>
    %305 = arith.mulf %304, %302 : vector<8x128xf32>
    %306 = arith.subf %299, %305 : vector<8x128xf32>
    %c0_119 = arith.constant 0 : index
    %307 = arith.index_cast %c11_i32 : i32 to index
    %c0_120 = arith.constant 0 : index
    %c0_121 = arith.constant 0 : index
    %308 = vector.load %arg2[%c0_119, %307, %c0_120, %c0_121] : memref<1x32x8x128xbf16, #tpu.memory_space<vmem>>, vector<1x1x8x128xbf16>
    %309 = vector.shape_cast %308 : vector<1x1x8x128xbf16> to vector<8x128xbf16>
    %310 = arith.extf %309 : vector<8x128xbf16> to vector<8x128xf32>
    %311 = arith.addf %306, %310 : vector<8x128xf32>
    %312 = arith.truncf %311 : vector<8x128xf32> to vector<8x128xbf16>
    %cst_122 = arith.constant dense<0.000000e+00> : vector<8x128xf32>
    %313 = tpu.matmul %312, %0, %cst_122 {dimension_numbers = #tpu.dot_dimension_numbers<[1], [0], [0], [1], [0, 0, 1, 1], [], []>} : vector<8x128xbf16>, vector<128x128xbf16>, vector<8x128xf32> -> vector<8x128xf32>
    %314 = arith.mulf %313, %313 : vector<8x128xf32>
    %cst_123 = arith.constant dense<0.000000e+00> : vector<8xf32>
    %315 = vector.multi_reduction <add>, %314, %cst_123 [1] : vector<8x128xf32> to vector<8xf32>
    %316 = vector.shape_cast %315 : vector<8xf32> to vector<8x1xf32>
    %317 = arith.subf %316, %303 : vector<8x1xf32>
    %cst_124 = arith.constant -2.500000e-03 : f32
    %318 = vector.broadcast %cst_124 : f32 to vector<8x1xf32>
    %319 = arith.mulf %318, %317 : vector<8x1xf32>
    %c0_125 = arith.constant 0 : index
    %320 = arith.index_cast %c11_i32 : i32 to index
    %c0_126 = arith.constant 0 : index
    %c0_127 = arith.constant 0 : index
    %321 = vector.load %arg3[%c0_125, %320, %c0_126, %c0_127] : memref<1x32x8x1xf32, #tpu.memory_space<vmem>>, vector<1x1x8x1xf32>
    %322 = vector.shape_cast %321 : vector<1x1x8x1xf32> to vector<8x1xf32>
    %323 = arith.cmpf ole, %322, %319 : vector<8x1xf32>
    %324 = vector.shape_cast %323 : vector<8x1xi1> to vector<8x1xi1>
    %325 = vector.broadcast %324 : vector<8x1xi1> to vector<8x128xi1>
    %326 = arith.select %325, %311, %299 : vector<8x128xi1>, vector<8x128xf32>
    %327 = vector.shape_cast %323 : vector<8x1xi1> to vector<8x1xi1>
    %328 = vector.broadcast %327 : vector<8x1xi1> to vector<8x128xi1>
    %329 = arith.select %328, %313, %302 : vector<8x128xi1>, vector<8x128xf32>
    %330 = arith.select %323, %316, %303 : vector<8x1xi1>, vector<8x1xf32>
    %c12_i32 = arith.constant 12 : i32
    %cst_128 = arith.constant 0.00999999977 : f32
    %331 = vector.broadcast %cst_128 : f32 to vector<8x128xf32>
    %332 = arith.mulf %331, %329 : vector<8x128xf32>
    %333 = arith.subf %326, %332 : vector<8x128xf32>
    %c0_129 = arith.constant 0 : index
    %334 = arith.index_cast %c12_i32 : i32 to index
    %c0_130 = arith.constant 0 : index
    %c0_131 = arith.constant 0 : index
    %335 = vector.load %arg2[%c0_129, %334, %c0_130, %c0_131] : memref<1x32x8x128xbf16, #tpu.memory_space<vmem>>, vector<1x1x8x128xbf16>
    %336 = vector.shape_cast %335 : vector<1x1x8x128xbf16> to vector<8x128xbf16>
    %337 = arith.extf %336 : vector<8x128xbf16> to vector<8x128xf32>
    %338 = arith.addf %333, %337 : vector<8x128xf32>
    %339 = arith.truncf %338 : vector<8x128xf32> to vector<8x128xbf16>
    %cst_132 = arith.constant dense<0.000000e+00> : vector<8x128xf32>
    %340 = tpu.matmul %339, %0, %cst_132 {dimension_numbers = #tpu.dot_dimension_numbers<[1], [0], [0], [1], [0, 0, 1, 1], [], []>} : vector<8x128xbf16>, vector<128x128xbf16>, vector<8x128xf32> -> vector<8x128xf32>
    %341 = arith.mulf %340, %340 : vector<8x128xf32>
    %cst_133 = arith.constant dense<0.000000e+00> : vector<8xf32>
    %342 = vector.multi_reduction <add>, %341, %cst_133 [1] : vector<8x128xf32> to vector<8xf32>
    %343 = vector.shape_cast %342 : vector<8xf32> to vector<8x1xf32>
    %344 = arith.subf %343, %330 : vector<8x1xf32>
    %cst_134 = arith.constant -2.500000e-03 : f32
    %345 = vector.broadcast %cst_134 : f32 to vector<8x1xf32>
    %346 = arith.mulf %345, %344 : vector<8x1xf32>
    %c0_135 = arith.constant 0 : index
    %347 = arith.index_cast %c12_i32 : i32 to index
    %c0_136 = arith.constant 0 : index
    %c0_137 = arith.constant 0 : index
    %348 = vector.load %arg3[%c0_135, %347, %c0_136, %c0_137] : memref<1x32x8x1xf32, #tpu.memory_space<vmem>>, vector<1x1x8x1xf32>
    %349 = vector.shape_cast %348 : vector<1x1x8x1xf32> to vector<8x1xf32>
    %350 = arith.cmpf ole, %349, %346 : vector<8x1xf32>
    %351 = vector.shape_cast %350 : vector<8x1xi1> to vector<8x1xi1>
    %352 = vector.broadcast %351 : vector<8x1xi1> to vector<8x128xi1>
    %353 = arith.select %352, %338, %326 : vector<8x128xi1>, vector<8x128xf32>
    %354 = vector.shape_cast %350 : vector<8x1xi1> to vector<8x1xi1>
    %355 = vector.broadcast %354 : vector<8x1xi1> to vector<8x128xi1>
    %356 = arith.select %355, %340, %329 : vector<8x128xi1>, vector<8x128xf32>
    %357 = arith.select %350, %343, %330 : vector<8x1xi1>, vector<8x1xf32>
    %c13_i32 = arith.constant 13 : i32
    %cst_138 = arith.constant 0.00999999977 : f32
    %358 = vector.broadcast %cst_138 : f32 to vector<8x128xf32>
    %359 = arith.mulf %358, %356 : vector<8x128xf32>
    %360 = arith.subf %353, %359 : vector<8x128xf32>
    %c0_139 = arith.constant 0 : index
    %361 = arith.index_cast %c13_i32 : i32 to index
    %c0_140 = arith.constant 0 : index
    %c0_141 = arith.constant 0 : index
    %362 = vector.load %arg2[%c0_139, %361, %c0_140, %c0_141] : memref<1x32x8x128xbf16, #tpu.memory_space<vmem>>, vector<1x1x8x128xbf16>
    %363 = vector.shape_cast %362 : vector<1x1x8x128xbf16> to vector<8x128xbf16>
    %364 = arith.extf %363 : vector<8x128xbf16> to vector<8x128xf32>
    %365 = arith.addf %360, %364 : vector<8x128xf32>
    %366 = arith.truncf %365 : vector<8x128xf32> to vector<8x128xbf16>
    %cst_142 = arith.constant dense<0.000000e+00> : vector<8x128xf32>
    %367 = tpu.matmul %366, %0, %cst_142 {dimension_numbers = #tpu.dot_dimension_numbers<[1], [0], [0], [1], [0, 0, 1, 1], [], []>} : vector<8x128xbf16>, vector<128x128xbf16>, vector<8x128xf32> -> vector<8x128xf32>
    %368 = arith.mulf %367, %367 : vector<8x128xf32>
    %cst_143 = arith.constant dense<0.000000e+00> : vector<8xf32>
    %369 = vector.multi_reduction <add>, %368, %cst_143 [1] : vector<8x128xf32> to vector<8xf32>
    %370 = vector.shape_cast %369 : vector<8xf32> to vector<8x1xf32>
    %371 = arith.subf %370, %357 : vector<8x1xf32>
    %cst_144 = arith.constant -2.500000e-03 : f32
    %372 = vector.broadcast %cst_144 : f32 to vector<8x1xf32>
    %373 = arith.mulf %372, %371 : vector<8x1xf32>
    %c0_145 = arith.constant 0 : index
    %374 = arith.index_cast %c13_i32 : i32 to index
    %c0_146 = arith.constant 0 : index
    %c0_147 = arith.constant 0 : index
    %375 = vector.load %arg3[%c0_145, %374, %c0_146, %c0_147] : memref<1x32x8x1xf32, #tpu.memory_space<vmem>>, vector<1x1x8x1xf32>
    %376 = vector.shape_cast %375 : vector<1x1x8x1xf32> to vector<8x1xf32>
    %377 = arith.cmpf ole, %376, %373 : vector<8x1xf32>
    %378 = vector.shape_cast %377 : vector<8x1xi1> to vector<8x1xi1>
    %379 = vector.broadcast %378 : vector<8x1xi1> to vector<8x128xi1>
    %380 = arith.select %379, %365, %353 : vector<8x128xi1>, vector<8x128xf32>
    %381 = vector.shape_cast %377 : vector<8x1xi1> to vector<8x1xi1>
    %382 = vector.broadcast %381 : vector<8x1xi1> to vector<8x128xi1>
    %383 = arith.select %382, %367, %356 : vector<8x128xi1>, vector<8x128xf32>
    %384 = arith.select %377, %370, %357 : vector<8x1xi1>, vector<8x1xf32>
    %c14_i32 = arith.constant 14 : i32
    %cst_148 = arith.constant 0.00999999977 : f32
    %385 = vector.broadcast %cst_148 : f32 to vector<8x128xf32>
    %386 = arith.mulf %385, %383 : vector<8x128xf32>
    %387 = arith.subf %380, %386 : vector<8x128xf32>
    %c0_149 = arith.constant 0 : index
    %388 = arith.index_cast %c14_i32 : i32 to index
    %c0_150 = arith.constant 0 : index
    %c0_151 = arith.constant 0 : index
    %389 = vector.load %arg2[%c0_149, %388, %c0_150, %c0_151] : memref<1x32x8x128xbf16, #tpu.memory_space<vmem>>, vector<1x1x8x128xbf16>
    %390 = vector.shape_cast %389 : vector<1x1x8x128xbf16> to vector<8x128xbf16>
    %391 = arith.extf %390 : vector<8x128xbf16> to vector<8x128xf32>
    %392 = arith.addf %387, %391 : vector<8x128xf32>
    %393 = arith.truncf %392 : vector<8x128xf32> to vector<8x128xbf16>
    %cst_152 = arith.constant dense<0.000000e+00> : vector<8x128xf32>
    %394 = tpu.matmul %393, %0, %cst_152 {dimension_numbers = #tpu.dot_dimension_numbers<[1], [0], [0], [1], [0, 0, 1, 1], [], []>} : vector<8x128xbf16>, vector<128x128xbf16>, vector<8x128xf32> -> vector<8x128xf32>
    %395 = arith.mulf %394, %394 : vector<8x128xf32>
    %cst_153 = arith.constant dense<0.000000e+00> : vector<8xf32>
    %396 = vector.multi_reduction <add>, %395, %cst_153 [1] : vector<8x128xf32> to vector<8xf32>
    %397 = vector.shape_cast %396 : vector<8xf32> to vector<8x1xf32>
    %398 = arith.subf %397, %384 : vector<8x1xf32>
    %cst_154 = arith.constant -2.500000e-03 : f32
    %399 = vector.broadcast %cst_154 : f32 to vector<8x1xf32>
    %400 = arith.mulf %399, %398 : vector<8x1xf32>
    %c0_155 = arith.constant 0 : index
    %401 = arith.index_cast %c14_i32 : i32 to index
    %c0_156 = arith.constant 0 : index
    %c0_157 = arith.constant 0 : index
    %402 = vector.load %arg3[%c0_155, %401, %c0_156, %c0_157] : memref<1x32x8x1xf32, #tpu.memory_space<vmem>>, vector<1x1x8x1xf32>
    %403 = vector.shape_cast %402 : vector<1x1x8x1xf32> to vector<8x1xf32>
    %404 = arith.cmpf ole, %403, %400 : vector<8x1xf32>
    %405 = vector.shape_cast %404 : vector<8x1xi1> to vector<8x1xi1>
    %406 = vector.broadcast %405 : vector<8x1xi1> to vector<8x128xi1>
    %407 = arith.select %406, %392, %380 : vector<8x128xi1>, vector<8x128xf32>
    %408 = vector.shape_cast %404 : vector<8x1xi1> to vector<8x1xi1>
    %409 = vector.broadcast %408 : vector<8x1xi1> to vector<8x128xi1>
    %410 = arith.select %409, %394, %383 : vector<8x128xi1>, vector<8x128xf32>
    %411 = arith.select %404, %397, %384 : vector<8x1xi1>, vector<8x1xf32>
    %c15_i32 = arith.constant 15 : i32
    %cst_158 = arith.constant 0.00999999977 : f32
    %412 = vector.broadcast %cst_158 : f32 to vector<8x128xf32>
    %413 = arith.mulf %412, %410 : vector<8x128xf32>
    %414 = arith.subf %407, %413 : vector<8x128xf32>
    %c0_159 = arith.constant 0 : index
    %415 = arith.index_cast %c15_i32 : i32 to index
    %c0_160 = arith.constant 0 : index
    %c0_161 = arith.constant 0 : index
    %416 = vector.load %arg2[%c0_159, %415, %c0_160, %c0_161] : memref<1x32x8x128xbf16, #tpu.memory_space<vmem>>, vector<1x1x8x128xbf16>
    %417 = vector.shape_cast %416 : vector<1x1x8x128xbf16> to vector<8x128xbf16>
    %418 = arith.extf %417 : vector<8x128xbf16> to vector<8x128xf32>
    %419 = arith.addf %414, %418 : vector<8x128xf32>
    %420 = arith.truncf %419 : vector<8x128xf32> to vector<8x128xbf16>
    %cst_162 = arith.constant dense<0.000000e+00> : vector<8x128xf32>
    %421 = tpu.matmul %420, %0, %cst_162 {dimension_numbers = #tpu.dot_dimension_numbers<[1], [0], [0], [1], [0, 0, 1, 1], [], []>} : vector<8x128xbf16>, vector<128x128xbf16>, vector<8x128xf32> -> vector<8x128xf32>
    %422 = arith.mulf %421, %421 : vector<8x128xf32>
    %cst_163 = arith.constant dense<0.000000e+00> : vector<8xf32>
    %423 = vector.multi_reduction <add>, %422, %cst_163 [1] : vector<8x128xf32> to vector<8xf32>
    %424 = vector.shape_cast %423 : vector<8xf32> to vector<8x1xf32>
    %425 = arith.subf %424, %411 : vector<8x1xf32>
    %cst_164 = arith.constant -2.500000e-03 : f32
    %426 = vector.broadcast %cst_164 : f32 to vector<8x1xf32>
    %427 = arith.mulf %426, %425 : vector<8x1xf32>
    %c0_165 = arith.constant 0 : index
    %428 = arith.index_cast %c15_i32 : i32 to index
    %c0_166 = arith.constant 0 : index
    %c0_167 = arith.constant 0 : index
    %429 = vector.load %arg3[%c0_165, %428, %c0_166, %c0_167] : memref<1x32x8x1xf32, #tpu.memory_space<vmem>>, vector<1x1x8x1xf32>
    %430 = vector.shape_cast %429 : vector<1x1x8x1xf32> to vector<8x1xf32>
    %431 = arith.cmpf ole, %430, %427 : vector<8x1xf32>
    %432 = vector.shape_cast %431 : vector<8x1xi1> to vector<8x1xi1>
    %433 = vector.broadcast %432 : vector<8x1xi1> to vector<8x128xi1>
    %434 = arith.select %433, %419, %407 : vector<8x128xi1>, vector<8x128xf32>
    %435 = vector.shape_cast %431 : vector<8x1xi1> to vector<8x1xi1>
    %436 = vector.broadcast %435 : vector<8x1xi1> to vector<8x128xi1>
    %437 = arith.select %436, %421, %410 : vector<8x128xi1>, vector<8x128xf32>
    %438 = arith.select %431, %424, %411 : vector<8x1xi1>, vector<8x1xf32>
    %c16_i32 = arith.constant 16 : i32
    %cst_168 = arith.constant 0.00999999977 : f32
    %439 = vector.broadcast %cst_168 : f32 to vector<8x128xf32>
    %440 = arith.mulf %439, %437 : vector<8x128xf32>
    %441 = arith.subf %434, %440 : vector<8x128xf32>
    %c0_169 = arith.constant 0 : index
    %442 = arith.index_cast %c16_i32 : i32 to index
    %c0_170 = arith.constant 0 : index
    %c0_171 = arith.constant 0 : index
    %443 = vector.load %arg2[%c0_169, %442, %c0_170, %c0_171] : memref<1x32x8x128xbf16, #tpu.memory_space<vmem>>, vector<1x1x8x128xbf16>
    %444 = vector.shape_cast %443 : vector<1x1x8x128xbf16> to vector<8x128xbf16>
    %445 = arith.extf %444 : vector<8x128xbf16> to vector<8x128xf32>
    %446 = arith.addf %441, %445 : vector<8x128xf32>
    %447 = arith.truncf %446 : vector<8x128xf32> to vector<8x128xbf16>
    %cst_172 = arith.constant dense<0.000000e+00> : vector<8x128xf32>
    %448 = tpu.matmul %447, %0, %cst_172 {dimension_numbers = #tpu.dot_dimension_numbers<[1], [0], [0], [1], [0, 0, 1, 1], [], []>} : vector<8x128xbf16>, vector<128x128xbf16>, vector<8x128xf32> -> vector<8x128xf32>
    %449 = arith.mulf %448, %448 : vector<8x128xf32>
    %cst_173 = arith.constant dense<0.000000e+00> : vector<8xf32>
    %450 = vector.multi_reduction <add>, %449, %cst_173 [1] : vector<8x128xf32> to vector<8xf32>
    %451 = vector.shape_cast %450 : vector<8xf32> to vector<8x1xf32>
    %452 = arith.subf %451, %438 : vector<8x1xf32>
    %cst_174 = arith.constant -2.500000e-03 : f32
    %453 = vector.broadcast %cst_174 : f32 to vector<8x1xf32>
    %454 = arith.mulf %453, %452 : vector<8x1xf32>
    %c0_175 = arith.constant 0 : index
    %455 = arith.index_cast %c16_i32 : i32 to index
    %c0_176 = arith.constant 0 : index
    %c0_177 = arith.constant 0 : index
    %456 = vector.load %arg3[%c0_175, %455, %c0_176, %c0_177] : memref<1x32x8x1xf32, #tpu.memory_space<vmem>>, vector<1x1x8x1xf32>
    %457 = vector.shape_cast %456 : vector<1x1x8x1xf32> to vector<8x1xf32>
    %458 = arith.cmpf ole, %457, %454 : vector<8x1xf32>
    %459 = vector.shape_cast %458 : vector<8x1xi1> to vector<8x1xi1>
    %460 = vector.broadcast %459 : vector<8x1xi1> to vector<8x128xi1>
    %461 = arith.select %460, %446, %434 : vector<8x128xi1>, vector<8x128xf32>
    %462 = vector.shape_cast %458 : vector<8x1xi1> to vector<8x1xi1>
    %463 = vector.broadcast %462 : vector<8x1xi1> to vector<8x128xi1>
    %464 = arith.select %463, %448, %437 : vector<8x128xi1>, vector<8x128xf32>
    %465 = arith.select %458, %451, %438 : vector<8x1xi1>, vector<8x1xf32>
    %c17_i32 = arith.constant 17 : i32
    %cst_178 = arith.constant 0.00999999977 : f32
    %466 = vector.broadcast %cst_178 : f32 to vector<8x128xf32>
    %467 = arith.mulf %466, %464 : vector<8x128xf32>
    %468 = arith.subf %461, %467 : vector<8x128xf32>
    %c0_179 = arith.constant 0 : index
    %469 = arith.index_cast %c17_i32 : i32 to index
    %c0_180 = arith.constant 0 : index
    %c0_181 = arith.constant 0 : index
    %470 = vector.load %arg2[%c0_179, %469, %c0_180, %c0_181] : memref<1x32x8x128xbf16, #tpu.memory_space<vmem>>, vector<1x1x8x128xbf16>
    %471 = vector.shape_cast %470 : vector<1x1x8x128xbf16> to vector<8x128xbf16>
    %472 = arith.extf %471 : vector<8x128xbf16> to vector<8x128xf32>
    %473 = arith.addf %468, %472 : vector<8x128xf32>
    %474 = arith.truncf %473 : vector<8x128xf32> to vector<8x128xbf16>
    %cst_182 = arith.constant dense<0.000000e+00> : vector<8x128xf32>
    %475 = tpu.matmul %474, %0, %cst_182 {dimension_numbers = #tpu.dot_dimension_numbers<[1], [0], [0], [1], [0, 0, 1, 1], [], []>} : vector<8x128xbf16>, vector<128x128xbf16>, vector<8x128xf32> -> vector<8x128xf32>
    %476 = arith.mulf %475, %475 : vector<8x128xf32>
    %cst_183 = arith.constant dense<0.000000e+00> : vector<8xf32>
    %477 = vector.multi_reduction <add>, %476, %cst_183 [1] : vector<8x128xf32> to vector<8xf32>
    %478 = vector.shape_cast %477 : vector<8xf32> to vector<8x1xf32>
    %479 = arith.subf %478, %465 : vector<8x1xf32>
    %cst_184 = arith.constant -2.500000e-03 : f32
    %480 = vector.broadcast %cst_184 : f32 to vector<8x1xf32>
    %481 = arith.mulf %480, %479 : vector<8x1xf32>
    %c0_185 = arith.constant 0 : index
    %482 = arith.index_cast %c17_i32 : i32 to index
    %c0_186 = arith.constant 0 : index
    %c0_187 = arith.constant 0 : index
    %483 = vector.load %arg3[%c0_185, %482, %c0_186, %c0_187] : memref<1x32x8x1xf32, #tpu.memory_space<vmem>>, vector<1x1x8x1xf32>
    %484 = vector.shape_cast %483 : vector<1x1x8x1xf32> to vector<8x1xf32>
    %485 = arith.cmpf ole, %484, %481 : vector<8x1xf32>
    %486 = vector.shape_cast %485 : vector<8x1xi1> to vector<8x1xi1>
    %487 = vector.broadcast %486 : vector<8x1xi1> to vector<8x128xi1>
    %488 = arith.select %487, %473, %461 : vector<8x128xi1>, vector<8x128xf32>
    %489 = vector.shape_cast %485 : vector<8x1xi1> to vector<8x1xi1>
    %490 = vector.broadcast %489 : vector<8x1xi1> to vector<8x128xi1>
    %491 = arith.select %490, %475, %464 : vector<8x128xi1>, vector<8x128xf32>
    %492 = arith.select %485, %478, %465 : vector<8x1xi1>, vector<8x1xf32>
    %c18_i32 = arith.constant 18 : i32
    %cst_188 = arith.constant 0.00999999977 : f32
    %493 = vector.broadcast %cst_188 : f32 to vector<8x128xf32>
    %494 = arith.mulf %493, %491 : vector<8x128xf32>
    %495 = arith.subf %488, %494 : vector<8x128xf32>
    %c0_189 = arith.constant 0 : index
    %496 = arith.index_cast %c18_i32 : i32 to index
    %c0_190 = arith.constant 0 : index
    %c0_191 = arith.constant 0 : index
    %497 = vector.load %arg2[%c0_189, %496, %c0_190, %c0_191] : memref<1x32x8x128xbf16, #tpu.memory_space<vmem>>, vector<1x1x8x128xbf16>
    %498 = vector.shape_cast %497 : vector<1x1x8x128xbf16> to vector<8x128xbf16>
    %499 = arith.extf %498 : vector<8x128xbf16> to vector<8x128xf32>
    %500 = arith.addf %495, %499 : vector<8x128xf32>
    %501 = arith.truncf %500 : vector<8x128xf32> to vector<8x128xbf16>
    %cst_192 = arith.constant dense<0.000000e+00> : vector<8x128xf32>
    %502 = tpu.matmul %501, %0, %cst_192 {dimension_numbers = #tpu.dot_dimension_numbers<[1], [0], [0], [1], [0, 0, 1, 1], [], []>} : vector<8x128xbf16>, vector<128x128xbf16>, vector<8x128xf32> -> vector<8x128xf32>
    %503 = arith.mulf %502, %502 : vector<8x128xf32>
    %cst_193 = arith.constant dense<0.000000e+00> : vector<8xf32>
    %504 = vector.multi_reduction <add>, %503, %cst_193 [1] : vector<8x128xf32> to vector<8xf32>
    %505 = vector.shape_cast %504 : vector<8xf32> to vector<8x1xf32>
    %506 = arith.subf %505, %492 : vector<8x1xf32>
    %cst_194 = arith.constant -2.500000e-03 : f32
    %507 = vector.broadcast %cst_194 : f32 to vector<8x1xf32>
    %508 = arith.mulf %507, %506 : vector<8x1xf32>
    %c0_195 = arith.constant 0 : index
    %509 = arith.index_cast %c18_i32 : i32 to index
    %c0_196 = arith.constant 0 : index
    %c0_197 = arith.constant 0 : index
    %510 = vector.load %arg3[%c0_195, %509, %c0_196, %c0_197] : memref<1x32x8x1xf32, #tpu.memory_space<vmem>>, vector<1x1x8x1xf32>
    %511 = vector.shape_cast %510 : vector<1x1x8x1xf32> to vector<8x1xf32>
    %512 = arith.cmpf ole, %511, %508 : vector<8x1xf32>
    %513 = vector.shape_cast %512 : vector<8x1xi1> to vector<8x1xi1>
    %514 = vector.broadcast %513 : vector<8x1xi1> to vector<8x128xi1>
    %515 = arith.select %514, %500, %488 : vector<8x128xi1>, vector<8x128xf32>
    %516 = vector.shape_cast %512 : vector<8x1xi1> to vector<8x1xi1>
    %517 = vector.broadcast %516 : vector<8x1xi1> to vector<8x128xi1>
    %518 = arith.select %517, %502, %491 : vector<8x128xi1>, vector<8x128xf32>
    %519 = arith.select %512, %505, %492 : vector<8x1xi1>, vector<8x1xf32>
    %c19_i32 = arith.constant 19 : i32
    %cst_198 = arith.constant 0.00999999977 : f32
    %520 = vector.broadcast %cst_198 : f32 to vector<8x128xf32>
    %521 = arith.mulf %520, %518 : vector<8x128xf32>
    %522 = arith.subf %515, %521 : vector<8x128xf32>
    %c0_199 = arith.constant 0 : index
    %523 = arith.index_cast %c19_i32 : i32 to index
    %c0_200 = arith.constant 0 : index
    %c0_201 = arith.constant 0 : index
    %524 = vector.load %arg2[%c0_199, %523, %c0_200, %c0_201] : memref<1x32x8x128xbf16, #tpu.memory_space<vmem>>, vector<1x1x8x128xbf16>
    %525 = vector.shape_cast %524 : vector<1x1x8x128xbf16> to vector<8x128xbf16>
    %526 = arith.extf %525 : vector<8x128xbf16> to vector<8x128xf32>
    %527 = arith.addf %522, %526 : vector<8x128xf32>
    %528 = arith.truncf %527 : vector<8x128xf32> to vector<8x128xbf16>
    %cst_202 = arith.constant dense<0.000000e+00> : vector<8x128xf32>
    %529 = tpu.matmul %528, %0, %cst_202 {dimension_numbers = #tpu.dot_dimension_numbers<[1], [0], [0], [1], [0, 0, 1, 1], [], []>} : vector<8x128xbf16>, vector<128x128xbf16>, vector<8x128xf32> -> vector<8x128xf32>
    %530 = arith.mulf %529, %529 : vector<8x128xf32>
    %cst_203 = arith.constant dense<0.000000e+00> : vector<8xf32>
    %531 = vector.multi_reduction <add>, %530, %cst_203 [1] : vector<8x128xf32> to vector<8xf32>
    %532 = vector.shape_cast %531 : vector<8xf32> to vector<8x1xf32>
    %533 = arith.subf %532, %519 : vector<8x1xf32>
    %cst_204 = arith.constant -2.500000e-03 : f32
    %534 = vector.broadcast %cst_204 : f32 to vector<8x1xf32>
    %535 = arith.mulf %534, %533 : vector<8x1xf32>
    %c0_205 = arith.constant 0 : index
    %536 = arith.index_cast %c19_i32 : i32 to index
    %c0_206 = arith.constant 0 : index
    %c0_207 = arith.constant 0 : index
    %537 = vector.load %arg3[%c0_205, %536, %c0_206, %c0_207] : memref<1x32x8x1xf32, #tpu.memory_space<vmem>>, vector<1x1x8x1xf32>
    %538 = vector.shape_cast %537 : vector<1x1x8x1xf32> to vector<8x1xf32>
    %539 = arith.cmpf ole, %538, %535 : vector<8x1xf32>
    %540 = vector.shape_cast %539 : vector<8x1xi1> to vector<8x1xi1>
    %541 = vector.broadcast %540 : vector<8x1xi1> to vector<8x128xi1>
    %542 = arith.select %541, %527, %515 : vector<8x128xi1>, vector<8x128xf32>
    %543 = vector.shape_cast %539 : vector<8x1xi1> to vector<8x1xi1>
    %544 = vector.broadcast %543 : vector<8x1xi1> to vector<8x128xi1>
    %545 = arith.select %544, %529, %518 : vector<8x128xi1>, vector<8x128xf32>
    %546 = arith.select %539, %532, %519 : vector<8x1xi1>, vector<8x1xf32>
    %c20_i32 = arith.constant 20 : i32
    %cst_208 = arith.constant 0.00999999977 : f32
    %547 = vector.broadcast %cst_208 : f32 to vector<8x128xf32>
    %548 = arith.mulf %547, %545 : vector<8x128xf32>
    %549 = arith.subf %542, %548 : vector<8x128xf32>
    %c0_209 = arith.constant 0 : index
    %550 = arith.index_cast %c20_i32 : i32 to index
    %c0_210 = arith.constant 0 : index
    %c0_211 = arith.constant 0 : index
    %551 = vector.load %arg2[%c0_209, %550, %c0_210, %c0_211] : memref<1x32x8x128xbf16, #tpu.memory_space<vmem>>, vector<1x1x8x128xbf16>
    %552 = vector.shape_cast %551 : vector<1x1x8x128xbf16> to vector<8x128xbf16>
    %553 = arith.extf %552 : vector<8x128xbf16> to vector<8x128xf32>
    %554 = arith.addf %549, %553 : vector<8x128xf32>
    %555 = arith.truncf %554 : vector<8x128xf32> to vector<8x128xbf16>
    %cst_212 = arith.constant dense<0.000000e+00> : vector<8x128xf32>
    %556 = tpu.matmul %555, %0, %cst_212 {dimension_numbers = #tpu.dot_dimension_numbers<[1], [0], [0], [1], [0, 0, 1, 1], [], []>} : vector<8x128xbf16>, vector<128x128xbf16>, vector<8x128xf32> -> vector<8x128xf32>
    %557 = arith.mulf %556, %556 : vector<8x128xf32>
    %cst_213 = arith.constant dense<0.000000e+00> : vector<8xf32>
    %558 = vector.multi_reduction <add>, %557, %cst_213 [1] : vector<8x128xf32> to vector<8xf32>
    %559 = vector.shape_cast %558 : vector<8xf32> to vector<8x1xf32>
    %560 = arith.subf %559, %546 : vector<8x1xf32>
    %cst_214 = arith.constant -2.500000e-03 : f32
    %561 = vector.broadcast %cst_214 : f32 to vector<8x1xf32>
    %562 = arith.mulf %561, %560 : vector<8x1xf32>
    %c0_215 = arith.constant 0 : index
    %563 = arith.index_cast %c20_i32 : i32 to index
    %c0_216 = arith.constant 0 : index
    %c0_217 = arith.constant 0 : index
    %564 = vector.load %arg3[%c0_215, %563, %c0_216, %c0_217] : memref<1x32x8x1xf32, #tpu.memory_space<vmem>>, vector<1x1x8x1xf32>
    %565 = vector.shape_cast %564 : vector<1x1x8x1xf32> to vector<8x1xf32>
    %566 = arith.cmpf ole, %565, %562 : vector<8x1xf32>
    %567 = vector.shape_cast %566 : vector<8x1xi1> to vector<8x1xi1>
    %568 = vector.broadcast %567 : vector<8x1xi1> to vector<8x128xi1>
    %569 = arith.select %568, %554, %542 : vector<8x128xi1>, vector<8x128xf32>
    %570 = vector.shape_cast %566 : vector<8x1xi1> to vector<8x1xi1>
    %571 = vector.broadcast %570 : vector<8x1xi1> to vector<8x128xi1>
    %572 = arith.select %571, %556, %545 : vector<8x128xi1>, vector<8x128xf32>
    %573 = arith.select %566, %559, %546 : vector<8x1xi1>, vector<8x1xf32>
    %c21_i32 = arith.constant 21 : i32
    %cst_218 = arith.constant 0.00999999977 : f32
    %574 = vector.broadcast %cst_218 : f32 to vector<8x128xf32>
    %575 = arith.mulf %574, %572 : vector<8x128xf32>
    %576 = arith.subf %569, %575 : vector<8x128xf32>
    %c0_219 = arith.constant 0 : index
    %577 = arith.index_cast %c21_i32 : i32 to index
    %c0_220 = arith.constant 0 : index
    %c0_221 = arith.constant 0 : index
    %578 = vector.load %arg2[%c0_219, %577, %c0_220, %c0_221] : memref<1x32x8x128xbf16, #tpu.memory_space<vmem>>, vector<1x1x8x128xbf16>
    %579 = vector.shape_cast %578 : vector<1x1x8x128xbf16> to vector<8x128xbf16>
    %580 = arith.extf %579 : vector<8x128xbf16> to vector<8x128xf32>
    %581 = arith.addf %576, %580 : vector<8x128xf32>
    %582 = arith.truncf %581 : vector<8x128xf32> to vector<8x128xbf16>
    %cst_222 = arith.constant dense<0.000000e+00> : vector<8x128xf32>
    %583 = tpu.matmul %582, %0, %cst_222 {dimension_numbers = #tpu.dot_dimension_numbers<[1], [0], [0], [1], [0, 0, 1, 1], [], []>} : vector<8x128xbf16>, vector<128x128xbf16>, vector<8x128xf32> -> vector<8x128xf32>
    %584 = arith.mulf %583, %583 : vector<8x128xf32>
    %cst_223 = arith.constant dense<0.000000e+00> : vector<8xf32>
    %585 = vector.multi_reduction <add>, %584, %cst_223 [1] : vector<8x128xf32> to vector<8xf32>
    %586 = vector.shape_cast %585 : vector<8xf32> to vector<8x1xf32>
    %587 = arith.subf %586, %573 : vector<8x1xf32>
    %cst_224 = arith.constant -2.500000e-03 : f32
    %588 = vector.broadcast %cst_224 : f32 to vector<8x1xf32>
    %589 = arith.mulf %588, %587 : vector<8x1xf32>
    %c0_225 = arith.constant 0 : index
    %590 = arith.index_cast %c21_i32 : i32 to index
    %c0_226 = arith.constant 0 : index
    %c0_227 = arith.constant 0 : index
    %591 = vector.load %arg3[%c0_225, %590, %c0_226, %c0_227] : memref<1x32x8x1xf32, #tpu.memory_space<vmem>>, vector<1x1x8x1xf32>
    %592 = vector.shape_cast %591 : vector<1x1x8x1xf32> to vector<8x1xf32>
    %593 = arith.cmpf ole, %592, %589 : vector<8x1xf32>
    %594 = vector.shape_cast %593 : vector<8x1xi1> to vector<8x1xi1>
    %595 = vector.broadcast %594 : vector<8x1xi1> to vector<8x128xi1>
    %596 = arith.select %595, %581, %569 : vector<8x128xi1>, vector<8x128xf32>
    %597 = vector.shape_cast %593 : vector<8x1xi1> to vector<8x1xi1>
    %598 = vector.broadcast %597 : vector<8x1xi1> to vector<8x128xi1>
    %599 = arith.select %598, %583, %572 : vector<8x128xi1>, vector<8x128xf32>
    %600 = arith.select %593, %586, %573 : vector<8x1xi1>, vector<8x1xf32>
    %c22_i32 = arith.constant 22 : i32
    %cst_228 = arith.constant 0.00999999977 : f32
    %601 = vector.broadcast %cst_228 : f32 to vector<8x128xf32>
    %602 = arith.mulf %601, %599 : vector<8x128xf32>
    %603 = arith.subf %596, %602 : vector<8x128xf32>
    %c0_229 = arith.constant 0 : index
    %604 = arith.index_cast %c22_i32 : i32 to index
    %c0_230 = arith.constant 0 : index
    %c0_231 = arith.constant 0 : index
    %605 = vector.load %arg2[%c0_229, %604, %c0_230, %c0_231] : memref<1x32x8x128xbf16, #tpu.memory_space<vmem>>, vector<1x1x8x128xbf16>
    %606 = vector.shape_cast %605 : vector<1x1x8x128xbf16> to vector<8x128xbf16>
    %607 = arith.extf %606 : vector<8x128xbf16> to vector<8x128xf32>
    %608 = arith.addf %603, %607 : vector<8x128xf32>
    %609 = arith.truncf %608 : vector<8x128xf32> to vector<8x128xbf16>
    %cst_232 = arith.constant dense<0.000000e+00> : vector<8x128xf32>
    %610 = tpu.matmul %609, %0, %cst_232 {dimension_numbers = #tpu.dot_dimension_numbers<[1], [0], [0], [1], [0, 0, 1, 1], [], []>} : vector<8x128xbf16>, vector<128x128xbf16>, vector<8x128xf32> -> vector<8x128xf32>
    %611 = arith.mulf %610, %610 : vector<8x128xf32>
    %cst_233 = arith.constant dense<0.000000e+00> : vector<8xf32>
    %612 = vector.multi_reduction <add>, %611, %cst_233 [1] : vector<8x128xf32> to vector<8xf32>
    %613 = vector.shape_cast %612 : vector<8xf32> to vector<8x1xf32>
    %614 = arith.subf %613, %600 : vector<8x1xf32>
    %cst_234 = arith.constant -2.500000e-03 : f32
    %615 = vector.broadcast %cst_234 : f32 to vector<8x1xf32>
    %616 = arith.mulf %615, %614 : vector<8x1xf32>
    %c0_235 = arith.constant 0 : index
    %617 = arith.index_cast %c22_i32 : i32 to index
    %c0_236 = arith.constant 0 : index
    %c0_237 = arith.constant 0 : index
    %618 = vector.load %arg3[%c0_235, %617, %c0_236, %c0_237] : memref<1x32x8x1xf32, #tpu.memory_space<vmem>>, vector<1x1x8x1xf32>
    %619 = vector.shape_cast %618 : vector<1x1x8x1xf32> to vector<8x1xf32>
    %620 = arith.cmpf ole, %619, %616 : vector<8x1xf32>
    %621 = vector.shape_cast %620 : vector<8x1xi1> to vector<8x1xi1>
    %622 = vector.broadcast %621 : vector<8x1xi1> to vector<8x128xi1>
    %623 = arith.select %622, %608, %596 : vector<8x128xi1>, vector<8x128xf32>
    %624 = vector.shape_cast %620 : vector<8x1xi1> to vector<8x1xi1>
    %625 = vector.broadcast %624 : vector<8x1xi1> to vector<8x128xi1>
    %626 = arith.select %625, %610, %599 : vector<8x128xi1>, vector<8x128xf32>
    %627 = arith.select %620, %613, %600 : vector<8x1xi1>, vector<8x1xf32>
    %c23_i32 = arith.constant 23 : i32
    %cst_238 = arith.constant 0.00999999977 : f32
    %628 = vector.broadcast %cst_238 : f32 to vector<8x128xf32>
    %629 = arith.mulf %628, %626 : vector<8x128xf32>
    %630 = arith.subf %623, %629 : vector<8x128xf32>
    %c0_239 = arith.constant 0 : index
    %631 = arith.index_cast %c23_i32 : i32 to index
    %c0_240 = arith.constant 0 : index
    %c0_241 = arith.constant 0 : index
    %632 = vector.load %arg2[%c0_239, %631, %c0_240, %c0_241] : memref<1x32x8x128xbf16, #tpu.memory_space<vmem>>, vector<1x1x8x128xbf16>
    %633 = vector.shape_cast %632 : vector<1x1x8x128xbf16> to vector<8x128xbf16>
    %634 = arith.extf %633 : vector<8x128xbf16> to vector<8x128xf32>
    %635 = arith.addf %630, %634 : vector<8x128xf32>
    %636 = arith.truncf %635 : vector<8x128xf32> to vector<8x128xbf16>
    %cst_242 = arith.constant dense<0.000000e+00> : vector<8x128xf32>
    %637 = tpu.matmul %636, %0, %cst_242 {dimension_numbers = #tpu.dot_dimension_numbers<[1], [0], [0], [1], [0, 0, 1, 1], [], []>} : vector<8x128xbf16>, vector<128x128xbf16>, vector<8x128xf32> -> vector<8x128xf32>
    %638 = arith.mulf %637, %637 : vector<8x128xf32>
    %cst_243 = arith.constant dense<0.000000e+00> : vector<8xf32>
    %639 = vector.multi_reduction <add>, %638, %cst_243 [1] : vector<8x128xf32> to vector<8xf32>
    %640 = vector.shape_cast %639 : vector<8xf32> to vector<8x1xf32>
    %641 = arith.subf %640, %627 : vector<8x1xf32>
    %cst_244 = arith.constant -2.500000e-03 : f32
    %642 = vector.broadcast %cst_244 : f32 to vector<8x1xf32>
    %643 = arith.mulf %642, %641 : vector<8x1xf32>
    %c0_245 = arith.constant 0 : index
    %644 = arith.index_cast %c23_i32 : i32 to index
    %c0_246 = arith.constant 0 : index
    %c0_247 = arith.constant 0 : index
    %645 = vector.load %arg3[%c0_245, %644, %c0_246, %c0_247] : memref<1x32x8x1xf32, #tpu.memory_space<vmem>>, vector<1x1x8x1xf32>
    %646 = vector.shape_cast %645 : vector<1x1x8x1xf32> to vector<8x1xf32>
    %647 = arith.cmpf ole, %646, %643 : vector<8x1xf32>
    %648 = vector.shape_cast %647 : vector<8x1xi1> to vector<8x1xi1>
    %649 = vector.broadcast %648 : vector<8x1xi1> to vector<8x128xi1>
    %650 = arith.select %649, %635, %623 : vector<8x128xi1>, vector<8x128xf32>
    %651 = vector.shape_cast %647 : vector<8x1xi1> to vector<8x1xi1>
    %652 = vector.broadcast %651 : vector<8x1xi1> to vector<8x128xi1>
    %653 = arith.select %652, %637, %626 : vector<8x128xi1>, vector<8x128xf32>
    %654 = arith.select %647, %640, %627 : vector<8x1xi1>, vector<8x1xf32>
    %c24_i32 = arith.constant 24 : i32
    %cst_248 = arith.constant 0.00999999977 : f32
    %655 = vector.broadcast %cst_248 : f32 to vector<8x128xf32>
    %656 = arith.mulf %655, %653 : vector<8x128xf32>
    %657 = arith.subf %650, %656 : vector<8x128xf32>
    %c0_249 = arith.constant 0 : index
    %658 = arith.index_cast %c24_i32 : i32 to index
    %c0_250 = arith.constant 0 : index
    %c0_251 = arith.constant 0 : index
    %659 = vector.load %arg2[%c0_249, %658, %c0_250, %c0_251] : memref<1x32x8x128xbf16, #tpu.memory_space<vmem>>, vector<1x1x8x128xbf16>
    %660 = vector.shape_cast %659 : vector<1x1x8x128xbf16> to vector<8x128xbf16>
    %661 = arith.extf %660 : vector<8x128xbf16> to vector<8x128xf32>
    %662 = arith.addf %657, %661 : vector<8x128xf32>
    %663 = arith.truncf %662 : vector<8x128xf32> to vector<8x128xbf16>
    %cst_252 = arith.constant dense<0.000000e+00> : vector<8x128xf32>
    %664 = tpu.matmul %663, %0, %cst_252 {dimension_numbers = #tpu.dot_dimension_numbers<[1], [0], [0], [1], [0, 0, 1, 1], [], []>} : vector<8x128xbf16>, vector<128x128xbf16>, vector<8x128xf32> -> vector<8x128xf32>
    %665 = arith.mulf %664, %664 : vector<8x128xf32>
    %cst_253 = arith.constant dense<0.000000e+00> : vector<8xf32>
    %666 = vector.multi_reduction <add>, %665, %cst_253 [1] : vector<8x128xf32> to vector<8xf32>
    %667 = vector.shape_cast %666 : vector<8xf32> to vector<8x1xf32>
    %668 = arith.subf %667, %654 : vector<8x1xf32>
    %cst_254 = arith.constant -2.500000e-03 : f32
    %669 = vector.broadcast %cst_254 : f32 to vector<8x1xf32>
    %670 = arith.mulf %669, %668 : vector<8x1xf32>
    %c0_255 = arith.constant 0 : index
    %671 = arith.index_cast %c24_i32 : i32 to index
    %c0_256 = arith.constant 0 : index
    %c0_257 = arith.constant 0 : index
    %672 = vector.load %arg3[%c0_255, %671, %c0_256, %c0_257] : memref<1x32x8x1xf32, #tpu.memory_space<vmem>>, vector<1x1x8x1xf32>
    %673 = vector.shape_cast %672 : vector<1x1x8x1xf32> to vector<8x1xf32>
    %674 = arith.cmpf ole, %673, %670 : vector<8x1xf32>
    %675 = vector.shape_cast %674 : vector<8x1xi1> to vector<8x1xi1>
    %676 = vector.broadcast %675 : vector<8x1xi1> to vector<8x128xi1>
    %677 = arith.select %676, %662, %650 : vector<8x128xi1>, vector<8x128xf32>
    %678 = vector.shape_cast %674 : vector<8x1xi1> to vector<8x1xi1>
    %679 = vector.broadcast %678 : vector<8x1xi1> to vector<8x128xi1>
    %680 = arith.select %679, %664, %653 : vector<8x128xi1>, vector<8x128xf32>
    %681 = arith.select %674, %667, %654 : vector<8x1xi1>, vector<8x1xf32>
    %c25_i32 = arith.constant 25 : i32
    %cst_258 = arith.constant 0.00999999977 : f32
    %682 = vector.broadcast %cst_258 : f32 to vector<8x128xf32>
    %683 = arith.mulf %682, %680 : vector<8x128xf32>
    %684 = arith.subf %677, %683 : vector<8x128xf32>
    %c0_259 = arith.constant 0 : index
    %685 = arith.index_cast %c25_i32 : i32 to index
    %c0_260 = arith.constant 0 : index
    %c0_261 = arith.constant 0 : index
    %686 = vector.load %arg2[%c0_259, %685, %c0_260, %c0_261] : memref<1x32x8x128xbf16, #tpu.memory_space<vmem>>, vector<1x1x8x128xbf16>
    %687 = vector.shape_cast %686 : vector<1x1x8x128xbf16> to vector<8x128xbf16>
    %688 = arith.extf %687 : vector<8x128xbf16> to vector<8x128xf32>
    %689 = arith.addf %684, %688 : vector<8x128xf32>
    %690 = arith.truncf %689 : vector<8x128xf32> to vector<8x128xbf16>
    %cst_262 = arith.constant dense<0.000000e+00> : vector<8x128xf32>
    %691 = tpu.matmul %690, %0, %cst_262 {dimension_numbers = #tpu.dot_dimension_numbers<[1], [0], [0], [1], [0, 0, 1, 1], [], []>} : vector<8x128xbf16>, vector<128x128xbf16>, vector<8x128xf32> -> vector<8x128xf32>
    %692 = arith.mulf %691, %691 : vector<8x128xf32>
    %cst_263 = arith.constant dense<0.000000e+00> : vector<8xf32>
    %693 = vector.multi_reduction <add>, %692, %cst_263 [1] : vector<8x128xf32> to vector<8xf32>
    %694 = vector.shape_cast %693 : vector<8xf32> to vector<8x1xf32>
    %695 = arith.subf %694, %681 : vector<8x1xf32>
    %cst_264 = arith.constant -2.500000e-03 : f32
    %696 = vector.broadcast %cst_264 : f32 to vector<8x1xf32>
    %697 = arith.mulf %696, %695 : vector<8x1xf32>
    %c0_265 = arith.constant 0 : index
    %698 = arith.index_cast %c25_i32 : i32 to index
    %c0_266 = arith.constant 0 : index
    %c0_267 = arith.constant 0 : index
    %699 = vector.load %arg3[%c0_265, %698, %c0_266, %c0_267] : memref<1x32x8x1xf32, #tpu.memory_space<vmem>>, vector<1x1x8x1xf32>
    %700 = vector.shape_cast %699 : vector<1x1x8x1xf32> to vector<8x1xf32>
    %701 = arith.cmpf ole, %700, %697 : vector<8x1xf32>
    %702 = vector.shape_cast %701 : vector<8x1xi1> to vector<8x1xi1>
    %703 = vector.broadcast %702 : vector<8x1xi1> to vector<8x128xi1>
    %704 = arith.select %703, %689, %677 : vector<8x128xi1>, vector<8x128xf32>
    %705 = vector.shape_cast %701 : vector<8x1xi1> to vector<8x1xi1>
    %706 = vector.broadcast %705 : vector<8x1xi1> to vector<8x128xi1>
    %707 = arith.select %706, %691, %680 : vector<8x128xi1>, vector<8x128xf32>
    %708 = arith.select %701, %694, %681 : vector<8x1xi1>, vector<8x1xf32>
    %c26_i32 = arith.constant 26 : i32
    %cst_268 = arith.constant 0.00999999977 : f32
    %709 = vector.broadcast %cst_268 : f32 to vector<8x128xf32>
    %710 = arith.mulf %709, %707 : vector<8x128xf32>
    %711 = arith.subf %704, %710 : vector<8x128xf32>
    %c0_269 = arith.constant 0 : index
    %712 = arith.index_cast %c26_i32 : i32 to index
    %c0_270 = arith.constant 0 : index
    %c0_271 = arith.constant 0 : index
    %713 = vector.load %arg2[%c0_269, %712, %c0_270, %c0_271] : memref<1x32x8x128xbf16, #tpu.memory_space<vmem>>, vector<1x1x8x128xbf16>
    %714 = vector.shape_cast %713 : vector<1x1x8x128xbf16> to vector<8x128xbf16>
    %715 = arith.extf %714 : vector<8x128xbf16> to vector<8x128xf32>
    %716 = arith.addf %711, %715 : vector<8x128xf32>
    %717 = arith.truncf %716 : vector<8x128xf32> to vector<8x128xbf16>
    %cst_272 = arith.constant dense<0.000000e+00> : vector<8x128xf32>
    %718 = tpu.matmul %717, %0, %cst_272 {dimension_numbers = #tpu.dot_dimension_numbers<[1], [0], [0], [1], [0, 0, 1, 1], [], []>} : vector<8x128xbf16>, vector<128x128xbf16>, vector<8x128xf32> -> vector<8x128xf32>
    %719 = arith.mulf %718, %718 : vector<8x128xf32>
    %cst_273 = arith.constant dense<0.000000e+00> : vector<8xf32>
    %720 = vector.multi_reduction <add>, %719, %cst_273 [1] : vector<8x128xf32> to vector<8xf32>
    %721 = vector.shape_cast %720 : vector<8xf32> to vector<8x1xf32>
    %722 = arith.subf %721, %708 : vector<8x1xf32>
    %cst_274 = arith.constant -2.500000e-03 : f32
    %723 = vector.broadcast %cst_274 : f32 to vector<8x1xf32>
    %724 = arith.mulf %723, %722 : vector<8x1xf32>
    %c0_275 = arith.constant 0 : index
    %725 = arith.index_cast %c26_i32 : i32 to index
    %c0_276 = arith.constant 0 : index
    %c0_277 = arith.constant 0 : index
    %726 = vector.load %arg3[%c0_275, %725, %c0_276, %c0_277] : memref<1x32x8x1xf32, #tpu.memory_space<vmem>>, vector<1x1x8x1xf32>
    %727 = vector.shape_cast %726 : vector<1x1x8x1xf32> to vector<8x1xf32>
    %728 = arith.cmpf ole, %727, %724 : vector<8x1xf32>
    %729 = vector.shape_cast %728 : vector<8x1xi1> to vector<8x1xi1>
    %730 = vector.broadcast %729 : vector<8x1xi1> to vector<8x128xi1>
    %731 = arith.select %730, %716, %704 : vector<8x128xi1>, vector<8x128xf32>
    %732 = vector.shape_cast %728 : vector<8x1xi1> to vector<8x1xi1>
    %733 = vector.broadcast %732 : vector<8x1xi1> to vector<8x128xi1>
    %734 = arith.select %733, %718, %707 : vector<8x128xi1>, vector<8x128xf32>
    %735 = arith.select %728, %721, %708 : vector<8x1xi1>, vector<8x1xf32>
    %c27_i32 = arith.constant 27 : i32
    %cst_278 = arith.constant 0.00999999977 : f32
    %736 = vector.broadcast %cst_278 : f32 to vector<8x128xf32>
    %737 = arith.mulf %736, %734 : vector<8x128xf32>
    %738 = arith.subf %731, %737 : vector<8x128xf32>
    %c0_279 = arith.constant 0 : index
    %739 = arith.index_cast %c27_i32 : i32 to index
    %c0_280 = arith.constant 0 : index
    %c0_281 = arith.constant 0 : index
    %740 = vector.load %arg2[%c0_279, %739, %c0_280, %c0_281] : memref<1x32x8x128xbf16, #tpu.memory_space<vmem>>, vector<1x1x8x128xbf16>
    %741 = vector.shape_cast %740 : vector<1x1x8x128xbf16> to vector<8x128xbf16>
    %742 = arith.extf %741 : vector<8x128xbf16> to vector<8x128xf32>
    %743 = arith.addf %738, %742 : vector<8x128xf32>
    %744 = arith.truncf %743 : vector<8x128xf32> to vector<8x128xbf16>
    %cst_282 = arith.constant dense<0.000000e+00> : vector<8x128xf32>
    %745 = tpu.matmul %744, %0, %cst_282 {dimension_numbers = #tpu.dot_dimension_numbers<[1], [0], [0], [1], [0, 0, 1, 1], [], []>} : vector<8x128xbf16>, vector<128x128xbf16>, vector<8x128xf32> -> vector<8x128xf32>
    %746 = arith.mulf %745, %745 : vector<8x128xf32>
    %cst_283 = arith.constant dense<0.000000e+00> : vector<8xf32>
    %747 = vector.multi_reduction <add>, %746, %cst_283 [1] : vector<8x128xf32> to vector<8xf32>
    %748 = vector.shape_cast %747 : vector<8xf32> to vector<8x1xf32>
    %749 = arith.subf %748, %735 : vector<8x1xf32>
    %cst_284 = arith.constant -2.500000e-03 : f32
    %750 = vector.broadcast %cst_284 : f32 to vector<8x1xf32>
    %751 = arith.mulf %750, %749 : vector<8x1xf32>
    %c0_285 = arith.constant 0 : index
    %752 = arith.index_cast %c27_i32 : i32 to index
    %c0_286 = arith.constant 0 : index
    %c0_287 = arith.constant 0 : index
    %753 = vector.load %arg3[%c0_285, %752, %c0_286, %c0_287] : memref<1x32x8x1xf32, #tpu.memory_space<vmem>>, vector<1x1x8x1xf32>
    %754 = vector.shape_cast %753 : vector<1x1x8x1xf32> to vector<8x1xf32>
    %755 = arith.cmpf ole, %754, %751 : vector<8x1xf32>
    %756 = vector.shape_cast %755 : vector<8x1xi1> to vector<8x1xi1>
    %757 = vector.broadcast %756 : vector<8x1xi1> to vector<8x128xi1>
    %758 = arith.select %757, %743, %731 : vector<8x128xi1>, vector<8x128xf32>
    %759 = vector.shape_cast %755 : vector<8x1xi1> to vector<8x1xi1>
    %760 = vector.broadcast %759 : vector<8x1xi1> to vector<8x128xi1>
    %761 = arith.select %760, %745, %734 : vector<8x128xi1>, vector<8x128xf32>
    %762 = arith.select %755, %748, %735 : vector<8x1xi1>, vector<8x1xf32>
    %c28_i32 = arith.constant 28 : i32
    %cst_288 = arith.constant 0.00999999977 : f32
    %763 = vector.broadcast %cst_288 : f32 to vector<8x128xf32>
    %764 = arith.mulf %763, %761 : vector<8x128xf32>
    %765 = arith.subf %758, %764 : vector<8x128xf32>
    %c0_289 = arith.constant 0 : index
    %766 = arith.index_cast %c28_i32 : i32 to index
    %c0_290 = arith.constant 0 : index
    %c0_291 = arith.constant 0 : index
    %767 = vector.load %arg2[%c0_289, %766, %c0_290, %c0_291] : memref<1x32x8x128xbf16, #tpu.memory_space<vmem>>, vector<1x1x8x128xbf16>
    %768 = vector.shape_cast %767 : vector<1x1x8x128xbf16> to vector<8x128xbf16>
    %769 = arith.extf %768 : vector<8x128xbf16> to vector<8x128xf32>
    %770 = arith.addf %765, %769 : vector<8x128xf32>
    %771 = arith.truncf %770 : vector<8x128xf32> to vector<8x128xbf16>
    %cst_292 = arith.constant dense<0.000000e+00> : vector<8x128xf32>
    %772 = tpu.matmul %771, %0, %cst_292 {dimension_numbers = #tpu.dot_dimension_numbers<[1], [0], [0], [1], [0, 0, 1, 1], [], []>} : vector<8x128xbf16>, vector<128x128xbf16>, vector<8x128xf32> -> vector<8x128xf32>
    %773 = arith.mulf %772, %772 : vector<8x128xf32>
    %cst_293 = arith.constant dense<0.000000e+00> : vector<8xf32>
    %774 = vector.multi_reduction <add>, %773, %cst_293 [1] : vector<8x128xf32> to vector<8xf32>
    %775 = vector.shape_cast %774 : vector<8xf32> to vector<8x1xf32>
    %776 = arith.subf %775, %762 : vector<8x1xf32>
    %cst_294 = arith.constant -2.500000e-03 : f32
    %777 = vector.broadcast %cst_294 : f32 to vector<8x1xf32>
    %778 = arith.mulf %777, %776 : vector<8x1xf32>
    %c0_295 = arith.constant 0 : index
    %779 = arith.index_cast %c28_i32 : i32 to index
    %c0_296 = arith.constant 0 : index
    %c0_297 = arith.constant 0 : index
    %780 = vector.load %arg3[%c0_295, %779, %c0_296, %c0_297] : memref<1x32x8x1xf32, #tpu.memory_space<vmem>>, vector<1x1x8x1xf32>
    %781 = vector.shape_cast %780 : vector<1x1x8x1xf32> to vector<8x1xf32>
    %782 = arith.cmpf ole, %781, %778 : vector<8x1xf32>
    %783 = vector.shape_cast %782 : vector<8x1xi1> to vector<8x1xi1>
    %784 = vector.broadcast %783 : vector<8x1xi1> to vector<8x128xi1>
    %785 = arith.select %784, %770, %758 : vector<8x128xi1>, vector<8x128xf32>
    %786 = vector.shape_cast %782 : vector<8x1xi1> to vector<8x1xi1>
    %787 = vector.broadcast %786 : vector<8x1xi1> to vector<8x128xi1>
    %788 = arith.select %787, %772, %761 : vector<8x128xi1>, vector<8x128xf32>
    %789 = arith.select %782, %775, %762 : vector<8x1xi1>, vector<8x1xf32>
    %c29_i32 = arith.constant 29 : i32
    %cst_298 = arith.constant 0.00999999977 : f32
    %790 = vector.broadcast %cst_298 : f32 to vector<8x128xf32>
    %791 = arith.mulf %790, %788 : vector<8x128xf32>
    %792 = arith.subf %785, %791 : vector<8x128xf32>
    %c0_299 = arith.constant 0 : index
    %793 = arith.index_cast %c29_i32 : i32 to index
    %c0_300 = arith.constant 0 : index
    %c0_301 = arith.constant 0 : index
    %794 = vector.load %arg2[%c0_299, %793, %c0_300, %c0_301] : memref<1x32x8x128xbf16, #tpu.memory_space<vmem>>, vector<1x1x8x128xbf16>
    %795 = vector.shape_cast %794 : vector<1x1x8x128xbf16> to vector<8x128xbf16>
    %796 = arith.extf %795 : vector<8x128xbf16> to vector<8x128xf32>
    %797 = arith.addf %792, %796 : vector<8x128xf32>
    %798 = arith.truncf %797 : vector<8x128xf32> to vector<8x128xbf16>
    %cst_302 = arith.constant dense<0.000000e+00> : vector<8x128xf32>
    %799 = tpu.matmul %798, %0, %cst_302 {dimension_numbers = #tpu.dot_dimension_numbers<[1], [0], [0], [1], [0, 0, 1, 1], [], []>} : vector<8x128xbf16>, vector<128x128xbf16>, vector<8x128xf32> -> vector<8x128xf32>
    %800 = arith.mulf %799, %799 : vector<8x128xf32>
    %cst_303 = arith.constant dense<0.000000e+00> : vector<8xf32>
    %801 = vector.multi_reduction <add>, %800, %cst_303 [1] : vector<8x128xf32> to vector<8xf32>
    %802 = vector.shape_cast %801 : vector<8xf32> to vector<8x1xf32>
    %803 = arith.subf %802, %789 : vector<8x1xf32>
    %cst_304 = arith.constant -2.500000e-03 : f32
    %804 = vector.broadcast %cst_304 : f32 to vector<8x1xf32>
    %805 = arith.mulf %804, %803 : vector<8x1xf32>
    %c0_305 = arith.constant 0 : index
    %806 = arith.index_cast %c29_i32 : i32 to index
    %c0_306 = arith.constant 0 : index
    %c0_307 = arith.constant 0 : index
    %807 = vector.load %arg3[%c0_305, %806, %c0_306, %c0_307] : memref<1x32x8x1xf32, #tpu.memory_space<vmem>>, vector<1x1x8x1xf32>
    %808 = vector.shape_cast %807 : vector<1x1x8x1xf32> to vector<8x1xf32>
    %809 = arith.cmpf ole, %808, %805 : vector<8x1xf32>
    %810 = vector.shape_cast %809 : vector<8x1xi1> to vector<8x1xi1>
    %811 = vector.broadcast %810 : vector<8x1xi1> to vector<8x128xi1>
    %812 = arith.select %811, %797, %785 : vector<8x128xi1>, vector<8x128xf32>
    %813 = vector.shape_cast %809 : vector<8x1xi1> to vector<8x1xi1>
    %814 = vector.broadcast %813 : vector<8x1xi1> to vector<8x128xi1>
    %815 = arith.select %814, %799, %788 : vector<8x128xi1>, vector<8x128xf32>
    %816 = arith.select %809, %802, %789 : vector<8x1xi1>, vector<8x1xf32>
    %c30_i32 = arith.constant 30 : i32
    %cst_308 = arith.constant 0.00999999977 : f32
    %817 = vector.broadcast %cst_308 : f32 to vector<8x128xf32>
    %818 = arith.mulf %817, %815 : vector<8x128xf32>
    %819 = arith.subf %812, %818 : vector<8x128xf32>
    %c0_309 = arith.constant 0 : index
    %820 = arith.index_cast %c30_i32 : i32 to index
    %c0_310 = arith.constant 0 : index
    %c0_311 = arith.constant 0 : index
    %821 = vector.load %arg2[%c0_309, %820, %c0_310, %c0_311] : memref<1x32x8x128xbf16, #tpu.memory_space<vmem>>, vector<1x1x8x128xbf16>
    %822 = vector.shape_cast %821 : vector<1x1x8x128xbf16> to vector<8x128xbf16>
    %823 = arith.extf %822 : vector<8x128xbf16> to vector<8x128xf32>
    %824 = arith.addf %819, %823 : vector<8x128xf32>
    %825 = arith.truncf %824 : vector<8x128xf32> to vector<8x128xbf16>
    %cst_312 = arith.constant dense<0.000000e+00> : vector<8x128xf32>
    %826 = tpu.matmul %825, %0, %cst_312 {dimension_numbers = #tpu.dot_dimension_numbers<[1], [0], [0], [1], [0, 0, 1, 1], [], []>} : vector<8x128xbf16>, vector<128x128xbf16>, vector<8x128xf32> -> vector<8x128xf32>
    %827 = arith.mulf %826, %826 : vector<8x128xf32>
    %cst_313 = arith.constant dense<0.000000e+00> : vector<8xf32>
    %828 = vector.multi_reduction <add>, %827, %cst_313 [1] : vector<8x128xf32> to vector<8xf32>
    %829 = vector.shape_cast %828 : vector<8xf32> to vector<8x1xf32>
    %830 = arith.subf %829, %816 : vector<8x1xf32>
    %cst_314 = arith.constant -2.500000e-03 : f32
    %831 = vector.broadcast %cst_314 : f32 to vector<8x1xf32>
    %832 = arith.mulf %831, %830 : vector<8x1xf32>
    %c0_315 = arith.constant 0 : index
    %833 = arith.index_cast %c30_i32 : i32 to index
    %c0_316 = arith.constant 0 : index
    %c0_317 = arith.constant 0 : index
    %834 = vector.load %arg3[%c0_315, %833, %c0_316, %c0_317] : memref<1x32x8x1xf32, #tpu.memory_space<vmem>>, vector<1x1x8x1xf32>
    %835 = vector.shape_cast %834 : vector<1x1x8x1xf32> to vector<8x1xf32>
    %836 = arith.cmpf ole, %835, %832 : vector<8x1xf32>
    %837 = vector.shape_cast %836 : vector<8x1xi1> to vector<8x1xi1>
    %838 = vector.broadcast %837 : vector<8x1xi1> to vector<8x128xi1>
    %839 = arith.select %838, %824, %812 : vector<8x128xi1>, vector<8x128xf32>
    %840 = vector.shape_cast %836 : vector<8x1xi1> to vector<8x1xi1>
    %841 = vector.broadcast %840 : vector<8x1xi1> to vector<8x128xi1>
    %842 = arith.select %841, %826, %815 : vector<8x128xi1>, vector<8x128xf32>
    %843 = arith.select %836, %829, %816 : vector<8x1xi1>, vector<8x1xf32>
    %c31_i32 = arith.constant 31 : i32
    %cst_318 = arith.constant 0.00999999977 : f32
    %844 = vector.broadcast %cst_318 : f32 to vector<8x128xf32>
    %845 = arith.mulf %844, %842 : vector<8x128xf32>
    %846 = arith.subf %839, %845 : vector<8x128xf32>
    %c0_319 = arith.constant 0 : index
    %847 = arith.index_cast %c31_i32 : i32 to index
    %c0_320 = arith.constant 0 : index
    %c0_321 = arith.constant 0 : index
    %848 = vector.load %arg2[%c0_319, %847, %c0_320, %c0_321] : memref<1x32x8x128xbf16, #tpu.memory_space<vmem>>, vector<1x1x8x128xbf16>
    %849 = vector.shape_cast %848 : vector<1x1x8x128xbf16> to vector<8x128xbf16>
    %850 = arith.extf %849 : vector<8x128xbf16> to vector<8x128xf32>
    %851 = arith.addf %846, %850 : vector<8x128xf32>
    %852 = arith.truncf %851 : vector<8x128xf32> to vector<8x128xbf16>
    %cst_322 = arith.constant dense<0.000000e+00> : vector<8x128xf32>
    %853 = tpu.matmul %852, %0, %cst_322 {dimension_numbers = #tpu.dot_dimension_numbers<[1], [0], [0], [1], [0, 0, 1, 1], [], []>} : vector<8x128xbf16>, vector<128x128xbf16>, vector<8x128xf32> -> vector<8x128xf32>
    %854 = arith.mulf %853, %853 : vector<8x128xf32>
    %cst_323 = arith.constant dense<0.000000e+00> : vector<8xf32>
    %855 = vector.multi_reduction <add>, %854, %cst_323 [1] : vector<8x128xf32> to vector<8xf32>
    %856 = vector.shape_cast %855 : vector<8xf32> to vector<8x1xf32>
    %857 = arith.subf %856, %843 : vector<8x1xf32>
    %cst_324 = arith.constant -2.500000e-03 : f32
    %858 = vector.broadcast %cst_324 : f32 to vector<8x1xf32>
    %859 = arith.mulf %858, %857 : vector<8x1xf32>
    %c0_325 = arith.constant 0 : index
    %860 = arith.index_cast %c31_i32 : i32 to index
    %c0_326 = arith.constant 0 : index
    %c0_327 = arith.constant 0 : index
    %861 = vector.load %arg3[%c0_325, %860, %c0_326, %c0_327] : memref<1x32x8x1xf32, #tpu.memory_space<vmem>>, vector<1x1x8x1xf32>
    %862 = vector.shape_cast %861 : vector<1x1x8x1xf32> to vector<8x1xf32>
    %863 = arith.cmpf ole, %862, %859 : vector<8x1xf32>
    %864 = vector.shape_cast %863 : vector<8x1xi1> to vector<8x1xi1>
    %865 = vector.broadcast %864 : vector<8x1xi1> to vector<8x128xi1>
    %866 = arith.select %865, %851, %839 : vector<8x128xi1>, vector<8x128xf32>
    %867 = vector.shape_cast %863 : vector<8x1xi1> to vector<8x1xi1>
    %868 = vector.broadcast %867 : vector<8x1xi1> to vector<8x128xi1>
    %869 = arith.select %868, %853, %842 : vector<8x128xi1>, vector<8x128xf32>
    %870 = arith.select %863, %856, %843 : vector<8x1xi1>, vector<8x1xf32>
    %c32_i32 = arith.constant 32 : i32
    %c0_328 = arith.constant 0 : index
    %c0_329 = arith.constant 0 : index
    %871 = vector.load %arg6[%c0_328, %c0_329] : memref<8x128xf32, #tpu.memory_space<vmem>>, vector<8x128xf32>
    tpu.vector_store %arg6[%c0_328, %c0_329], %866 {strides = array<i32>} : memref<8x128xf32, #tpu.memory_space<vmem>>, vector<8x128xf32>,
    %c0_330 = arith.constant 0 : index
    %c0_331 = arith.constant 0 : index
    %872 = vector.load %arg7[%c0_330, %c0_331] : memref<8x128xf32, #tpu.memory_space<vmem>>, vector<8x128xf32>
    tpu.vector_store %arg7[%c0_330, %c0_331], %869 {strides = array<i32>} : memref<8x128xf32, #tpu.memory_space<vmem>>, vector<8x128xf32>,
    %c0_332 = arith.constant 0 : index
    %c0_333 = arith.constant 0 : index
    %873 = vector.load %arg8[%c0_332, %c0_333] : memref<8x1xf32, #tpu.memory_space<vmem>>, vector<8x1xf32>
    tpu.vector_store %arg8[%c0_332, %c0_333], %870 {strides = array<i32>} : memref<8x1xf32, #tpu.memory_space<vmem>>, vector<8x1xf32>,
    return
  }
  func.func @transform_0(%arg0: i32, %arg1: i32) -> (i32, i32, i32, i32) {
    %c0_i32 = arith.constant 0 : i32
    %c0_i32_0 = arith.constant 0 : i32
    %c0_i32_1 = arith.constant 0 : i32
    return %arg1, %c0_i32, %arg0, %c0_i32_0 : i32, i32, i32, i32
  }
  func.func @transform_1(%arg0: i32, %arg1: i32) -> (i32, i32, i32, i32) {
    %c0_i32 = arith.constant 0 : i32
    %c0_i32_0 = arith.constant 0 : i32
    %c0_i32_1 = arith.constant 0 : i32
    return %arg1, %c0_i32, %arg0, %c0_i32_0 : i32, i32, i32, i32
  }
  func.func @transform_2(%arg0: i32, %arg1: i32) -> (i32, i32) {
    %c0_i32 = arith.constant 0 : i32
    %c0_i32_0 = arith.constant 0 : i32
    return %arg0, %c0_i32 : i32, i32
  }
  func.func @transform_3(%arg0: i32, %arg1: i32) -> (i32, i32) {
    %c0_i32 = arith.constant 0 : i32
    %c0_i32_0 = arith.constant 0 : i32
    %c0_i32_1 = arith.constant 0 : i32
    return %c0_i32, %c0_i32_0 : i32, i32
  }
  func.func @transform_4(%arg0: i32, %arg1: i32) -> (i32, i32) {
    %c0_i32 = arith.constant 0 : i32
    %c0_i32_0 = arith.constant 0 : i32
    return %arg0, %c0_i32 : i32, i32
  }
}

module attributes {stable_mosaic.version = 11 : i64} {
  func.func @_mala_kernel(%arg0: i32, %arg1: i32, %arg2: memref<1x32x8x128xbf16, #tpu.memory_space<vmem>>, %arg3: memref<1x32x8x1xf32, #tpu.memory_space<vmem>>, %arg4: memref<8x128xf32, #tpu.memory_space<vmem>>, %arg5: memref<128x128xbf16, #tpu.memory_space<vmem>>, %arg6: memref<8x128xf32, #tpu.memory_space<vmem>>, %arg7: memref<8x128xf32, #tpu.memory_space<vmem>>, %arg8: memref<8x1xf32, #tpu.memory_space<vmem>>) attributes {dimension_semantics = [#tpu.dimension_semantics<parallel>, #tpu.dimension_semantics<arbitrary>], iteration_bounds = array<i64: 1, 2>, scalar_prefetch = 0 : i64, scratch_operands = 2 : i64, tpu.core_type = #tpu.core_type<tc>, window_params = [{transform_indices = @transform_0, window_bounds = array<i64: 1, 32, 8, 128>}, {transform_indices = @transform_1, window_bounds = array<i64: 1, 32, 8, 1>}, {transform_indices = @transform_2, window_bounds = array<i64: 8, 128>}, {pipeline_mode = #tpu.pipeline_mode<synchronous>, transform_indices = @transform_3, window_bounds = array<i64: 128, 128>}, {transform_indices = @transform_4, window_bounds = array<i64: 8, 128>}]} {
    %c0 = arith.constant 0 : index
    %c0_0 = arith.constant 0 : index
    %0 = vector.load %arg5[%c0, %c0_0] : memref<128x128xbf16, #tpu.memory_space<vmem>>, vector<128x128xbf16>
    %c0_i32 = arith.constant 0 : i32
    %1 = arith.cmpi eq, %arg1, %c0_i32 : i32
    %2 = arith.extui %1 : i1 to i32
    %c0_i32_1 = arith.constant 0 : i32
    %3 = arith.cmpi ne, %2, %c0_i32_1 : i32
    scf.if %3 {
      %c0_334 = arith.constant 0 : index
      %c0_335 = arith.constant 0 : index
      %874 = vector.load %arg4[%c0_334, %c0_335] : memref<8x128xf32, #tpu.memory_space<vmem>>, vector<8x128xf32>
      %875 = arith.truncf %874 : vector<8x128xf32> to vector<8x128xbf16>
      %cst_336 = arith.constant dense<0.000000e+00> : vector<8x128xf32>
      %876 = tpu.matmul %875, %0, %cst_336 {dimension_numbers = #tpu.dot_dimension_numbers<[1], [0], [0], [1], [0, 0, 1, 1], [], []>} : vector<8x128xbf16>, vector<128x128xbf16>, vector<8x128xf32> -> vector<8x128xf32>
      %c0_337 = arith.constant 0 : index
      %c0_338 = arith.constant 0 : index
      %877 = vector.load %arg6[%c0_337, %c0_338] : memref<8x128xf32, #tpu.memory_space<vmem>>, vector<8x128xf32>
      tpu.vector_store %arg6[%c0_337, %c0_338], %874 {strides = array<i32>} : memref<8x128xf32, #tpu.memory_space<vmem>>, vector<8x128xf32>,
      %c0_339 = arith.constant 0 : index
      %c0_340 = arith.constant 0 : index
      %878 = vector.load %arg7[%c0_339, %c0_340] : memref<8x128xf32, #tpu.memory_space<vmem>>, vector<8x128xf32>
      tpu.vector_store %arg7[%c0_339, %c0_340], %876 {strides = array<i32>} : memref<8x128xf32, #tpu.memory_space<vmem>>, vector<8x128xf32>,
      %879 = arith.mulf %876, %876 : vector<8x128xf32>
      %cst_341 = arith.constant dense<0.000000e+00> : vector<8xf32>
      %880 = vector.multi_reduction <add>, %879, %cst_341 [1] : vector<8x128xf32> to vector<8xf32>
      %881 = vector.shape_cast %880 : vector<8xf32> to vector<8x1xf32>
      %c0_342 = arith.constant 0 : index
      %c0_343 = arith.constant 0 : index
      %882 = vector.load %arg8[%c0_342, %c0_343] : memref<8x1xf32, #tpu.memory_space<vmem>>, vector<8x1xf32>
      tpu.vector_store %arg8[%c0_342, %c0_343], %881 {strides = array<i32>} : memref<8x1xf32, #tpu.memory_space<vmem>>, vector<8x1xf32>,
    } else {
    }
    %c0_2 = arith.constant 0 : index
    %c0_3 = arith.constant 0 : index
    %4 = vector.load %arg6[%c0_2, %c0_3] : memref<8x128xf32, #tpu.memory_space<vmem>>, vector<8x128xf32>
    %c0_4 = arith.constant 0 : index
    %c0_5 = arith.constant 0 : index
    %5 = vector.load %arg7[%c0_4, %c0_5] : memref<8x128xf32, #tpu.memory_space<vmem>>, vector<8x128xf32>
    %c0_6 = arith.constant 0 : index
    %c0_7 = arith.constant 0 : index
    %6 = vector.load %arg8[%c0_6, %c0_7] : memref<8x1xf32, #tpu.memory_space<vmem>>, vector<8x1xf32>
    %c0_i32_8 = arith.constant 0 : i32
    %cst = arith.constant 0.00999999977 : f32
    %7 = vector.broadcast %cst : f32 to vector<8x128xf32>
    %8 = arith.mulf %7, %5 : vector<8x128xf32>
    %9 = arith.subf %4, %8 : vector<8x128xf32>
    %c0_9 = arith.constant 0 : index
    %10 = arith.index_cast %c0_i32_8 : i32 to index
    %c0_10 = arith.constant 0 : index
    %c0_11 = arith.constant 0 : index
    %11 = vector.load %arg2[%c0_9, %10, %c0_10, %c0_11] : memref<1x32x8x128xbf16, #tpu.memory_space<vmem>>, vector<1x1x8x128xbf16>
    %12 = vector.shape_cast %11 : vector<1x1x8x128xbf16> to vector<8x128xbf16>
    %13 = arith.extf %12 : vector<8x128xbf16> to vector<8x128xf32>
    %14 = arith.addf %9, %13 : vector<8x128xf32>
    %15 = arith.truncf %14 : vector<8x128xf32> to vector<8x128xbf16>
    %cst_12 = arith.constant dense<0.000000e+00> : vector<8x128xf32>
    %16 = tpu.matmul %15, %0, %cst_12 {dimension_numbers = #tpu.dot_dimension_numbers<[1], [0], [0], [1], [0, 0, 1, 1], [], []>} : vector<8x128xbf16>, vector<128x128xbf16>, vector<8x128xf32> -> vector<8x128xf32>
    %17 = arith.mulf %16, %16 : vector<8x128xf32>
    %cst_13 = arith.constant dense<0.000000e+00> : vector<8xf32>
    %18 = vector.multi_reduction <add>, %17, %cst_13 [1] : vector<8x128xf32> to vector<8xf32>
    %19 = vector.shape_cast %18 : vector<8xf32> to vector<8x1xf32>
    %20 = arith.subf %19, %6 : vector<8x1xf32>
    %cst_14 = arith.constant -2.500000e-03 : f32
    %21 = vector.broadcast %cst_14 : f32 to vector<8x1xf32>
    %22 = arith.mulf %21, %20 : vector<8x1xf32>
    %c0_15 = arith.constant 0 : index
    %23 = arith.index_cast %c0_i32_8 : i32 to index
    %c0_16 = arith.constant 0 : index
    %c0_17 = arith.constant 0 : index
    %24 = vector.load %arg3[%c0_15, %23, %c0_16, %c0_17] : memref<1x32x8x1xf32, #tpu.memory_space<vmem>>, vector<1x1x8x1xf32>
    %25 = vector.shape_cast %24 : vector<1x1x8x1xf32> to vector<8x1xf32>
    %26 = arith.cmpf ole, %25, %22 : vector<8x1xf32>
    %27 = vector.shape_cast %26 : vector<8x1xi1> to vector<8x1xi1>
    %28 = vector.broadcast %27 : vector<8x1xi1> to vector<8x128xi1>
    %29 = arith.select %28, %14, %4 : vector<8x128xi1>, vector<8x128xf32>
    %30 = vector.shape_cast %26 : vector<8x1xi1> to vector<8x1xi1>
    %31 = vector.broadcast %30 : vector<8x1xi1> to vector<8x128xi1>
    %32 = arith.select %31, %16, %5 : vector<8x128xi1>, vector<8x128xf32>
    %33 = arith.select %26, %19, %6 : vector<8x1xi1>, vector<8x1xf32>
    %c1_i32 = arith.constant 1 : i32
    %cst_18 = arith.constant 0.00999999977 : f32
    %34 = vector.broadcast %cst_18 : f32 to vector<8x128xf32>
    %35 = arith.mulf %34, %32 : vector<8x128xf32>
    %36 = arith.subf %29, %35 : vector<8x128xf32>
    %c0_19 = arith.constant 0 : index
    %37 = arith.index_cast %c1_i32 : i32 to index
    %c0_20 = arith.constant 0 : index
    %c0_21 = arith.constant 0 : index
    %38 = vector.load %arg2[%c0_19, %37, %c0_20, %c0_21] : memref<1x32x8x128xbf16, #tpu.memory_space<vmem>>, vector<1x1x8x128xbf16>
    %39 = vector.shape_cast %38 : vector<1x1x8x128xbf16> to vector<8x128xbf16>
    %40 = arith.extf %39 : vector<8x128xbf16> to vector<8x128xf32>
    %41 = arith.addf %36, %40 : vector<8x128xf32>
    %42 = arith.truncf %41 : vector<8x128xf32> to vector<8x128xbf16>
    %cst_22 = arith.constant dense<0.000000e+00> : vector<8x128xf32>
    %43 = tpu.matmul %42, %0, %cst_22 {dimension_numbers = #tpu.dot_dimension_numbers<[1], [0], [0], [1], [0, 0, 1, 1], [], []>} : vector<8x128xbf16>, vector<128x128xbf16>, vector<8x128xf32> -> vector<8x128xf32>
    %44 = arith.mulf %43, %43 : vector<8x128xf32>
    %cst_23 = arith.constant dense<0.000000e+00> : vector<8xf32>
    %45 = vector.multi_reduction <add>, %44, %cst_23 [1] : vector<8x128xf32> to vector<8xf32>
    %46 = vector.shape_cast %45 : vector<8xf32> to vector<8x1xf32>
    %47 = arith.subf %46, %33 : vector<8x1xf32>
    %cst_24 = arith.constant -2.500000e-03 : f32
    %48 = vector.broadcast %cst_24 : f32 to vector<8x1xf32>
    %49 = arith.mulf %48, %47 : vector<8x1xf32>
    %c0_25 = arith.constant 0 : index
    %50 = arith.index_cast %c1_i32 : i32 to index
    %c0_26 = arith.constant 0 : index
    %c0_27 = arith.constant 0 : index
    %51 = vector.load %arg3[%c0_25, %50, %c0_26, %c0_27] : memref<1x32x8x1xf32, #tpu.memory_space<vmem>>, vector<1x1x8x1xf32>
    %52 = vector.shape_cast %51 : vector<1x1x8x1xf32> to vector<8x1xf32>
    %53 = arith.cmpf ole, %52, %49 : vector<8x1xf32>
    %54 = vector.shape_cast %53 : vector<8x1xi1> to vector<8x1xi1>
    %55 = vector.broadcast %54 : vector<8x1xi1> to vector<8x128xi1>
    %56 = arith.select %55, %41, %29 : vector<8x128xi1>, vector<8x128xf32>
    %57 = vector.shape_cast %53 : vector<8x1xi1> to vector<8x1xi1>
    %58 = vector.broadcast %57 : vector<8x1xi1> to vector<8x128xi1>
    %59 = arith.select %58, %43, %32 : vector<8x128xi1>, vector<8x128xf32>
    %60 = arith.select %53, %46, %33 : vector<8x1xi1>, vector<8x1xf32>
    %c2_i32 = arith.constant 2 : i32
    %cst_28 = arith.constant 0.00999999977 : f32
    %61 = vector.broadcast %cst_28 : f32 to vector<8x128xf32>
    %62 = arith.mulf %61, %59 : vector<8x128xf32>
    %63 = arith.subf %56, %62 : vector<8x128xf32>
    %c0_29 = arith.constant 0 : index
    %64 = arith.index_cast %c2_i32 : i32 to index
    %c0_30 = arith.constant 0 : index
    %c0_31 = arith.constant 0 : index
    %65 = vector.load %arg2[%c0_29, %64, %c0_30, %c0_31] : memref<1x32x8x128xbf16, #tpu.memory_space<vmem>>, vector<1x1x8x128xbf16>
    %66 = vector.shape_cast %65 : vector<1x1x8x128xbf16> to vector<8x128xbf16>
    %67 = arith.extf %66 : vector<8x128xbf16> to vector<8x128xf32>
    %68 = arith.addf %63, %67 : vector<8x128xf32>
    %69 = arith.truncf %68 : vector<8x128xf32> to vector<8x128xbf16>
    %cst_32 = arith.constant dense<0.000000e+00> : vector<8x128xf32>
    %70 = tpu.matmul %69, %0, %cst_32 {dimension_numbers = #tpu.dot_dimension_numbers<[1], [0], [0], [1], [0, 0, 1, 1], [], []>} : vector<8x128xbf16>, vector<128x128xbf16>, vector<8x128xf32> -> vector<8x128xf32>
    %71 = arith.mulf %70, %70 : vector<8x128xf32>
    %cst_33 = arith.constant dense<0.000000e+00> : vector<8xf32>
    %72 = vector.multi_reduction <add>, %71, %cst_33 [1] : vector<8x128xf32> to vector<8xf32>
    %73 = vector.shape_cast %72 : vector<8xf32> to vector<8x1xf32>
    %74 = arith.subf %73, %60 : vector<8x1xf32>
    %cst_34 = arith.constant -2.500000e-03 : f32
    %75 = vector.broadcast %cst_34 : f32 to vector<8x1xf32>
    %76 = arith.mulf %75, %74 : vector<8x1xf32>
    %c0_35 = arith.constant 0 : index
    %77 = arith.index_cast %c2_i32 : i32 to index
    %c0_36 = arith.constant 0 : index
    %c0_37 = arith.constant 0 : index
    %78 = vector.load %arg3[%c0_35, %77, %c0_36, %c0_37] : memref<1x32x8x1xf32, #tpu.memory_space<vmem>>, vector<1x1x8x1xf32>
    %79 = vector.shape_cast %78 : vector<1x1x8x1xf32> to vector<8x1xf32>
    %80 = arith.cmpf ole, %79, %76 : vector<8x1xf32>
    %81 = vector.shape_cast %80 : vector<8x1xi1> to vector<8x1xi1>
    %82 = vector.broadcast %81 : vector<8x1xi1> to vector<8x128xi1>
    %83 = arith.select %82, %68, %56 : vector<8x128xi1>, vector<8x128xf32>
    %84 = vector.shape_cast %80 : vector<8x1xi1> to vector<8x1xi1>
    %85 = vector.broadcast %84 : vector<8x1xi1> to vector<8x128xi1>
    %86 = arith.select %85, %70, %59 : vector<8x128xi1>, vector<8x128xf32>
    %87 = arith.select %80, %73, %60 : vector<8x1xi1>, vector<8x1xf32>
    %c3_i32 = arith.constant 3 : i32
    %cst_38 = arith.constant 0.00999999977 : f32
    %88 = vector.broadcast %cst_38 : f32 to vector<8x128xf32>
    %89 = arith.mulf %88, %86 : vector<8x128xf32>
    %90 = arith.subf %83, %89 : vector<8x128xf32>
    %c0_39 = arith.constant 0 : index
    %91 = arith.index_cast %c3_i32 : i32 to index
    %c0_40 = arith.constant 0 : index
    %c0_41 = arith.constant 0 : index
    %92 = vector.load %arg2[%c0_39, %91, %c0_40, %c0_41] : memref<1x32x8x128xbf16, #tpu.memory_space<vmem>>, vector<1x1x8x128xbf16>
    %93 = vector.shape_cast %92 : vector<1x1x8x128xbf16> to vector<8x128xbf16>
    %94 = arith.extf %93 : vector<8x128xbf16> to vector<8x128xf32>
    %95 = arith.addf %90, %94 : vector<8x128xf32>
    %96 = arith.truncf %95 : vector<8x128xf32> to vector<8x128xbf16>
    %cst_42 = arith.constant dense<0.000000e+00> : vector<8x128xf32>
    %97 = tpu.matmul %96, %0, %cst_42 {dimension_numbers = #tpu.dot_dimension_numbers<[1], [0], [0], [1], [0, 0, 1, 1], [], []>} : vector<8x128xbf16>, vector<128x128xbf16>, vector<8x128xf32> -> vector<8x128xf32>
    %98 = arith.mulf %97, %97 : vector<8x128xf32>
    %cst_43 = arith.constant dense<0.000000e+00> : vector<8xf32>
    %99 = vector.multi_reduction <add>, %98, %cst_43 [1] : vector<8x128xf32> to vector<8xf32>
    %100 = vector.shape_cast %99 : vector<8xf32> to vector<8x1xf32>
    %101 = arith.subf %100, %87 : vector<8x1xf32>
    %cst_44 = arith.constant -2.500000e-03 : f32
    %102 = vector.broadcast %cst_44 : f32 to vector<8x1xf32>
    %103 = arith.mulf %102, %101 : vector<8x1xf32>
    %c0_45 = arith.constant 0 : index
    %104 = arith.index_cast %c3_i32 : i32 to index
    %c0_46 = arith.constant 0 : index
    %c0_47 = arith.constant 0 : index
    %105 = vector.load %arg3[%c0_45, %104, %c0_46, %c0_47] : memref<1x32x8x1xf32, #tpu.memory_space<vmem>>, vector<1x1x8x1xf32>
    %106 = vector.shape_cast %105 : vector<1x1x8x1xf32> to vector<8x1xf32>
    %107 = arith.cmpf ole, %106, %103 : vector<8x1xf32>
    %108 = vector.shape_cast %107 : vector<8x1xi1> to vector<8x1xi1>
    %109 = vector.broadcast %108 : vector<8x1xi1> to vector<8x128xi1>
    %110 = arith.select %109, %95, %83 : vector<8x128xi1>, vector<8x128xf32>
    %111 = vector.shape_cast %107 : vector<8x1xi1> to vector<8x1xi1>
    %112 = vector.broadcast %111 : vector<8x1xi1> to vector<8x128xi1>
    %113 = arith.select %112, %97, %86 : vector<8x128xi1>, vector<8x128xf32>
    %114 = arith.select %107, %100, %87 : vector<8x1xi1>, vector<8x1xf32>
    %c4_i32 = arith.constant 4 : i32
    %cst_48 = arith.constant 0.00999999977 : f32
    %115 = vector.broadcast %cst_48 : f32 to vector<8x128xf32>
    %116 = arith.mulf %115, %113 : vector<8x128xf32>
    %117 = arith.subf %110, %116 : vector<8x128xf32>
    %c0_49 = arith.constant 0 : index
    %118 = arith.index_cast %c4_i32 : i32 to index
    %c0_50 = arith.constant 0 : index
    %c0_51 = arith.constant 0 : index
    %119 = vector.load %arg2[%c0_49, %118, %c0_50, %c0_51] : memref<1x32x8x128xbf16, #tpu.memory_space<vmem>>, vector<1x1x8x128xbf16>
    %120 = vector.shape_cast %119 : vector<1x1x8x128xbf16> to vector<8x128xbf16>
    %121 = arith.extf %120 : vector<8x128xbf16> to vector<8x128xf32>
    %122 = arith.addf %117, %121 : vector<8x128xf32>
    %123 = arith.truncf %122 : vector<8x128xf32> to vector<8x128xbf16>
    %cst_52 = arith.constant dense<0.000000e+00> : vector<8x128xf32>
    %124 = tpu.matmul %123, %0, %cst_52 {dimension_numbers = #tpu.dot_dimension_numbers<[1], [0], [0], [1], [0, 0, 1, 1], [], []>} : vector<8x128xbf16>, vector<128x128xbf16>, vector<8x128xf32> -> vector<8x128xf32>
    %125 = arith.mulf %124, %124 : vector<8x128xf32>
    %cst_53 = arith.constant dense<0.000000e+00> : vector<8xf32>
    %126 = vector.multi_reduction <add>, %125, %cst_53 [1] : vector<8x128xf32> to vector<8xf32>
    %127 = vector.shape_cast %126 : vector<8xf32> to vector<8x1xf32>
    %128 = arith.subf %127, %114 : vector<8x1xf32>
    %cst_54 = arith.constant -2.500000e-03 : f32
    %129 = vector.broadcast %cst_54 : f32 to vector<8x1xf32>
    %130 = arith.mulf %129, %128 : vector<8x1xf32>
    %c0_55 = arith.constant 0 : index
    %131 = arith.index_cast %c4_i32 : i32 to index
    %c0_56 = arith.constant 0 : index
    %c0_57 = arith.constant 0 : index
    %132 = vector.load %arg3[%c0_55, %131, %c0_56, %c0_57] : memref<1x32x8x1xf32, #tpu.memory_space<vmem>>, vector<1x1x8x1xf32>
    %133 = vector.shape_cast %132 : vector<1x1x8x1xf32> to vector<8x1xf32>
    %134 = arith.cmpf ole, %133, %130 : vector<8x1xf32>
    %135 = vector.shape_cast %134 : vector<8x1xi1> to vector<8x1xi1>
    %136 = vector.broadcast %135 : vector<8x1xi1> to vector<8x128xi1>
    %137 = arith.select %136, %122, %110 : vector<8x128xi1>, vector<8x128xf32>
    %138 = vector.shape_cast %134 : vector<8x1xi1> to vector<8x1xi1>
    %139 = vector.broadcast %138 : vector<8x1xi1> to vector<8x128xi1>
    %140 = arith.select %139, %124, %113 : vector<8x128xi1>, vector<8x128xf32>
    %141 = arith.select %134, %127, %114 : vector<8x1xi1>, vector<8x1xf32>
    %c5_i32 = arith.constant 5 : i32
    %cst_58 = arith.constant 0.00999999977 : f32
    %142 = vector.broadcast %cst_58 : f32 to vector<8x128xf32>
    %143 = arith.mulf %142, %140 : vector<8x128xf32>
    %144 = arith.subf %137, %143 : vector<8x128xf32>
    %c0_59 = arith.constant 0 : index
    %145 = arith.index_cast %c5_i32 : i32 to index
    %c0_60 = arith.constant 0 : index
    %c0_61 = arith.constant 0 : index
    %146 = vector.load %arg2[%c0_59, %145, %c0_60, %c0_61] : memref<1x32x8x128xbf16, #tpu.memory_space<vmem>>, vector<1x1x8x128xbf16>
    %147 = vector.shape_cast %146 : vector<1x1x8x128xbf16> to vector<8x128xbf16>
    %148 = arith.extf %147 : vector<8x128xbf16> to vector<8x128xf32>
    %149 = arith.addf %144, %148 : vector<8x128xf32>
    %150 = arith.truncf %149 : vector<8x128xf32> to vector<8x128xbf16>
    %cst_62 = arith.constant dense<0.000000e+00> : vector<8x128xf32>
    %151 = tpu.matmul %150, %0, %cst_62 {dimension_numbers = #tpu.dot_dimension_numbers<[1], [0], [0], [1], [0, 0, 1, 1], [], []>} : vector<8x128xbf16>, vector<128x128xbf16>, vector<8x128xf32> -> vector<8x128xf32>
    %152 = arith.mulf %151, %151 : vector<8x128xf32>
    %cst_63 = arith.constant dense<0.000000e+00> : vector<8xf32>
    %153 = vector.multi_reduction <add>, %152, %cst_63 [1] : vector<8x128xf32> to vector<8xf32>
    %154 = vector.shape_cast %153 : vector<8xf32> to vector<8x1xf32>
    %155 = arith.subf %154, %141 : vector<8x1xf32>
    %cst_64 = arith.constant -2.500000e-03 : f32
    %156 = vector.broadcast %cst_64 : f32 to vector<8x1xf32>
    %157 = arith.mulf %156, %155 : vector<8x1xf32>
    %c0_65 = arith.constant 0 : index
    %158 = arith.index_cast %c5_i32 : i32 to index
    %c0_66 = arith.constant 0 : index
    %c0_67 = arith.constant 0 : index
    %159 = vector.load %arg3[%c0_65, %158, %c0_66, %c0_67] : memref<1x32x8x1xf32, #tpu.memory_space<vmem>>, vector<1x1x8x1xf32>
    %160 = vector.shape_cast %159 : vector<1x1x8x1xf32> to vector<8x1xf32>
    %161 = arith.cmpf ole, %160, %157 : vector<8x1xf32>
    %162 = vector.shape_cast %161 : vector<8x1xi1> to vector<8x1xi1>
    %163 = vector.broadcast %162 : vector<8x1xi1> to vector<8x128xi1>
    %164 = arith.select %163, %149, %137 : vector<8x128xi1>, vector<8x128xf32>
    %165 = vector.shape_cast %161 : vector<8x1xi1> to vector<8x1xi1>
    %166 = vector.broadcast %165 : vector<8x1xi1> to vector<8x128xi1>
    %167 = arith.select %166, %151, %140 : vector<8x128xi1>, vector<8x128xf32>
    %168 = arith.select %161, %154, %141 : vector<8x1xi1>, vector<8x1xf32>
    %c6_i32 = arith.constant 6 : i32
    %cst_68 = arith.constant 0.00999999977 : f32
    %169 = vector.broadcast %cst_68 : f32 to vector<8x128xf32>
    %170 = arith.mulf %169, %167 : vector<8x128xf32>
    %171 = arith.subf %164, %170 : vector<8x128xf32>
    %c0_69 = arith.constant 0 : index
    %172 = arith.index_cast %c6_i32 : i32 to index
    %c0_70 = arith.constant 0 : index
    %c0_71 = arith.constant 0 : index
    %173 = vector.load %arg2[%c0_69, %172, %c0_70, %c0_71] : memref<1x32x8x128xbf16, #tpu.memory_space<vmem>>, vector<1x1x8x128xbf16>
    %174 = vector.shape_cast %173 : vector<1x1x8x128xbf16> to vector<8x128xbf16>
    %175 = arith.extf %174 : vector<8x128xbf16> to vector<8x128xf32>
    %176 = arith.addf %171, %175 : vector<8x128xf32>
    %177 = arith.truncf %176 : vector<8x128xf32> to vector<8x128xbf16>
    %cst_72 = arith.constant dense<0.000000e+00> : vector<8x128xf32>
    %178 = tpu.matmul %177, %0, %cst_72 {dimension_numbers = #tpu.dot_dimension_numbers<[1], [0], [0], [1], [0, 0, 1, 1], [], []>} : vector<8x128xbf16>, vector<128x128xbf16>, vector<8x128xf32> -> vector<8x128xf32>
    %179 = arith.mulf %178, %178 : vector<8x128xf32>
    %cst_73 = arith.constant dense<0.000000e+00> : vector<8xf32>
    %180 = vector.multi_reduction <add>, %179, %cst_73 [1] : vector<8x128xf32> to vector<8xf32>
    %181 = vector.shape_cast %180 : vector<8xf32> to vector<8x1xf32>
    %182 = arith.subf %181, %168 : vector<8x1xf32>
    %cst_74 = arith.constant -2.500000e-03 : f32
    %183 = vector.broadcast %cst_74 : f32 to vector<8x1xf32>
    %184 = arith.mulf %183, %182 : vector<8x1xf32>
    %c0_75 = arith.constant 0 : index
    %185 = arith.index_cast %c6_i32 : i32 to index
    %c0_76 = arith.constant 0 : index
    %c0_77 = arith.constant 0 : index
    %186 = vector.load %arg3[%c0_75, %185, %c0_76, %c0_77] : memref<1x32x8x1xf32, #tpu.memory_space<vmem>>, vector<1x1x8x1xf32>
    %187 = vector.shape_cast %186 : vector<1x1x8x1xf32> to vector<8x1xf32>
    %188 = arith.cmpf ole, %187, %184 : vector<8x1xf32>
    %189 = vector.shape_cast %188 : vector<8x1xi1> to vector<8x1xi1>
    %190 = vector.broadcast %189 : vector<8x1xi1> to vector<8x128xi1>
    %191 = arith.select %190, %176, %164 : vector<8x128xi1>, vector<8x128xf32>
    %192 = vector.shape_cast %188 : vector<8x1xi1> to vector<8x1xi1>
    %193 = vector.broadcast %192 : vector<8x1xi1> to vector<8x128xi1>
    %194 = arith.select %193, %178, %167 : vector<8x128xi1>, vector<8x128xf32>
    %195 = arith.select %188, %181, %168 : vector<8x1xi1>, vector<8x1xf32>
    %c7_i32 = arith.constant 7 : i32
    %cst_78 = arith.constant 0.00999999977 : f32
    %196 = vector.broadcast %cst_78 : f32 to vector<8x128xf32>
    %197 = arith.mulf %196, %194 : vector<8x128xf32>
    %198 = arith.subf %191, %197 : vector<8x128xf32>
    %c0_79 = arith.constant 0 : index
    %199 = arith.index_cast %c7_i32 : i32 to index
    %c0_80 = arith.constant 0 : index
    %c0_81 = arith.constant 0 : index
    %200 = vector.load %arg2[%c0_79, %199, %c0_80, %c0_81] : memref<1x32x8x128xbf16, #tpu.memory_space<vmem>>, vector<1x1x8x128xbf16>
    %201 = vector.shape_cast %200 : vector<1x1x8x128xbf16> to vector<8x128xbf16>
    %202 = arith.extf %201 : vector<8x128xbf16> to vector<8x128xf32>
    %203 = arith.addf %198, %202 : vector<8x128xf32>
    %204 = arith.truncf %203 : vector<8x128xf32> to vector<8x128xbf16>
    %cst_82 = arith.constant dense<0.000000e+00> : vector<8x128xf32>
    %205 = tpu.matmul %204, %0, %cst_82 {dimension_numbers = #tpu.dot_dimension_numbers<[1], [0], [0], [1], [0, 0, 1, 1], [], []>} : vector<8x128xbf16>, vector<128x128xbf16>, vector<8x128xf32> -> vector<8x128xf32>
    %206 = arith.mulf %205, %205 : vector<8x128xf32>
    %cst_83 = arith.constant dense<0.000000e+00> : vector<8xf32>
    %207 = vector.multi_reduction <add>, %206, %cst_83 [1] : vector<8x128xf32> to vector<8xf32>
    %208 = vector.shape_cast %207 : vector<8xf32> to vector<8x1xf32>
    %209 = arith.subf %208, %195 : vector<8x1xf32>
    %cst_84 = arith.constant -2.500000e-03 : f32
    %210 = vector.broadcast %cst_84 : f32 to vector<8x1xf32>
    %211 = arith.mulf %210, %209 : vector<8x1xf32>
    %c0_85 = arith.constant 0 : index
    %212 = arith.index_cast %c7_i32 : i32 to index
    %c0_86 = arith.constant 0 : index
    %c0_87 = arith.constant 0 : index
    %213 = vector.load %arg3[%c0_85, %212, %c0_86, %c0_87] : memref<1x32x8x1xf32, #tpu.memory_space<vmem>>, vector<1x1x8x1xf32>
    %214 = vector.shape_cast %213 : vector<1x1x8x1xf32> to vector<8x1xf32>
    %215 = arith.cmpf ole, %214, %211 : vector<8x1xf32>
    %216 = vector.shape_cast %215 : vector<8x1xi1> to vector<8x1xi1>
    %217 = vector.broadcast %216 : vector<8x1xi1> to vector<8x128xi1>
    %218 = arith.select %217, %203, %191 : vector<8x128xi1>, vector<8x128xf32>
    %219 = vector.shape_cast %215 : vector<8x1xi1> to vector<8x1xi1>
    %220 = vector.broadcast %219 : vector<8x1xi1> to vector<8x128xi1>
    %221 = arith.select %220, %205, %194 : vector<8x128xi1>, vector<8x128xf32>
    %222 = arith.select %215, %208, %195 : vector<8x1xi1>, vector<8x1xf32>
    %c8_i32 = arith.constant 8 : i32
    %cst_88 = arith.constant 0.00999999977 : f32
    %223 = vector.broadcast %cst_88 : f32 to vector<8x128xf32>
    %224 = arith.mulf %223, %221 : vector<8x128xf32>
    %225 = arith.subf %218, %224 : vector<8x128xf32>
    %c0_89 = arith.constant 0 : index
    %226 = arith.index_cast %c8_i32 : i32 to index
    %c0_90 = arith.constant 0 : index
    %c0_91 = arith.constant 0 : index
    %227 = vector.load %arg2[%c0_89, %226, %c0_90, %c0_91] : memref<1x32x8x128xbf16, #tpu.memory_space<vmem>>, vector<1x1x8x128xbf16>
    %228 = vector.shape_cast %227 : vector<1x1x8x128xbf16> to vector<8x128xbf16>
    %229 = arith.extf %228 : vector<8x128xbf16> to vector<8x128xf32>
    %230 = arith.addf %225, %229 : vector<8x128xf32>
    %231 = arith.truncf %230 : vector<8x128xf32> to vector<8x128xbf16>
    %cst_92 = arith.constant dense<0.000000e+00> : vector<8x128xf32>
    %232 = tpu.matmul %231, %0, %cst_92 {dimension_numbers = #tpu.dot_dimension_numbers<[1], [0], [0], [1], [0, 0, 1, 1], [], []>} : vector<8x128xbf16>, vector<128x128xbf16>, vector<8x128xf32> -> vector<8x128xf32>
    %233 = arith.mulf %232, %232 : vector<8x128xf32>
    %cst_93 = arith.constant dense<0.000000e+00> : vector<8xf32>
    %234 = vector.multi_reduction <add>, %233, %cst_93 [1] : vector<8x128xf32> to vector<8xf32>
    %235 = vector.shape_cast %234 : vector<8xf32> to vector<8x1xf32>
    %236 = arith.subf %235, %222 : vector<8x1xf32>
    %cst_94 = arith.constant -2.500000e-03 : f32
    %237 = vector.broadcast %cst_94 : f32 to vector<8x1xf32>
    %238 = arith.mulf %237, %236 : vector<8x1xf32>
    %c0_95 = arith.constant 0 : index
    %239 = arith.index_cast %c8_i32 : i32 to index
    %c0_96 = arith.constant 0 : index
    %c0_97 = arith.constant 0 : index
    %240 = vector.load %arg3[%c0_95, %239, %c0_96, %c0_97] : memref<1x32x8x1xf32, #tpu.memory_space<vmem>>, vector<1x1x8x1xf32>
    %241 = vector.shape_cast %240 : vector<1x1x8x1xf32> to vector<8x1xf32>
    %242 = arith.cmpf ole, %241, %238 : vector<8x1xf32>
    %243 = vector.shape_cast %242 : vector<8x1xi1> to vector<8x1xi1>
    %244 = vector.broadcast %243 : vector<8x1xi1> to vector<8x128xi1>
    %245 = arith.select %244, %230, %218 : vector<8x128xi1>, vector<8x128xf32>
    %246 = vector.shape_cast %242 : vector<8x1xi1> to vector<8x1xi1>
    %247 = vector.broadcast %246 : vector<8x1xi1> to vector<8x128xi1>
    %248 = arith.select %247, %232, %221 : vector<8x128xi1>, vector<8x128xf32>
    %249 = arith.select %242, %235, %222 : vector<8x1xi1>, vector<8x1xf32>
    %c9_i32 = arith.constant 9 : i32
    %cst_98 = arith.constant 0.00999999977 : f32
    %250 = vector.broadcast %cst_98 : f32 to vector<8x128xf32>
    %251 = arith.mulf %250, %248 : vector<8x128xf32>
    %252 = arith.subf %245, %251 : vector<8x128xf32>
    %c0_99 = arith.constant 0 : index
    %253 = arith.index_cast %c9_i32 : i32 to index
    %c0_100 = arith.constant 0 : index
    %c0_101 = arith.constant 0 : index
    %254 = vector.load %arg2[%c0_99, %253, %c0_100, %c0_101] : memref<1x32x8x128xbf16, #tpu.memory_space<vmem>>, vector<1x1x8x128xbf16>
    %255 = vector.shape_cast %254 : vector<1x1x8x128xbf16> to vector<8x128xbf16>
    %256 = arith.extf %255 : vector<8x128xbf16> to vector<8x128xf32>
    %257 = arith.addf %252, %256 : vector<8x128xf32>
    %258 = arith.truncf %257 : vector<8x128xf32> to vector<8x128xbf16>
    %cst_102 = arith.constant dense<0.000000e+00> : vector<8x128xf32>
    %259 = tpu.matmul %258, %0, %cst_102 {dimension_numbers = #tpu.dot_dimension_numbers<[1], [0], [0], [1], [0, 0, 1, 1], [], []>} : vector<8x128xbf16>, vector<128x128xbf16>, vector<8x128xf32> -> vector<8x128xf32>
    %260 = arith.mulf %259, %259 : vector<8x128xf32>
    %cst_103 = arith.constant dense<0.000000e+00> : vector<8xf32>
    %261 = vector.multi_reduction <add>, %260, %cst_103 [1] : vector<8x128xf32> to vector<8xf32>
    %262 = vector.shape_cast %261 : vector<8xf32> to vector<8x1xf32>
    %263 = arith.subf %262, %249 : vector<8x1xf32>
    %cst_104 = arith.constant -2.500000e-03 : f32
    %264 = vector.broadcast %cst_104 : f32 to vector<8x1xf32>
    %265 = arith.mulf %264, %263 : vector<8x1xf32>
    %c0_105 = arith.constant 0 : index
    %266 = arith.index_cast %c9_i32 : i32 to index
    %c0_106 = arith.constant 0 : index
    %c0_107 = arith.constant 0 : index
    %267 = vector.load %arg3[%c0_105, %266, %c0_106, %c0_107] : memref<1x32x8x1xf32, #tpu.memory_space<vmem>>, vector<1x1x8x1xf32>
    %268 = vector.shape_cast %267 : vector<1x1x8x1xf32> to vector<8x1xf32>
    %269 = arith.cmpf ole, %268, %265 : vector<8x1xf32>
    %270 = vector.shape_cast %269 : vector<8x1xi1> to vector<8x1xi1>
    %271 = vector.broadcast %270 : vector<8x1xi1> to vector<8x128xi1>
    %272 = arith.select %271, %257, %245 : vector<8x128xi1>, vector<8x128xf32>
    %273 = vector.shape_cast %269 : vector<8x1xi1> to vector<8x1xi1>
    %274 = vector.broadcast %273 : vector<8x1xi1> to vector<8x128xi1>
    %275 = arith.select %274, %259, %248 : vector<8x128xi1>, vector<8x128xf32>
    %276 = arith.select %269, %262, %249 : vector<8x1xi1>, vector<8x1xf32>
    %c10_i32 = arith.constant 10 : i32
    %cst_108 = arith.constant 0.00999999977 : f32
    %277 = vector.broadcast %cst_108 : f32 to vector<8x128xf32>
    %278 = arith.mulf %277, %275 : vector<8x128xf32>
    %279 = arith.subf %272, %278 : vector<8x128xf32>
    %c0_109 = arith.constant 0 : index
    %280 = arith.index_cast %c10_i32 : i32 to index
    %c0_110 = arith.constant 0 : index
    %c0_111 = arith.constant 0 : index
    %281 = vector.load %arg2[%c0_109, %280, %c0_110, %c0_111] : memref<1x32x8x128xbf16, #tpu.memory_space<vmem>>, vector<1x1x8x128xbf16>
    %282 = vector.shape_cast %281 : vector<1x1x8x128xbf16> to vector<8x128xbf16>
    %283 = arith.extf %282 : vector<8x128xbf16> to vector<8x128xf32>
    %284 = arith.addf %279, %283 : vector<8x128xf32>
    %285 = arith.truncf %284 : vector<8x128xf32> to vector<8x128xbf16>
    %cst_112 = arith.constant dense<0.000000e+00> : vector<8x128xf32>
    %286 = tpu.matmul %285, %0, %cst_112 {dimension_numbers = #tpu.dot_dimension_numbers<[1], [0], [0], [1], [0, 0, 1, 1], [], []>} : vector<8x128xbf16>, vector<128x128xbf16>, vector<8x128xf32> -> vector<8x128xf32>
    %287 = arith.mulf %286, %286 : vector<8x128xf32>
    %cst_113 = arith.constant dense<0.000000e+00> : vector<8xf32>
    %288 = vector.multi_reduction <add>, %287, %cst_113 [1] : vector<8x128xf32> to vector<8xf32>
    %289 = vector.shape_cast %288 : vector<8xf32> to vector<8x1xf32>
    %290 = arith.subf %289, %276 : vector<8x1xf32>
    %cst_114 = arith.constant -2.500000e-03 : f32
    %291 = vector.broadcast %cst_114 : f32 to vector<8x1xf32>
    %292 = arith.mulf %291, %290 : vector<8x1xf32>
    %c0_115 = arith.constant 0 : index
    %293 = arith.index_cast %c10_i32 : i32 to index
    %c0_116 = arith.constant 0 : index
    %c0_117 = arith.constant 0 : index
    %294 = vector.load %arg3[%c0_115, %293, %c0_116, %c0_117] : memref<1x32x8x1xf32, #tpu.memory_space<vmem>>, vector<1x1x8x1xf32>
    %295 = vector.shape_cast %294 : vector<1x1x8x1xf32> to vector<8x1xf32>
    %296 = arith.cmpf ole, %295, %292 : vector<8x1xf32>
    %297 = vector.shape_cast %296 : vector<8x1xi1> to vector<8x1xi1>
    %298 = vector.broadcast %297 : vector<8x1xi1> to vector<8x128xi1>
    %299 = arith.select %298, %284, %272 : vector<8x128xi1>, vector<8x128xf32>
    %300 = vector.shape_cast %296 : vector<8x1xi1> to vector<8x1xi1>
    %301 = vector.broadcast %300 : vector<8x1xi1> to vector<8x128xi1>
    %302 = arith.select %301, %286, %275 : vector<8x128xi1>, vector<8x128xf32>
    %303 = arith.select %296, %289, %276 : vector<8x1xi1>, vector<8x1xf32>
    %c11_i32 = arith.constant 11 : i32
    %cst_118 = arith.constant 0.00999999977 : f32
    %304 = vector.broadcast %cst_118 : f32 to vector<8x128xf32>
    %305 = arith.mulf %304, %302 : vector<8x128xf32>
    %306 = arith.subf %299, %305 : vector<8x128xf32>
    %c0_119 = arith.constant 0 : index
    %307 = arith.index_cast %c11_i32 : i32 to index
    %c0_120 = arith.constant 0 : index
    %c0_121 = arith.constant 0 : index
    %308 = vector.load %arg2[%c0_119, %307, %c0_120, %c0_121] : memref<1x32x8x128xbf16, #tpu.memory_space<vmem>>, vector<1x1x8x128xbf16>
    %309 = vector.shape_cast %308 : vector<1x1x8x128xbf16> to vector<8x128xbf16>
    %310 = arith.extf %309 : vector<8x128xbf16> to vector<8x128xf32>
    %311 = arith.addf %306, %310 : vector<8x128xf32>
    %312 = arith.truncf %311 : vector<8x128xf32> to vector<8x128xbf16>
    %cst_122 = arith.constant dense<0.000000e+00> : vector<8x128xf32>
    %313 = tpu.matmul %312, %0, %cst_122 {dimension_numbers = #tpu.dot_dimension_numbers<[1], [0], [0], [1], [0, 0, 1, 1], [], []>} : vector<8x128xbf16>, vector<128x128xbf16>, vector<8x128xf32> -> vector<8x128xf32>
    %314 = arith.mulf %313, %313 : vector<8x128xf32>
    %cst_123 = arith.constant dense<0.000000e+00> : vector<8xf32>
    %315 = vector.multi_reduction <add>, %314, %cst_123 [1] : vector<8x128xf32> to vector<8xf32>
    %316 = vector.shape_cast %315 : vector<8xf32> to vector<8x1xf32>
    %317 = arith.subf %316, %303 : vector<8x1xf32>
    %cst_124 = arith.constant -2.500000e-03 : f32
    %318 = vector.broadcast %cst_124 : f32 to vector<8x1xf32>
    %319 = arith.mulf %318, %317 : vector<8x1xf32>
    %c0_125 = arith.constant 0 : index
    %320 = arith.index_cast %c11_i32 : i32 to index
    %c0_126 = arith.constant 0 : index
    %c0_127 = arith.constant 0 : index
    %321 = vector.load %arg3[%c0_125, %320, %c0_126, %c0_127] : memref<1x32x8x1xf32, #tpu.memory_space<vmem>>, vector<1x1x8x1xf32>
    %322 = vector.shape_cast %321 : vector<1x1x8x1xf32> to vector<8x1xf32>
    %323 = arith.cmpf ole, %322, %319 : vector<8x1xf32>
    %324 = vector.shape_cast %323 : vector<8x1xi1> to vector<8x1xi1>
    %325 = vector.broadcast %324 : vector<8x1xi1> to vector<8x128xi1>
    %326 = arith.select %325, %311, %299 : vector<8x128xi1>, vector<8x128xf32>
    %327 = vector.shape_cast %323 : vector<8x1xi1> to vector<8x1xi1>
    %328 = vector.broadcast %327 : vector<8x1xi1> to vector<8x128xi1>
    %329 = arith.select %328, %313, %302 : vector<8x128xi1>, vector<8x128xf32>
    %330 = arith.select %323, %316, %303 : vector<8x1xi1>, vector<8x1xf32>
    %c12_i32 = arith.constant 12 : i32
    %cst_128 = arith.constant 0.00999999977 : f32
    %331 = vector.broadcast %cst_128 : f32 to vector<8x128xf32>
    %332 = arith.mulf %331, %329 : vector<8x128xf32>
    %333 = arith.subf %326, %332 : vector<8x128xf32>
    %c0_129 = arith.constant 0 : index
    %334 = arith.index_cast %c12_i32 : i32 to index
    %c0_130 = arith.constant 0 : index
    %c0_131 = arith.constant 0 : index
    %335 = vector.load %arg2[%c0_129, %334, %c0_130, %c0_131] : memref<1x32x8x128xbf16, #tpu.memory_space<vmem>>, vector<1x1x8x128xbf16>
    %336 = vector.shape_cast %335 : vector<1x1x8x128xbf16> to vector<8x128xbf16>
    %337 = arith.extf %336 : vector<8x128xbf16> to vector<8x128xf32>
    %338 = arith.addf %333, %337 : vector<8x128xf32>
    %339 = arith.truncf %338 : vector<8x128xf32> to vector<8x128xbf16>
    %cst_132 = arith.constant dense<0.000000e+00> : vector<8x128xf32>
    %340 = tpu.matmul %339, %0, %cst_132 {dimension_numbers = #tpu.dot_dimension_numbers<[1], [0], [0], [1], [0, 0, 1, 1], [], []>} : vector<8x128xbf16>, vector<128x128xbf16>, vector<8x128xf32> -> vector<8x128xf32>
    %341 = arith.mulf %340, %340 : vector<8x128xf32>
    %cst_133 = arith.constant dense<0.000000e+00> : vector<8xf32>
    %342 = vector.multi_reduction <add>, %341, %cst_133 [1] : vector<8x128xf32> to vector<8xf32>
    %343 = vector.shape_cast %342 : vector<8xf32> to vector<8x1xf32>
    %344 = arith.subf %343, %330 : vector<8x1xf32>
    %cst_134 = arith.constant -2.500000e-03 : f32
    %345 = vector.broadcast %cst_134 : f32 to vector<8x1xf32>
    %346 = arith.mulf %345, %344 : vector<8x1xf32>
    %c0_135 = arith.constant 0 : index
    %347 = arith.index_cast %c12_i32 : i32 to index
    %c0_136 = arith.constant 0 : index
    %c0_137 = arith.constant 0 : index
    %348 = vector.load %arg3[%c0_135, %347, %c0_136, %c0_137] : memref<1x32x8x1xf32, #tpu.memory_space<vmem>>, vector<1x1x8x1xf32>
    %349 = vector.shape_cast %348 : vector<1x1x8x1xf32> to vector<8x1xf32>
    %350 = arith.cmpf ole, %349, %346 : vector<8x1xf32>
    %351 = vector.shape_cast %350 : vector<8x1xi1> to vector<8x1xi1>
    %352 = vector.broadcast %351 : vector<8x1xi1> to vector<8x128xi1>
    %353 = arith.select %352, %338, %326 : vector<8x128xi1>, vector<8x128xf32>
    %354 = vector.shape_cast %350 : vector<8x1xi1> to vector<8x1xi1>
    %355 = vector.broadcast %354 : vector<8x1xi1> to vector<8x128xi1>
    %356 = arith.select %355, %340, %329 : vector<8x128xi1>, vector<8x128xf32>
    %357 = arith.select %350, %343, %330 : vector<8x1xi1>, vector<8x1xf32>
    %c13_i32 = arith.constant 13 : i32
    %cst_138 = arith.constant 0.00999999977 : f32
    %358 = vector.broadcast %cst_138 : f32 to vector<8x128xf32>
    %359 = arith.mulf %358, %356 : vector<8x128xf32>
    %360 = arith.subf %353, %359 : vector<8x128xf32>
    %c0_139 = arith.constant 0 : index
    %361 = arith.index_cast %c13_i32 : i32 to index
    %c0_140 = arith.constant 0 : index
    %c0_141 = arith.constant 0 : index
    %362 = vector.load %arg2[%c0_139, %361, %c0_140, %c0_141] : memref<1x32x8x128xbf16, #tpu.memory_space<vmem>>, vector<1x1x8x128xbf16>
    %363 = vector.shape_cast %362 : vector<1x1x8x128xbf16> to vector<8x128xbf16>
    %364 = arith.extf %363 : vector<8x128xbf16> to vector<8x128xf32>
    %365 = arith.addf %360, %364 : vector<8x128xf32>
    %366 = arith.truncf %365 : vector<8x128xf32> to vector<8x128xbf16>
    %cst_142 = arith.constant dense<0.000000e+00> : vector<8x128xf32>
    %367 = tpu.matmul %366, %0, %cst_142 {dimension_numbers = #tpu.dot_dimension_numbers<[1], [0], [0], [1], [0, 0, 1, 1], [], []>} : vector<8x128xbf16>, vector<128x128xbf16>, vector<8x128xf32> -> vector<8x128xf32>
    %368 = arith.mulf %367, %367 : vector<8x128xf32>
    %cst_143 = arith.constant dense<0.000000e+00> : vector<8xf32>
    %369 = vector.multi_reduction <add>, %368, %cst_143 [1] : vector<8x128xf32> to vector<8xf32>
    %370 = vector.shape_cast %369 : vector<8xf32> to vector<8x1xf32>
    %371 = arith.subf %370, %357 : vector<8x1xf32>
    %cst_144 = arith.constant -2.500000e-03 : f32
    %372 = vector.broadcast %cst_144 : f32 to vector<8x1xf32>
    %373 = arith.mulf %372, %371 : vector<8x1xf32>
    %c0_145 = arith.constant 0 : index
    %374 = arith.index_cast %c13_i32 : i32 to index
    %c0_146 = arith.constant 0 : index
    %c0_147 = arith.constant 0 : index
    %375 = vector.load %arg3[%c0_145, %374, %c0_146, %c0_147] : memref<1x32x8x1xf32, #tpu.memory_space<vmem>>, vector<1x1x8x1xf32>
    %376 = vector.shape_cast %375 : vector<1x1x8x1xf32> to vector<8x1xf32>
    %377 = arith.cmpf ole, %376, %373 : vector<8x1xf32>
    %378 = vector.shape_cast %377 : vector<8x1xi1> to vector<8x1xi1>
    %379 = vector.broadcast %378 : vector<8x1xi1> to vector<8x128xi1>
    %380 = arith.select %379, %365, %353 : vector<8x128xi1>, vector<8x128xf32>
    %381 = vector.shape_cast %377 : vector<8x1xi1> to vector<8x1xi1>
    %382 = vector.broadcast %381 : vector<8x1xi1> to vector<8x128xi1>
    %383 = arith.select %382, %367, %356 : vector<8x128xi1>, vector<8x128xf32>
    %384 = arith.select %377, %370, %357 : vector<8x1xi1>, vector<8x1xf32>
    %c14_i32 = arith.constant 14 : i32
    %cst_148 = arith.constant 0.00999999977 : f32
    %385 = vector.broadcast %cst_148 : f32 to vector<8x128xf32>
    %386 = arith.mulf %385, %383 : vector<8x128xf32>
    %387 = arith.subf %380, %386 : vector<8x128xf32>
    %c0_149 = arith.constant 0 : index
    %388 = arith.index_cast %c14_i32 : i32 to index
    %c0_150 = arith.constant 0 : index
    %c0_151 = arith.constant 0 : index
    %389 = vector.load %arg2[%c0_149, %388, %c0_150, %c0_151] : memref<1x32x8x128xbf16, #tpu.memory_space<vmem>>, vector<1x1x8x128xbf16>
    %390 = vector.shape_cast %389 : vector<1x1x8x128xbf16> to vector<8x128xbf16>
    %391 = arith.extf %390 : vector<8x128xbf16> to vector<8x128xf32>
    %392 = arith.addf %387, %391 : vector<8x128xf32>
    %393 = arith.truncf %392 : vector<8x128xf32> to vector<8x128xbf16>
    %cst_152 = arith.constant dense<0.000000e+00> : vector<8x128xf32>
    %394 = tpu.matmul %393, %0, %cst_152 {dimension_numbers = #tpu.dot_dimension_numbers<[1], [0], [0], [1], [0, 0, 1, 1], [], []>} : vector<8x128xbf16>, vector<128x128xbf16>, vector<8x128xf32> -> vector<8x128xf32>
    %395 = arith.mulf %394, %394 : vector<8x128xf32>
    %cst_153 = arith.constant dense<0.000000e+00> : vector<8xf32>
    %396 = vector.multi_reduction <add>, %395, %cst_153 [1] : vector<8x128xf32> to vector<8xf32>
    %397 = vector.shape_cast %396 : vector<8xf32> to vector<8x1xf32>
    %398 = arith.subf %397, %384 : vector<8x1xf32>
    %cst_154 = arith.constant -2.500000e-03 : f32
    %399 = vector.broadcast %cst_154 : f32 to vector<8x1xf32>
    %400 = arith.mulf %399, %398 : vector<8x1xf32>
    %c0_155 = arith.constant 0 : index
    %401 = arith.index_cast %c14_i32 : i32 to index
    %c0_156 = arith.constant 0 : index
    %c0_157 = arith.constant 0 : index
    %402 = vector.load %arg3[%c0_155, %401, %c0_156, %c0_157] : memref<1x32x8x1xf32, #tpu.memory_space<vmem>>, vector<1x1x8x1xf32>
    %403 = vector.shape_cast %402 : vector<1x1x8x1xf32> to vector<8x1xf32>
    %404 = arith.cmpf ole, %403, %400 : vector<8x1xf32>
    %405 = vector.shape_cast %404 : vector<8x1xi1> to vector<8x1xi1>
    %406 = vector.broadcast %405 : vector<8x1xi1> to vector<8x128xi1>
    %407 = arith.select %406, %392, %380 : vector<8x128xi1>, vector<8x128xf32>
    %408 = vector.shape_cast %404 : vector<8x1xi1> to vector<8x1xi1>
    %409 = vector.broadcast %408 : vector<8x1xi1> to vector<8x128xi1>
    %410 = arith.select %409, %394, %383 : vector<8x128xi1>, vector<8x128xf32>
    %411 = arith.select %404, %397, %384 : vector<8x1xi1>, vector<8x1xf32>
    %c15_i32 = arith.constant 15 : i32
    %cst_158 = arith.constant 0.00999999977 : f32
    %412 = vector.broadcast %cst_158 : f32 to vector<8x128xf32>
    %413 = arith.mulf %412, %410 : vector<8x128xf32>
    %414 = arith.subf %407, %413 : vector<8x128xf32>
    %c0_159 = arith.constant 0 : index
    %415 = arith.index_cast %c15_i32 : i32 to index
    %c0_160 = arith.constant 0 : index
    %c0_161 = arith.constant 0 : index
    %416 = vector.load %arg2[%c0_159, %415, %c0_160, %c0_161] : memref<1x32x8x128xbf16, #tpu.memory_space<vmem>>, vector<1x1x8x128xbf16>
    %417 = vector.shape_cast %416 : vector<1x1x8x128xbf16> to vector<8x128xbf16>
    %418 = arith.extf %417 : vector<8x128xbf16> to vector<8x128xf32>
    %419 = arith.addf %414, %418 : vector<8x128xf32>
    %420 = arith.truncf %419 : vector<8x128xf32> to vector<8x128xbf16>
    %cst_162 = arith.constant dense<0.000000e+00> : vector<8x128xf32>
    %421 = tpu.matmul %420, %0, %cst_162 {dimension_numbers = #tpu.dot_dimension_numbers<[1], [0], [0], [1], [0, 0, 1, 1], [], []>} : vector<8x128xbf16>, vector<128x128xbf16>, vector<8x128xf32> -> vector<8x128xf32>
    %422 = arith.mulf %421, %421 : vector<8x128xf32>
    %cst_163 = arith.constant dense<0.000000e+00> : vector<8xf32>
    %423 = vector.multi_reduction <add>, %422, %cst_163 [1] : vector<8x128xf32> to vector<8xf32>
    %424 = vector.shape_cast %423 : vector<8xf32> to vector<8x1xf32>
    %425 = arith.subf %424, %411 : vector<8x1xf32>
    %cst_164 = arith.constant -2.500000e-03 : f32
    %426 = vector.broadcast %cst_164 : f32 to vector<8x1xf32>
    %427 = arith.mulf %426, %425 : vector<8x1xf32>
    %c0_165 = arith.constant 0 : index
    %428 = arith.index_cast %c15_i32 : i32 to index
    %c0_166 = arith.constant 0 : index
    %c0_167 = arith.constant 0 : index
    %429 = vector.load %arg3[%c0_165, %428, %c0_166, %c0_167] : memref<1x32x8x1xf32, #tpu.memory_space<vmem>>, vector<1x1x8x1xf32>
    %430 = vector.shape_cast %429 : vector<1x1x8x1xf32> to vector<8x1xf32>
    %431 = arith.cmpf ole, %430, %427 : vector<8x1xf32>
    %432 = vector.shape_cast %431 : vector<8x1xi1> to vector<8x1xi1>
    %433 = vector.broadcast %432 : vector<8x1xi1> to vector<8x128xi1>
    %434 = arith.select %433, %419, %407 : vector<8x128xi1>, vector<8x128xf32>
    %435 = vector.shape_cast %431 : vector<8x1xi1> to vector<8x1xi1>
    %436 = vector.broadcast %435 : vector<8x1xi1> to vector<8x128xi1>
    %437 = arith.select %436, %421, %410 : vector<8x128xi1>, vector<8x128xf32>
    %438 = arith.select %431, %424, %411 : vector<8x1xi1>, vector<8x1xf32>
    %c16_i32 = arith.constant 16 : i32
    %cst_168 = arith.constant 0.00999999977 : f32
    %439 = vector.broadcast %cst_168 : f32 to vector<8x128xf32>
    %440 = arith.mulf %439, %437 : vector<8x128xf32>
    %441 = arith.subf %434, %440 : vector<8x128xf32>
    %c0_169 = arith.constant 0 : index
    %442 = arith.index_cast %c16_i32 : i32 to index
    %c0_170 = arith.constant 0 : index
    %c0_171 = arith.constant 0 : index
    %443 = vector.load %arg2[%c0_169, %442, %c0_170, %c0_171] : memref<1x32x8x128xbf16, #tpu.memory_space<vmem>>, vector<1x1x8x128xbf16>
    %444 = vector.shape_cast %443 : vector<1x1x8x128xbf16> to vector<8x128xbf16>
    %445 = arith.extf %444 : vector<8x128xbf16> to vector<8x128xf32>
    %446 = arith.addf %441, %445 : vector<8x128xf32>
    %447 = arith.truncf %446 : vector<8x128xf32> to vector<8x128xbf16>
    %cst_172 = arith.constant dense<0.000000e+00> : vector<8x128xf32>
    %448 = tpu.matmul %447, %0, %cst_172 {dimension_numbers = #tpu.dot_dimension_numbers<[1], [0], [0], [1], [0, 0, 1, 1], [], []>} : vector<8x128xbf16>, vector<128x128xbf16>, vector<8x128xf32> -> vector<8x128xf32>
    %449 = arith.mulf %448, %448 : vector<8x128xf32>
    %cst_173 = arith.constant dense<0.000000e+00> : vector<8xf32>
    %450 = vector.multi_reduction <add>, %449, %cst_173 [1] : vector<8x128xf32> to vector<8xf32>
    %451 = vector.shape_cast %450 : vector<8xf32> to vector<8x1xf32>
    %452 = arith.subf %451, %438 : vector<8x1xf32>
    %cst_174 = arith.constant -2.500000e-03 : f32
    %453 = vector.broadcast %cst_174 : f32 to vector<8x1xf32>
    %454 = arith.mulf %453, %452 : vector<8x1xf32>
    %c0_175 = arith.constant 0 : index
    %455 = arith.index_cast %c16_i32 : i32 to index
    %c0_176 = arith.constant 0 : index
    %c0_177 = arith.constant 0 : index
    %456 = vector.load %arg3[%c0_175, %455, %c0_176, %c0_177] : memref<1x32x8x1xf32, #tpu.memory_space<vmem>>, vector<1x1x8x1xf32>
    %457 = vector.shape_cast %456 : vector<1x1x8x1xf32> to vector<8x1xf32>
    %458 = arith.cmpf ole, %457, %454 : vector<8x1xf32>
    %459 = vector.shape_cast %458 : vector<8x1xi1> to vector<8x1xi1>
    %460 = vector.broadcast %459 : vector<8x1xi1> to vector<8x128xi1>
    %461 = arith.select %460, %446, %434 : vector<8x128xi1>, vector<8x128xf32>
    %462 = vector.shape_cast %458 : vector<8x1xi1> to vector<8x1xi1>
    %463 = vector.broadcast %462 : vector<8x1xi1> to vector<8x128xi1>
    %464 = arith.select %463, %448, %437 : vector<8x128xi1>, vector<8x128xf32>
    %465 = arith.select %458, %451, %438 : vector<8x1xi1>, vector<8x1xf32>
    %c17_i32 = arith.constant 17 : i32
    %cst_178 = arith.constant 0.00999999977 : f32
    %466 = vector.broadcast %cst_178 : f32 to vector<8x128xf32>
    %467 = arith.mulf %466, %464 : vector<8x128xf32>
    %468 = arith.subf %461, %467 : vector<8x128xf32>
    %c0_179 = arith.constant 0 : index
    %469 = arith.index_cast %c17_i32 : i32 to index
    %c0_180 = arith.constant 0 : index
    %c0_181 = arith.constant 0 : index
    %470 = vector.load %arg2[%c0_179, %469, %c0_180, %c0_181] : memref<1x32x8x128xbf16, #tpu.memory_space<vmem>>, vector<1x1x8x128xbf16>
    %471 = vector.shape_cast %470 : vector<1x1x8x128xbf16> to vector<8x128xbf16>
    %472 = arith.extf %471 : vector<8x128xbf16> to vector<8x128xf32>
    %473 = arith.addf %468, %472 : vector<8x128xf32>
    %474 = arith.truncf %473 : vector<8x128xf32> to vector<8x128xbf16>
    %cst_182 = arith.constant dense<0.000000e+00> : vector<8x128xf32>
    %475 = tpu.matmul %474, %0, %cst_182 {dimension_numbers = #tpu.dot_dimension_numbers<[1], [0], [0], [1], [0, 0, 1, 1], [], []>} : vector<8x128xbf16>, vector<128x128xbf16>, vector<8x128xf32> -> vector<8x128xf32>
    %476 = arith.mulf %475, %475 : vector<8x128xf32>
    %cst_183 = arith.constant dense<0.000000e+00> : vector<8xf32>
    %477 = vector.multi_reduction <add>, %476, %cst_183 [1] : vector<8x128xf32> to vector<8xf32>
    %478 = vector.shape_cast %477 : vector<8xf32> to vector<8x1xf32>
    %479 = arith.subf %478, %465 : vector<8x1xf32>
    %cst_184 = arith.constant -2.500000e-03 : f32
    %480 = vector.broadcast %cst_184 : f32 to vector<8x1xf32>
    %481 = arith.mulf %480, %479 : vector<8x1xf32>
    %c0_185 = arith.constant 0 : index
    %482 = arith.index_cast %c17_i32 : i32 to index
    %c0_186 = arith.constant 0 : index
    %c0_187 = arith.constant 0 : index
    %483 = vector.load %arg3[%c0_185, %482, %c0_186, %c0_187] : memref<1x32x8x1xf32, #tpu.memory_space<vmem>>, vector<1x1x8x1xf32>
    %484 = vector.shape_cast %483 : vector<1x1x8x1xf32> to vector<8x1xf32>
    %485 = arith.cmpf ole, %484, %481 : vector<8x1xf32>
    %486 = vector.shape_cast %485 : vector<8x1xi1> to vector<8x1xi1>
    %487 = vector.broadcast %486 : vector<8x1xi1> to vector<8x128xi1>
    %488 = arith.select %487, %473, %461 : vector<8x128xi1>, vector<8x128xf32>
    %489 = vector.shape_cast %485 : vector<8x1xi1> to vector<8x1xi1>
    %490 = vector.broadcast %489 : vector<8x1xi1> to vector<8x128xi1>
    %491 = arith.select %490, %475, %464 : vector<8x128xi1>, vector<8x128xf32>
    %492 = arith.select %485, %478, %465 : vector<8x1xi1>, vector<8x1xf32>
    %c18_i32 = arith.constant 18 : i32
    %cst_188 = arith.constant 0.00999999977 : f32
    %493 = vector.broadcast %cst_188 : f32 to vector<8x128xf32>
    %494 = arith.mulf %493, %491 : vector<8x128xf32>
    %495 = arith.subf %488, %494 : vector<8x128xf32>
    %c0_189 = arith.constant 0 : index
    %496 = arith.index_cast %c18_i32 : i32 to index
    %c0_190 = arith.constant 0 : index
    %c0_191 = arith.constant 0 : index
    %497 = vector.load %arg2[%c0_189, %496, %c0_190, %c0_191] : memref<1x32x8x128xbf16, #tpu.memory_space<vmem>>, vector<1x1x8x128xbf16>
    %498 = vector.shape_cast %497 : vector<1x1x8x128xbf16> to vector<8x128xbf16>
    %499 = arith.extf %498 : vector<8x128xbf16> to vector<8x128xf32>
    %500 = arith.addf %495, %499 : vector<8x128xf32>
    %501 = arith.truncf %500 : vector<8x128xf32> to vector<8x128xbf16>
    %cst_192 = arith.constant dense<0.000000e+00> : vector<8x128xf32>
    %502 = tpu.matmul %501, %0, %cst_192 {dimension_numbers = #tpu.dot_dimension_numbers<[1], [0], [0], [1], [0, 0, 1, 1], [], []>} : vector<8x128xbf16>, vector<128x128xbf16>, vector<8x128xf32> -> vector<8x128xf32>
    %503 = arith.mulf %502, %502 : vector<8x128xf32>
    %cst_193 = arith.constant dense<0.000000e+00> : vector<8xf32>
    %504 = vector.multi_reduction <add>, %503, %cst_193 [1] : vector<8x128xf32> to vector<8xf32>
    %505 = vector.shape_cast %504 : vector<8xf32> to vector<8x1xf32>
    %506 = arith.subf %505, %492 : vector<8x1xf32>
    %cst_194 = arith.constant -2.500000e-03 : f32
    %507 = vector.broadcast %cst_194 : f32 to vector<8x1xf32>
    %508 = arith.mulf %507, %506 : vector<8x1xf32>
    %c0_195 = arith.constant 0 : index
    %509 = arith.index_cast %c18_i32 : i32 to index
    %c0_196 = arith.constant 0 : index
    %c0_197 = arith.constant 0 : index
    %510 = vector.load %arg3[%c0_195, %509, %c0_196, %c0_197] : memref<1x32x8x1xf32, #tpu.memory_space<vmem>>, vector<1x1x8x1xf32>
    %511 = vector.shape_cast %510 : vector<1x1x8x1xf32> to vector<8x1xf32>
    %512 = arith.cmpf ole, %511, %508 : vector<8x1xf32>
    %513 = vector.shape_cast %512 : vector<8x1xi1> to vector<8x1xi1>
    %514 = vector.broadcast %513 : vector<8x1xi1> to vector<8x128xi1>
    %515 = arith.select %514, %500, %488 : vector<8x128xi1>, vector<8x128xf32>
    %516 = vector.shape_cast %512 : vector<8x1xi1> to vector<8x1xi1>
    %517 = vector.broadcast %516 : vector<8x1xi1> to vector<8x128xi1>
    %518 = arith.select %517, %502, %491 : vector<8x128xi1>, vector<8x128xf32>
    %519 = arith.select %512, %505, %492 : vector<8x1xi1>, vector<8x1xf32>
    %c19_i32 = arith.constant 19 : i32
    %cst_198 = arith.constant 0.00999999977 : f32
    %520 = vector.broadcast %cst_198 : f32 to vector<8x128xf32>
    %521 = arith.mulf %520, %518 : vector<8x128xf32>
    %522 = arith.subf %515, %521 : vector<8x128xf32>
    %c0_199 = arith.constant 0 : index
    %523 = arith.index_cast %c19_i32 : i32 to index
    %c0_200 = arith.constant 0 : index
    %c0_201 = arith.constant 0 : index
    %524 = vector.load %arg2[%c0_199, %523, %c0_200, %c0_201] : memref<1x32x8x128xbf16, #tpu.memory_space<vmem>>, vector<1x1x8x128xbf16>
    %525 = vector.shape_cast %524 : vector<1x1x8x128xbf16> to vector<8x128xbf16>
    %526 = arith.extf %525 : vector<8x128xbf16> to vector<8x128xf32>
    %527 = arith.addf %522, %526 : vector<8x128xf32>
    %528 = arith.truncf %527 : vector<8x128xf32> to vector<8x128xbf16>
    %cst_202 = arith.constant dense<0.000000e+00> : vector<8x128xf32>
    %529 = tpu.matmul %528, %0, %cst_202 {dimension_numbers = #tpu.dot_dimension_numbers<[1], [0], [0], [1], [0, 0, 1, 1], [], []>} : vector<8x128xbf16>, vector<128x128xbf16>, vector<8x128xf32> -> vector<8x128xf32>
    %530 = arith.mulf %529, %529 : vector<8x128xf32>
    %cst_203 = arith.constant dense<0.000000e+00> : vector<8xf32>
    %531 = vector.multi_reduction <add>, %530, %cst_203 [1] : vector<8x128xf32> to vector<8xf32>
    %532 = vector.shape_cast %531 : vector<8xf32> to vector<8x1xf32>
    %533 = arith.subf %532, %519 : vector<8x1xf32>
    %cst_204 = arith.constant -2.500000e-03 : f32
    %534 = vector.broadcast %cst_204 : f32 to vector<8x1xf32>
    %535 = arith.mulf %534, %533 : vector<8x1xf32>
    %c0_205 = arith.constant 0 : index
    %536 = arith.index_cast %c19_i32 : i32 to index
    %c0_206 = arith.constant 0 : index
    %c0_207 = arith.constant 0 : index
    %537 = vector.load %arg3[%c0_205, %536, %c0_206, %c0_207] : memref<1x32x8x1xf32, #tpu.memory_space<vmem>>, vector<1x1x8x1xf32>
    %538 = vector.shape_cast %537 : vector<1x1x8x1xf32> to vector<8x1xf32>
    %539 = arith.cmpf ole, %538, %535 : vector<8x1xf32>
    %540 = vector.shape_cast %539 : vector<8x1xi1> to vector<8x1xi1>
    %541 = vector.broadcast %540 : vector<8x1xi1> to vector<8x128xi1>
    %542 = arith.select %541, %527, %515 : vector<8x128xi1>, vector<8x128xf32>
    %543 = vector.shape_cast %539 : vector<8x1xi1> to vector<8x1xi1>
    %544 = vector.broadcast %543 : vector<8x1xi1> to vector<8x128xi1>
    %545 = arith.select %544, %529, %518 : vector<8x128xi1>, vector<8x128xf32>
    %546 = arith.select %539, %532, %519 : vector<8x1xi1>, vector<8x1xf32>
    %c20_i32 = arith.constant 20 : i32
    %cst_208 = arith.constant 0.00999999977 : f32
    %547 = vector.broadcast %cst_208 : f32 to vector<8x128xf32>
    %548 = arith.mulf %547, %545 : vector<8x128xf32>
    %549 = arith.subf %542, %548 : vector<8x128xf32>
    %c0_209 = arith.constant 0 : index
    %550 = arith.index_cast %c20_i32 : i32 to index
    %c0_210 = arith.constant 0 : index
    %c0_211 = arith.constant 0 : index
    %551 = vector.load %arg2[%c0_209, %550, %c0_210, %c0_211] : memref<1x32x8x128xbf16, #tpu.memory_space<vmem>>, vector<1x1x8x128xbf16>
    %552 = vector.shape_cast %551 : vector<1x1x8x128xbf16> to vector<8x128xbf16>
    %553 = arith.extf %552 : vector<8x128xbf16> to vector<8x128xf32>
    %554 = arith.addf %549, %553 : vector<8x128xf32>
    %555 = arith.truncf %554 : vector<8x128xf32> to vector<8x128xbf16>
    %cst_212 = arith.constant dense<0.000000e+00> : vector<8x128xf32>
    %556 = tpu.matmul %555, %0, %cst_212 {dimension_numbers = #tpu.dot_dimension_numbers<[1], [0], [0], [1], [0, 0, 1, 1], [], []>} : vector<8x128xbf16>, vector<128x128xbf16>, vector<8x128xf32> -> vector<8x128xf32>
    %557 = arith.mulf %556, %556 : vector<8x128xf32>
    %cst_213 = arith.constant dense<0.000000e+00> : vector<8xf32>
    %558 = vector.multi_reduction <add>, %557, %cst_213 [1] : vector<8x128xf32> to vector<8xf32>
    %559 = vector.shape_cast %558 : vector<8xf32> to vector<8x1xf32>
    %560 = arith.subf %559, %546 : vector<8x1xf32>
    %cst_214 = arith.constant -2.500000e-03 : f32
    %561 = vector.broadcast %cst_214 : f32 to vector<8x1xf32>
    %562 = arith.mulf %561, %560 : vector<8x1xf32>
    %c0_215 = arith.constant 0 : index
    %563 = arith.index_cast %c20_i32 : i32 to index
    %c0_216 = arith.constant 0 : index
    %c0_217 = arith.constant 0 : index
    %564 = vector.load %arg3[%c0_215, %563, %c0_216, %c0_217] : memref<1x32x8x1xf32, #tpu.memory_space<vmem>>, vector<1x1x8x1xf32>
    %565 = vector.shape_cast %564 : vector<1x1x8x1xf32> to vector<8x1xf32>
    %566 = arith.cmpf ole, %565, %562 : vector<8x1xf32>
    %567 = vector.shape_cast %566 : vector<8x1xi1> to vector<8x1xi1>
    %568 = vector.broadcast %567 : vector<8x1xi1> to vector<8x128xi1>
    %569 = arith.select %568, %554, %542 : vector<8x128xi1>, vector<8x128xf32>
    %570 = vector.shape_cast %566 : vector<8x1xi1> to vector<8x1xi1>
    %571 = vector.broadcast %570 : vector<8x1xi1> to vector<8x128xi1>
    %572 = arith.select %571, %556, %545 : vector<8x128xi1>, vector<8x128xf32>
    %573 = arith.select %566, %559, %546 : vector<8x1xi1>, vector<8x1xf32>
    %c21_i32 = arith.constant 21 : i32
    %cst_218 = arith.constant 0.00999999977 : f32
    %574 = vector.broadcast %cst_218 : f32 to vector<8x128xf32>
    %575 = arith.mulf %574, %572 : vector<8x128xf32>
    %576 = arith.subf %569, %575 : vector<8x128xf32>
    %c0_219 = arith.constant 0 : index
    %577 = arith.index_cast %c21_i32 : i32 to index
    %c0_220 = arith.constant 0 : index
    %c0_221 = arith.constant 0 : index
    %578 = vector.load %arg2[%c0_219, %577, %c0_220, %c0_221] : memref<1x32x8x128xbf16, #tpu.memory_space<vmem>>, vector<1x1x8x128xbf16>
    %579 = vector.shape_cast %578 : vector<1x1x8x128xbf16> to vector<8x128xbf16>
    %580 = arith.extf %579 : vector<8x128xbf16> to vector<8x128xf32>
    %581 = arith.addf %576, %580 : vector<8x128xf32>
    %582 = arith.truncf %581 : vector<8x128xf32> to vector<8x128xbf16>
    %cst_222 = arith.constant dense<0.000000e+00> : vector<8x128xf32>
    %583 = tpu.matmul %582, %0, %cst_222 {dimension_numbers = #tpu.dot_dimension_numbers<[1], [0], [0], [1], [0, 0, 1, 1], [], []>} : vector<8x128xbf16>, vector<128x128xbf16>, vector<8x128xf32> -> vector<8x128xf32>
    %584 = arith.mulf %583, %583 : vector<8x128xf32>
    %cst_223 = arith.constant dense<0.000000e+00> : vector<8xf32>
    %585 = vector.multi_reduction <add>, %584, %cst_223 [1] : vector<8x128xf32> to vector<8xf32>
    %586 = vector.shape_cast %585 : vector<8xf32> to vector<8x1xf32>
    %587 = arith.subf %586, %573 : vector<8x1xf32>
    %cst_224 = arith.constant -2.500000e-03 : f32
    %588 = vector.broadcast %cst_224 : f32 to vector<8x1xf32>
    %589 = arith.mulf %588, %587 : vector<8x1xf32>
    %c0_225 = arith.constant 0 : index
    %590 = arith.index_cast %c21_i32 : i32 to index
    %c0_226 = arith.constant 0 : index
    %c0_227 = arith.constant 0 : index
    %591 = vector.load %arg3[%c0_225, %590, %c0_226, %c0_227] : memref<1x32x8x1xf32, #tpu.memory_space<vmem>>, vector<1x1x8x1xf32>
    %592 = vector.shape_cast %591 : vector<1x1x8x1xf32> to vector<8x1xf32>
    %593 = arith.cmpf ole, %592, %589 : vector<8x1xf32>
    %594 = vector.shape_cast %593 : vector<8x1xi1> to vector<8x1xi1>
    %595 = vector.broadcast %594 : vector<8x1xi1> to vector<8x128xi1>
    %596 = arith.select %595, %581, %569 : vector<8x128xi1>, vector<8x128xf32>
    %597 = vector.shape_cast %593 : vector<8x1xi1> to vector<8x1xi1>
    %598 = vector.broadcast %597 : vector<8x1xi1> to vector<8x128xi1>
    %599 = arith.select %598, %583, %572 : vector<8x128xi1>, vector<8x128xf32>
    %600 = arith.select %593, %586, %573 : vector<8x1xi1>, vector<8x1xf32>
    %c22_i32 = arith.constant 22 : i32
    %cst_228 = arith.constant 0.00999999977 : f32
    %601 = vector.broadcast %cst_228 : f32 to vector<8x128xf32>
    %602 = arith.mulf %601, %599 : vector<8x128xf32>
    %603 = arith.subf %596, %602 : vector<8x128xf32>
    %c0_229 = arith.constant 0 : index
    %604 = arith.index_cast %c22_i32 : i32 to index
    %c0_230 = arith.constant 0 : index
    %c0_231 = arith.constant 0 : index
    %605 = vector.load %arg2[%c0_229, %604, %c0_230, %c0_231] : memref<1x32x8x128xbf16, #tpu.memory_space<vmem>>, vector<1x1x8x128xbf16>
    %606 = vector.shape_cast %605 : vector<1x1x8x128xbf16> to vector<8x128xbf16>
    %607 = arith.extf %606 : vector<8x128xbf16> to vector<8x128xf32>
    %608 = arith.addf %603, %607 : vector<8x128xf32>
    %609 = arith.truncf %608 : vector<8x128xf32> to vector<8x128xbf16>
    %cst_232 = arith.constant dense<0.000000e+00> : vector<8x128xf32>
    %610 = tpu.matmul %609, %0, %cst_232 {dimension_numbers = #tpu.dot_dimension_numbers<[1], [0], [0], [1], [0, 0, 1, 1], [], []>} : vector<8x128xbf16>, vector<128x128xbf16>, vector<8x128xf32> -> vector<8x128xf32>
    %611 = arith.mulf %610, %610 : vector<8x128xf32>
    %cst_233 = arith.constant dense<0.000000e+00> : vector<8xf32>
    %612 = vector.multi_reduction <add>, %611, %cst_233 [1] : vector<8x128xf32> to vector<8xf32>
    %613 = vector.shape_cast %612 : vector<8xf32> to vector<8x1xf32>
    %614 = arith.subf %613, %600 : vector<8x1xf32>
    %cst_234 = arith.constant -2.500000e-03 : f32
    %615 = vector.broadcast %cst_234 : f32 to vector<8x1xf32>
    %616 = arith.mulf %615, %614 : vector<8x1xf32>
    %c0_235 = arith.constant 0 : index
    %617 = arith.index_cast %c22_i32 : i32 to index
    %c0_236 = arith.constant 0 : index
    %c0_237 = arith.constant 0 : index
    %618 = vector.load %arg3[%c0_235, %617, %c0_236, %c0_237] : memref<1x32x8x1xf32, #tpu.memory_space<vmem>>, vector<1x1x8x1xf32>
    %619 = vector.shape_cast %618 : vector<1x1x8x1xf32> to vector<8x1xf32>
    %620 = arith.cmpf ole, %619, %616 : vector<8x1xf32>
    %621 = vector.shape_cast %620 : vector<8x1xi1> to vector<8x1xi1>
    %622 = vector.broadcast %621 : vector<8x1xi1> to vector<8x128xi1>
    %623 = arith.select %622, %608, %596 : vector<8x128xi1>, vector<8x128xf32>
    %624 = vector.shape_cast %620 : vector<8x1xi1> to vector<8x1xi1>
    %625 = vector.broadcast %624 : vector<8x1xi1> to vector<8x128xi1>
    %626 = arith.select %625, %610, %599 : vector<8x128xi1>, vector<8x128xf32>
    %627 = arith.select %620, %613, %600 : vector<8x1xi1>, vector<8x1xf32>
    %c23_i32 = arith.constant 23 : i32
    %cst_238 = arith.constant 0.00999999977 : f32
    %628 = vector.broadcast %cst_238 : f32 to vector<8x128xf32>
    %629 = arith.mulf %628, %626 : vector<8x128xf32>
    %630 = arith.subf %623, %629 : vector<8x128xf32>
    %c0_239 = arith.constant 0 : index
    %631 = arith.index_cast %c23_i32 : i32 to index
    %c0_240 = arith.constant 0 : index
    %c0_241 = arith.constant 0 : index
    %632 = vector.load %arg2[%c0_239, %631, %c0_240, %c0_241] : memref<1x32x8x128xbf16, #tpu.memory_space<vmem>>, vector<1x1x8x128xbf16>
    %633 = vector.shape_cast %632 : vector<1x1x8x128xbf16> to vector<8x128xbf16>
    %634 = arith.extf %633 : vector<8x128xbf16> to vector<8x128xf32>
    %635 = arith.addf %630, %634 : vector<8x128xf32>
    %636 = arith.truncf %635 : vector<8x128xf32> to vector<8x128xbf16>
    %cst_242 = arith.constant dense<0.000000e+00> : vector<8x128xf32>
    %637 = tpu.matmul %636, %0, %cst_242 {dimension_numbers = #tpu.dot_dimension_numbers<[1], [0], [0], [1], [0, 0, 1, 1], [], []>} : vector<8x128xbf16>, vector<128x128xbf16>, vector<8x128xf32> -> vector<8x128xf32>
    %638 = arith.mulf %637, %637 : vector<8x128xf32>
    %cst_243 = arith.constant dense<0.000000e+00> : vector<8xf32>
    %639 = vector.multi_reduction <add>, %638, %cst_243 [1] : vector<8x128xf32> to vector<8xf32>
    %640 = vector.shape_cast %639 : vector<8xf32> to vector<8x1xf32>
    %641 = arith.subf %640, %627 : vector<8x1xf32>
    %cst_244 = arith.constant -2.500000e-03 : f32
    %642 = vector.broadcast %cst_244 : f32 to vector<8x1xf32>
    %643 = arith.mulf %642, %641 : vector<8x1xf32>
    %c0_245 = arith.constant 0 : index
    %644 = arith.index_cast %c23_i32 : i32 to index
    %c0_246 = arith.constant 0 : index
    %c0_247 = arith.constant 0 : index
    %645 = vector.load %arg3[%c0_245, %644, %c0_246, %c0_247] : memref<1x32x8x1xf32, #tpu.memory_space<vmem>>, vector<1x1x8x1xf32>
    %646 = vector.shape_cast %645 : vector<1x1x8x1xf32> to vector<8x1xf32>
    %647 = arith.cmpf ole, %646, %643 : vector<8x1xf32>
    %648 = vector.shape_cast %647 : vector<8x1xi1> to vector<8x1xi1>
    %649 = vector.broadcast %648 : vector<8x1xi1> to vector<8x128xi1>
    %650 = arith.select %649, %635, %623 : vector<8x128xi1>, vector<8x128xf32>
    %651 = vector.shape_cast %647 : vector<8x1xi1> to vector<8x1xi1>
    %652 = vector.broadcast %651 : vector<8x1xi1> to vector<8x128xi1>
    %653 = arith.select %652, %637, %626 : vector<8x128xi1>, vector<8x128xf32>
    %654 = arith.select %647, %640, %627 : vector<8x1xi1>, vector<8x1xf32>
    %c24_i32 = arith.constant 24 : i32
    %cst_248 = arith.constant 0.00999999977 : f32
    %655 = vector.broadcast %cst_248 : f32 to vector<8x128xf32>
    %656 = arith.mulf %655, %653 : vector<8x128xf32>
    %657 = arith.subf %650, %656 : vector<8x128xf32>
    %c0_249 = arith.constant 0 : index
    %658 = arith.index_cast %c24_i32 : i32 to index
    %c0_250 = arith.constant 0 : index
    %c0_251 = arith.constant 0 : index
    %659 = vector.load %arg2[%c0_249, %658, %c0_250, %c0_251] : memref<1x32x8x128xbf16, #tpu.memory_space<vmem>>, vector<1x1x8x128xbf16>
    %660 = vector.shape_cast %659 : vector<1x1x8x128xbf16> to vector<8x128xbf16>
    %661 = arith.extf %660 : vector<8x128xbf16> to vector<8x128xf32>
    %662 = arith.addf %657, %661 : vector<8x128xf32>
    %663 = arith.truncf %662 : vector<8x128xf32> to vector<8x128xbf16>
    %cst_252 = arith.constant dense<0.000000e+00> : vector<8x128xf32>
    %664 = tpu.matmul %663, %0, %cst_252 {dimension_numbers = #tpu.dot_dimension_numbers<[1], [0], [0], [1], [0, 0, 1, 1], [], []>} : vector<8x128xbf16>, vector<128x128xbf16>, vector<8x128xf32> -> vector<8x128xf32>
    %665 = arith.mulf %664, %664 : vector<8x128xf32>
    %cst_253 = arith.constant dense<0.000000e+00> : vector<8xf32>
    %666 = vector.multi_reduction <add>, %665, %cst_253 [1] : vector<8x128xf32> to vector<8xf32>
    %667 = vector.shape_cast %666 : vector<8xf32> to vector<8x1xf32>
    %668 = arith.subf %667, %654 : vector<8x1xf32>
    %cst_254 = arith.constant -2.500000e-03 : f32
    %669 = vector.broadcast %cst_254 : f32 to vector<8x1xf32>
    %670 = arith.mulf %669, %668 : vector<8x1xf32>
    %c0_255 = arith.constant 0 : index
    %671 = arith.index_cast %c24_i32 : i32 to index
    %c0_256 = arith.constant 0 : index
    %c0_257 = arith.constant 0 : index
    %672 = vector.load %arg3[%c0_255, %671, %c0_256, %c0_257] : memref<1x32x8x1xf32, #tpu.memory_space<vmem>>, vector<1x1x8x1xf32>
    %673 = vector.shape_cast %672 : vector<1x1x8x1xf32> to vector<8x1xf32>
    %674 = arith.cmpf ole, %673, %670 : vector<8x1xf32>
    %675 = vector.shape_cast %674 : vector<8x1xi1> to vector<8x1xi1>
    %676 = vector.broadcast %675 : vector<8x1xi1> to vector<8x128xi1>
    %677 = arith.select %676, %662, %650 : vector<8x128xi1>, vector<8x128xf32>
    %678 = vector.shape_cast %674 : vector<8x1xi1> to vector<8x1xi1>
    %679 = vector.broadcast %678 : vector<8x1xi1> to vector<8x128xi1>
    %680 = arith.select %679, %664, %653 : vector<8x128xi1>, vector<8x128xf32>
    %681 = arith.select %674, %667, %654 : vector<8x1xi1>, vector<8x1xf32>
    %c25_i32 = arith.constant 25 : i32
    %cst_258 = arith.constant 0.00999999977 : f32
    %682 = vector.broadcast %cst_258 : f32 to vector<8x128xf32>
    %683 = arith.mulf %682, %680 : vector<8x128xf32>
    %684 = arith.subf %677, %683 : vector<8x128xf32>
    %c0_259 = arith.constant 0 : index
    %685 = arith.index_cast %c25_i32 : i32 to index
    %c0_260 = arith.constant 0 : index
    %c0_261 = arith.constant 0 : index
    %686 = vector.load %arg2[%c0_259, %685, %c0_260, %c0_261] : memref<1x32x8x128xbf16, #tpu.memory_space<vmem>>, vector<1x1x8x128xbf16>
    %687 = vector.shape_cast %686 : vector<1x1x8x128xbf16> to vector<8x128xbf16>
    %688 = arith.extf %687 : vector<8x128xbf16> to vector<8x128xf32>
    %689 = arith.addf %684, %688 : vector<8x128xf32>
    %690 = arith.truncf %689 : vector<8x128xf32> to vector<8x128xbf16>
    %cst_262 = arith.constant dense<0.000000e+00> : vector<8x128xf32>
    %691 = tpu.matmul %690, %0, %cst_262 {dimension_numbers = #tpu.dot_dimension_numbers<[1], [0], [0], [1], [0, 0, 1, 1], [], []>} : vector<8x128xbf16>, vector<128x128xbf16>, vector<8x128xf32> -> vector<8x128xf32>
    %692 = arith.mulf %691, %691 : vector<8x128xf32>
    %cst_263 = arith.constant dense<0.000000e+00> : vector<8xf32>
    %693 = vector.multi_reduction <add>, %692, %cst_263 [1] : vector<8x128xf32> to vector<8xf32>
    %694 = vector.shape_cast %693 : vector<8xf32> to vector<8x1xf32>
    %695 = arith.subf %694, %681 : vector<8x1xf32>
    %cst_264 = arith.constant -2.500000e-03 : f32
    %696 = vector.broadcast %cst_264 : f32 to vector<8x1xf32>
    %697 = arith.mulf %696, %695 : vector<8x1xf32>
    %c0_265 = arith.constant 0 : index
    %698 = arith.index_cast %c25_i32 : i32 to index
    %c0_266 = arith.constant 0 : index
    %c0_267 = arith.constant 0 : index
    %699 = vector.load %arg3[%c0_265, %698, %c0_266, %c0_267] : memref<1x32x8x1xf32, #tpu.memory_space<vmem>>, vector<1x1x8x1xf32>
    %700 = vector.shape_cast %699 : vector<1x1x8x1xf32> to vector<8x1xf32>
    %701 = arith.cmpf ole, %700, %697 : vector<8x1xf32>
    %702 = vector.shape_cast %701 : vector<8x1xi1> to vector<8x1xi1>
    %703 = vector.broadcast %702 : vector<8x1xi1> to vector<8x128xi1>
    %704 = arith.select %703, %689, %677 : vector<8x128xi1>, vector<8x128xf32>
    %705 = vector.shape_cast %701 : vector<8x1xi1> to vector<8x1xi1>
    %706 = vector.broadcast %705 : vector<8x1xi1> to vector<8x128xi1>
    %707 = arith.select %706, %691, %680 : vector<8x128xi1>, vector<8x128xf32>
    %708 = arith.select %701, %694, %681 : vector<8x1xi1>, vector<8x1xf32>
    %c26_i32 = arith.constant 26 : i32
    %cst_268 = arith.constant 0.00999999977 : f32
    %709 = vector.broadcast %cst_268 : f32 to vector<8x128xf32>
    %710 = arith.mulf %709, %707 : vector<8x128xf32>
    %711 = arith.subf %704, %710 : vector<8x128xf32>
    %c0_269 = arith.constant 0 : index
    %712 = arith.index_cast %c26_i32 : i32 to index
    %c0_270 = arith.constant 0 : index
    %c0_271 = arith.constant 0 : index
    %713 = vector.load %arg2[%c0_269, %712, %c0_270, %c0_271] : memref<1x32x8x128xbf16, #tpu.memory_space<vmem>>, vector<1x1x8x128xbf16>
    %714 = vector.shape_cast %713 : vector<1x1x8x128xbf16> to vector<8x128xbf16>
    %715 = arith.extf %714 : vector<8x128xbf16> to vector<8x128xf32>
    %716 = arith.addf %711, %715 : vector<8x128xf32>
    %717 = arith.truncf %716 : vector<8x128xf32> to vector<8x128xbf16>
    %cst_272 = arith.constant dense<0.000000e+00> : vector<8x128xf32>
    %718 = tpu.matmul %717, %0, %cst_272 {dimension_numbers = #tpu.dot_dimension_numbers<[1], [0], [0], [1], [0, 0, 1, 1], [], []>} : vector<8x128xbf16>, vector<128x128xbf16>, vector<8x128xf32> -> vector<8x128xf32>
    %719 = arith.mulf %718, %718 : vector<8x128xf32>
    %cst_273 = arith.constant dense<0.000000e+00> : vector<8xf32>
    %720 = vector.multi_reduction <add>, %719, %cst_273 [1] : vector<8x128xf32> to vector<8xf32>
    %721 = vector.shape_cast %720 : vector<8xf32> to vector<8x1xf32>
    %722 = arith.subf %721, %708 : vector<8x1xf32>
    %cst_274 = arith.constant -2.500000e-03 : f32
    %723 = vector.broadcast %cst_274 : f32 to vector<8x1xf32>
    %724 = arith.mulf %723, %722 : vector<8x1xf32>
    %c0_275 = arith.constant 0 : index
    %725 = arith.index_cast %c26_i32 : i32 to index
    %c0_276 = arith.constant 0 : index
    %c0_277 = arith.constant 0 : index
    %726 = vector.load %arg3[%c0_275, %725, %c0_276, %c0_277] : memref<1x32x8x1xf32, #tpu.memory_space<vmem>>, vector<1x1x8x1xf32>
    %727 = vector.shape_cast %726 : vector<1x1x8x1xf32> to vector<8x1xf32>
    %728 = arith.cmpf ole, %727, %724 : vector<8x1xf32>
    %729 = vector.shape_cast %728 : vector<8x1xi1> to vector<8x1xi1>
    %730 = vector.broadcast %729 : vector<8x1xi1> to vector<8x128xi1>
    %731 = arith.select %730, %716, %704 : vector<8x128xi1>, vector<8x128xf32>
    %732 = vector.shape_cast %728 : vector<8x1xi1> to vector<8x1xi1>
    %733 = vector.broadcast %732 : vector<8x1xi1> to vector<8x128xi1>
    %734 = arith.select %733, %718, %707 : vector<8x128xi1>, vector<8x128xf32>
    %735 = arith.select %728, %721, %708 : vector<8x1xi1>, vector<8x1xf32>
    %c27_i32 = arith.constant 27 : i32
    %cst_278 = arith.constant 0.00999999977 : f32
    %736 = vector.broadcast %cst_278 : f32 to vector<8x128xf32>
    %737 = arith.mulf %736, %734 : vector<8x128xf32>
    %738 = arith.subf %731, %737 : vector<8x128xf32>
    %c0_279 = arith.constant 0 : index
    %739 = arith.index_cast %c27_i32 : i32 to index
    %c0_280 = arith.constant 0 : index
    %c0_281 = arith.constant 0 : index
    %740 = vector.load %arg2[%c0_279, %739, %c0_280, %c0_281] : memref<1x32x8x128xbf16, #tpu.memory_space<vmem>>, vector<1x1x8x128xbf16>
    %741 = vector.shape_cast %740 : vector<1x1x8x128xbf16> to vector<8x128xbf16>
    %742 = arith.extf %741 : vector<8x128xbf16> to vector<8x128xf32>
    %743 = arith.addf %738, %742 : vector<8x128xf32>
    %744 = arith.truncf %743 : vector<8x128xf32> to vector<8x128xbf16>
    %cst_282 = arith.constant dense<0.000000e+00> : vector<8x128xf32>
    %745 = tpu.matmul %744, %0, %cst_282 {dimension_numbers = #tpu.dot_dimension_numbers<[1], [0], [0], [1], [0, 0, 1, 1], [], []>} : vector<8x128xbf16>, vector<128x128xbf16>, vector<8x128xf32> -> vector<8x128xf32>
    %746 = arith.mulf %745, %745 : vector<8x128xf32>
    %cst_283 = arith.constant dense<0.000000e+00> : vector<8xf32>
    %747 = vector.multi_reduction <add>, %746, %cst_283 [1] : vector<8x128xf32> to vector<8xf32>
    %748 = vector.shape_cast %747 : vector<8xf32> to vector<8x1xf32>
    %749 = arith.subf %748, %735 : vector<8x1xf32>
    %cst_284 = arith.constant -2.500000e-03 : f32
    %750 = vector.broadcast %cst_284 : f32 to vector<8x1xf32>
    %751 = arith.mulf %750, %749 : vector<8x1xf32>
    %c0_285 = arith.constant 0 : index
    %752 = arith.index_cast %c27_i32 : i32 to index
    %c0_286 = arith.constant 0 : index
    %c0_287 = arith.constant 0 : index
    %753 = vector.load %arg3[%c0_285, %752, %c0_286, %c0_287] : memref<1x32x8x1xf32, #tpu.memory_space<vmem>>, vector<1x1x8x1xf32>
    %754 = vector.shape_cast %753 : vector<1x1x8x1xf32> to vector<8x1xf32>
    %755 = arith.cmpf ole, %754, %751 : vector<8x1xf32>
    %756 = vector.shape_cast %755 : vector<8x1xi1> to vector<8x1xi1>
    %757 = vector.broadcast %756 : vector<8x1xi1> to vector<8x128xi1>
    %758 = arith.select %757, %743, %731 : vector<8x128xi1>, vector<8x128xf32>
    %759 = vector.shape_cast %755 : vector<8x1xi1> to vector<8x1xi1>
    %760 = vector.broadcast %759 : vector<8x1xi1> to vector<8x128xi1>
    %761 = arith.select %760, %745, %734 : vector<8x128xi1>, vector<8x128xf32>
    %762 = arith.select %755, %748, %735 : vector<8x1xi1>, vector<8x1xf32>
    %c28_i32 = arith.constant 28 : i32
    %cst_288 = arith.constant 0.00999999977 : f32
    %763 = vector.broadcast %cst_288 : f32 to vector<8x128xf32>
    %764 = arith.mulf %763, %761 : vector<8x128xf32>
    %765 = arith.subf %758, %764 : vector<8x128xf32>
    %c0_289 = arith.constant 0 : index
    %766 = arith.index_cast %c28_i32 : i32 to index
    %c0_290 = arith.constant 0 : index
    %c0_291 = arith.constant 0 : index
    %767 = vector.load %arg2[%c0_289, %766, %c0_290, %c0_291] : memref<1x32x8x128xbf16, #tpu.memory_space<vmem>>, vector<1x1x8x128xbf16>
    %768 = vector.shape_cast %767 : vector<1x1x8x128xbf16> to vector<8x128xbf16>
    %769 = arith.extf %768 : vector<8x128xbf16> to vector<8x128xf32>
    %770 = arith.addf %765, %769 : vector<8x128xf32>
    %771 = arith.truncf %770 : vector<8x128xf32> to vector<8x128xbf16>
    %cst_292 = arith.constant dense<0.000000e+00> : vector<8x128xf32>
    %772 = tpu.matmul %771, %0, %cst_292 {dimension_numbers = #tpu.dot_dimension_numbers<[1], [0], [0], [1], [0, 0, 1, 1], [], []>} : vector<8x128xbf16>, vector<128x128xbf16>, vector<8x128xf32> -> vector<8x128xf32>
    %773 = arith.mulf %772, %772 : vector<8x128xf32>
    %cst_293 = arith.constant dense<0.000000e+00> : vector<8xf32>
    %774 = vector.multi_reduction <add>, %773, %cst_293 [1] : vector<8x128xf32> to vector<8xf32>
    %775 = vector.shape_cast %774 : vector<8xf32> to vector<8x1xf32>
    %776 = arith.subf %775, %762 : vector<8x1xf32>
    %cst_294 = arith.constant -2.500000e-03 : f32
    %777 = vector.broadcast %cst_294 : f32 to vector<8x1xf32>
    %778 = arith.mulf %777, %776 : vector<8x1xf32>
    %c0_295 = arith.constant 0 : index
    %779 = arith.index_cast %c28_i32 : i32 to index
    %c0_296 = arith.constant 0 : index
    %c0_297 = arith.constant 0 : index
    %780 = vector.load %arg3[%c0_295, %779, %c0_296, %c0_297] : memref<1x32x8x1xf32, #tpu.memory_space<vmem>>, vector<1x1x8x1xf32>
    %781 = vector.shape_cast %780 : vector<1x1x8x1xf32> to vector<8x1xf32>
    %782 = arith.cmpf ole, %781, %778 : vector<8x1xf32>
    %783 = vector.shape_cast %782 : vector<8x1xi1> to vector<8x1xi1>
    %784 = vector.broadcast %783 : vector<8x1xi1> to vector<8x128xi1>
    %785 = arith.select %784, %770, %758 : vector<8x128xi1>, vector<8x128xf32>
    %786 = vector.shape_cast %782 : vector<8x1xi1> to vector<8x1xi1>
    %787 = vector.broadcast %786 : vector<8x1xi1> to vector<8x128xi1>
    %788 = arith.select %787, %772, %761 : vector<8x128xi1>, vector<8x128xf32>
    %789 = arith.select %782, %775, %762 : vector<8x1xi1>, vector<8x1xf32>
    %c29_i32 = arith.constant 29 : i32
    %cst_298 = arith.constant 0.00999999977 : f32
    %790 = vector.broadcast %cst_298 : f32 to vector<8x128xf32>
    %791 = arith.mulf %790, %788 : vector<8x128xf32>
    %792 = arith.subf %785, %791 : vector<8x128xf32>
    %c0_299 = arith.constant 0 : index
    %793 = arith.index_cast %c29_i32 : i32 to index
    %c0_300 = arith.constant 0 : index
    %c0_301 = arith.constant 0 : index
    %794 = vector.load %arg2[%c0_299, %793, %c0_300, %c0_301] : memref<1x32x8x128xbf16, #tpu.memory_space<vmem>>, vector<1x1x8x128xbf16>
    %795 = vector.shape_cast %794 : vector<1x1x8x128xbf16> to vector<8x128xbf16>
    %796 = arith.extf %795 : vector<8x128xbf16> to vector<8x128xf32>
    %797 = arith.addf %792, %796 : vector<8x128xf32>
    %798 = arith.truncf %797 : vector<8x128xf32> to vector<8x128xbf16>
    %cst_302 = arith.constant dense<0.000000e+00> : vector<8x128xf32>
    %799 = tpu.matmul %798, %0, %cst_302 {dimension_numbers = #tpu.dot_dimension_numbers<[1], [0], [0], [1], [0, 0, 1, 1], [], []>} : vector<8x128xbf16>, vector<128x128xbf16>, vector<8x128xf32> -> vector<8x128xf32>
    %800 = arith.mulf %799, %799 : vector<8x128xf32>
    %cst_303 = arith.constant dense<0.000000e+00> : vector<8xf32>
    %801 = vector.multi_reduction <add>, %800, %cst_303 [1] : vector<8x128xf32> to vector<8xf32>
    %802 = vector.shape_cast %801 : vector<8xf32> to vector<8x1xf32>
    %803 = arith.subf %802, %789 : vector<8x1xf32>
    %cst_304 = arith.constant -2.500000e-03 : f32
    %804 = vector.broadcast %cst_304 : f32 to vector<8x1xf32>
    %805 = arith.mulf %804, %803 : vector<8x1xf32>
    %c0_305 = arith.constant 0 : index
    %806 = arith.index_cast %c29_i32 : i32 to index
    %c0_306 = arith.constant 0 : index
    %c0_307 = arith.constant 0 : index
    %807 = vector.load %arg3[%c0_305, %806, %c0_306, %c0_307] : memref<1x32x8x1xf32, #tpu.memory_space<vmem>>, vector<1x1x8x1xf32>
    %808 = vector.shape_cast %807 : vector<1x1x8x1xf32> to vector<8x1xf32>
    %809 = arith.cmpf ole, %808, %805 : vector<8x1xf32>
    %810 = vector.shape_cast %809 : vector<8x1xi1> to vector<8x1xi1>
    %811 = vector.broadcast %810 : vector<8x1xi1> to vector<8x128xi1>
    %812 = arith.select %811, %797, %785 : vector<8x128xi1>, vector<8x128xf32>
    %813 = vector.shape_cast %809 : vector<8x1xi1> to vector<8x1xi1>
    %814 = vector.broadcast %813 : vector<8x1xi1> to vector<8x128xi1>
    %815 = arith.select %814, %799, %788 : vector<8x128xi1>, vector<8x128xf32>
    %816 = arith.select %809, %802, %789 : vector<8x1xi1>, vector<8x1xf32>
    %c30_i32 = arith.constant 30 : i32
    %cst_308 = arith.constant 0.00999999977 : f32
    %817 = vector.broadcast %cst_308 : f32 to vector<8x128xf32>
    %818 = arith.mulf %817, %815 : vector<8x128xf32>
    %819 = arith.subf %812, %818 : vector<8x128xf32>
    %c0_309 = arith.constant 0 : index
    %820 = arith.index_cast %c30_i32 : i32 to index
    %c0_310 = arith.constant 0 : index
    %c0_311 = arith.constant 0 : index
    %821 = vector.load %arg2[%c0_309, %820, %c0_310, %c0_311] : memref<1x32x8x128xbf16, #tpu.memory_space<vmem>>, vector<1x1x8x128xbf16>
    %822 = vector.shape_cast %821 : vector<1x1x8x128xbf16> to vector<8x128xbf16>
    %823 = arith.extf %822 : vector<8x128xbf16> to vector<8x128xf32>
    %824 = arith.addf %819, %823 : vector<8x128xf32>
    %825 = arith.truncf %824 : vector<8x128xf32> to vector<8x128xbf16>
    %cst_312 = arith.constant dense<0.000000e+00> : vector<8x128xf32>
    %826 = tpu.matmul %825, %0, %cst_312 {dimension_numbers = #tpu.dot_dimension_numbers<[1], [0], [0], [1], [0, 0, 1, 1], [], []>} : vector<8x128xbf16>, vector<128x128xbf16>, vector<8x128xf32> -> vector<8x128xf32>
    %827 = arith.mulf %826, %826 : vector<8x128xf32>
    %cst_313 = arith.constant dense<0.000000e+00> : vector<8xf32>
    %828 = vector.multi_reduction <add>, %827, %cst_313 [1] : vector<8x128xf32> to vector<8xf32>
    %829 = vector.shape_cast %828 : vector<8xf32> to vector<8x1xf32>
    %830 = arith.subf %829, %816 : vector<8x1xf32>
    %cst_314 = arith.constant -2.500000e-03 : f32
    %831 = vector.broadcast %cst_314 : f32 to vector<8x1xf32>
    %832 = arith.mulf %831, %830 : vector<8x1xf32>
    %c0_315 = arith.constant 0 : index
    %833 = arith.index_cast %c30_i32 : i32 to index
    %c0_316 = arith.constant 0 : index
    %c0_317 = arith.constant 0 : index
    %834 = vector.load %arg3[%c0_315, %833, %c0_316, %c0_317] : memref<1x32x8x1xf32, #tpu.memory_space<vmem>>, vector<1x1x8x1xf32>
    %835 = vector.shape_cast %834 : vector<1x1x8x1xf32> to vector<8x1xf32>
    %836 = arith.cmpf ole, %835, %832 : vector<8x1xf32>
    %837 = vector.shape_cast %836 : vector<8x1xi1> to vector<8x1xi1>
    %838 = vector.broadcast %837 : vector<8x1xi1> to vector<8x128xi1>
    %839 = arith.select %838, %824, %812 : vector<8x128xi1>, vector<8x128xf32>
    %840 = vector.shape_cast %836 : vector<8x1xi1> to vector<8x1xi1>
    %841 = vector.broadcast %840 : vector<8x1xi1> to vector<8x128xi1>
    %842 = arith.select %841, %826, %815 : vector<8x128xi1>, vector<8x128xf32>
    %843 = arith.select %836, %829, %816 : vector<8x1xi1>, vector<8x1xf32>
    %c31_i32 = arith.constant 31 : i32
    %cst_318 = arith.constant 0.00999999977 : f32
    %844 = vector.broadcast %cst_318 : f32 to vector<8x128xf32>
    %845 = arith.mulf %844, %842 : vector<8x128xf32>
    %846 = arith.subf %839, %845 : vector<8x128xf32>
    %c0_319 = arith.constant 0 : index
    %847 = arith.index_cast %c31_i32 : i32 to index
    %c0_320 = arith.constant 0 : index
    %c0_321 = arith.constant 0 : index
    %848 = vector.load %arg2[%c0_319, %847, %c0_320, %c0_321] : memref<1x32x8x128xbf16, #tpu.memory_space<vmem>>, vector<1x1x8x128xbf16>
    %849 = vector.shape_cast %848 : vector<1x1x8x128xbf16> to vector<8x128xbf16>
    %850 = arith.extf %849 : vector<8x128xbf16> to vector<8x128xf32>
    %851 = arith.addf %846, %850 : vector<8x128xf32>
    %852 = arith.truncf %851 : vector<8x128xf32> to vector<8x128xbf16>
    %cst_322 = arith.constant dense<0.000000e+00> : vector<8x128xf32>
    %853 = tpu.matmul %852, %0, %cst_322 {dimension_numbers = #tpu.dot_dimension_numbers<[1], [0], [0], [1], [0, 0, 1, 1], [], []>} : vector<8x128xbf16>, vector<128x128xbf16>, vector<8x128xf32> -> vector<8x128xf32>
    %854 = arith.mulf %853, %853 : vector<8x128xf32>
    %cst_323 = arith.constant dense<0.000000e+00> : vector<8xf32>
    %855 = vector.multi_reduction <add>, %854, %cst_323 [1] : vector<8x128xf32> to vector<8xf32>
    %856 = vector.shape_cast %855 : vector<8xf32> to vector<8x1xf32>
    %857 = arith.subf %856, %843 : vector<8x1xf32>
    %cst_324 = arith.constant -2.500000e-03 : f32
    %858 = vector.broadcast %cst_324 : f32 to vector<8x1xf32>
    %859 = arith.mulf %858, %857 : vector<8x1xf32>
    %c0_325 = arith.constant 0 : index
    %860 = arith.index_cast %c31_i32 : i32 to index
    %c0_326 = arith.constant 0 : index
    %c0_327 = arith.constant 0 : index
    %861 = vector.load %arg3[%c0_325, %860, %c0_326, %c0_327] : memref<1x32x8x1xf32, #tpu.memory_space<vmem>>, vector<1x1x8x1xf32>
    %862 = vector.shape_cast %861 : vector<1x1x8x1xf32> to vector<8x1xf32>
    %863 = arith.cmpf ole, %862, %859 : vector<8x1xf32>
    %864 = vector.shape_cast %863 : vector<8x1xi1> to vector<8x1xi1>
    %865 = vector.broadcast %864 : vector<8x1xi1> to vector<8x128xi1>
    %866 = arith.select %865, %851, %839 : vector<8x128xi1>, vector<8x128xf32>
    %867 = vector.shape_cast %863 : vector<8x1xi1> to vector<8x1xi1>
    %868 = vector.broadcast %867 : vector<8x1xi1> to vector<8x128xi1>
    %869 = arith.select %868, %853, %842 : vector<8x128xi1>, vector<8x128xf32>
    %870 = arith.select %863, %856, %843 : vector<8x1xi1>, vector<8x1xf32>
    %c32_i32 = arith.constant 32 : i32
    %c0_328 = arith.constant 0 : index
    %c0_329 = arith.constant 0 : index
    %871 = vector.load %arg6[%c0_328, %c0_329] : memref<8x128xf32, #tpu.memory_space<vmem>>, vector<8x128xf32>
    tpu.vector_store %arg6[%c0_328, %c0_329], %866 {strides = array<i32>} : memref<8x128xf32, #tpu.memory_space<vmem>>, vector<8x128xf32>,
    %c0_330 = arith.constant 0 : index
    %c0_331 = arith.constant 0 : index
    %872 = vector.load %arg7[%c0_330, %c0_331] : memref<8x128xf32, #tpu.memory_space<vmem>>, vector<8x128xf32>
    tpu.vector_store %arg7[%c0_330, %c0_331], %869 {strides = array<i32>} : memref<8x128xf32, #tpu.memory_space<vmem>>, vector<8x128xf32>,
    %c0_332 = arith.constant 0 : index
    %c0_333 = arith.constant 0 : index
    %873 = vector.load %arg8[%c0_332, %c0_333] : memref<8x1xf32, #tpu.memory_space<vmem>>, vector<8x1xf32>
    tpu.vector_store %arg8[%c0_332, %c0_333], %870 {strides = array<i32>} : memref<8x1xf32, #tpu.memory_space<vmem>>, vector<8x1xf32>,
    return
  }
  func.func @transform_0(%arg0: i32, %arg1: i32) -> (i32, i32, i32, i32) {
    %c0_i32 = arith.constant 0 : i32
    %c0_i32_0 = arith.constant 0 : i32
    %c0_i32_1 = arith.constant 0 : i32
    return %arg1, %c0_i32, %arg0, %c0_i32_0 : i32, i32, i32, i32
  }
  func.func @transform_1(%arg0: i32, %arg1: i32) -> (i32, i32, i32, i32) {
    %c0_i32 = arith.constant 0 : i32
    %c0_i32_0 = arith.constant 0 : i32
    %c0_i32_1 = arith.constant 0 : i32
    return %arg1, %c0_i32, %arg0, %c0_i32_0 : i32, i32, i32, i32
  }
  func.func @transform_2(%arg0: i32, %arg1: i32) -> (i32, i32) {
    %c0_i32 = arith.constant 0 : i32
    %c0_i32_0 = arith.constant 0 : i32
    return %arg0, %c0_i32 : i32, i32
  }
  func.func @transform_3(%arg0: i32, %arg1: i32) -> (i32, i32) {
    %c0_i32 = arith.constant 0 : i32
    %c0_i32_0 = arith.constant 0 : i32
    %c0_i32_1 = arith.constant 0 : i32
    return %c0_i32, %c0_i32_0 : i32, i32
  }
  func.func @transform_4(%arg0: i32, %arg1: i32) -> (i32, i32) {
    %c0_i32 = arith.constant 0 : i32
    %c0_i32_0 = arith.constant 0 : i32
    return %arg0, %c0_i32 : i32, i32
  }
}

</mosaic_0001>

<llo_original>
// kernel: tpu_custom_call.1
$region0: #{tpu_custom_call.1}
  #allocation0 [shape = 'u32[]', space=smem, size = 0x4, offset = 0x4, fixed_abs, tag = 'smem constant byte address 0x4 - core index']
  #allocation1 [shape = 'u32[144,128]{1,0:T(1,128)}', space=vmem, size = 0x12000, scoped, tag = 'internal scratch']
  #allocation2 [shape = 'f32[8,128]{1,0:T(8,128)}', space=vmem, size = 0x1000, scoped, tag = 'scratch operand']
  #allocation3 [shape = 'f32[8,1]{1,0:T(8,128)}', space=vmem, size = 0x1000, scoped, tag = 'scratch operand']
  %s0 = inlined_call_operand.vmem [shape: bf16[2,32,8,128], index: 0, kind: input, shape index: {}]
  %s1 = inlined_call_operand.vmem [shape: f32[2,32,8,1], index: 1, kind: input, shape index: {}]
  %s2 = inlined_call_operand.vmem [shape: f32[8,128], index: 2, kind: input, shape index: {}]
  %s3 = inlined_call_operand.vmem [shape: bf16[128,128], index: 3, kind: input, shape index: {}]
  %s4 = inlined_call_operand.hbm [shape: f32[8,128], index: 4, kind: output, shape index: {}]
  %s5 = sld [smem:[#allocation0]]
  $region53: #{tpu_custom_call.1} parent=0
    _
  %s7 = ssub.s32 1, %s5
  %s8 = scalar_select 0, %s7, %s5
  $region1: #{tpu_custom_call.1} parent=0
    #allocation4 [shape = 'u8[4096]{0}', space=vmem, size = 0x1000, scoped, tag = 'output window, operand 0, single buffered']
    #allocation5 [shape = 's32[2]{0}', space=sflag, size = 0x8, scoped, tag = 'scoped memory for tpu_custom_call.1']
    %9 = vsyncpa [#allocation5], 0
    loop: start=0, step=1, limit=4
    $region2: #{tpu_custom_call.1} parent=1 // loop_pre_header
      _
    $region3: #{tpu_custom_call.1} parent=1 // loop_header
      %s11 = sphi 0, %s15
      %p12 = scmp.ge.s32.totalorder %s11, 4
      %s18 = sphi 0, %s30
      %s19 = sphi 0, %s26
      %s20 = sphi 0, %s18
      %s21 = sphi 0, %s19
      %s22 = sphi 0, %s20
      %s23 = sphi 0, %s21
      %s35 = sphi 0, %s37
      %s38 = sphi 0, %s35
      %s39 = sphi 0, %s38
      %s55 = sphi 0, %s39
      %s63 = sphi 0, %s65
      %s66 = sphi 0, %s63
      %s67 = sphi 0, %s66
      %s83 = sphi 0, %s67
      %s89 = sphi 0, %s91
      %s92 = sphi 0, %s89
      %s93 = sphi 0, %s92
      %s109 = sphi 0, %s93
      %s113 = sphi 0, %s113
      %s115 = sphi 0, %s113
      %s116 = sphi 0, %s115
      %s130 = sphi 0, %s116
      %s136 = sphi 0, %s138
      %s139 = sphi 0, %s136
      %s140 = sphi 0, %s139
      %s156 = sphi 0, %s140
    $region4: #{tpu_custom_call.1} parent=1 // loop_header_branch
      %14 = sbr.rel (%p12) target = $region8
    $region5: #{tpu_custom_call.1} parent=1 // loop_body
      %s16 = ssub.s32 %s11, 1
      %s17 = ssub.s32 %s11, 2
      %s24 = sadd.s32 1, %s19
      %p25 = scmp.ge.s32.totalorder %s24, 2
      %s26 = scalar_select %p25, 0, %s24
      %s27 = sadd.s32 1, %s18
      %s28 = scalar_select %p25, %s27, %s18
      %p29 = scmp.ge.s32.totalorder %s28, 1
      %s30 = scalar_select %p29, 0, %s28
      %s31 = ssub.s32 %s19, %s26
      %s32 = ssub.s32 %s18, %s30
      %s33 = sor.u32 %s31, %s32
      %p34 = scmp.eq.s32.totalorder %s33, 0
      %s36 = sadd.s32 %s35, 1
      %s37 = scalar_select %p34, %s35, %s36
      %p40 = pneg %p34
      %p41 = scmp.eq.s32.totalorder %s11, 1
      %p42 = por %p40, %p41
      %p43 = scmp.ne.s32.totalorder %s35, %s38
      %p44 = scmp.eq.s32.totalorder %s11, 0
      %p45 = por %p43, %p44
      %p46 = scmp.ne.s32.totalorder %s35, %s38
      %p47 = scmp.eq.s32.totalorder %s16, 1
      %p48 = por %p46, %p47
      %p49 = scmp.ne.s32.totalorder %s38, %s39
      %p50 = scmp.eq.s32.totalorder %s16, 0
      %p51 = por %p49, %p50
      %p52 = scmp.ne.s32.totalorder %s38, %s39
      %p53 = scmp.eq.s32.totalorder %s17, 1
      %p54 = por %p52, %p53
      %p56 = scmp.ne.s32.totalorder %s39, %s55
      %p57 = scmp.eq.s32.totalorder %s17, 0
      %p58 = por %p56, %p57
      %s59 = ssub.s32 %s19, %s26
      %s60 = ssub.s32 %s18, %s30
      %s61 = sor.u32 %s59, %s60
      %p62 = scmp.eq.s32.totalorder %s61, 0
      %s64 = sadd.s32 %s63, 1
      %s65 = scalar_select %p62, %s63, %s64
      %p68 = pneg %p62
      %p69 = scmp.eq.s32.totalorder %s11, 1
      %p70 = por %p68, %p69
      %p71 = scmp.ne.s32.totalorder %s63, %s66
      %p72 = scmp.eq.s32.totalorder %s11, 0
      %p73 = por %p71, %p72
      %p74 = scmp.ne.s32.totalorder %s63, %s66
      %p75 = scmp.eq.s32.totalorder %s16, 1
      %p76 = por %p74, %p75
      %p77 = scmp.ne.s32.totalorder %s66, %s67
      %p78 = scmp.eq.s32.totalorder %s16, 0
      %p79 = por %p77, %p78
      %p80 = scmp.ne.s32.totalorder %s66, %s67
      %p81 = scmp.eq.s32.totalorder %s17, 1
      %p82 = por %p80, %p81
      %p84 = scmp.ne.s32.totalorder %s67, %s83
      %p85 = scmp.eq.s32.totalorder %s17, 0
      %p86 = por %p84, %p85
      %s87 = ssub.s32 %s18, %s30
      %p88 = scmp.eq.s32.totalorder %s87, 0
      %s90 = sadd.s32 %s89, 1
      %s91 = scalar_select %p88, %s89, %s90
      %p94 = pneg %p88
      %p95 = scmp.eq.s32.totalorder %s11, 1
      %p96 = por %p94, %p95
      %p97 = scmp.ne.s32.totalorder %s89, %s92
      %p98 = scmp.eq.s32.totalorder %s11, 0
      %p99 = por %p97, %p98
      %p100 = scmp.ne.s32.totalorder %s89, %s92
      %p101 = scmp.eq.s32.totalorder %s16, 1
      %p102 = por %p100, %p101
      %p103 = scmp.ne.s32.totalorder %s92, %s93
      %p104 = scmp.eq.s32.totalorder %s16, 0
      %p105 = por %p103, %p104
      %p106 = scmp.ne.s32.totalorder %s92, %s93
      %p107 = scmp.eq.s32.totalorder %s17, 1
      %p108 = por %p106, %p107
      %p110 = scmp.ne.s32.totalorder %s93, %s109
      %p111 = scmp.eq.s32.totalorder %s17, 0
      %p112 = por %p110, %p111
      %s114 = sadd.s32 %s113, 1
      %p117 = scmp.eq.s32.totalorder %s11, 1
      %p118 = scmp.ne.s32.totalorder %s113, %s115
      %p119 = scmp.eq.s32.totalorder %s11, 0
      %p120 = por %p118, %p119
      %p121 = scmp.ne.s32.totalorder %s113, %s115
      %p122 = scmp.eq.s32.totalorder %s16, 1
      %p123 = por %p121, %p122
      %p124 = scmp.ne.s32.totalorder %s115, %s116
      %p125 = scmp.eq.s32.totalorder %s16, 0
      %p126 = por %p124, %p125
      %p127 = scmp.ne.s32.totalorder %s115, %s116
      %p128 = scmp.eq.s32.totalorder %s17, 1
      %p129 = por %p127, %p128
      %p131 = scmp.ne.s32.totalorder %s116, %s130
      %p132 = scmp.eq.s32.totalorder %s17, 0
      %p133 = por %p131, %p132
      %s134 = ssub.s32 %s18, %s30
      %p135 = scmp.eq.s32.totalorder %s134, 0
      %s137 = sadd.s32 %s136, 1
      %s138 = scalar_select %p135, %s136, %s137
      %p141 = pneg %p135
      %p142 = scmp.eq.s32.totalorder %s11, 1
      %p143 = por %p141, %p142
      %p144 = scmp.ne.s32.totalorder %s136, %s139
      %p145 = scmp.eq.s32.totalorder %s11, 0
      %p146 = por %p144, %p145
      %p147 = scmp.ne.s32.totalorder %s136, %s139
      %p148 = scmp.eq.s32.totalorder %s16, 1
      %p149 = por %p147, %p148
      %p150 = scmp.ne.s32.totalorder %s139, %s140
      %p151 = scmp.eq.s32.totalorder %s16, 0
      %p152 = por %p150, %p151
      %p153 = scmp.ne.s32.totalorder %s139, %s140
      %p154 = scmp.eq.s32.totalorder %s17, 1
      %p155 = por %p153, %p154
      %p157 = scmp.ne.s32.totalorder %s140, %s156
      %p158 = scmp.eq.s32.totalorder %s17, 0
      %p159 = por %p157, %p158
      %p160 = scmp.le.s32.totalorder 1, %s11
      %p161 = scmp.lt.s32.totalorder %s11, 3
      %p162 = pnand %p160, %p161
      %p163 = pneg %p162
      // Predicated region
      $region9: #{tpu_custom_call.1} parent=5 // pred_check
        _
      $region10: #{tpu_custom_call.1} parent=5 // pred_check_branch
        %165 = sbr.rel (%p162) target = $region12
      $region11: #{tpu_custom_call.1} parent=5 // pred_region
        %s166 = ssub.s32 %s11, 1
        // Predicated region
        $region13: #{tpu_custom_call.1} parent=11 // pred_check
          %p167 = pneg %p105
        $region14: #{tpu_custom_call.1} parent=11 // pred_check_branch
          %169 = sbr.rel (%p167) target = $region16
        $region15: #{tpu_custom_call.1} parent=11 // pred_region
          %p170 = scmp.lt.s32.totalorder %s20, 0
          %s171 = scalar_select %p170, %s20, 0
          %s172 = smul.addr %s171, 8
          %s173 = scalar_lea.vmem %s2, %s172
        $region16: #{tpu_custom_call.1} parent=11 // pred_fallthru
          _
        // Predicated region
        $region17: #{tpu_custom_call.1} parent=11 // pred_check
          %p174 = pneg %p126
        $region18: #{tpu_custom_call.1} parent=11 // pred_check_branch
          %176 = sbr.rel (%p174) target = $region20
        $region19: #{tpu_custom_call.1} parent=11 // pred_region
          _
        $region20: #{tpu_custom_call.1} parent=11 // pred_fallthru
          _
      $region12: #{tpu_custom_call.1} parent=5 // pred_fallthru
        _
      %p177 = scmp.lt.s32.totalorder %s11, 2
      // Predicated region
      $region21: #{tpu_custom_call.1} parent=5 // pred_check
        %p178 = pneg %p177
      $region22: #{tpu_custom_call.1} parent=5 // pred_check_branch
        %180 = sbr.rel (%p178) target = $region24
      $region23: #{tpu_custom_call.1} parent=5 // pred_region
        // Predicated region
        $region25: #{tpu_custom_call.1} parent=23 // pred_check
          %p181 = pneg %p45
        $region26: #{tpu_custom_call.1} parent=23 // pred_check_branch
          %183 = sbr.rel (%p181) target = $region28
        $region27: #{tpu_custom_call.1} parent=23 // pred_region
          %p184 = scmp.lt.s32.totalorder %s19, 1
          %s185 = scalar_select %p184, %s19, 1
          %p186 = scmp.lt.s32.totalorder %s18, 0
          %s187 = scalar_select %p186, %s18, 0
          %s188 = smul.addr %s185, 32
          %s189 = sadd.s32 %s187, %s188
          %s190 = smul.addr %s189, 4
          %s191 = scalar_lea.vmem %s0, %s190
        $region28: #{tpu_custom_call.1} parent=23 // pred_fallthru
          _
        // Predicated region
        $region29: #{tpu_custom_call.1} parent=23 // pred_check
          %p192 = pneg %p73
        $region30: #{tpu_custom_call.1} parent=23 // pred_check_branch
          %194 = sbr.rel (%p192) target = $region32
        $region31: #{tpu_custom_call.1} parent=23 // pred_region
          %p195 = scmp.lt.s32.totalorder %s19, 1
          %s196 = scalar_select %p195, %s19, 1
          %p197 = scmp.lt.s32.totalorder %s18, 0
          %s198 = scalar_select %p197, %s18, 0
          %s199 = smul.addr %s196, 32
          %s200 = sadd.s32 %s198, %s199
          %s201 = smul.addr %s200, 8
          %s202 = scalar_lea.vmem %s1, %s201
        $region32: #{tpu_custom_call.1} parent=23 // pred_fallthru
          _
      $region24: #{tpu_custom_call.1} parent=5 // pred_fallthru
        _
      %p203 = scmp.le.s32.totalorder 1, %s11
      %p204 = scmp.lt.s32.totalorder %s11, 3
      %p205 = pnand %p203, %p204
      %p206 = pneg %p205
      // Predicated region
      $region33: #{tpu_custom_call.1} parent=5 // pred_check
        _
      $region34: #{tpu_custom_call.1} parent=5 // pred_check_branch
        %208 = sbr.rel (%p205) target = $region36
      $region35: #{tpu_custom_call.1} parent=5 // pred_region
        %s209 = ssub.s32 %s11, 1
        %p210 = scmp.lt.s32.totalorder %s21, 1
        %s211 = scalar_select %p210, %s21, 1
        %p212 = scmp.lt.s32.totalorder %s20, 0
        %s213 = scalar_select %p212, %s20, 0
        %s214 = smul.addr %s211, 32
        %s215 = sadd.s32 %s213, %s214
        %s216 = smul.addr %s215, 4
        %s217 = scalar_lea.vmem %s0, %s216
        %p218 = pneg %p51
        %p219 = pneg %p48
        %p220 = scmp.lt.s32.totalorder %s21, 1
        %s221 = scalar_select %p220, %s21, 1
        %p222 = scmp.lt.s32.totalorder %s20, 0
        %s223 = scalar_select %p222, %s20, 0
        %s224 = smul.addr %s221, 32
        %s225 = sadd.s32 %s223, %s224
        %s226 = smul.addr %s225, 8
        %s227 = scalar_lea.vmem %s1, %s226
        %p228 = pneg %p79
        %p229 = pneg %p76
        %p230 = scmp.lt.s32.totalorder %s20, 0
        %s231 = scalar_select %p230, %s20, 0
        %s232 = smul.addr %s231, 8
        %s233 = scalar_lea.vmem %s2, %s232
        %p234 = pneg %p105
        %p235 = pneg %p102
        %p236 = pneg %p126
        %p237 = pneg %p123
        %p238 = pneg %p152
        %p239 = pneg %p149
        %p240 = scmp.lt.s32.totalorder %s21, 1
        %s241 = scalar_select %p240, %s21, 1
        %p242 = scmp.lt.s32.totalorder %s20, 0
        %s243 = scalar_select %p242, %s20, 0
        %s244 = smul.addr %s241, 32
        %s245 = sadd.s32 %s243, %s244
        %s246 = smul.addr %s245, 4
        %s247 = scalar_lea.vmem %s0, %s246
        %p248 = scmp.lt.s32.totalorder %s21, 1
        %s249 = scalar_select %p248, %s21, 1
        %p250 = scmp.lt.s32.totalorder %s20, 0
        %s251 = scalar_select %p250, %s20, 0
        %s252 = smul.addr %s249, 32
        %s253 = sadd.s32 %s251, %s252
        %s254 = smul.addr %s253, 8
        %s255 = scalar_lea.vmem %s1, %s254
        %p256 = scmp.lt.s32.totalorder %s20, 0
        %s257 = scalar_select %p256, %s20, 0
        %s258 = smul.addr %s257, 8
        %s259 = scalar_lea.vmem %s2, %s258
        %v261 = vld [vmem:[%s3] sm:$0xf]
        %v262 = vld [vmem:[%s3 + $0x4] sm:$0xf]
        %v263 = vld [vmem:[%s3 + $0x8] sm:$0xf]
        %v264 = vld [vmem:[%s3 + $0xc] sm:$0xf]
        %v265 = vld [vmem:[%s3 + $0x10] sm:$0xf]
        %v266 = vld [vmem:[%s3 + $0x14] sm:$0xf]
        %v267 = vld [vmem:[%s3 + $0x18] sm:$0xf]
        %v268 = vld [vmem:[%s3 + $0x1c] sm:$0xf]
        %v269 = vld [vmem:[%s3 + $0x20] sm:$0xf]
        %v270 = vld [vmem:[%s3 + $0x24] sm:$0xf]
        %v271 = vld [vmem:[%s3 + $0x28] sm:$0xf]
        %v272 = vld [vmem:[%s3 + $0x2c] sm:$0xf]
        %v273 = vld [vmem:[%s3 + $0x30] sm:$0xf]
        %v274 = vld [vmem:[%s3 + $0x34] sm:$0xf]
        %v275 = vld [vmem:[%s3 + $0x38] sm:$0xf]
        %v276 = vld [vmem:[%s3 + $0x3c] sm:$0xf]
        %p277 = scmp.eq.s32.totalorder %s21, 0
        // Predicated region
        $region37: #{tpu_custom_call.1} parent=35 // pred_check
          %p278 = pneg %p277
        $region38: #{tpu_custom_call.1} parent=35 // pred_check_branch
          %280 = sbr.rel (%p278) target = $region40
        $region39: #{tpu_custom_call.1} parent=35 // pred_region
          %v281 = vld [vmem:[%s259] sm:$0xff]
          %v282 = vpack.c.bf16 %v281, %v281
          %v299 = vunpack.c.l.b16 %v261
          %v300 = vunpack.c.l.b16 %v262
          %v301 = vunpack.c.l.b16 %v263
          %v302 = vunpack.c.l.b16 %v264
          %v303 = vunpack.c.l.b16 %v265
          %v304 = vunpack.c.l.b16 %v266
          %v305 = vunpack.c.l.b16 %v267
          %v306 = vunpack.c.l.b16 %v268
          %v307 = vunpack.c.l.b16 %v269
          %v308 = vunpack.c.l.b16 %v270
          %v309 = vunpack.c.l.b16 %v271
          %v310 = vunpack.c.l.b16 %v272
          %v311 = vunpack.c.l.b16 %v273
          %v312 = vunpack.c.l.b16 %v274
          %v313 = vunpack.c.l.b16 %v275
          %v314 = vunpack.c.l.b16 %v276
          %v315 = vpack.c.b16 %v300, %v299
          %v316 = vpack.c.b16 %v302, %v301
          %v317 = vpack.c.b16 %v304, %v303
          %v318 = vpack.c.b16 %v306, %v305
          %v319 = vpack.c.b16 %v308, %v307
          %v320 = vpack.c.b16 %v310, %v309
          %v321 = vpack.c.b16 %v312, %v311
          %v322 = vpack.c.b16 %v314, %v313
          %331 = vmatprep.subr.bf16.mxu0 0
          %332 = vmatpush1.bf16.msra.mxu0 %v315
          %333 = vmatprep.subr.bf16.mxu0 0
          %334 = vmatpush1.bf16.msra.mxu0 %v316
          %335 = vmatprep.subr.bf16.mxu0 0
          %336 = vmatpush1.bf16.msra.mxu0 %v317
          %337 = vmatprep.subr.bf16.mxu0 0
          %338 = vmatpush1.bf16.msra.mxu0 %v318
          %339 = vmatprep.subr.bf16.mxu0 0
          %340 = vmatpush1.bf16.msra.mxu0 %v319
          %341 = vmatprep.subr.bf16.mxu0 0
          %342 = vmatpush1.bf16.msra.mxu0 %v320
          %343 = vmatprep.subr.bf16.mxu0 0
          %344 = vmatpush1.bf16.msra.mxu0 %v321
          %345 = vmatprep.subr.bf16.mxu0 0
          %346 = vmatpush1.bf16.msra.mxu0 %v322
          %347 = vmatprep.subr.bf16.mxu0 0
          %348 = vmatpush1.bf16.msra.mxu0 0
          %349 = vmatprep.subr.bf16.mxu0 0
          %350 = vmatpush1.bf16.msra.mxu0 0
          %351 = vmatprep.subr.bf16.mxu0 0
          %352 = vmatpush1.bf16.msra.mxu0 0
          %353 = vmatprep.subr.bf16.mxu0 0
          %354 = vmatpush1.bf16.msra.mxu0 0
          %355 = vmatprep.subr.bf16.mxu0 0
          %356 = vmatpush1.bf16.msra.mxu0 0
          %357 = vmatprep.subr.bf16.mxu0 0
          %358 = vmatpush1.bf16.msra.mxu0 0
          %359 = vmatprep.subr.bf16.mxu0 0
          %360 = vmatpush1.bf16.msra.mxu0 0
          %361 = vmatprep.subr.bf16.mxu0 0
          %362 = vmatpush1.bf16.msra.mxu0 0
          %363 = vmatprep.mubr.bf16.mxu0 0
          %364 = vmatmul.mubr.bf16.gmra.mrb[0].mxu0 %v282
          %v365 = vpop.f32.mrb[0].mxu0
          %v366 = vadd.f32 0.0, %v365
          %v367 = vpop.f32.mrb[0].mxu0
          %v368 = vpop.f32.mrb[0].mxu0
          %v369 = vpop.f32.mrb[0].mxu0
          %370 = vdwg.mxu0
          %371 = vst [vmem:[#allocation4] sm:$0xff] %v281
          %372 = vst [vmem:[#allocation2] sm:$0xff] %v366
          %v373 = vmul.f32 %v366, %v366
          %374 = vadd.xlane.f32.xlu0 %v373
          %v375 = vpop.xlane.xlu0 %374
          %vm376 = vcmask 7168
          %377 = vst.msk [vmem:[#allocation3] sm:$0xff] %vm376, %v375
        $region40: #{tpu_custom_call.1} parent=35 // pred_fallthru
          _
        %v378 = vld [vmem:[#allocation4] sm:$0xff]
        %v379 = vld [vmem:[#allocation2] sm:$0xff]
        %v380 = vld [vmem:[#allocation3] sm:$0xff]
        %v381 = vmul.f32 %v379, 0.01
        %v382 = vsub.f32 %v378, %v381
        %v383 = vld [vmem:[%s247] sm:$0xf]
        %v384 = vunpack.c.l.bf16 %v383
        %v385 = vadd.f32 %v382, %v384
        %v386 = vpack.c.bf16 %v385, %v385
        %v403 = vunpack.c.l.b16 %v261
        %v404 = vunpack.c.l.b16 %v262
        %v405 = vunpack.c.l.b16 %v263
        %v406 = vunpack.c.l.b16 %v264
        %v407 = vunpack.c.l.b16 %v265
        %v408 = vunpack.c.l.b16 %v266
        %v409 = vunpack.c.l.b16 %v267
        %v410 = vunpack.c.l.b16 %v268
        %v411 = vunpack.c.l.b16 %v269
        %v412 = vunpack.c.l.b16 %v270
        %v413 = vunpack.c.l.b16 %v271
        %v414 = vunpack.c.l.b16 %v272
        %v415 = vunpack.c.l.b16 %v273
        %v416 = vunpack.c.l.b16 %v274
        %v417 = vunpack.c.l.b16 %v275
        %v418 = vunpack.c.l.b16 %v276
        %v419 = vpack.c.b16 %v404, %v403
        %v420 = vpack.c.b16 %v406, %v405
        %v421 = vpack.c.b16 %v408, %v407
        %v422 = vpack.c.b16 %v410, %v409
        %v423 = vpack.c.b16 %v412, %v411
        %v424 = vpack.c.b16 %v414, %v413
        %v425 = vpack.c.b16 %v416, %v415
        %v426 = vpack.c.b16 %v418, %v417
        %435 = vmatprep.subr.bf16.mxu0 0
        %436 = vmatpush1.bf16.msra.mxu0 %v419
        %437 = vmatprep.subr.bf16.mxu0 0
        %438 = vmatpush1.bf16.msra.mxu0 %v420
        %439 = vmatprep.subr.bf16.mxu0 0
        %440 = vmatpush1.bf16.msra.mxu0 %v421
        %441 = vmatprep.subr.bf16.mxu0 0
        %442 = vmatpush1.bf16.msra.mxu0 %v422
        %443 = vmatprep.subr.bf16.mxu0 0
        %444 = vmatpush1.bf16.msra.mxu0 %v423
        %445 = vmatprep.subr.bf16.mxu0 0
        %446 = vmatpush1.bf16.msra.mxu0 %v424
        %447 = vmatprep.subr.bf16.mxu0 0
        %448 = vmatpush1.bf16.msra.mxu0 %v425
        %449 = vmatprep.subr.bf16.mxu0 0
        %450 = vmatpush1.bf16.msra.mxu0 %v426
        %451 = vmatprep.subr.bf16.mxu0 0
        %452 = vmatpush1.bf16.msra.mxu0 0
        %453 = vmatprep.subr.bf16.mxu0 0
        %454 = vmatpush1.bf16.msra.mxu0 0
        %455 = vmatprep.subr.bf16.mxu0 0
        %456 = vmatpush1.bf16.msra.mxu0 0
        %457 = vmatprep.subr.bf16.mxu0 0
        %458 = vmatpush1.bf16.msra.mxu0 0
        %459 = vmatprep.subr.bf16.mxu0 0
        %460 = vmatpush1.bf16.msra.mxu0 0
        %461 = vmatprep.subr.bf16.mxu0 0
        %462 = vmatpush1.bf16.msra.mxu0 0
        %463 = vmatprep.subr.bf16.mxu0 0
        %464 = vmatpush1.bf16.msra.mxu0 0
        %465 = vmatprep.subr.bf16.mxu0 0
        %466 = vmatpush1.bf16.msra.mxu0 0
        %467 = vmatprep.mubr.bf16.mxu0 0
        %468 = vmatmul.mubr.bf16.gmra.mrb[0].mxu0 %v386
        %v469 = vpop.f32.mrb[0].mxu0
        %v470 = vadd.f32 0.0, %v469
        %v471 = vpop.f32.mrb[0].mxu0
        %v472 = vpop.f32.mrb[0].mxu0
        %v473 = vpop.f32.mrb[0].mxu0
        %474 = vdwg.mxu0
        %v475 = vmul.f32 %v470, %v470
        %476 = vadd.xlane.f32.xlu0 %v475
        %v477 = vpop.xlane.xlu0 %476
        %v478 = vsub.f32 %v477, %v380
        %v479 = vmul.f32 %v478, -0.0025
        %v480 = vld [vmem:[%s255] sm:$0xff]
        %vm481 = vcmp.le.f32.partialorder %v480, %v479
        %v482 = vsel %vm481, 1, 0
        %483 = vset.pattern.permute.xlu0 0
        %484 = vperm.xlu0 %483, %v482
        %v485 = vpop.permute.xlu0 %484
        %vm486 = vcmp.eq.s32.totalorder %v485, 1
        %v487 = vsel %vm486, %v385, %v378
        %v488 = vsel %vm486, %v470, %v379
        %v489 = vsel %vm481, %v477, %v380
        %v490 = vmul.f32 %v488, 0.01
        %v491 = vsub.f32 %v487, %v490
        %s492 = scalar_lea.vmem %s247, 4
        %v493 = vld [vmem:[%s492] sm:$0xf]
        %v494 = vunpack.c.l.bf16 %v493
        %v495 = vadd.f32 %v491, %v494
        %v496 = vpack.c.bf16 %v495, %v495
        %497 = vmatprep.subr.bf16.mxu0 0
        %498 = vmatpush1.bf16.msra.mxu0 %v419
        %499 = vmatprep.subr.bf16.mxu0 0
        %500 = vmatpush1.bf16.msra.mxu0 %v420
        %501 = vmatprep.subr.bf16.mxu0 0
        %502 = vmatpush1.bf16.msra.mxu0 %v421
        %503 = vmatprep.subr.bf16.mxu0 0
        %504 = vmatpush1.bf16.msra.mxu0 %v422
        %505 = vmatprep.subr.bf16.mxu0 0
        %506 = vmatpush1.bf16.msra.mxu0 %v423
        %507 = vmatprep.subr.bf16.mxu0 0
        %508 = vmatpush1.bf16.msra.mxu0 %v424
        %509 = vmatprep.subr.bf16.mxu0 0
        %510 = vmatpush1.bf16.msra.mxu0 %v425
        %511 = vmatprep.subr.bf16.mxu0 0
        %512 = vmatpush1.bf16.msra.mxu0 %v426
        %513 = vmatprep.subr.bf16.mxu0 0
        %514 = vmatpush1.bf16.msra.mxu0 0
        %515 = vmatprep.subr.bf16.mxu0 0
        %516 = vmatpush1.bf16.msra.mxu0 0
        %517 = vmatprep.subr.bf16.mxu0 0
        %518 = vmatpush1.bf16.msra.mxu0 0
        %519 = vmatprep.subr.bf16.mxu0 0
        %520 = vmatpush1.bf16.msra.mxu0 0
        %521 = vmatprep.subr.bf16.mxu0 0
        %522 = vmatpush1.bf16.msra.mxu0 0
        %523 = vmatprep.subr.bf16.mxu0 0
        %524 = vmatpush1.bf16.msra.mxu0 0
        %525 = vmatprep.subr.bf16.mxu0 0
        %526 = vmatpush1.bf16.msra.mxu0 0
        %527 = vmatprep.subr.bf16.mxu0 0
        %528 = vmatpush1.bf16.msra.mxu0 0
        %529 = vmatprep.mubr.bf16.mxu0 0
        %530 = vmatmul.mubr.bf16.gmra.mrb[0].mxu0 %v496
        %v531 = vpop.f32.mrb[0].mxu0
        %v532 = vadd.f32 0.0, %v531
        %v533 = vpop.f32.mrb[0].mxu0
        %v534 = vpop.f32.mrb[0].mxu0
        %v535 = vpop.f32.mrb[0].mxu0
        %536 = vdwg.mxu0
        %v537 = vmul.f32 %v532, %v532
        %538 = vadd.xlane.f32.xlu0 %v537
        %v539 = vpop.xlane.xlu0 %538
        %v540 = vsub.f32 %v539, %v489
        %v541 = vmul.f32 %v540, -0.0025
        %s542 = scalar_lea.vmem %s255, 8
        %v543 = vld [vmem:[%s542] sm:$0xff]
        %vm544 = vcmp.le.f32.partialorder %v543, %v541
        %v545 = vsel %vm544, 1, 0
        %546 = vset.pattern.permute.xlu0 0
        %547 = vperm.xlu0 %546, %v545
        %v548 = vpop.permute.xlu0 %547
        %vm549 = vcmp.eq.s32.totalorder %v548, 1
        %v550 = vsel %vm549, %v495, %v487
        %v551 = vsel %vm549, %v532, %v488
        %v552 = vsel %vm544, %v539, %v489
        %v553 = vmul.f32 %v551, 0.01
        %v554 = vsub.f32 %v550, %v553
        %s555 = scalar_lea.vmem %s247, 8
        %v556 = vld [vmem:[%s555] sm:$0xf]
        %v557 = vunpack.c.l.bf16 %v556
        %v558 = vadd.f32 %v554, %v557
        %v559 = vpack.c.bf16 %v558, %v558
        %560 = vmatprep.subr.bf16.mxu0 0
        %561 = vmatpush1.bf16.msra.mxu0 %v419
        %562 = vmatprep.subr.bf16.mxu0 0
        %563 = vmatpush1.bf16.msra.mxu0 %v420
        %564 = vmatprep.subr.bf16.mxu0 0
        %565 = vmatpush1.bf16.msra.mxu0 %v421
        %566 = vmatprep.subr.bf16.mxu0 0
        %567 = vmatpush1.bf16.msra.mxu0 %v422
        %568 = vmatprep.subr.bf16.mxu0 0
        %569 = vmatpush1.bf16.msra.mxu0 %v423
        %570 = vmatprep.subr.bf16.mxu0 0
        %571 = vmatpush1.bf16.msra.mxu0 %v424
        %572 = vmatprep.subr.bf16.mxu0 0
        %573 = vmatpush1.bf16.msra.mxu0 %v425
        %574 = vmatprep.subr.bf16.mxu0 0
        %575 = vmatpush1.bf16.msra.mxu0 %v426
        %576 = vmatprep.subr.bf16.mxu0 0
        %577 = vmatpush1.bf16.msra.mxu0 0
        %578 = vmatprep.subr.bf16.mxu0 0
        %579 = vmatpush1.bf16.msra.mxu0 0
        %580 = vmatprep.subr.bf16.mxu0 0
        %581 = vmatpush1.bf16.msra.mxu0 0
        %582 = vmatprep.subr.bf16.mxu0 0
        %583 = vmatpush1.bf16.msra.mxu0 0
        %584 = vmatprep.subr.bf16.mxu0 0
        %585 = vmatpush1.bf16.msra.mxu0 0
        %586 = vmatprep.subr.bf16.mxu0 0
        %587 = vmatpush1.bf16.msra.mxu0 0
        %588 = vmatprep.subr.bf16.mxu0 0
        %589 = vmatpush1.bf16.msra.mxu0 0
        %590 = vmatprep.subr.bf16.mxu0 0
        %591 = vmatpush1.bf16.msra.mxu0 0
        %592 = vmatprep.mubr.bf16.mxu0 0
        %593 = vmatmul.mubr.bf16.gmra.mrb[0].mxu0 %v559
        %v594 = vpop.f32.mrb[0].mxu0
        %v595 = vadd.f32 0.0, %v594
        %v596 = vpop.f32.mrb[0].mxu0
        %v597 = vpop.f32.mrb[0].mxu0
        %v598 = vpop.f32.mrb[0].mxu0
        %599 = vdwg.mxu0
        %v600 = vmul.f32 %v595, %v595
        %601 = vadd.xlane.f32.xlu0 %v600
        %v602 = vpop.xlane.xlu0 %601
        %v603 = vsub.f32 %v602, %v552
        %v604 = vmul.f32 %v603, -0.0025
        %s605 = scalar_lea.vmem %s255, 16
        %v606 = vld [vmem:[%s605] sm:$0xff]
        %vm607 = vcmp.le.f32.partialorder %v606, %v604
        %v608 = vsel %vm607, 1, 0
        %609 = vset.pattern.permute.xlu0 0
        %610 = vperm.xlu0 %609, %v608
        %v611 = vpop.permute.xlu0 %610
        %vm612 = vcmp.eq.s32.totalorder %v611, 1
        %v613 = vsel %vm612, %v558, %v550
        %v614 = vsel %vm612, %v595, %v551
        %v615 = vsel %vm607, %v602, %v552
        %v616 = vmul.f32 %v614, 0.01
        %v617 = vsub.f32 %v613, %v616
        %s618 = scalar_lea.vmem %s247, 12
        %v619 = vld [vmem:[%s618] sm:$0xf]
        %v620 = vunpack.c.l.bf16 %v619
        %v621 = vadd.f32 %v617, %v620
        %v622 = vpack.c.bf16 %v621, %v621
        %623 = vmatprep.subr.bf16.mxu0 0
        %624 = vmatpush1.bf16.msra.mxu0 %v419
        %625 = vmatprep.subr.bf16.mxu0 0
        %626 = vmatpush1.bf16.msra.mxu0 %v420
        %627 = vmatprep.subr.bf16.mxu0 0
        %628 = vmatpush1.bf16.msra.mxu0 %v421
        %629 = vmatprep.subr.bf16.mxu0 0
        %630 = vmatpush1.bf16.msra.mxu0 %v422
        %631 = vmatprep.subr.bf16.mxu0 0
        %632 = vmatpush1.bf16.msra.mxu0 %v423
        %633 = vmatprep.subr.bf16.mxu0 0
        %634 = vmatpush1.bf16.msra.mxu0 %v424
        %635 = vmatprep.subr.bf16.mxu0 0
        %636 = vmatpush1.bf16.msra.mxu0 %v425
        %637 = vmatprep.subr.bf16.mxu0 0
        %638 = vmatpush1.bf16.msra.mxu0 %v426
        %639 = vmatprep.subr.bf16.mxu0 0
        %640 = vmatpush1.bf16.msra.mxu0 0
        %641 = vmatprep.subr.bf16.mxu0 0
        %642 = vmatpush1.bf16.msra.mxu0 0
        %643 = vmatprep.subr.bf16.mxu0 0
        %644 = vmatpush1.bf16.msra.mxu0 0
        %645 = vmatprep.subr.bf16.mxu0 0
        %646 = vmatpush1.bf16.msra.mxu0 0
        %647 = vmatprep.subr.bf16.mxu0 0
        %648 = vmatpush1.bf16.msra.mxu0 0
        %649 = vmatprep.subr.bf16.mxu0 0
        %650 = vmatpush1.bf16.msra.mxu0 0
        %651 = vmatprep.subr.bf16.mxu0 0
        %652 = vmatpush1.bf16.msra.mxu0 0
        %653 = vmatprep.subr.bf16.mxu0 0
        %654 = vmatpush1.bf16.msra.mxu0 0
        %655 = vmatprep.mubr.bf16.mxu0 0
        %656 = vmatmul.mubr.bf16.gmra.mrb[0].mxu0 %v622
        %v657 = vpop.f32.mrb[0].mxu0
        %v658 = vadd.f32 0.0, %v657
        %v659 = vpop.f32.mrb[0].mxu0
        %v660 = vpop.f32.mrb[0].mxu0
        %v661 = vpop.f32.mrb[0].mxu0
        %662 = vdwg.mxu0
        %v663 = vmul.f32 %v658, %v658
        %664 = vadd.xlane.f32.xlu0 %v663
        %v665 = vpop.xlane.xlu0 %664
        %v666 = vsub.f32 %v665, %v615
        %v667 = vmul.f32 %v666, -0.0025
        %s668 = scalar_lea.vmem %s255, 24
        %v669 = vld [vmem:[%s668] sm:$0xff]
        %vm670 = vcmp.le.f32.partialorder %v669, %v667
        %v671 = vsel %vm670, 1, 0
        %672 = vset.pattern.permute.xlu0 0
        %673 = vperm.xlu0 %672, %v671
        %v674 = vpop.permute.xlu0 %673
        %vm675 = vcmp.eq.s32.totalorder %v674, 1
        %v676 = vsel %vm675, %v621, %v613
        %v677 = vsel %vm675, %v658, %v614
        %v678 = vsel %vm670, %v665, %v615
        %v679 = vmul.f32 %v677, 0.01
        %v680 = vsub.f32 %v676, %v679
        %s681 = scalar_lea.vmem %s247, 16
        %v682 = vld [vmem:[%s681] sm:$0xf]
        %v683 = vunpack.c.l.bf16 %v682
        %v684 = vadd.f32 %v680, %v683
        %v685 = vpack.c.bf16 %v684, %v684
        %686 = vmatprep.subr.bf16.mxu0 0
        %687 = vmatpush1.bf16.msra.mxu0 %v419
        %688 = vmatprep.subr.bf16.mxu0 0
        %689 = vmatpush1.bf16.msra.mxu0 %v420
        %690 = vmatprep.subr.bf16.mxu0 0
        %691 = vmatpush1.bf16.msra.mxu0 %v421
        %692 = vmatprep.subr.bf16.mxu0 0
        %693 = vmatpush1.bf16.msra.mxu0 %v422
        %694 = vmatprep.subr.bf16.mxu0 0
        %695 = vmatpush1.bf16.msra.mxu0 %v423
        %696 = vmatprep.subr.bf16.mxu0 0
        %697 = vmatpush1.bf16.msra.mxu0 %v424
        %698 = vmatprep.subr.bf16.mxu0 0
        %699 = vmatpush1.bf16.msra.mxu0 %v425
        %700 = vmatprep.subr.bf16.mxu0 0
        %701 = vmatpush1.bf16.msra.mxu0 %v426
        %702 = vmatprep.subr.bf16.mxu0 0
        %703 = vmatpush1.bf16.msra.mxu0 0
        %704 = vmatprep.subr.bf16.mxu0 0
        %705 = vmatpush1.bf16.msra.mxu0 0
        %706 = vmatprep.subr.bf16.mxu0 0
        %707 = vmatpush1.bf16.msra.mxu0 0
        %708 = vmatprep.subr.bf16.mxu0 0
        %709 = vmatpush1.bf16.msra.mxu0 0
        %710 = vmatprep.subr.bf16.mxu0 0
        %711 = vmatpush1.bf16.msra.mxu0 0
        %712 = vmatprep.subr.bf16.mxu0 0
        %713 = vmatpush1.bf16.msra.mxu0 0
        %714 = vmatprep.subr.bf16.mxu0 0
        %715 = vmatpush1.bf16.msra.mxu0 0
        %716 = vmatprep.subr.bf16.mxu0 0
        %717 = vmatpush1.bf16.msra.mxu0 0
        %718 = vmatprep.mubr.bf16.mxu0 0
        %719 = vmatmul.mubr.bf16.gmra.mrb[0].mxu0 %v685
        %v720 = vpop.f32.mrb[0].mxu0
        %v721 = vadd.f32 0.0, %v720
        %v722 = vpop.f32.mrb[0].mxu0
        %v723 = vpop.f32.mrb[0].mxu0
        %v724 = vpop.f32.mrb[0].mxu0
        %725 = vdwg.mxu0
        %v726 = vmul.f32 %v721, %v721
        %727 = vadd.xlane.f32.xlu0 %v726
        %v728 = vpop.xlane.xlu0 %727
        %v729 = vsub.f32 %v728, %v678
        %v730 = vmul.f32 %v729, -0.0025
        %s731 = scalar_lea.vmem %s255, 32
        %v732 = vld [vmem:[%s731] sm:$0xff]
        %vm733 = vcmp.le.f32.partialorder %v732, %v730
        %v734 = vsel %vm733, 1, 0
        %735 = vset.pattern.permute.xlu0 0
        %736 = vperm.xlu0 %735, %v734
        %v737 = vpop.permute.xlu0 %736
        %vm738 = vcmp.eq.s32.totalorder %v737, 1
        %v739 = vsel %vm738, %v684, %v676
        %v740 = vsel %vm738, %v721, %v677
        %v741 = vsel %vm733, %v728, %v678
        %v742 = vmul.f32 %v740, 0.01
        %v743 = vsub.f32 %v739, %v742
        %s744 = scalar_lea.vmem %s247, 20
        %v745 = vld [vmem:[%s744] sm:$0xf]
        %v746 = vunpack.c.l.bf16 %v745
        %v747 = vadd.f32 %v743, %v746
        %v748 = vpack.c.bf16 %v747, %v747
        %749 = vmatprep.subr.bf16.mxu0 0
        %750 = vmatpush1.bf16.msra.mxu0 %v419
        %751 = vmatprep.subr.bf16.mxu0 0
        %752 = vmatpush1.bf16.msra.mxu0 %v420
        %753 = vmatprep.subr.bf16.mxu0 0
        %754 = vmatpush1.bf16.msra.mxu0 %v421
        %755 = vmatprep.subr.bf16.mxu0 0
        %756 = vmatpush1.bf16.msra.mxu0 %v422
        %757 = vmatprep.subr.bf16.mxu0 0
        %758 = vmatpush1.bf16.msra.mxu0 %v423
        %759 = vmatprep.subr.bf16.mxu0 0
        %760 = vmatpush1.bf16.msra.mxu0 %v424
        %761 = vmatprep.subr.bf16.mxu0 0
        %762 = vmatpush1.bf16.msra.mxu0 %v425
        %763 = vmatprep.subr.bf16.mxu0 0
        %764 = vmatpush1.bf16.msra.mxu0 %v426
        %765 = vmatprep.subr.bf16.mxu0 0
        %766 = vmatpush1.bf16.msra.mxu0 0
        %767 = vmatprep.subr.bf16.mxu0 0
        %768 = vmatpush1.bf16.msra.mxu0 0
        %769 = vmatprep.subr.bf16.mxu0 0
        %770 = vmatpush1.bf16.msra.mxu0 0
        %771 = vmatprep.subr.bf16.mxu0 0
        %772 = vmatpush1.bf16.msra.mxu0 0
        %773 = vmatprep.subr.bf16.mxu0 0
        %774 = vmatpush1.bf16.msra.mxu0 0
        %775 = vmatprep.subr.bf16.mxu0 0
        %776 = vmatpush1.bf16.msra.mxu0 0
        %777 = vmatprep.subr.bf16.mxu0 0
        %778 = vmatpush1.bf16.msra.mxu0 0
        %779 = vmatprep.subr.bf16.mxu0 0
        %780 = vmatpush1.bf16.msra.mxu0 0
        %781 = vmatprep.mubr.bf16.mxu0 0
        %782 = vmatmul.mubr.bf16.gmra.mrb[0].mxu0 %v748
        %v783 = vpop.f32.mrb[0].mxu0
        %v784 = vadd.f32 0.0, %v783
        %v785 = vpop.f32.mrb[0].mxu0
        %v786 = vpop.f32.mrb[0].mxu0
        %v787 = vpop.f32.mrb[0].mxu0
        %788 = vdwg.mxu0
        %v789 = vmul.f32 %v784, %v784
        %790 = vadd.xlane.f32.xlu0 %v789
        %v791 = vpop.xlane.xlu0 %790
        %v792 = vsub.f32 %v791, %v741
        %v793 = vmul.f32 %v792, -0.0025
        %s794 = scalar_lea.vmem %s255, 40
        %v795 = vld [vmem:[%s794] sm:$0xff]
        %vm796 = vcmp.le.f32.partialorder %v795, %v793
        %v797 = vsel %vm796, 1, 0
        %798 = vset.pattern.permute.xlu0 0
        %799 = vperm.xlu0 %798, %v797
        %v800 = vpop.permute.xlu0 %799
        %vm801 = vcmp.eq.s32.totalorder %v800, 1
        %v802 = vsel %vm801, %v747, %v739
        %v803 = vsel %vm801, %v784, %v740
        %v804 = vsel %vm796, %v791, %v741
        %v805 = vmul.f32 %v803, 0.01
        %v806 = vsub.f32 %v802, %v805
        %s807 = scalar_lea.vmem %s247, 24
        %v808 = vld [vmem:[%s807] sm:$0xf]
        %v809 = vunpack.c.l.bf16 %v808
        %v810 = vadd.f32 %v806, %v809
        %v811 = vpack.c.bf16 %v810, %v810
        %812 = vmatprep.subr.bf16.mxu0 0
        %813 = vmatpush1.bf16.msra.mxu0 %v419
        %814 = vmatprep.subr.bf16.mxu0 0
        %815 = vmatpush1.bf16.msra.mxu0 %v420
        %816 = vmatprep.subr.bf16.mxu0 0
        %817 = vmatpush1.bf16.msra.mxu0 %v421
        %818 = vmatprep.subr.bf16.mxu0 0
        %819 = vmatpush1.bf16.msra.mxu0 %v422
        %820 = vmatprep.subr.bf16.mxu0 0
        %821 = vmatpush1.bf16.msra.mxu0 %v423
        %822 = vmatprep.subr.bf16.mxu0 0
        %823 = vmatpush1.bf16.msra.mxu0 %v424
        %824 = vmatprep.subr.bf16.mxu0 0
        %825 = vmatpush1.bf16.msra.mxu0 %v425
        %826 = vmatprep.subr.bf16.mxu0 0
        %827 = vmatpush1.bf16.msra.mxu0 %v426
        %828 = vmatprep.subr.bf16.mxu0 0
        %829 = vmatpush1.bf16.msra.mxu0 0
        %830 = vmatprep.subr.bf16.mxu0 0
        %831 = vmatpush1.bf16.msra.mxu0 0
        %832 = vmatprep.subr.bf16.mxu0 0
        %833 = vmatpush1.bf16.msra.mxu0 0
        %834 = vmatprep.subr.bf16.mxu0 0
        %835 = vmatpush1.bf16.msra.mxu0 0
        %836 = vmatprep.subr.bf16.mxu0 0
        %837 = vmatpush1.bf16.msra.mxu0 0
        %838 = vmatprep.subr.bf16.mxu0 0
        %839 = vmatpush1.bf16.msra.mxu0 0
        %840 = vmatprep.subr.bf16.mxu0 0
        %841 = vmatpush1.bf16.msra.mxu0 0
        %842 = vmatprep.subr.bf16.mxu0 0
        %843 = vmatpush1.bf16.msra.mxu0 0
        %844 = vmatprep.mubr.bf16.mxu0 0
        %845 = vmatmul.mubr.bf16.gmra.mrb[0].mxu0 %v811
        %v846 = vpop.f32.mrb[0].mxu0
        %v847 = vadd.f32 0.0, %v846
        %v848 = vpop.f32.mrb[0].mxu0
        %v849 = vpop.f32.mrb[0].mxu0
        %v850 = vpop.f32.mrb[0].mxu0
        %851 = vdwg.mxu0
        %v852 = vmul.f32 %v847, %v847
        %853 = vadd.xlane.f32.xlu0 %v852
        %v854 = vpop.xlane.xlu0 %853
        %v855 = vsub.f32 %v854, %v804
        %v856 = vmul.f32 %v855, -0.0025
        %s857 = scalar_lea.vmem %s255, 48
        %v858 = vld [vmem:[%s857] sm:$0xff]
        %vm859 = vcmp.le.f32.partialorder %v858, %v856
        %v860 = vsel %vm859, 1, 0
        %861 = vset.pattern.permute.xlu0 0
        %862 = vperm.xlu0 %861, %v860
        %v863 = vpop.permute.xlu0 %862
        %vm864 = vcmp.eq.s32.totalorder %v863, 1
        %v865 = vsel %vm864, %v810, %v802
        %v866 = vsel %vm864, %v847, %v803
        %v867 = vsel %vm859, %v854, %v804
        %v868 = vmul.f32 %v866, 0.01
        %v869 = vsub.f32 %v865, %v868
        %s870 = scalar_lea.vmem %s247, 28
        %v871 = vld [vmem:[%s870] sm:$0xf]
        %v872 = vunpack.c.l.bf16 %v871
        %v873 = vadd.f32 %v869, %v872
        %v874 = vpack.c.bf16 %v873, %v873
        %875 = vmatprep.subr.bf16.mxu0 0
        %876 = vmatpush1.bf16.msra.mxu0 %v419
        %877 = vmatprep.subr.bf16.mxu0 0
        %878 = vmatpush1.bf16.msra.mxu0 %v420
        %879 = vmatprep.subr.bf16.mxu0 0
        %880 = vmatpush1.bf16.msra.mxu0 %v421
        %881 = vmatprep.subr.bf16.mxu0 0
        %882 = vmatpush1.bf16.msra.mxu0 %v422
        %883 = vmatprep.subr.bf16.mxu0 0
        %884 = vmatpush1.bf16.msra.mxu0 %v423
        %885 = vmatprep.subr.bf16.mxu0 0
        %886 = vmatpush1.bf16.msra.mxu0 %v424
        %887 = vmatprep.subr.bf16.mxu0 0
        %888 = vmatpush1.bf16.msra.mxu0 %v425
        %889 = vmatprep.subr.bf16.mxu0 0
        %890 = vmatpush1.bf16.msra.mxu0 %v426
        %891 = vmatprep.subr.bf16.mxu0 0
        %892 = vmatpush1.bf16.msra.mxu0 0
        %893 = vmatprep.subr.bf16.mxu0 0
        %894 = vmatpush1.bf16.msra.mxu0 0
        %895 = vmatprep.subr.bf16.mxu0 0
        %896 = vmatpush1.bf16.msra.mxu0 0
        %897 = vmatprep.subr.bf16.mxu0 0
        %898 = vmatpush1.bf16.msra.mxu0 0
        %899 = vmatprep.subr.bf16.mxu0 0
        %900 = vmatpush1.bf16.msra.mxu0 0
        %901 = vmatprep.subr.bf16.mxu0 0
        %902 = vmatpush1.bf16.msra.mxu0 0
        %903 = vmatprep.subr.bf16.mxu0 0
        %904 = vmatpush1.bf16.msra.mxu0 0
        %905 = vmatprep.subr.bf16.mxu0 0
        %906 = vmatpush1.bf16.msra.mxu0 0
        %907 = vmatprep.mubr.bf16.mxu0 0
        %908 = vmatmul.mubr.bf16.gmra.mrb[0].mxu0 %v874
        %v909 = vpop.f32.mrb[0].mxu0
        %v910 = vadd.f32 0.0, %v909
        %v911 = vpop.f32.mrb[0].mxu0
        %v912 = vpop.f32.mrb[0].mxu0
        %v913 = vpop.f32.mrb[0].mxu0
        %914 = vdwg.mxu0
        %v915 = vmul.f32 %v910, %v910
        %916 = vadd.xlane.f32.xlu0 %v915
        %v917 = vpop.xlane.xlu0 %916
        %v918 = vsub.f32 %v917, %v867
        %v919 = vmul.f32 %v918, -0.0025
        %s920 = scalar_lea.vmem %s255, 56
        %v921 = vld [vmem:[%s920] sm:$0xff]
        %vm922 = vcmp.le.f32.partialorder %v921, %v919
        %v923 = vsel %vm922, 1, 0
        %924 = vset.pattern.permute.xlu0 0
        %925 = vperm.xlu0 %924, %v923
        %v926 = vpop.permute.xlu0 %925
        %vm927 = vcmp.eq.s32.totalorder %v926, 1
        %v928 = vsel %vm927, %v873, %v865
        %v929 = vsel %vm927, %v910, %v866
        %v930 = vsel %vm922, %v917, %v867
        %v931 = vmul.f32 %v929, 0.01
        %v932 = vsub.f32 %v928, %v931
        %s933 = scalar_lea.vmem %s247, 32
        %v934 = vld [vmem:[%s933] sm:$0xf]
        %v935 = vunpack.c.l.bf16 %v934
        %v936 = vadd.f32 %v932, %v935
        %v937 = vpack.c.bf16 %v936, %v936
        %938 = vmatprep.subr.bf16.mxu0 0
        %939 = vmatpush1.bf16.msra.mxu0 %v419
        %940 = vmatprep.subr.bf16.mxu0 0
        %941 = vmatpush1.bf16.msra.mxu0 %v420
        %942 = vmatprep.subr.bf16.mxu0 0
        %943 = vmatpush1.bf16.msra.mxu0 %v421
        %944 = vmatprep.subr.bf16.mxu0 0
        %945 = vmatpush1.bf16.msra.mxu0 %v422
        %946 = vmatprep.subr.bf16.mxu0 0
        %947 = vmatpush1.bf16.msra.mxu0 %v423
        %948 = vmatprep.subr.bf16.mxu0 0
        %949 = vmatpush1.bf16.msra.mxu0 %v424
        %950 = vmatprep.subr.bf16.mxu0 0
        %951 = vmatpush1.bf16.msra.mxu0 %v425
        %952 = vmatprep.subr.bf16.mxu0 0
        %953 = vmatpush1.bf16.msra.mxu0 %v426
        %954 = vmatprep.subr.bf16.mxu0 0
        %955 = vmatpush1.bf16.msra.mxu0 0
        %956 = vmatprep.subr.bf16.mxu0 0
        %957 = vmatpush1.bf16.msra.mxu0 0
        %958 = vmatprep.subr.bf16.mxu0 0
        %959 = vmatpush1.bf16.msra.mxu0 0
        %960 = vmatprep.subr.bf16.mxu0 0
        %961 = vmatpush1.bf16.msra.mxu0 0
        %962 = vmatprep.subr.bf16.mxu0 0
        %963 = vmatpush1.bf16.msra.mxu0 0
        %964 = vmatprep.subr.bf16.mxu0 0
        %965 = vmatpush1.bf16.msra.mxu0 0
        %966 = vmatprep.subr.bf16.mxu0 0
        %967 = vmatpush1.bf16.msra.mxu0 0
        %968 = vmatprep.subr.bf16.mxu0 0
        %969 = vmatpush1.bf16.msra.mxu0 0
        %970 = vmatprep.mubr.bf16.mxu0 0
        %971 = vmatmul.mubr.bf16.gmra.mrb[0].mxu0 %v937
        %v972 = vpop.f32.mrb[0].mxu0
        %v973 = vadd.f32 0.0, %v972
        %v974 = vpop.f32.mrb[0].mxu0
        %v975 = vpop.f32.mrb[0].mxu0
        %v976 = vpop.f32.mrb[0].mxu0
        %977 = vdwg.mxu0
        %v978 = vmul.f32 %v973, %v973
        %979 = vadd.xlane.f32.xlu0 %v978
        %v980 = vpop.xlane.xlu0 %979
        %v981 = vsub.f32 %v980, %v930
        %v982 = vmul.f32 %v981, -0.0025
        %s983 = scalar_lea.vmem %s255, 64
        %v984 = vld [vmem:[%s983] sm:$0xff]
        %vm985 = vcmp.le.f32.partialorder %v984, %v982
        %v986 = vsel %vm985, 1, 0
        %987 = vset.pattern.permute.xlu0 0
        %988 = vperm.xlu0 %987, %v986
        %v989 = vpop.permute.xlu0 %988
        %vm990 = vcmp.eq.s32.totalorder %v989, 1
        %v991 = vsel %vm990, %v936, %v928
        %v992 = vsel %vm990, %v973, %v929
        %v993 = vsel %vm985, %v980, %v930
        %v994 = vmul.f32 %v992, 0.01
        %v995 = vsub.f32 %v991, %v994
        %s996 = scalar_lea.vmem %s247, 36
        %v997 = vld [vmem:[%s996] sm:$0xf]
        %v998 = vunpack.c.l.bf16 %v997
        %v999 = vadd.f32 %v995, %v998
        %v1000 = vpack.c.bf16 %v999, %v999
        %1001 = vmatprep.subr.bf16.mxu0 0
        %1002 = vmatpush1.bf16.msra.mxu0 %v419
        %1003 = vmatprep.subr.bf16.mxu0 0
        %1004 = vmatpush1.bf16.msra.mxu0 %v420
        %1005 = vmatprep.subr.bf16.mxu0 0
        %1006 = vmatpush1.bf16.msra.mxu0 %v421
        %1007 = vmatprep.subr.bf16.mxu0 0
        %1008 = vmatpush1.bf16.msra.mxu0 %v422
        %1009 = vmatprep.subr.bf16.mxu0 0
        %1010 = vmatpush1.bf16.msra.mxu0 %v423
        %1011 = vmatprep.subr.bf16.mxu0 0
        %1012 = vmatpush1.bf16.msra.mxu0 %v424
        %1013 = vmatprep.subr.bf16.mxu0 0
        %1014 = vmatpush1.bf16.msra.mxu0 %v425
        %1015 = vmatprep.subr.bf16.mxu0 0
        %1016 = vmatpush1.bf16.msra.mxu0 %v426
        %1017 = vmatprep.subr.bf16.mxu0 0
        %1018 = vmatpush1.bf16.msra.mxu0 0
        %1019 = vmatprep.subr.bf16.mxu0 0
        %1020 = vmatpush1.bf16.msra.mxu0 0
        %1021 = vmatprep.subr.bf16.mxu0 0
        %1022 = vmatpush1.bf16.msra.mxu0 0
        %1023 = vmatprep.subr.bf16.mxu0 0
        %1024 = vmatpush1.bf16.msra.mxu0 0
        %1025 = vmatprep.subr.bf16.mxu0 0
        %1026 = vmatpush1.bf16.msra.mxu0 0
        %1027 = vmatprep.subr.bf16.mxu0 0
        %1028 = vmatpush1.bf16.msra.mxu0 0
        %1029 = vmatprep.subr.bf16.mxu0 0
        %1030 = vmatpush1.bf16.msra.mxu0 0
        %1031 = vmatprep.subr.bf16.mxu0 0
        %1032 = vmatpush1.bf16.msra.mxu0 0
        %1033 = vmatprep.mubr.bf16.mxu0 0
        %1034 = vmatmul.mubr.bf16.gmra.mrb[0].mxu0 %v1000
        %v1035 = vpop.f32.mrb[0].mxu0
        %v1036 = vadd.f32 0.0, %v1035
        %v1037 = vpop.f32.mrb[0].mxu0
        %v1038 = vpop.f32.mrb[0].mxu0
        %v1039 = vpop.f32.mrb[0].mxu0
        %1040 = vdwg.mxu0
        %v1041 = vmul.f32 %v1036, %v1036
        %1042 = vadd.xlane.f32.xlu0 %v1041
        %v1043 = vpop.xlane.xlu0 %1042
        %v1044 = vsub.f32 %v1043, %v993
        %v1045 = vmul.f32 %v1044, -0.0025
        %s1046 = scalar_lea.vmem %s255, 72
        %v1047 = vld [vmem:[%s1046] sm:$0xff]
        %vm1048 = vcmp.le.f32.partialorder %v1047, %v1045
        %v1049 = vsel %vm1048, 1, 0
        %1050 = vset.pattern.permute.xlu0 0
        %1051 = vperm.xlu0 %1050, %v1049
        %v1052 = vpop.permute.xlu0 %1051
        %vm1053 = vcmp.eq.s32.totalorder %v1052, 1
        %v1054 = vsel %vm1053, %v999, %v991
        %v1055 = vsel %vm1053, %v1036, %v992
        %v1056 = vsel %vm1048, %v1043, %v993
        %v1057 = vmul.f32 %v1055, 0.01
        %v1058 = vsub.f32 %v1054, %v1057
        %s1059 = scalar_lea.vmem %s247, 40
        %v1060 = vld [vmem:[%s1059] sm:$0xf]
        %v1061 = vunpack.c.l.bf16 %v1060
        %v1062 = vadd.f32 %v1058, %v1061
        %v1063 = vpack.c.bf16 %v1062, %v1062
        %1064 = vmatprep.subr.bf16.mxu0 0
        %1065 = vmatpush1.bf16.msra.mxu0 %v419
        %1066 = vmatprep.subr.bf16.mxu0 0
        %1067 = vmatpush1.bf16.msra.mxu0 %v420
        %1068 = vmatprep.subr.bf16.mxu0 0
        %1069 = vmatpush1.bf16.msra.mxu0 %v421
        %1070 = vmatprep.subr.bf16.mxu0 0
        %1071 = vmatpush1.bf16.msra.mxu0 %v422
        %1072 = vmatprep.subr.bf16.mxu0 0
        %1073 = vmatpush1.bf16.msra.mxu0 %v423
        %1074 = vmatprep.subr.bf16.mxu0 0
        %1075 = vmatpush1.bf16.msra.mxu0 %v424
        %1076 = vmatprep.subr.bf16.mxu0 0
        %1077 = vmatpush1.bf16.msra.mxu0 %v425
        %1078 = vmatprep.subr.bf16.mxu0 0
        %1079 = vmatpush1.bf16.msra.mxu0 %v426
        %1080 = vmatprep.subr.bf16.mxu0 0
        %1081 = vmatpush1.bf16.msra.mxu0 0
        %1082 = vmatprep.subr.bf16.mxu0 0
        %1083 = vmatpush1.bf16.msra.mxu0 0
        %1084 = vmatprep.subr.bf16.mxu0 0
        %1085 = vmatpush1.bf16.msra.mxu0 0
        %1086 = vmatprep.subr.bf16.mxu0 0
        %1087 = vmatpush1.bf16.msra.mxu0 0
        %1088 = vmatprep.subr.bf16.mxu0 0
        %1089 = vmatpush1.bf16.msra.mxu0 0
        %1090 = vmatprep.subr.bf16.mxu0 0
        %1091 = vmatpush1.bf16.msra.mxu0 0
        %1092 = vmatprep.subr.bf16.mxu0 0
        %1093 = vmatpush1.bf16.msra.mxu0 0
        %1094 = vmatprep.subr.bf16.mxu0 0
        %1095 = vmatpush1.bf16.msra.mxu0 0
        %1096 = vmatprep.mubr.bf16.mxu0 0
        %1097 = vmatmul.mubr.bf16.gmra.mrb[0].mxu0 %v1063
        %v1098 = vpop.f32.mrb[0].mxu0
        %v1099 = vadd.f32 0.0, %v1098
        %v1100 = vpop.f32.mrb[0].mxu0
        %v1101 = vpop.f32.mrb[0].mxu0
        %v1102 = vpop.f32.mrb[0].mxu0
        %1103 = vdwg.mxu0
        %v1104 = vmul.f32 %v1099, %v1099
        %1105 = vadd.xlane.f32.xlu0 %v1104
        %v1106 = vpop.xlane.xlu0 %1105
        %v1107 = vsub.f32 %v1106, %v1056
        %v1108 = vmul.f32 %v1107, -0.0025
        %s1109 = scalar_lea.vmem %s255, 80
        %v1110 = vld [vmem:[%s1109] sm:$0xff]
        %vm1111 = vcmp.le.f32.partialorder %v1110, %v1108
        %v1112 = vsel %vm1111, 1, 0
        %1113 = vset.pattern.permute.xlu0 0
        %1114 = vperm.xlu0 %1113, %v1112
        %v1115 = vpop.permute.xlu0 %1114
        %vm1116 = vcmp.eq.s32.totalorder %v1115, 1
        %v1117 = vsel %vm1116, %v1062, %v1054
        %v1118 = vsel %vm1116, %v1099, %v1055
        %v1119 = vsel %vm1111, %v1106, %v1056
        %v1120 = vmul.f32 %v1118, 0.01
        %v1121 = vsub.f32 %v1117, %v1120
        %s1122 = scalar_lea.vmem %s247, 44
        %v1123 = vld [vmem:[%s1122] sm:$0xf]
        %v1124 = vunpack.c.l.bf16 %v1123
        %v1125 = vadd.f32 %v1121, %v1124
        %v1126 = vpack.c.bf16 %v1125, %v1125
        %1127 = vmatprep.subr.bf16.mxu0 0
        %1128 = vmatpush1.bf16.msra.mxu0 %v419
        %1129 = vmatprep.subr.bf16.mxu0 0
        %1130 = vmatpush1.bf16.msra.mxu0 %v420
        %1131 = vmatprep.subr.bf16.mxu0 0
        %1132 = vmatpush1.bf16.msra.mxu0 %v421
        %1133 = vmatprep.subr.bf16.mxu0 0
        %1134 = vmatpush1.bf16.msra.mxu0 %v422
        %1135 = vmatprep.subr.bf16.mxu0 0
        %1136 = vmatpush1.bf16.msra.mxu0 %v423
        %1137 = vmatprep.subr.bf16.mxu0 0
        %1138 = vmatpush1.bf16.msra.mxu0 %v424
        %1139 = vmatprep.subr.bf16.mxu0 0
        %1140 = vmatpush1.bf16.msra.mxu0 %v425
        %1141 = vmatprep.subr.bf16.mxu0 0
        %1142 = vmatpush1.bf16.msra.mxu0 %v426
        %1143 = vmatprep.subr.bf16.mxu0 0
        %1144 = vmatpush1.bf16.msra.mxu0 0
        %1145 = vmatprep.subr.bf16.mxu0 0
        %1146 = vmatpush1.bf16.msra.mxu0 0
        %1147 = vmatprep.subr.bf16.mxu0 0
        %1148 = vmatpush1.bf16.msra.mxu0 0
        %1149 = vmatprep.subr.bf16.mxu0 0
        %1150 = vmatpush1.bf16.msra.mxu0 0
        %1151 = vmatprep.subr.bf16.mxu0 0
        %1152 = vmatpush1.bf16.msra.mxu0 0
        %1153 = vmatprep.subr.bf16.mxu0 0
        %1154 = vmatpush1.bf16.msra.mxu0 0
        %1155 = vmatprep.subr.bf16.mxu0 0
        %1156 = vmatpush1.bf16.msra.mxu0 0
        %1157 = vmatprep.subr.bf16.mxu0 0
        %1158 = vmatpush1.bf16.msra.mxu0 0
        %1159 = vmatprep.mubr.bf16.mxu0 0
        %1160 = vmatmul.mubr.bf16.gmra.mrb[0].mxu0 %v1126
        %v1161 = vpop.f32.mrb[0].mxu0
        %v1162 = vadd.f32 0.0, %v1161
        %v1163 = vpop.f32.mrb[0].mxu0
        %v1164 = vpop.f32.mrb[0].mxu0
        %v1165 = vpop.f32.mrb[0].mxu0
        %1166 = vdwg.mxu0
        %v1167 = vmul.f32 %v1162, %v1162
        %1168 = vadd.xlane.f32.xlu0 %v1167
        %v1169 = vpop.xlane.xlu0 %1168
        %v1170 = vsub.f32 %v1169, %v1119
        %v1171 = vmul.f32 %v1170, -0.0025
        %s1172 = scalar_lea.vmem %s255, 88
        %v1173 = vld [vmem:[%s1172] sm:$0xff]
        %vm1174 = vcmp.le.f32.partialorder %v1173, %v1171
        %v1175 = vsel %vm1174, 1, 0
        %1176 = vset.pattern.permute.xlu0 0
        %1177 = vperm.xlu0 %1176, %v1175
        %v1178 = vpop.permute.xlu0 %1177
        %vm1179 = vcmp.eq.s32.totalorder %v1178, 1
        %v1180 = vsel %vm1179, %v1125, %v1117
        %v1181 = vsel %vm1179, %v1162, %v1118
        %v1182 = vsel %vm1174, %v1169, %v1119
        %v1183 = vmul.f32 %v1181, 0.01
        %v1184 = vsub.f32 %v1180, %v1183
        %s1185 = scalar_lea.vmem %s247, 48
        %v1186 = vld [vmem:[%s1185] sm:$0xf]
        %v1187 = vunpack.c.l.bf16 %v1186
        %v1188 = vadd.f32 %v1184, %v1187
        %v1189 = vpack.c.bf16 %v1188, %v1188
        %1190 = vmatprep.subr.bf16.mxu0 0
        %1191 = vmatpush1.bf16.msra.mxu0 %v419
        %1192 = vmatprep.subr.bf16.mxu0 0
        %1193 = vmatpush1.bf16.msra.mxu0 %v420
        %1194 = vmatprep.subr.bf16.mxu0 0
        %1195 = vmatpush1.bf16.msra.mxu0 %v421
        %1196 = vmatprep.subr.bf16.mxu0 0
        %1197 = vmatpush1.bf16.msra.mxu0 %v422
        %1198 = vmatprep.subr.bf16.mxu0 0
        %1199 = vmatpush1.bf16.msra.mxu0 %v423
        %1200 = vmatprep.subr.bf16.mxu0 0
        %1201 = vmatpush1.bf16.msra.mxu0 %v424
        %1202 = vmatprep.subr.bf16.mxu0 0
        %1203 = vmatpush1.bf16.msra.mxu0 %v425
        %1204 = vmatprep.subr.bf16.mxu0 0
        %1205 = vmatpush1.bf16.msra.mxu0 %v426
        %1206 = vmatprep.subr.bf16.mxu0 0
        %1207 = vmatpush1.bf16.msra.mxu0 0
        %1208 = vmatprep.subr.bf16.mxu0 0
        %1209 = vmatpush1.bf16.msra.mxu0 0
        %1210 = vmatprep.subr.bf16.mxu0 0
        %1211 = vmatpush1.bf16.msra.mxu0 0
        %1212 = vmatprep.subr.bf16.mxu0 0
        %1213 = vmatpush1.bf16.msra.mxu0 0
        %1214 = vmatprep.subr.bf16.mxu0 0
        %1215 = vmatpush1.bf16.msra.mxu0 0
        %1216 = vmatprep.subr.bf16.mxu0 0
        %1217 = vmatpush1.bf16.msra.mxu0 0
        %1218 = vmatprep.subr.bf16.mxu0 0
        %1219 = vmatpush1.bf16.msra.mxu0 0
        %1220 = vmatprep.subr.bf16.mxu0 0
        %1221 = vmatpush1.bf16.msra.mxu0 0
        %1222 = vmatprep.mubr.bf16.mxu0 0
        %1223 = vmatmul.mubr.bf16.gmra.mrb[0].mxu0 %v1189
        %v1224 = vpop.f32.mrb[0].mxu0
        %v1225 = vadd.f32 0.0, %v1224
        %v1226 = vpop.f32.mrb[0].mxu0
        %v1227 = vpop.f32.mrb[0].mxu0
        %v1228 = vpop.f32.mrb[0].mxu0
        %1229 = vdwg.mxu0
        %v1230 = vmul.f32 %v1225, %v1225
        %1231 = vadd.xlane.f32.xlu0 %v1230
        %v1232 = vpop.xlane.xlu0 %1231
        %v1233 = vsub.f32 %v1232, %v1182
        %v1234 = vmul.f32 %v1233, -0.0025
        %s1235 = scalar_lea.vmem %s255, 96
        %v1236 = vld [vmem:[%s1235] sm:$0xff]
        %vm1237 = vcmp.le.f32.partialorder %v1236, %v1234
        %v1238 = vsel %vm1237, 1, 0
        %1239 = vset.pattern.permute.xlu0 0
        %1240 = vperm.xlu0 %1239, %v1238
        %v1241 = vpop.permute.xlu0 %1240
        %vm1242 = vcmp.eq.s32.totalorder %v1241, 1
        %v1243 = vsel %vm1242, %v1188, %v1180
        %v1244 = vsel %vm1242, %v1225, %v1181
        %v1245 = vsel %vm1237, %v1232, %v1182
        %v1246 = vmul.f32 %v1244, 0.01
        %v1247 = vsub.f32 %v1243, %v1246
        %s1248 = scalar_lea.vmem %s247, 52
        %v1249 = vld [vmem:[%s1248] sm:$0xf]
        %v1250 = vunpack.c.l.bf16 %v1249
        %v1251 = vadd.f32 %v1247, %v1250
        %v1252 = vpack.c.bf16 %v1251, %v1251
        %1253 = vmatprep.subr.bf16.mxu0 0
        %1254 = vmatpush1.bf16.msra.mxu0 %v419
        %1255 = vmatprep.subr.bf16.mxu0 0
        %1256 = vmatpush1.bf16.msra.mxu0 %v420
        %1257 = vmatprep.subr.bf16.mxu0 0
        %1258 = vmatpush1.bf16.msra.mxu0 %v421
        %1259 = vmatprep.subr.bf16.mxu0 0
        %1260 = vmatpush1.bf16.msra.mxu0 %v422
        %1261 = vmatprep.subr.bf16.mxu0 0
        %1262 = vmatpush1.bf16.msra.mxu0 %v423
        %1263 = vmatprep.subr.bf16.mxu0 0
        %1264 = vmatpush1.bf16.msra.mxu0 %v424
        %1265 = vmatprep.subr.bf16.mxu0 0
        %1266 = vmatpush1.bf16.msra.mxu0 %v425
        %1267 = vmatprep.subr.bf16.mxu0 0
        %1268 = vmatpush1.bf16.msra.mxu0 %v426
        %1269 = vmatprep.subr.bf16.mxu0 0
        %1270 = vmatpush1.bf16.msra.mxu0 0
        %1271 = vmatprep.subr.bf16.mxu0 0
        %1272 = vmatpush1.bf16.msra.mxu0 0
        %1273 = vmatprep.subr.bf16.mxu0 0
        %1274 = vmatpush1.bf16.msra.mxu0 0
        %1275 = vmatprep.subr.bf16.mxu0 0
        %1276 = vmatpush1.bf16.msra.mxu0 0
        %1277 = vmatprep.subr.bf16.mxu0 0
        %1278 = vmatpush1.bf16.msra.mxu0 0
        %1279 = vmatprep.subr.bf16.mxu0 0
        %1280 = vmatpush1.bf16.msra.mxu0 0
        %1281 = vmatprep.subr.bf16.mxu0 0
        %1282 = vmatpush1.bf16.msra.mxu0 0
        %1283 = vmatprep.subr.bf16.mxu0 0
        %1284 = vmatpush1.bf16.msra.mxu0 0
        %1285 = vmatprep.mubr.bf16.mxu0 0
        %1286 = vmatmul.mubr.bf16.gmra.mrb[0].mxu0 %v1252
        %v1287 = vpop.f32.mrb[0].mxu0
        %v1288 = vadd.f32 0.0, %v1287
        %v1289 = vpop.f32.mrb[0].mxu0
        %v1290 = vpop.f32.mrb[0].mxu0
        %v1291 = vpop.f32.mrb[0].mxu0
        %1292 = vdwg.mxu0
        %v1293 = vmul.f32 %v1288, %v1288
        %1294 = vadd.xlane.f32.xlu0 %v1293
        %v1295 = vpop.xlane.xlu0 %1294
        %v1296 = vsub.f32 %v1295, %v1245
        %v1297 = vmul.f32 %v1296, -0.0025
        %s1298 = scalar_lea.vmem %s255, 104
        %v1299 = vld [vmem:[%s1298] sm:$0xff]
        %vm1300 = vcmp.le.f32.partialorder %v1299, %v1297
        %v1301 = vsel %vm1300, 1, 0
        %1302 = vset.pattern.permute.xlu0 0
        %1303 = vperm.xlu0 %1302, %v1301
        %v1304 = vpop.permute.xlu0 %1303
        %vm1305 = vcmp.eq.s32.totalorder %v1304, 1
        %v1306 = vsel %vm1305, %v1251, %v1243
        %v1307 = vsel %vm1305, %v1288, %v1244
        %v1308 = vsel %vm1300, %v1295, %v1245
        %v1309 = vmul.f32 %v1307, 0.01
        %v1310 = vsub.f32 %v1306, %v1309
        %s1311 = scalar_lea.vmem %s247, 56
        %v1312 = vld [vmem:[%s1311] sm:$0xf]
        %v1313 = vunpack.c.l.bf16 %v1312
        %v1314 = vadd.f32 %v1310, %v1313
        %v1315 = vpack.c.bf16 %v1314, %v1314
        %1316 = vmatprep.subr.bf16.mxu0 0
        %1317 = vmatpush1.bf16.msra.mxu0 %v419
        %1318 = vmatprep.subr.bf16.mxu0 0
        %1319 = vmatpush1.bf16.msra.mxu0 %v420
        %1320 = vmatprep.subr.bf16.mxu0 0
        %1321 = vmatpush1.bf16.msra.mxu0 %v421
        %1322 = vmatprep.subr.bf16.mxu0 0
        %1323 = vmatpush1.bf16.msra.mxu0 %v422
        %1324 = vmatprep.subr.bf16.mxu0 0
        %1325 = vmatpush1.bf16.msra.mxu0 %v423
        %1326 = vmatprep.subr.bf16.mxu0 0
        %1327 = vmatpush1.bf16.msra.mxu0 %v424
        %1328 = vmatprep.subr.bf16.mxu0 0
        %1329 = vmatpush1.bf16.msra.mxu0 %v425
        %1330 = vmatprep.subr.bf16.mxu0 0
        %1331 = vmatpush1.bf16.msra.mxu0 %v426
        %1332 = vmatprep.subr.bf16.mxu0 0
        %1333 = vmatpush1.bf16.msra.mxu0 0
        %1334 = vmatprep.subr.bf16.mxu0 0
        %1335 = vmatpush1.bf16.msra.mxu0 0
        %1336 = vmatprep.subr.bf16.mxu0 0
        %1337 = vmatpush1.bf16.msra.mxu0 0
        %1338 = vmatprep.subr.bf16.mxu0 0
        %1339 = vmatpush1.bf16.msra.mxu0 0
        %1340 = vmatprep.subr.bf16.mxu0 0
        %1341 = vmatpush1.bf16.msra.mxu0 0
        %1342 = vmatprep.subr.bf16.mxu0 0
        %1343 = vmatpush1.bf16.msra.mxu0 0
        %1344 = vmatprep.subr.bf16.mxu0 0
        %1345 = vmatpush1.bf16.msra.mxu0 0
        %1346 = vmatprep.subr.bf16.mxu0 0
        %1347 = vmatpush1.bf16.msra.mxu0 0
        %1348 = vmatprep.mubr.bf16.mxu0 0
        %1349 = vmatmul.mubr.bf16.gmra.mrb[0].mxu0 %v1315
        %v1350 = vpop.f32.mrb[0].mxu0
        %v1351 = vadd.f32 0.0, %v1350
        %v1352 = vpop.f32.mrb[0].mxu0
        %v1353 = vpop.f32.mrb[0].mxu0
        %v1354 = vpop.f32.mrb[0].mxu0
        %1355 = vdwg.mxu0
        %v1356 = vmul.f32 %v1351, %v1351
        %1357 = vadd.xlane.f32.xlu0 %v1356
        %v1358 = vpop.xlane.xlu0 %1357
        %v1359 = vsub.f32 %v1358, %v1308
        %v1360 = vmul.f32 %v1359, -0.0025
        %s1361 = scalar_lea.vmem %s255, 112
        %v1362 = vld [vmem:[%s1361] sm:$0xff]
        %vm1363 = vcmp.le.f32.partialorder %v1362, %v1360
        %v1364 = vsel %vm1363, 1, 0
        %1365 = vset.pattern.permute.xlu0 0
        %1366 = vperm.xlu0 %1365, %v1364
        %v1367 = vpop.permute.xlu0 %1366
        %vm1368 = vcmp.eq.s32.totalorder %v1367, 1
        %v1369 = vsel %vm1368, %v1314, %v1306
        %v1370 = vsel %vm1368, %v1351, %v1307
        %v1371 = vsel %vm1363, %v1358, %v1308
        %v1372 = vmul.f32 %v1370, 0.01
        %v1373 = vsub.f32 %v1369, %v1372
        %s1374 = scalar_lea.vmem %s247, 60
        %v1375 = vld [vmem:[%s1374] sm:$0xf]
        %v1376 = vunpack.c.l.bf16 %v1375
        %v1377 = vadd.f32 %v1373, %v1376
        %v1378 = vpack.c.bf16 %v1377, %v1377
        %1379 = vmatprep.subr.bf16.mxu0 0
        %1380 = vmatpush1.bf16.msra.mxu0 %v419
        %1381 = vmatprep.subr.bf16.mxu0 0
        %1382 = vmatpush1.bf16.msra.mxu0 %v420
        %1383 = vmatprep.subr.bf16.mxu0 0
        %1384 = vmatpush1.bf16.msra.mxu0 %v421
        %1385 = vmatprep.subr.bf16.mxu0 0
        %1386 = vmatpush1.bf16.msra.mxu0 %v422
        %1387 = vmatprep.subr.bf16.mxu0 0
        %1388 = vmatpush1.bf16.msra.mxu0 %v423
        %1389 = vmatprep.subr.bf16.mxu0 0
        %1390 = vmatpush1.bf16.msra.mxu0 %v424
        %1391 = vmatprep.subr.bf16.mxu0 0
        %1392 = vmatpush1.bf16.msra.mxu0 %v425
        %1393 = vmatprep.subr.bf16.mxu0 0
        %1394 = vmatpush1.bf16.msra.mxu0 %v426
        %1395 = vmatprep.subr.bf16.mxu0 0
        %1396 = vmatpush1.bf16.msra.mxu0 0
        %1397 = vmatprep.subr.bf16.mxu0 0
        %1398 = vmatpush1.bf16.msra.mxu0 0
        %1399 = vmatprep.subr.bf16.mxu0 0
        %1400 = vmatpush1.bf16.msra.mxu0 0
        %1401 = vmatprep.subr.bf16.mxu0 0
        %1402 = vmatpush1.bf16.msra.mxu0 0
        %1403 = vmatprep.subr.bf16.mxu0 0
        %1404 = vmatpush1.bf16.msra.mxu0 0
        %1405 = vmatprep.subr.bf16.mxu0 0
        %1406 = vmatpush1.bf16.msra.mxu0 0
        %1407 = vmatprep.subr.bf16.mxu0 0
        %1408 = vmatpush1.bf16.msra.mxu0 0
        %1409 = vmatprep.subr.bf16.mxu0 0
        %1410 = vmatpush1.bf16.msra.mxu0 0
        %1411 = vmatprep.mubr.bf16.mxu0 0
        %1412 = vmatmul.mubr.bf16.gmra.mrb[0].mxu0 %v1378
        %v1413 = vpop.f32.mrb[0].mxu0
        %v1414 = vadd.f32 0.0, %v1413
        %v1415 = vpop.f32.mrb[0].mxu0
        %v1416 = vpop.f32.mrb[0].mxu0
        %v1417 = vpop.f32.mrb[0].mxu0
        %1418 = vdwg.mxu0
        %v1419 = vmul.f32 %v1414, %v1414
        %1420 = vadd.xlane.f32.xlu0 %v1419
        %v1421 = vpop.xlane.xlu0 %1420
        %v1422 = vsub.f32 %v1421, %v1371
        %v1423 = vmul.f32 %v1422, -0.0025
        %s1424 = scalar_lea.vmem %s255, 120
        %v1425 = vld [vmem:[%s1424] sm:$0xff]
        %vm1426 = vcmp.le.f32.partialorder %v1425, %v1423
        %v1427 = vsel %vm1426, 1, 0
        %1428 = vset.pattern.permute.xlu0 0
        %1429 = vperm.xlu0 %1428, %v1427
        %v1430 = vpop.permute.xlu0 %1429
        %vm1431 = vcmp.eq.s32.totalorder %v1430, 1
        %v1432 = vsel %vm1431, %v1377, %v1369
        %v1433 = vsel %vm1431, %v1414, %v1370
        %v1434 = vsel %vm1426, %v1421, %v1371
        %v1435 = vmul.f32 %v1433, 0.01
        %v1436 = vsub.f32 %v1432, %v1435
        %s1437 = scalar_lea.vmem %s247, 64
        %v1438 = vld [vmem:[%s1437] sm:$0xf]
        %v1439 = vunpack.c.l.bf16 %v1438
        %v1440 = vadd.f32 %v1436, %v1439
        %v1441 = vpack.c.bf16 %v1440, %v1440
        %1442 = vmatprep.subr.bf16.mxu0 0
        %1443 = vmatpush1.bf16.msra.mxu0 %v419
        %1444 = vmatprep.subr.bf16.mxu0 0
        %1445 = vmatpush1.bf16.msra.mxu0 %v420
        %1446 = vmatprep.subr.bf16.mxu0 0
        %1447 = vmatpush1.bf16.msra.mxu0 %v421
        %1448 = vmatprep.subr.bf16.mxu0 0
        %1449 = vmatpush1.bf16.msra.mxu0 %v422
        %1450 = vmatprep.subr.bf16.mxu0 0
        %1451 = vmatpush1.bf16.msra.mxu0 %v423
        %1452 = vmatprep.subr.bf16.mxu0 0
        %1453 = vmatpush1.bf16.msra.mxu0 %v424
        %1454 = vmatprep.subr.bf16.mxu0 0
        %1455 = vmatpush1.bf16.msra.mxu0 %v425
        %1456 = vmatprep.subr.bf16.mxu0 0
        %1457 = vmatpush1.bf16.msra.mxu0 %v426
        %1458 = vmatprep.subr.bf16.mxu0 0
        %1459 = vmatpush1.bf16.msra.mxu0 0
        %1460 = vmatprep.subr.bf16.mxu0 0
        %1461 = vmatpush1.bf16.msra.mxu0 0
        %1462 = vmatprep.subr.bf16.mxu0 0
        %1463 = vmatpush1.bf16.msra.mxu0 0
        %1464 = vmatprep.subr.bf16.mxu0 0
        %1465 = vmatpush1.bf16.msra.mxu0 0
        %1466 = vmatprep.subr.bf16.mxu0 0
        %1467 = vmatpush1.bf16.msra.mxu0 0
        %1468 = vmatprep.subr.bf16.mxu0 0
        %1469 = vmatpush1.bf16.msra.mxu0 0
        %1470 = vmatprep.subr.bf16.mxu0 0
        %1471 = vmatpush1.bf16.msra.mxu0 0
        %1472 = vmatprep.subr.bf16.mxu0 0
        %1473 = vmatpush1.bf16.msra.mxu0 0
        %1474 = vmatprep.mubr.bf16.mxu0 0
        %1475 = vmatmul.mubr.bf16.gmra.mrb[0].mxu0 %v1441
        %v1476 = vpop.f32.mrb[0].mxu0
        %v1477 = vadd.f32 0.0, %v1476
        %v1478 = vpop.f32.mrb[0].mxu0
        %v1479 = vpop.f32.mrb[0].mxu0
        %v1480 = vpop.f32.mrb[0].mxu0
        %1481 = vdwg.mxu0
        %v1482 = vmul.f32 %v1477, %v1477
        %1483 = vadd.xlane.f32.xlu0 %v1482
        %v1484 = vpop.xlane.xlu0 %1483
        %v1485 = vsub.f32 %v1484, %v1434
        %v1486 = vmul.f32 %v1485, -0.0025
        %s1487 = scalar_lea.vmem %s255, 128
        %v1488 = vld [vmem:[%s1487] sm:$0xff]
        %vm1489 = vcmp.le.f32.partialorder %v1488, %v1486
        %v1490 = vsel %vm1489, 1, 0
        %1491 = vset.pattern.permute.xlu0 0
        %1492 = vperm.xlu0 %1491, %v1490
        %v1493 = vpop.permute.xlu0 %1492
        %vm1494 = vcmp.eq.s32.totalorder %v1493, 1
        %v1495 = vsel %vm1494, %v1440, %v1432
        %v1496 = vsel %vm1494, %v1477, %v1433
        %v1497 = vsel %vm1489, %v1484, %v1434
        %v1498 = vmul.f32 %v1496, 0.01
        %v1499 = vsub.f32 %v1495, %v1498
        %s1500 = scalar_lea.vmem %s247, 68
        %v1501 = vld [vmem:[%s1500] sm:$0xf]
        %v1502 = vunpack.c.l.bf16 %v1501
        %v1503 = vadd.f32 %v1499, %v1502
        %v1504 = vpack.c.bf16 %v1503, %v1503
        %1505 = vmatprep.subr.bf16.mxu0 0
        %1506 = vmatpush1.bf16.msra.mxu0 %v419
        %1507 = vmatprep.subr.bf16.mxu0 0
        %1508 = vmatpush1.bf16.msra.mxu0 %v420
        %1509 = vmatprep.subr.bf16.mxu0 0
        %1510 = vmatpush1.bf16.msra.mxu0 %v421
        %1511 = vmatprep.subr.bf16.mxu0 0
        %1512 = vmatpush1.bf16.msra.mxu0 %v422
        %1513 = vmatprep.subr.bf16.mxu0 0
        %1514 = vmatpush1.bf16.msra.mxu0 %v423
        %1515 = vmatprep.subr.bf16.mxu0 0
        %1516 = vmatpush1.bf16.msra.mxu0 %v424
        %1517 = vmatprep.subr.bf16.mxu0 0
        %1518 = vmatpush1.bf16.msra.mxu0 %v425
        %1519 = vmatprep.subr.bf16.mxu0 0
        %1520 = vmatpush1.bf16.msra.mxu0 %v426
        %1521 = vmatprep.subr.bf16.mxu0 0
        %1522 = vmatpush1.bf16.msra.mxu0 0
        %1523 = vmatprep.subr.bf16.mxu0 0
        %1524 = vmatpush1.bf16.msra.mxu0 0
        %1525 = vmatprep.subr.bf16.mxu0 0
        %1526 = vmatpush1.bf16.msra.mxu0 0
        %1527 = vmatprep.subr.bf16.mxu0 0
        %1528 = vmatpush1.bf16.msra.mxu0 0
        %1529 = vmatprep.subr.bf16.mxu0 0
        %1530 = vmatpush1.bf16.msra.mxu0 0
        %1531 = vmatprep.subr.bf16.mxu0 0
        %1532 = vmatpush1.bf16.msra.mxu0 0
        %1533 = vmatprep.subr.bf16.mxu0 0
        %1534 = vmatpush1.bf16.msra.mxu0 0
        %1535 = vmatprep.subr.bf16.mxu0 0
        %1536 = vmatpush1.bf16.msra.mxu0 0
        %1537 = vmatprep.mubr.bf16.mxu0 0
        %1538 = vmatmul.mubr.bf16.gmra.mrb[0].mxu0 %v1504
        %v1539 = vpop.f32.mrb[0].mxu0
        %v1540 = vadd.f32 0.0, %v1539
        %v1541 = vpop.f32.mrb[0].mxu0
        %v1542 = vpop.f32.mrb[0].mxu0
        %v1543 = vpop.f32.mrb[0].mxu0
        %1544 = vdwg.mxu0
        %v1545 = vmul.f32 %v1540, %v1540
        %1546 = vadd.xlane.f32.xlu0 %v1545
        %v1547 = vpop.xlane.xlu0 %1546
        %v1548 = vsub.f32 %v1547, %v1497
        %v1549 = vmul.f32 %v1548, -0.0025
        %s1550 = scalar_lea.vmem %s255, 136
        %v1551 = vld [vmem:[%s1550] sm:$0xff]
        %vm1552 = vcmp.le.f32.partialorder %v1551, %v1549
        %v1553 = vsel %vm1552, 1, 0
        %1554 = vset.pattern.permute.xlu0 0
        %1555 = vperm.xlu0 %1554, %v1553
        %v1556 = vpop.permute.xlu0 %1555
        %vm1557 = vcmp.eq.s32.totalorder %v1556, 1
        %v1558 = vsel %vm1557, %v1503, %v1495
        %v1559 = vsel %vm1557, %v1540, %v1496
        %v1560 = vsel %vm1552, %v1547, %v1497
        %v1561 = vmul.f32 %v1559, 0.01
        %v1562 = vsub.f32 %v1558, %v1561
        %s1563 = scalar_lea.vmem %s247, 72
        %v1564 = vld [vmem:[%s1563] sm:$0xf]
        %v1565 = vunpack.c.l.bf16 %v1564
        %v1566 = vadd.f32 %v1562, %v1565
        %v1567 = vpack.c.bf16 %v1566, %v1566
        %1568 = vmatprep.subr.bf16.mxu0 0
        %1569 = vmatpush1.bf16.msra.mxu0 %v419
        %1570 = vmatprep.subr.bf16.mxu0 0
        %1571 = vmatpush1.bf16.msra.mxu0 %v420
        %1572 = vmatprep.subr.bf16.mxu0 0
        %1573 = vmatpush1.bf16.msra.mxu0 %v421
        %1574 = vmatprep.subr.bf16.mxu0 0
        %1575 = vmatpush1.bf16.msra.mxu0 %v422
        %1576 = vmatprep.subr.bf16.mxu0 0
        %1577 = vmatpush1.bf16.msra.mxu0 %v423
        %1578 = vmatprep.subr.bf16.mxu0 0
        %1579 = vmatpush1.bf16.msra.mxu0 %v424
        %1580 = vmatprep.subr.bf16.mxu0 0
        %1581 = vmatpush1.bf16.msra.mxu0 %v425
        %1582 = vmatprep.subr.bf16.mxu0 0
        %1583 = vmatpush1.bf16.msra.mxu0 %v426
        %1584 = vmatprep.subr.bf16.mxu0 0
        %1585 = vmatpush1.bf16.msra.mxu0 0
        %1586 = vmatprep.subr.bf16.mxu0 0
        %1587 = vmatpush1.bf16.msra.mxu0 0
        %1588 = vmatprep.subr.bf16.mxu0 0
        %1589 = vmatpush1.bf16.msra.mxu0 0
        %1590 = vmatprep.subr.bf16.mxu0 0
        %1591 = vmatpush1.bf16.msra.mxu0 0
        %1592 = vmatprep.subr.bf16.mxu0 0
        %1593 = vmatpush1.bf16.msra.mxu0 0
        %1594 = vmatprep.subr.bf16.mxu0 0
        %1595 = vmatpush1.bf16.msra.mxu0 0
        %1596 = vmatprep.subr.bf16.mxu0 0
        %1597 = vmatpush1.bf16.msra.mxu0 0
        %1598 = vmatprep.subr.bf16.mxu0 0
        %1599 = vmatpush1.bf16.msra.mxu0 0
        %1600 = vmatprep.mubr.bf16.mxu0 0
        %1601 = vmatmul.mubr.bf16.gmra.mrb[0].mxu0 %v1567
        %v1602 = vpop.f32.mrb[0].mxu0
        %v1603 = vadd.f32 0.0, %v1602
        %v1604 = vpop.f32.mrb[0].mxu0
        %v1605 = vpop.f32.mrb[0].mxu0
        %v1606 = vpop.f32.mrb[0].mxu0
        %1607 = vdwg.mxu0
        %v1608 = vmul.f32 %v1603, %v1603
        %1609 = vadd.xlane.f32.xlu0 %v1608
        %v1610 = vpop.xlane.xlu0 %1609
        %v1611 = vsub.f32 %v1610, %v1560
        %v1612 = vmul.f32 %v1611, -0.0025
        %s1613 = scalar_lea.vmem %s255, 144
        %v1614 = vld [vmem:[%s1613] sm:$0xff]
        %vm1615 = vcmp.le.f32.partialorder %v1614, %v1612
        %v1616 = vsel %vm1615, 1, 0
        %1617 = vset.pattern.permute.xlu0 0
        %1618 = vperm.xlu0 %1617, %v1616
        %v1619 = vpop.permute.xlu0 %1618
        %vm1620 = vcmp.eq.s32.totalorder %v1619, 1
        %v1621 = vsel %vm1620, %v1566, %v1558
        %v1622 = vsel %vm1620, %v1603, %v1559
        %v1623 = vsel %vm1615, %v1610, %v1560
        %v1624 = vmul.f32 %v1622, 0.01
        %v1625 = vsub.f32 %v1621, %v1624
        %s1626 = scalar_lea.vmem %s247, 76
        %v1627 = vld [vmem:[%s1626] sm:$0xf]
        %v1628 = vunpack.c.l.bf16 %v1627
        %v1629 = vadd.f32 %v1625, %v1628
        %v1630 = vpack.c.bf16 %v1629, %v1629
        %1631 = vmatprep.subr.bf16.mxu0 0
        %1632 = vmatpush1.bf16.msra.mxu0 %v419
        %1633 = vmatprep.subr.bf16.mxu0 0
        %1634 = vmatpush1.bf16.msra.mxu0 %v420
        %1635 = vmatprep.subr.bf16.mxu0 0
        %1636 = vmatpush1.bf16.msra.mxu0 %v421
        %1637 = vmatprep.subr.bf16.mxu0 0
        %1638 = vmatpush1.bf16.msra.mxu0 %v422
        %1639 = vmatprep.subr.bf16.mxu0 0
        %1640 = vmatpush1.bf16.msra.mxu0 %v423
        %1641 = vmatprep.subr.bf16.mxu0 0
        %1642 = vmatpush1.bf16.msra.mxu0 %v424
        %1643 = vmatprep.subr.bf16.mxu0 0
        %1644 = vmatpush1.bf16.msra.mxu0 %v425
        %1645 = vmatprep.subr.bf16.mxu0 0
        %1646 = vmatpush1.bf16.msra.mxu0 %v426
        %1647 = vmatprep.subr.bf16.mxu0 0
        %1648 = vmatpush1.bf16.msra.mxu0 0
        %1649 = vmatprep.subr.bf16.mxu0 0
        %1650 = vmatpush1.bf16.msra.mxu0 0
        %1651 = vmatprep.subr.bf16.mxu0 0
        %1652 = vmatpush1.bf16.msra.mxu0 0
        %1653 = vmatprep.subr.bf16.mxu0 0
        %1654 = vmatpush1.bf16.msra.mxu0 0
        %1655 = vmatprep.subr.bf16.mxu0 0
        %1656 = vmatpush1.bf16.msra.mxu0 0
        %1657 = vmatprep.subr.bf16.mxu0 0
        %1658 = vmatpush1.bf16.msra.mxu0 0
        %1659 = vmatprep.subr.bf16.mxu0 0
        %1660 = vmatpush1.bf16.msra.mxu0 0
        %1661 = vmatprep.subr.bf16.mxu0 0
        %1662 = vmatpush1.bf16.msra.mxu0 0
        %1663 = vmatprep.mubr.bf16.mxu0 0
        %1664 = vmatmul.mubr.bf16.gmra.mrb[0].mxu0 %v1630
        %v1665 = vpop.f32.mrb[0].mxu0
        %v1666 = vadd.f32 0.0, %v1665
        %v1667 = vpop.f32.mrb[0].mxu0
        %v1668 = vpop.f32.mrb[0].mxu0
        %v1669 = vpop.f32.mrb[0].mxu0
        %1670 = vdwg.mxu0
        %v1671 = vmul.f32 %v1666, %v1666
        %1672 = vadd.xlane.f32.xlu0 %v1671
        %v1673 = vpop.xlane.xlu0 %1672
        %v1674 = vsub.f32 %v1673, %v1623
        %v1675 = vmul.f32 %v1674, -0.0025
        %s1676 = scalar_lea.vmem %s255, 152
        %v1677 = vld [vmem:[%s1676] sm:$0xff]
        %vm1678 = vcmp.le.f32.partialorder %v1677, %v1675
        %v1679 = vsel %vm1678, 1, 0
        %1680 = vset.pattern.permute.xlu0 0
        %1681 = vperm.xlu0 %1680, %v1679
        %v1682 = vpop.permute.xlu0 %1681
        %vm1683 = vcmp.eq.s32.totalorder %v1682, 1
        %v1684 = vsel %vm1683, %v1629, %v1621
        %v1685 = vsel %vm1683, %v1666, %v1622
        %v1686 = vsel %vm1678, %v1673, %v1623
        %v1687 = vmul.f32 %v1685, 0.01
        %v1688 = vsub.f32 %v1684, %v1687
        %s1689 = scalar_lea.vmem %s247, 80
        %v1690 = vld [vmem:[%s1689] sm:$0xf]
        %v1691 = vunpack.c.l.bf16 %v1690
        %v1692 = vadd.f32 %v1688, %v1691
        %v1693 = vpack.c.bf16 %v1692, %v1692
        %1694 = vmatprep.subr.bf16.mxu0 0
        %1695 = vmatpush1.bf16.msra.mxu0 %v419
        %1696 = vmatprep.subr.bf16.mxu0 0
        %1697 = vmatpush1.bf16.msra.mxu0 %v420
        %1698 = vmatprep.subr.bf16.mxu0 0
        %1699 = vmatpush1.bf16.msra.mxu0 %v421
        %1700 = vmatprep.subr.bf16.mxu0 0
        %1701 = vmatpush1.bf16.msra.mxu0 %v422
        %1702 = vmatprep.subr.bf16.mxu0 0
        %1703 = vmatpush1.bf16.msra.mxu0 %v423
        %1704 = vmatprep.subr.bf16.mxu0 0
        %1705 = vmatpush1.bf16.msra.mxu0 %v424
        %1706 = vmatprep.subr.bf16.mxu0 0
        %1707 = vmatpush1.bf16.msra.mxu0 %v425
        %1708 = vmatprep.subr.bf16.mxu0 0
        %1709 = vmatpush1.bf16.msra.mxu0 %v426
        %1710 = vmatprep.subr.bf16.mxu0 0
        %1711 = vmatpush1.bf16.msra.mxu0 0
        %1712 = vmatprep.subr.bf16.mxu0 0
        %1713 = vmatpush1.bf16.msra.mxu0 0
        %1714 = vmatprep.subr.bf16.mxu0 0
        %1715 = vmatpush1.bf16.msra.mxu0 0
        %1716 = vmatprep.subr.bf16.mxu0 0
        %1717 = vmatpush1.bf16.msra.mxu0 0
        %1718 = vmatprep.subr.bf16.mxu0 0
        %1719 = vmatpush1.bf16.msra.mxu0 0
        %1720 = vmatprep.subr.bf16.mxu0 0
        %1721 = vmatpush1.bf16.msra.mxu0 0
        %1722 = vmatprep.subr.bf16.mxu0 0
        %1723 = vmatpush1.bf16.msra.mxu0 0
        %1724 = vmatprep.subr.bf16.mxu0 0
        %1725 = vmatpush1.bf16.msra.mxu0 0
        %1726 = vmatprep.mubr.bf16.mxu0 0
        %1727 = vmatmul.mubr.bf16.gmra.mrb[0].mxu0 %v1693
        %v1728 = vpop.f32.mrb[0].mxu0
        %v1729 = vadd.f32 0.0, %v1728
        %v1730 = vpop.f32.mrb[0].mxu0
        %v1731 = vpop.f32.mrb[0].mxu0
        %v1732 = vpop.f32.mrb[0].mxu0
        %1733 = vdwg.mxu0
        %v1734 = vmul.f32 %v1729, %v1729
        %1735 = vadd.xlane.f32.xlu0 %v1734
        %v1736 = vpop.xlane.xlu0 %1735
        %v1737 = vsub.f32 %v1736, %v1686
        %v1738 = vmul.f32 %v1737, -0.0025
        %s1739 = scalar_lea.vmem %s255, 160
        %v1740 = vld [vmem:[%s1739] sm:$0xff]
        %vm1741 = vcmp.le.f32.partialorder %v1740, %v1738
        %v1742 = vsel %vm1741, 1, 0
        %1743 = vset.pattern.permute.xlu0 0
        %1744 = vperm.xlu0 %1743, %v1742
        %v1745 = vpop.permute.xlu0 %1744
        %vm1746 = vcmp.eq.s32.totalorder %v1745, 1
        %v1747 = vsel %vm1746, %v1692, %v1684
        %v1748 = vsel %vm1746, %v1729, %v1685
        %v1749 = vsel %vm1741, %v1736, %v1686
        %v1750 = vmul.f32 %v1748, 0.01
        %v1751 = vsub.f32 %v1747, %v1750
        %s1752 = scalar_lea.vmem %s247, 84
        %v1753 = vld [vmem:[%s1752] sm:$0xf]
        %v1754 = vunpack.c.l.bf16 %v1753
        %v1755 = vadd.f32 %v1751, %v1754
        %v1756 = vpack.c.bf16 %v1755, %v1755
        %1757 = vmatprep.subr.bf16.mxu0 0
        %1758 = vmatpush1.bf16.msra.mxu0 %v419
        %1759 = vmatprep.subr.bf16.mxu0 0
        %1760 = vmatpush1.bf16.msra.mxu0 %v420
        %1761 = vmatprep.subr.bf16.mxu0 0
        %1762 = vmatpush1.bf16.msra.mxu0 %v421
        %1763 = vmatprep.subr.bf16.mxu0 0
        %1764 = vmatpush1.bf16.msra.mxu0 %v422
        %1765 = vmatprep.subr.bf16.mxu0 0
        %1766 = vmatpush1.bf16.msra.mxu0 %v423
        %1767 = vmatprep.subr.bf16.mxu0 0
        %1768 = vmatpush1.bf16.msra.mxu0 %v424
        %1769 = vmatprep.subr.bf16.mxu0 0
        %1770 = vmatpush1.bf16.msra.mxu0 %v425
        %1771 = vmatprep.subr.bf16.mxu0 0
        %1772 = vmatpush1.bf16.msra.mxu0 %v426
        %1773 = vmatprep.subr.bf16.mxu0 0
        %1774 = vmatpush1.bf16.msra.mxu0 0
        %1775 = vmatprep.subr.bf16.mxu0 0
        %1776 = vmatpush1.bf16.msra.mxu0 0
        %1777 = vmatprep.subr.bf16.mxu0 0
        %1778 = vmatpush1.bf16.msra.mxu0 0
        %1779 = vmatprep.subr.bf16.mxu0 0
        %1780 = vmatpush1.bf16.msra.mxu0 0
        %1781 = vmatprep.subr.bf16.mxu0 0
        %1782 = vmatpush1.bf16.msra.mxu0 0
        %1783 = vmatprep.subr.bf16.mxu0 0
        %1784 = vmatpush1.bf16.msra.mxu0 0
        %1785 = vmatprep.subr.bf16.mxu0 0
        %1786 = vmatpush1.bf16.msra.mxu0 0
        %1787 = vmatprep.subr.bf16.mxu0 0
        %1788 = vmatpush1.bf16.msra.mxu0 0
        %1789 = vmatprep.mubr.bf16.mxu0 0
        %1790 = vmatmul.mubr.bf16.gmra.mrb[0].mxu0 %v1756
        %v1791 = vpop.f32.mrb[0].mxu0
        %v1792 = vadd.f32 0.0, %v1791
        %v1793 = vpop.f32.mrb[0].mxu0
        %v1794 = vpop.f32.mrb[0].mxu0
        %v1795 = vpop.f32.mrb[0].mxu0
        %1796 = vdwg.mxu0
        %v1797 = vmul.f32 %v1792, %v1792
        %1798 = vadd.xlane.f32.xlu0 %v1797
        %v1799 = vpop.xlane.xlu0 %1798
        %v1800 = vsub.f32 %v1799, %v1749
        %v1801 = vmul.f32 %v1800, -0.0025
        %s1802 = scalar_lea.vmem %s255, 168
        %v1803 = vld [vmem:[%s1802] sm:$0xff]
        %vm1804 = vcmp.le.f32.partialorder %v1803, %v1801
        %v1805 = vsel %vm1804, 1, 0
        %1806 = vset.pattern.permute.xlu0 0
        %1807 = vperm.xlu0 %1806, %v1805
        %v1808 = vpop.permute.xlu0 %1807
        %vm1809 = vcmp.eq.s32.totalorder %v1808, 1
        %v1810 = vsel %vm1809, %v1755, %v1747
        %v1811 = vsel %vm1809, %v1792, %v1748
        %v1812 = vsel %vm1804, %v1799, %v1749
        %v1813 = vmul.f32 %v1811, 0.01
        %v1814 = vsub.f32 %v1810, %v1813
        %s1815 = scalar_lea.vmem %s247, 88
        %v1816 = vld [vmem:[%s1815] sm:$0xf]
        %v1817 = vunpack.c.l.bf16 %v1816
        %v1818 = vadd.f32 %v1814, %v1817
        %v1819 = vpack.c.bf16 %v1818, %v1818
        %1820 = vmatprep.subr.bf16.mxu0 0
        %1821 = vmatpush1.bf16.msra.mxu0 %v419
        %1822 = vmatprep.subr.bf16.mxu0 0
        %1823 = vmatpush1.bf16.msra.mxu0 %v420
        %1824 = vmatprep.subr.bf16.mxu0 0
        %1825 = vmatpush1.bf16.msra.mxu0 %v421
        %1826 = vmatprep.subr.bf16.mxu0 0
        %1827 = vmatpush1.bf16.msra.mxu0 %v422
        %1828 = vmatprep.subr.bf16.mxu0 0
        %1829 = vmatpush1.bf16.msra.mxu0 %v423
        %1830 = vmatprep.subr.bf16.mxu0 0
        %1831 = vmatpush1.bf16.msra.mxu0 %v424
        %1832 = vmatprep.subr.bf16.mxu0 0
        %1833 = vmatpush1.bf16.msra.mxu0 %v425
        %1834 = vmatprep.subr.bf16.mxu0 0
        %1835 = vmatpush1.bf16.msra.mxu0 %v426
        %1836 = vmatprep.subr.bf16.mxu0 0
        %1837 = vmatpush1.bf16.msra.mxu0 0
        %1838 = vmatprep.subr.bf16.mxu0 0
        %1839 = vmatpush1.bf16.msra.mxu0 0
        %1840 = vmatprep.subr.bf16.mxu0 0
        %1841 = vmatpush1.bf16.msra.mxu0 0
        %1842 = vmatprep.subr.bf16.mxu0 0
        %1843 = vmatpush1.bf16.msra.mxu0 0
        %1844 = vmatprep.subr.bf16.mxu0 0
        %1845 = vmatpush1.bf16.msra.mxu0 0
        %1846 = vmatprep.subr.bf16.mxu0 0
        %1847 = vmatpush1.bf16.msra.mxu0 0
        %1848 = vmatprep.subr.bf16.mxu0 0
        %1849 = vmatpush1.bf16.msra.mxu0 0
        %1850 = vmatprep.subr.bf16.mxu0 0
        %1851 = vmatpush1.bf16.msra.mxu0 0
        %1852 = vmatprep.mubr.bf16.mxu0 0
        %1853 = vmatmul.mubr.bf16.gmra.mrb[0].mxu0 %v1819
        %v1854 = vpop.f32.mrb[0].mxu0
        %v1855 = vadd.f32 0.0, %v1854
        %v1856 = vpop.f32.mrb[0].mxu0
        %v1857 = vpop.f32.mrb[0].mxu0
        %v1858 = vpop.f32.mrb[0].mxu0
        %1859 = vdwg.mxu0
        %v1860 = vmul.f32 %v1855, %v1855
        %1861 = vadd.xlane.f32.xlu0 %v1860
        %v1862 = vpop.xlane.xlu0 %1861
        %v1863 = vsub.f32 %v1862, %v1812
        %v1864 = vmul.f32 %v1863, -0.0025
        %s1865 = scalar_lea.vmem %s255, 176
        %v1866 = vld [vmem:[%s1865] sm:$0xff]
        %vm1867 = vcmp.le.f32.partialorder %v1866, %v1864
        %v1868 = vsel %vm1867, 1, 0
        %1869 = vset.pattern.permute.xlu0 0
        %1870 = vperm.xlu0 %1869, %v1868
        %v1871 = vpop.permute.xlu0 %1870
        %vm1872 = vcmp.eq.s32.totalorder %v1871, 1
        %v1873 = vsel %vm1872, %v1818, %v1810
        %v1874 = vsel %vm1872, %v1855, %v1811
        %v1875 = vsel %vm1867, %v1862, %v1812
        %v1876 = vmul.f32 %v1874, 0.01
        %v1877 = vsub.f32 %v1873, %v1876
        %s1878 = scalar_lea.vmem %s247, 92
        %v1879 = vld [vmem:[%s1878] sm:$0xf]
        %v1880 = vunpack.c.l.bf16 %v1879
        %v1881 = vadd.f32 %v1877, %v1880
        %v1882 = vpack.c.bf16 %v1881, %v1881
        %1883 = vmatprep.subr.bf16.mxu0 0
        %1884 = vmatpush1.bf16.msra.mxu0 %v419
        %1885 = vmatprep.subr.bf16.mxu0 0
        %1886 = vmatpush1.bf16.msra.mxu0 %v420
        %1887 = vmatprep.subr.bf16.mxu0 0
        %1888 = vmatpush1.bf16.msra.mxu0 %v421
        %1889 = vmatprep.subr.bf16.mxu0 0
        %1890 = vmatpush1.bf16.msra.mxu0 %v422
        %1891 = vmatprep.subr.bf16.mxu0 0
        %1892 = vmatpush1.bf16.msra.mxu0 %v423
        %1893 = vmatprep.subr.bf16.mxu0 0
        %1894 = vmatpush1.bf16.msra.mxu0 %v424
        %1895 = vmatprep.subr.bf16.mxu0 0
        %1896 = vmatpush1.bf16.msra.mxu0 %v425
        %1897 = vmatprep.subr.bf16.mxu0 0
        %1898 = vmatpush1.bf16.msra.mxu0 %v426
        %1899 = vmatprep.subr.bf16.mxu0 0
        %1900 = vmatpush1.bf16.msra.mxu0 0
        %1901 = vmatprep.subr.bf16.mxu0 0
        %1902 = vmatpush1.bf16.msra.mxu0 0
        %1903 = vmatprep.subr.bf16.mxu0 0
        %1904 = vmatpush1.bf16.msra.mxu0 0
        %1905 = vmatprep.subr.bf16.mxu0 0
        %1906 = vmatpush1.bf16.msra.mxu0 0
        %1907 = vmatprep.subr.bf16.mxu0 0
        %1908 = vmatpush1.bf16.msra.mxu0 0
        %1909 = vmatprep.subr.bf16.mxu0 0
        %1910 = vmatpush1.bf16.msra.mxu0 0
        %1911 = vmatprep.subr.bf16.mxu0 0
        %1912 = vmatpush1.bf16.msra.mxu0 0
        %1913 = vmatprep.subr.bf16.mxu0 0
        %1914 = vmatpush1.bf16.msra.mxu0 0
        %1915 = vmatprep.mubr.bf16.mxu0 0
        %1916 = vmatmul.mubr.bf16.gmra.mrb[0].mxu0 %v1882
        %v1917 = vpop.f32.mrb[0].mxu0
        %v1918 = vadd.f32 0.0, %v1917
        %v1919 = vpop.f32.mrb[0].mxu0
        %v1920 = vpop.f32.mrb[0].mxu0
        %v1921 = vpop.f32.mrb[0].mxu0
        %1922 = vdwg.mxu0
        %v1923 = vmul.f32 %v1918, %v1918
        %1924 = vadd.xlane.f32.xlu0 %v1923
        %v1925 = vpop.xlane.xlu0 %1924
        %v1926 = vsub.f32 %v1925, %v1875
        %v1927 = vmul.f32 %v1926, -0.0025
        %s1928 = scalar_lea.vmem %s255, 184
        %v1929 = vld [vmem:[%s1928] sm:$0xff]
        %vm1930 = vcmp.le.f32.partialorder %v1929, %v1927
        %v1931 = vsel %vm1930, 1, 0
        %1932 = vset.pattern.permute.xlu0 0
        %1933 = vperm.xlu0 %1932, %v1931
        %v1934 = vpop.permute.xlu0 %1933
        %vm1935 = vcmp.eq.s32.totalorder %v1934, 1
        %v1936 = vsel %vm1935, %v1881, %v1873
        %v1937 = vsel %vm1935, %v1918, %v1874
        %v1938 = vsel %vm1930, %v1925, %v1875
        %v1939 = vmul.f32 %v1937, 0.01
        %v1940 = vsub.f32 %v1936, %v1939
        %s1941 = scalar_lea.vmem %s247, 96
        %v1942 = vld [vmem:[%s1941] sm:$0xf]
        %v1943 = vunpack.c.l.bf16 %v1942
        %v1944 = vadd.f32 %v1940, %v1943
        %v1945 = vpack.c.bf16 %v1944, %v1944
        %1946 = vmatprep.subr.bf16.mxu0 0
        %1947 = vmatpush1.bf16.msra.mxu0 %v419
        %1948 = vmatprep.subr.bf16.mxu0 0
        %1949 = vmatpush1.bf16.msra.mxu0 %v420
        %1950 = vmatprep.subr.bf16.mxu0 0
        %1951 = vmatpush1.bf16.msra.mxu0 %v421
        %1952 = vmatprep.subr.bf16.mxu0 0
        %1953 = vmatpush1.bf16.msra.mxu0 %v422
        %1954 = vmatprep.subr.bf16.mxu0 0
        %1955 = vmatpush1.bf16.msra.mxu0 %v423
        %1956 = vmatprep.subr.bf16.mxu0 0
        %1957 = vmatpush1.bf16.msra.mxu0 %v424
        %1958 = vmatprep.subr.bf16.mxu0 0
        %1959 = vmatpush1.bf16.msra.mxu0 %v425
        %1960 = vmatprep.subr.bf16.mxu0 0
        %1961 = vmatpush1.bf16.msra.mxu0 %v426
        %1962 = vmatprep.subr.bf16.mxu0 0
        %1963 = vmatpush1.bf16.msra.mxu0 0
        %1964 = vmatprep.subr.bf16.mxu0 0
        %1965 = vmatpush1.bf16.msra.mxu0 0
        %1966 = vmatprep.subr.bf16.mxu0 0
        %1967 = vmatpush1.bf16.msra.mxu0 0
        %1968 = vmatprep.subr.bf16.mxu0 0
        %1969 = vmatpush1.bf16.msra.mxu0 0
        %1970 = vmatprep.subr.bf16.mxu0 0
        %1971 = vmatpush1.bf16.msra.mxu0 0
        %1972 = vmatprep.subr.bf16.mxu0 0
        %1973 = vmatpush1.bf16.msra.mxu0 0
        %1974 = vmatprep.subr.bf16.mxu0 0
        %1975 = vmatpush1.bf16.msra.mxu0 0
        %1976 = vmatprep.subr.bf16.mxu0 0
        %1977 = vmatpush1.bf16.msra.mxu0 0
        %1978 = vmatprep.mubr.bf16.mxu0 0
        %1979 = vmatmul.mubr.bf16.gmra.mrb[0].mxu0 %v1945
        %v1980 = vpop.f32.mrb[0].mxu0
        %v1981 = vadd.f32 0.0, %v1980
        %v1982 = vpop.f32.mrb[0].mxu0
        %v1983 = vpop.f32.mrb[0].mxu0
        %v1984 = vpop.f32.mrb[0].mxu0
        %1985 = vdwg.mxu0
        %v1986 = vmul.f32 %v1981, %v1981
        %1987 = vadd.xlane.f32.xlu0 %v1986
        %v1988 = vpop.xlane.xlu0 %1987
        %v1989 = vsub.f32 %v1988, %v1938
        %v1990 = vmul.f32 %v1989, -0.0025
        %s1991 = scalar_lea.vmem %s255, 192
        %v1992 = vld [vmem:[%s1991] sm:$0xff]
        %vm1993 = vcmp.le.f32.partialorder %v1992, %v1990
        %v1994 = vsel %vm1993, 1, 0
        %1995 = vset.pattern.permute.xlu0 0
        %1996 = vperm.xlu0 %1995, %v1994
        %v1997 = vpop.permute.xlu0 %1996
        %vm1998 = vcmp.eq.s32.totalorder %v1997, 1
        %v1999 = vsel %vm1998, %v1944, %v1936
        %v2000 = vsel %vm1998, %v1981, %v1937
        %v2001 = vsel %vm1993, %v1988, %v1938
        %v2002 = vmul.f32 %v2000, 0.01
        %v2003 = vsub.f32 %v1999, %v2002
        %s2004 = scalar_lea.vmem %s247, 100
        %v2005 = vld [vmem:[%s2004] sm:$0xf]
        %v2006 = vunpack.c.l.bf16 %v2005
        %v2007 = vadd.f32 %v2003, %v2006
        %v2008 = vpack.c.bf16 %v2007, %v2007
        %2009 = vmatprep.subr.bf16.mxu0 0
        %2010 = vmatpush1.bf16.msra.mxu0 %v419
        %2011 = vmatprep.subr.bf16.mxu0 0
        %2012 = vmatpush1.bf16.msra.mxu0 %v420
        %2013 = vmatprep.subr.bf16.mxu0 0
        %2014 = vmatpush1.bf16.msra.mxu0 %v421
        %2015 = vmatprep.subr.bf16.mxu0 0
        %2016 = vmatpush1.bf16.msra.mxu0 %v422
        %2017 = vmatprep.subr.bf16.mxu0 0
        %2018 = vmatpush1.bf16.msra.mxu0 %v423
        %2019 = vmatprep.subr.bf16.mxu0 0
        %2020 = vmatpush1.bf16.msra.mxu0 %v424
        %2021 = vmatprep.subr.bf16.mxu0 0
        %2022 = vmatpush1.bf16.msra.mxu0 %v425
        %2023 = vmatprep.subr.bf16.mxu0 0
        %2024 = vmatpush1.bf16.msra.mxu0 %v426
        %2025 = vmatprep.subr.bf16.mxu0 0
        %2026 = vmatpush1.bf16.msra.mxu0 0
        %2027 = vmatprep.subr.bf16.mxu0 0
        %2028 = vmatpush1.bf16.msra.mxu0 0
        %2029 = vmatprep.subr.bf16.mxu0 0
        %2030 = vmatpush1.bf16.msra.mxu0 0
        %2031 = vmatprep.subr.bf16.mxu0 0
        %2032 = vmatpush1.bf16.msra.mxu0 0
        %2033 = vmatprep.subr.bf16.mxu0 0
        %2034 = vmatpush1.bf16.msra.mxu0 0
        %2035 = vmatprep.subr.bf16.mxu0 0
        %2036 = vmatpush1.bf16.msra.mxu0 0
        %2037 = vmatprep.subr.bf16.mxu0 0
        %2038 = vmatpush1.bf16.msra.mxu0 0
        %2039 = vmatprep.subr.bf16.mxu0 0
        %2040 = vmatpush1.bf16.msra.mxu0 0
        %2041 = vmatprep.mubr.bf16.mxu0 0
        %2042 = vmatmul.mubr.bf16.gmra.mrb[0].mxu0 %v2008
        %v2043 = vpop.f32.mrb[0].mxu0
        %v2044 = vadd.f32 0.0, %v2043
        %v2045 = vpop.f32.mrb[0].mxu0
        %v2046 = vpop.f32.mrb[0].mxu0
        %v2047 = vpop.f32.mrb[0].mxu0
        %2048 = vdwg.mxu0
        %v2049 = vmul.f32 %v2044, %v2044
        %2050 = vadd.xlane.f32.xlu0 %v2049
        %v2051 = vpop.xlane.xlu0 %2050
        %v2052 = vsub.f32 %v2051, %v2001
        %v2053 = vmul.f32 %v2052, -0.0025
        %s2054 = scalar_lea.vmem %s255, 200
        %v2055 = vld [vmem:[%s2054] sm:$0xff]
        %vm2056 = vcmp.le.f32.partialorder %v2055, %v2053
        %v2057 = vsel %vm2056, 1, 0
        %2058 = vset.pattern.permute.xlu0 0
        %2059 = vperm.xlu0 %2058, %v2057
        %v2060 = vpop.permute.xlu0 %2059
        %vm2061 = vcmp.eq.s32.totalorder %v2060, 1
        %v2062 = vsel %vm2061, %v2007, %v1999
        %v2063 = vsel %vm2061, %v2044, %v2000
        %v2064 = vsel %vm2056, %v2051, %v2001
        %v2065 = vmul.f32 %v2063, 0.01
        %v2066 = vsub.f32 %v2062, %v2065
        %s2067 = scalar_lea.vmem %s247, 104
        %v2068 = vld [vmem:[%s2067] sm:$0xf]
        %v2069 = vunpack.c.l.bf16 %v2068
        %v2070 = vadd.f32 %v2066, %v2069
        %v2071 = vpack.c.bf16 %v2070, %v2070
        %2072 = vmatprep.subr.bf16.mxu0 0
        %2073 = vmatpush1.bf16.msra.mxu0 %v419
        %2074 = vmatprep.subr.bf16.mxu0 0
        %2075 = vmatpush1.bf16.msra.mxu0 %v420
        %2076 = vmatprep.subr.bf16.mxu0 0
        %2077 = vmatpush1.bf16.msra.mxu0 %v421
        %2078 = vmatprep.subr.bf16.mxu0 0
        %2079 = vmatpush1.bf16.msra.mxu0 %v422
        %2080 = vmatprep.subr.bf16.mxu0 0
        %2081 = vmatpush1.bf16.msra.mxu0 %v423
        %2082 = vmatprep.subr.bf16.mxu0 0
        %2083 = vmatpush1.bf16.msra.mxu0 %v424
        %2084 = vmatprep.subr.bf16.mxu0 0
        %2085 = vmatpush1.bf16.msra.mxu0 %v425
        %2086 = vmatprep.subr.bf16.mxu0 0
        %2087 = vmatpush1.bf16.msra.mxu0 %v426
        %2088 = vmatprep.subr.bf16.mxu0 0
        %2089 = vmatpush1.bf16.msra.mxu0 0
        %2090 = vmatprep.subr.bf16.mxu0 0
        %2091 = vmatpush1.bf16.msra.mxu0 0
        %2092 = vmatprep.subr.bf16.mxu0 0
        %2093 = vmatpush1.bf16.msra.mxu0 0
        %2094 = vmatprep.subr.bf16.mxu0 0
        %2095 = vmatpush1.bf16.msra.mxu0 0
        %2096 = vmatprep.subr.bf16.mxu0 0
        %2097 = vmatpush1.bf16.msra.mxu0 0
        %2098 = vmatprep.subr.bf16.mxu0 0
        %2099 = vmatpush1.bf16.msra.mxu0 0
        %2100 = vmatprep.subr.bf16.mxu0 0
        %2101 = vmatpush1.bf16.msra.mxu0 0
        %2102 = vmatprep.subr.bf16.mxu0 0
        %2103 = vmatpush1.bf16.msra.mxu0 0
        %2104 = vmatprep.mubr.bf16.mxu0 0
        %2105 = vmatmul.mubr.bf16.gmra.mrb[0].mxu0 %v2071
        %v2106 = vpop.f32.mrb[0].mxu0
        %v2107 = vadd.f32 0.0, %v2106
        %v2108 = vpop.f32.mrb[0].mxu0
        %v2109 = vpop.f32.mrb[0].mxu0
        %v2110 = vpop.f32.mrb[0].mxu0
        %2111 = vdwg.mxu0
        %v2112 = vmul.f32 %v2107, %v2107
        %2113 = vadd.xlane.f32.xlu0 %v2112
        %v2114 = vpop.xlane.xlu0 %2113
        %v2115 = vsub.f32 %v2114, %v2064
        %v2116 = vmul.f32 %v2115, -0.0025
        %s2117 = scalar_lea.vmem %s255, 208
        %v2118 = vld [vmem:[%s2117] sm:$0xff]
        %vm2119 = vcmp.le.f32.partialorder %v2118, %v2116
        %v2120 = vsel %vm2119, 1, 0
        %2121 = vset.pattern.permute.xlu0 0
        %2122 = vperm.xlu0 %2121, %v2120
        %v2123 = vpop.permute.xlu0 %2122
        %vm2124 = vcmp.eq.s32.totalorder %v2123, 1
        %v2125 = vsel %vm2124, %v2070, %v2062
        %v2126 = vsel %vm2124, %v2107, %v2063
        %v2127 = vsel %vm2119, %v2114, %v2064
        %v2128 = vmul.f32 %v2126, 0.01
        %v2129 = vsub.f32 %v2125, %v2128
        %s2130 = scalar_lea.vmem %s247, 108
        %v2131 = vld [vmem:[%s2130] sm:$0xf]
        %v2132 = vunpack.c.l.bf16 %v2131
        %v2133 = vadd.f32 %v2129, %v2132
        %v2134 = vpack.c.bf16 %v2133, %v2133
        %2135 = vmatprep.subr.bf16.mxu0 0
        %2136 = vmatpush1.bf16.msra.mxu0 %v419
        %2137 = vmatprep.subr.bf16.mxu0 0
        %2138 = vmatpush1.bf16.msra.mxu0 %v420
        %2139 = vmatprep.subr.bf16.mxu0 0
        %2140 = vmatpush1.bf16.msra.mxu0 %v421
        %2141 = vmatprep.subr.bf16.mxu0 0
        %2142 = vmatpush1.bf16.msra.mxu0 %v422
        %2143 = vmatprep.subr.bf16.mxu0 0
        %2144 = vmatpush1.bf16.msra.mxu0 %v423
        %2145 = vmatprep.subr.bf16.mxu0 0
        %2146 = vmatpush1.bf16.msra.mxu0 %v424
        %2147 = vmatprep.subr.bf16.mxu0 0
        %2148 = vmatpush1.bf16.msra.mxu0 %v425
        %2149 = vmatprep.subr.bf16.mxu0 0
        %2150 = vmatpush1.bf16.msra.mxu0 %v426
        %2151 = vmatprep.subr.bf16.mxu0 0
        %2152 = vmatpush1.bf16.msra.mxu0 0
        %2153 = vmatprep.subr.bf16.mxu0 0
        %2154 = vmatpush1.bf16.msra.mxu0 0
        %2155 = vmatprep.subr.bf16.mxu0 0
        %2156 = vmatpush1.bf16.msra.mxu0 0
        %2157 = vmatprep.subr.bf16.mxu0 0
        %2158 = vmatpush1.bf16.msra.mxu0 0
        %2159 = vmatprep.subr.bf16.mxu0 0
        %2160 = vmatpush1.bf16.msra.mxu0 0
        %2161 = vmatprep.subr.bf16.mxu0 0
        %2162 = vmatpush1.bf16.msra.mxu0 0
        %2163 = vmatprep.subr.bf16.mxu0 0
        %2164 = vmatpush1.bf16.msra.mxu0 0
        %2165 = vmatprep.subr.bf16.mxu0 0
        %2166 = vmatpush1.bf16.msra.mxu0 0
        %2167 = vmatprep.mubr.bf16.mxu0 0
        %2168 = vmatmul.mubr.bf16.gmra.mrb[0].mxu0 %v2134
        %v2169 = vpop.f32.mrb[0].mxu0
        %v2170 = vadd.f32 0.0, %v2169
        %v2171 = vpop.f32.mrb[0].mxu0
        %v2172 = vpop.f32.mrb[0].mxu0
        %v2173 = vpop.f32.mrb[0].mxu0
        %2174 = vdwg.mxu0
        %v2175 = vmul.f32 %v2170, %v2170
        %2176 = vadd.xlane.f32.xlu0 %v2175
        %v2177 = vpop.xlane.xlu0 %2176
        %v2178 = vsub.f32 %v2177, %v2127
        %v2179 = vmul.f32 %v2178, -0.0025
        %s2180 = scalar_lea.vmem %s255, 216
        %v2181 = vld [vmem:[%s2180] sm:$0xff]
        %vm2182 = vcmp.le.f32.partialorder %v2181, %v2179
        %v2183 = vsel %vm2182, 1, 0
        %2184 = vset.pattern.permute.xlu0 0
        %2185 = vperm.xlu0 %2184, %v2183
        %v2186 = vpop.permute.xlu0 %2185
        %vm2187 = vcmp.eq.s32.totalorder %v2186, 1
        %v2188 = vsel %vm2187, %v2133, %v2125
        %v2189 = vsel %vm2187, %v2170, %v2126
        %v2190 = vsel %vm2182, %v2177, %v2127
        %v2191 = vmul.f32 %v2189, 0.01
        %v2192 = vsub.f32 %v2188, %v2191
        %s2193 = scalar_lea.vmem %s247, 112
        %v2194 = vld [vmem:[%s2193] sm:$0xf]
        %v2195 = vunpack.c.l.bf16 %v2194
        %v2196 = vadd.f32 %v2192, %v2195
        %v2197 = vpack.c.bf16 %v2196, %v2196
        %2198 = vmatprep.subr.bf16.mxu0 0
        %2199 = vmatpush1.bf16.msra.mxu0 %v419
        %2200 = vmatprep.subr.bf16.mxu0 0
        %2201 = vmatpush1.bf16.msra.mxu0 %v420
        %2202 = vmatprep.subr.bf16.mxu0 0
        %2203 = vmatpush1.bf16.msra.mxu0 %v421
        %2204 = vmatprep.subr.bf16.mxu0 0
        %2205 = vmatpush1.bf16.msra.mxu0 %v422
        %2206 = vmatprep.subr.bf16.mxu0 0
        %2207 = vmatpush1.bf16.msra.mxu0 %v423
        %2208 = vmatprep.subr.bf16.mxu0 0
        %2209 = vmatpush1.bf16.msra.mxu0 %v424
        %2210 = vmatprep.subr.bf16.mxu0 0
        %2211 = vmatpush1.bf16.msra.mxu0 %v425
        %2212 = vmatprep.subr.bf16.mxu0 0
        %2213 = vmatpush1.bf16.msra.mxu0 %v426
        %2214 = vmatprep.subr.bf16.mxu0 0
        %2215 = vmatpush1.bf16.msra.mxu0 0
        %2216 = vmatprep.subr.bf16.mxu0 0
        %2217 = vmatpush1.bf16.msra.mxu0 0
        %2218 = vmatprep.subr.bf16.mxu0 0
        %2219 = vmatpush1.bf16.msra.mxu0 0
        %2220 = vmatprep.subr.bf16.mxu0 0
        %2221 = vmatpush1.bf16.msra.mxu0 0
        %2222 = vmatprep.subr.bf16.mxu0 0
        %2223 = vmatpush1.bf16.msra.mxu0 0
        %2224 = vmatprep.subr.bf16.mxu0 0
        %2225 = vmatpush1.bf16.msra.mxu0 0
        %2226 = vmatprep.subr.bf16.mxu0 0
        %2227 = vmatpush1.bf16.msra.mxu0 0
        %2228 = vmatprep.subr.bf16.mxu0 0
        %2229 = vmatpush1.bf16.msra.mxu0 0
        %2230 = vmatprep.mubr.bf16.mxu0 0
        %2231 = vmatmul.mubr.bf16.gmra.mrb[0].mxu0 %v2197
        %v2232 = vpop.f32.mrb[0].mxu0
        %v2233 = vadd.f32 0.0, %v2232
        %v2234 = vpop.f32.mrb[0].mxu0
        %v2235 = vpop.f32.mrb[0].mxu0
        %v2236 = vpop.f32.mrb[0].mxu0
        %2237 = vdwg.mxu0
        %v2238 = vmul.f32 %v2233, %v2233
        %2239 = vadd.xlane.f32.xlu0 %v2238
        %v2240 = vpop.xlane.xlu0 %2239
        %v2241 = vsub.f32 %v2240, %v2190
        %v2242 = vmul.f32 %v2241, -0.0025
        %s2243 = scalar_lea.vmem %s255, 224
        %v2244 = vld [vmem:[%s2243] sm:$0xff]
        %vm2245 = vcmp.le.f32.partialorder %v2244, %v2242
        %v2246 = vsel %vm2245, 1, 0
        %2247 = vset.pattern.permute.xlu0 0
        %2248 = vperm.xlu0 %2247, %v2246
        %v2249 = vpop.permute.xlu0 %2248
        %vm2250 = vcmp.eq.s32.totalorder %v2249, 1
        %v2251 = vsel %vm2250, %v2196, %v2188
        %v2252 = vsel %vm2250, %v2233, %v2189
        %v2253 = vsel %vm2245, %v2240, %v2190
        %v2254 = vmul.f32 %v2252, 0.01
        %v2255 = vsub.f32 %v2251, %v2254
        %s2256 = scalar_lea.vmem %s247, 116
        %v2257 = vld [vmem:[%s2256] sm:$0xf]
        %v2258 = vunpack.c.l.bf16 %v2257
        %v2259 = vadd.f32 %v2255, %v2258
        %v2260 = vpack.c.bf16 %v2259, %v2259
        %2261 = vmatprep.subr.bf16.mxu0 0
        %2262 = vmatpush1.bf16.msra.mxu0 %v419
        %2263 = vmatprep.subr.bf16.mxu0 0
        %2264 = vmatpush1.bf16.msra.mxu0 %v420
        %2265 = vmatprep.subr.bf16.mxu0 0
        %2266 = vmatpush1.bf16.msra.mxu0 %v421
        %2267 = vmatprep.subr.bf16.mxu0 0
        %2268 = vmatpush1.bf16.msra.mxu0 %v422
        %2269 = vmatprep.subr.bf16.mxu0 0
        %2270 = vmatpush1.bf16.msra.mxu0 %v423
        %2271 = vmatprep.subr.bf16.mxu0 0
        %2272 = vmatpush1.bf16.msra.mxu0 %v424
        %2273 = vmatprep.subr.bf16.mxu0 0
        %2274 = vmatpush1.bf16.msra.mxu0 %v425
        %2275 = vmatprep.subr.bf16.mxu0 0
        %2276 = vmatpush1.bf16.msra.mxu0 %v426
        %2277 = vmatprep.subr.bf16.mxu0 0
        %2278 = vmatpush1.bf16.msra.mxu0 0
        %2279 = vmatprep.subr.bf16.mxu0 0
        %2280 = vmatpush1.bf16.msra.mxu0 0
        %2281 = vmatprep.subr.bf16.mxu0 0
        %2282 = vmatpush1.bf16.msra.mxu0 0
        %2283 = vmatprep.subr.bf16.mxu0 0
        %2284 = vmatpush1.bf16.msra.mxu0 0
        %2285 = vmatprep.subr.bf16.mxu0 0
        %2286 = vmatpush1.bf16.msra.mxu0 0
        %2287 = vmatprep.subr.bf16.mxu0 0
        %2288 = vmatpush1.bf16.msra.mxu0 0
        %2289 = vmatprep.subr.bf16.mxu0 0
        %2290 = vmatpush1.bf16.msra.mxu0 0
        %2291 = vmatprep.subr.bf16.mxu0 0
        %2292 = vmatpush1.bf16.msra.mxu0 0
        %2293 = vmatprep.mubr.bf16.mxu0 0
        %2294 = vmatmul.mubr.bf16.gmra.mrb[0].mxu0 %v2260
        %v2295 = vpop.f32.mrb[0].mxu0
        %v2296 = vadd.f32 0.0, %v2295
        %v2297 = vpop.f32.mrb[0].mxu0
        %v2298 = vpop.f32.mrb[0].mxu0
        %v2299 = vpop.f32.mrb[0].mxu0
        %2300 = vdwg.mxu0
        %v2301 = vmul.f32 %v2296, %v2296
        %2302 = vadd.xlane.f32.xlu0 %v2301
        %v2303 = vpop.xlane.xlu0 %2302
        %v2304 = vsub.f32 %v2303, %v2253
        %v2305 = vmul.f32 %v2304, -0.0025
        %s2306 = scalar_lea.vmem %s255, 232
        %v2307 = vld [vmem:[%s2306] sm:$0xff]
        %vm2308 = vcmp.le.f32.partialorder %v2307, %v2305
        %v2309 = vsel %vm2308, 1, 0
        %2310 = vset.pattern.permute.xlu0 0
        %2311 = vperm.xlu0 %2310, %v2309
        %v2312 = vpop.permute.xlu0 %2311
        %vm2313 = vcmp.eq.s32.totalorder %v2312, 1
        %v2314 = vsel %vm2313, %v2259, %v2251
        %v2315 = vsel %vm2313, %v2296, %v2252
        %v2316 = vsel %vm2308, %v2303, %v2253
        %v2317 = vmul.f32 %v2315, 0.01
        %v2318 = vsub.f32 %v2314, %v2317
        %s2319 = scalar_lea.vmem %s247, 120
        %v2320 = vld [vmem:[%s2319] sm:$0xf]
        %v2321 = vunpack.c.l.bf16 %v2320
        %v2322 = vadd.f32 %v2318, %v2321
        %v2323 = vpack.c.bf16 %v2322, %v2322
        %2324 = vmatprep.subr.bf16.mxu0 0
        %2325 = vmatpush1.bf16.msra.mxu0 %v419
        %2326 = vmatprep.subr.bf16.mxu0 0
        %2327 = vmatpush1.bf16.msra.mxu0 %v420
        %2328 = vmatprep.subr.bf16.mxu0 0
        %2329 = vmatpush1.bf16.msra.mxu0 %v421
        %2330 = vmatprep.subr.bf16.mxu0 0
        %2331 = vmatpush1.bf16.msra.mxu0 %v422
        %2332 = vmatprep.subr.bf16.mxu0 0
        %2333 = vmatpush1.bf16.msra.mxu0 %v423
        %2334 = vmatprep.subr.bf16.mxu0 0
        %2335 = vmatpush1.bf16.msra.mxu0 %v424
        %2336 = vmatprep.subr.bf16.mxu0 0
        %2337 = vmatpush1.bf16.msra.mxu0 %v425
        %2338 = vmatprep.subr.bf16.mxu0 0
        %2339 = vmatpush1.bf16.msra.mxu0 %v426
        %2340 = vmatprep.subr.bf16.mxu0 0
        %2341 = vmatpush1.bf16.msra.mxu0 0
        %2342 = vmatprep.subr.bf16.mxu0 0
        %2343 = vmatpush1.bf16.msra.mxu0 0
        %2344 = vmatprep.subr.bf16.mxu0 0
        %2345 = vmatpush1.bf16.msra.mxu0 0
        %2346 = vmatprep.subr.bf16.mxu0 0
        %2347 = vmatpush1.bf16.msra.mxu0 0
        %2348 = vmatprep.subr.bf16.mxu0 0
        %2349 = vmatpush1.bf16.msra.mxu0 0
        %2350 = vmatprep.subr.bf16.mxu0 0
        %2351 = vmatpush1.bf16.msra.mxu0 0
        %2352 = vmatprep.subr.bf16.mxu0 0
        %2353 = vmatpush1.bf16.msra.mxu0 0
        %2354 = vmatprep.subr.bf16.mxu0 0
        %2355 = vmatpush1.bf16.msra.mxu0 0
        %2356 = vmatprep.mubr.bf16.mxu0 0
        %2357 = vmatmul.mubr.bf16.gmra.mrb[0].mxu0 %v2323
        %v2358 = vpop.f32.mrb[0].mxu0
        %v2359 = vadd.f32 0.0, %v2358
        %v2360 = vpop.f32.mrb[0].mxu0
        %v2361 = vpop.f32.mrb[0].mxu0
        %v2362 = vpop.f32.mrb[0].mxu0
        %2363 = vdwg.mxu0
        %v2364 = vmul.f32 %v2359, %v2359
        %2365 = vadd.xlane.f32.xlu0 %v2364
        %v2366 = vpop.xlane.xlu0 %2365
        %v2367 = vsub.f32 %v2366, %v2316
        %v2368 = vmul.f32 %v2367, -0.0025
        %s2369 = scalar_lea.vmem %s255, 240
        %v2370 = vld [vmem:[%s2369] sm:$0xff]
        %vm2371 = vcmp.le.f32.partialorder %v2370, %v2368
        %v2372 = vsel %vm2371, 1, 0
        %2373 = vset.pattern.permute.xlu0 0
        %2374 = vperm.xlu0 %2373, %v2372
        %v2375 = vpop.permute.xlu0 %2374
        %vm2376 = vcmp.eq.s32.totalorder %v2375, 1
        %v2377 = vsel %vm2376, %v2322, %v2314
        %v2378 = vsel %vm2376, %v2359, %v2315
        %v2379 = vsel %vm2371, %v2366, %v2316
        %v2380 = vmul.f32 %v2378, 0.01
        %v2381 = vsub.f32 %v2377, %v2380
        %s2382 = scalar_lea.vmem %s247, 124
        %v2383 = vld [vmem:[%s2382] sm:$0xf]
        %v2384 = vunpack.c.l.bf16 %v2383
        %v2385 = vadd.f32 %v2381, %v2384
        %v2386 = vpack.c.bf16 %v2385, %v2385
        %2387 = vmatprep.subr.bf16.mxu0 0
        %2388 = vmatpush1.bf16.msra.mxu0 %v419
        %2389 = vmatprep.subr.bf16.mxu0 0
        %2390 = vmatpush1.bf16.msra.mxu0 %v420
        %2391 = vmatprep.subr.bf16.mxu0 0
        %2392 = vmatpush1.bf16.msra.mxu0 %v421
        %2393 = vmatprep.subr.bf16.mxu0 0
        %2394 = vmatpush1.bf16.msra.mxu0 %v422
        %2395 = vmatprep.subr.bf16.mxu0 0
        %2396 = vmatpush1.bf16.msra.mxu0 %v423
        %2397 = vmatprep.subr.bf16.mxu0 0
        %2398 = vmatpush1.bf16.msra.mxu0 %v424
        %2399 = vmatprep.subr.bf16.mxu0 0
        %2400 = vmatpush1.bf16.msra.mxu0 %v425
        %2401 = vmatprep.subr.bf16.mxu0 0
        %2402 = vmatpush1.bf16.msra.mxu0 %v426
        %2403 = vmatprep.subr.bf16.mxu0 0
        %2404 = vmatpush1.bf16.msra.mxu0 0
        %2405 = vmatprep.subr.bf16.mxu0 0
        %2406 = vmatpush1.bf16.msra.mxu0 0
        %2407 = vmatprep.subr.bf16.mxu0 0
        %2408 = vmatpush1.bf16.msra.mxu0 0
        %2409 = vmatprep.subr.bf16.mxu0 0
        %2410 = vmatpush1.bf16.msra.mxu0 0
        %2411 = vmatprep.subr.bf16.mxu0 0
        %2412 = vmatpush1.bf16.msra.mxu0 0
        %2413 = vmatprep.subr.bf16.mxu0 0
        %2414 = vmatpush1.bf16.msra.mxu0 0
        %2415 = vmatprep.subr.bf16.mxu0 0
        %2416 = vmatpush1.bf16.msra.mxu0 0
        %2417 = vmatprep.subr.bf16.mxu0 0
        %2418 = vmatpush1.bf16.msra.mxu0 0
        %2419 = vmatprep.mubr.bf16.mxu0 0
        %2420 = vmatmul.mubr.bf16.gmra.mrb[0].mxu0 %v2386
        %v2421 = vpop.f32.mrb[0].mxu0
        %v2422 = vadd.f32 0.0, %v2421
        %v2423 = vpop.f32.mrb[0].mxu0
        %v2424 = vpop.f32.mrb[0].mxu0
        %v2425 = vpop.f32.mrb[0].mxu0
        %2426 = vdwg.mxu0
        %v2427 = vmul.f32 %v2422, %v2422
        %2428 = vadd.xlane.f32.xlu0 %v2427
        %v2429 = vpop.xlane.xlu0 %2428
        %v2430 = vsub.f32 %v2429, %v2379
        %v2431 = vmul.f32 %v2430, -0.0025
        %s2432 = scalar_lea.vmem %s255, 248
        %v2433 = vld [vmem:[%s2432] sm:$0xff]
        %vm2434 = vcmp.le.f32.partialorder %v2433, %v2431
        %v2435 = vsel %vm2434, 1, 0
        %2436 = vset.pattern.permute.xlu0 0
        %2437 = vperm.xlu0 %2436, %v2435
        %v2438 = vpop.permute.xlu0 %2437
        %vm2439 = vcmp.eq.s32.totalorder %v2438, 1
        %v2440 = vsel %vm2439, %v2385, %v2377
        %v2441 = vsel %vm2439, %v2422, %v2378
        %v2442 = vsel %vm2434, %v2429, %v2379
        %2443 = vst [vmem:[#allocation4] sm:$0xff] %v2440
        %2444 = vst [vmem:[#allocation2] sm:$0xff] %v2441
        %vm2445 = vcmask 7168
        %2446 = vst.msk [vmem:[#allocation3] sm:$0xff] %vm2445, %v2442
        // Predicated region
        $region41: #{tpu_custom_call.1} parent=35 // pred_check
          %p2447 = pneg %p149
        $region42: #{tpu_custom_call.1} parent=35 // pred_check_branch
          %2449 = sbr.rel (%p2447) target = $region44
        $region43: #{tpu_custom_call.1} parent=35 // pred_region
          %s2451 = ssub.s32 128, 128
          %2452 = vsyncadd [#allocation5], %s2451
          %s2453 = smul.addr %s20, 128
          %s2454 = scalar_lea.hbm %s4, %s2453
          %s2456 = sshll.u32 [#allocation4], 4
          %s2457 = int_to_ptr.vmem [resolvable:$true] %s2456
          %2459 = dma.vmem_to_hbm [thread:$0]  %s2457, 128, %s2454, [#allocation5]
        $region44: #{tpu_custom_call.1} parent=35 // pred_fallthru
          _
        // Predicated region
        $region45: #{tpu_custom_call.1} parent=35 // pred_check
          %p2460 = pneg %p149
        $region46: #{tpu_custom_call.1} parent=35 // pred_check_branch
          %2462 = sbr.rel (%p2460) target = $region48
        $region47: #{tpu_custom_call.1} parent=35 // pred_region
          %2463 = dma.done [#allocation5], 128
        $region48: #{tpu_custom_call.1} parent=35 // pred_fallthru
          _
      $region36: #{tpu_custom_call.1} parent=5 // pred_fallthru
        _
      %p2464 = scmp.le.s32.totalorder 2, %s11
      // Predicated region
      $region49: #{tpu_custom_call.1} parent=5 // pred_check
        %p2465 = pneg %p2464
      $region50: #{tpu_custom_call.1} parent=5 // pred_check_branch
        %2467 = sbr.rel (%p2465) target = $region52
      $region51: #{tpu_custom_call.1} parent=5 // pred_region
        %s2468 = ssub.s32 %s11, 2
      $region52: #{tpu_custom_call.1} parent=5 // pred_fallthru
        _
    $region6: #{tpu_custom_call.1} parent=1 // loop_footer
      %s15 = sadd.s32 1, %s11
    $region7: #{tpu_custom_call.1} parent=1 // loop_footer_branch
      %10 = sbr.rel target = $region3
    $region8: #{tpu_custom_call.1} parent=1 // loop_exit
      _
    %2469 = vsyncpa [#allocation5], 1
    %s2470 = scalar_lea.sflag [#allocation5], 1
    %2471 = vsyncpa %s2470, 1

// kernel: tpu_custom_call.1
$region0: #{tpu_custom_call.1}
  #allocation0 [shape = 'u32[]', space=smem, size = 0x4, offset = 0x4, fixed_abs, tag = 'smem constant byte address 0x4 - core index']
  #allocation1 [shape = 'u32[144,128]{1,0:T(1,128)}', space=vmem, size = 0x12000, scoped, tag = 'internal scratch']
  #allocation2 [shape = 'f32[8,128]{1,0:T(8,128)}', space=vmem, size = 0x1000, scoped, tag = 'scratch operand']
  #allocation3 [shape = 'f32[8,1]{1,0:T(8,128)}', space=vmem, size = 0x1000, scoped, tag = 'scratch operand']
  %s0 = inlined_call_operand.vmem [shape: bf16[2,32,8,128], index: 0, kind: input, shape index: {}]
  %s1 = inlined_call_operand.vmem [shape: f32[2,32,8,1], index: 1, kind: input, shape index: {}]
  %s2 = inlined_call_operand.vmem [shape: f32[8,128], index: 2, kind: input, shape index: {}]
  %s3 = inlined_call_operand.vmem [shape: bf16[128,128], index: 3, kind: input, shape index: {}]
  %s4 = inlined_call_operand.hbm [shape: f32[8,128], index: 4, kind: output, shape index: {}]
  %s5 = sld [smem:[#allocation0]]
  $region53: #{tpu_custom_call.1} parent=0
    _
  %s7 = ssub.s32 1, %s5
  %s8 = scalar_select 0, %s7, %s5
  $region1: #{tpu_custom_call.1} parent=0
    #allocation4 [shape = 'u8[4096]{0}', space=vmem, size = 0x1000, scoped, tag = 'output window, operand 0, single buffered']
    #allocation5 [shape = 's32[2]{0}', space=sflag, size = 0x8, scoped, tag = 'scoped memory for tpu_custom_call.1']
    %9 = vsyncpa [#allocation5], 0
    loop: start=0, step=1, limit=4
    $region2: #{tpu_custom_call.1} parent=1 // loop_pre_header
      _
    $region3: #{tpu_custom_call.1} parent=1 // loop_header
      %s11 = sphi 0, %s15
      %p12 = scmp.ge.s32.totalorder %s11, 4
      %s18 = sphi 0, %s30
      %s19 = sphi 0, %s26
      %s20 = sphi 0, %s18
      %s21 = sphi 0, %s19
      %s22 = sphi 0, %s20
      %s23 = sphi 0, %s21
      %s35 = sphi 0, %s37
      %s38 = sphi 0, %s35
      %s39 = sphi 0, %s38
      %s55 = sphi 0, %s39
      %s63 = sphi 0, %s65
      %s66 = sphi 0, %s63
      %s67 = sphi 0, %s66
      %s83 = sphi 0, %s67
      %s89 = sphi 0, %s91
      %s92 = sphi 0, %s89
      %s93 = sphi 0, %s92
      %s109 = sphi 0, %s93
      %s113 = sphi 0, %s113
      %s115 = sphi 0, %s113
      %s116 = sphi 0, %s115
      %s130 = sphi 0, %s116
      %s136 = sphi 0, %s138
      %s139 = sphi 0, %s136
      %s140 = sphi 0, %s139
      %s156 = sphi 0, %s140
    $region4: #{tpu_custom_call.1} parent=1 // loop_header_branch
      %14 = sbr.rel (%p12) target = $region8
    $region5: #{tpu_custom_call.1} parent=1 // loop_body
      %s16 = ssub.s32 %s11, 1
      %s17 = ssub.s32 %s11, 2
      %s24 = sadd.s32 1, %s19
      %p25 = scmp.ge.s32.totalorder %s24, 2
      %s26 = scalar_select %p25, 0, %s24
      %s27 = sadd.s32 1, %s18
      %s28 = scalar_select %p25, %s27, %s18
      %p29 = scmp.ge.s32.totalorder %s28, 1
      %s30 = scalar_select %p29, 0, %s28
      %s31 = ssub.s32 %s19, %s26
      %s32 = ssub.s32 %s18, %s30
      %s33 = sor.u32 %s31, %s32
      %p34 = scmp.eq.s32.totalorder %s33, 0
      %s36 = sadd.s32 %s35, 1
      %s37 = scalar_select %p34, %s35, %s36
      %p40 = pneg %p34
      %p41 = scmp.eq.s32.totalorder %s11, 1
      %p42 = por %p40, %p41
      %p43 = scmp.ne.s32.totalorder %s35, %s38
      %p44 = scmp.eq.s32.totalorder %s11, 0
      %p45 = por %p43, %p44
      %p46 = scmp.ne.s32.totalorder %s35, %s38
      %p47 = scmp.eq.s32.totalorder %s16, 1
      %p48 = por %p46, %p47
      %p49 = scmp.ne.s32.totalorder %s38, %s39
      %p50 = scmp.eq.s32.totalorder %s16, 0
      %p51 = por %p49, %p50
      %p52 = scmp.ne.s32.totalorder %s38, %s39
      %p53 = scmp.eq.s32.totalorder %s17, 1
      %p54 = por %p52, %p53
      %p56 = scmp.ne.s32.totalorder %s39, %s55
      %p57 = scmp.eq.s32.totalorder %s17, 0
      %p58 = por %p56, %p57
      %s59 = ssub.s32 %s19, %s26
      %s60 = ssub.s32 %s18, %s30
      %s61 = sor.u32 %s59, %s60
      %p62 = scmp.eq.s32.totalorder %s61, 0
      %s64 = sadd.s32 %s63, 1
      %s65 = scalar_select %p62, %s63, %s64
      %p68 = pneg %p62
      %p69 = scmp.eq.s32.totalorder %s11, 1
      %p70 = por %p68, %p69
      %p71 = scmp.ne.s32.totalorder %s63, %s66
      %p72 = scmp.eq.s32.totalorder %s11, 0
      %p73 = por %p71, %p72
      %p74 = scmp.ne.s32.totalorder %s63, %s66
      %p75 = scmp.eq.s32.totalorder %s16, 1
      %p76 = por %p74, %p75
      %p77 = scmp.ne.s32.totalorder %s66, %s67
      %p78 = scmp.eq.s32.totalorder %s16, 0
      %p79 = por %p77, %p78
      %p80 = scmp.ne.s32.totalorder %s66, %s67
      %p81 = scmp.eq.s32.totalorder %s17, 1
      %p82 = por %p80, %p81
      %p84 = scmp.ne.s32.totalorder %s67, %s83
      %p85 = scmp.eq.s32.totalorder %s17, 0
      %p86 = por %p84, %p85
      %s87 = ssub.s32 %s18, %s30
      %p88 = scmp.eq.s32.totalorder %s87, 0
      %s90 = sadd.s32 %s89, 1
      %s91 = scalar_select %p88, %s89, %s90
      %p94 = pneg %p88
      %p95 = scmp.eq.s32.totalorder %s11, 1
      %p96 = por %p94, %p95
      %p97 = scmp.ne.s32.totalorder %s89, %s92
      %p98 = scmp.eq.s32.totalorder %s11, 0
      %p99 = por %p97, %p98
      %p100 = scmp.ne.s32.totalorder %s89, %s92
      %p101 = scmp.eq.s32.totalorder %s16, 1
      %p102 = por %p100, %p101
      %p103 = scmp.ne.s32.totalorder %s92, %s93
      %p104 = scmp.eq.s32.totalorder %s16, 0
      %p105 = por %p103, %p104
      %p106 = scmp.ne.s32.totalorder %s92, %s93
      %p107 = scmp.eq.s32.totalorder %s17, 1
      %p108 = por %p106, %p107
      %p110 = scmp.ne.s32.totalorder %s93, %s109
      %p111 = scmp.eq.s32.totalorder %s17, 0
      %p112 = por %p110, %p111
      %s114 = sadd.s32 %s113, 1
      %p117 = scmp.eq.s32.totalorder %s11, 1
      %p118 = scmp.ne.s32.totalorder %s113, %s115
      %p119 = scmp.eq.s32.totalorder %s11, 0
      %p120 = por %p118, %p119
      %p121 = scmp.ne.s32.totalorder %s113, %s115
      %p122 = scmp.eq.s32.totalorder %s16, 1
      %p123 = por %p121, %p122
      %p124 = scmp.ne.s32.totalorder %s115, %s116
      %p125 = scmp.eq.s32.totalorder %s16, 0
      %p126 = por %p124, %p125
      %p127 = scmp.ne.s32.totalorder %s115, %s116
      %p128 = scmp.eq.s32.totalorder %s17, 1
      %p129 = por %p127, %p128
      %p131 = scmp.ne.s32.totalorder %s116, %s130
      %p132 = scmp.eq.s32.totalorder %s17, 0
      %p133 = por %p131, %p132
      %s134 = ssub.s32 %s18, %s30
      %p135 = scmp.eq.s32.totalorder %s134, 0
      %s137 = sadd.s32 %s136, 1
      %s138 = scalar_select %p135, %s136, %s137
      %p141 = pneg %p135
      %p142 = scmp.eq.s32.totalorder %s11, 1
      %p143 = por %p141, %p142
      %p144 = scmp.ne.s32.totalorder %s136, %s139
      %p145 = scmp.eq.s32.totalorder %s11, 0
      %p146 = por %p144, %p145
      %p147 = scmp.ne.s32.totalorder %s136, %s139
      %p148 = scmp.eq.s32.totalorder %s16, 1
      %p149 = por %p147, %p148
      %p150 = scmp.ne.s32.totalorder %s139, %s140
      %p151 = scmp.eq.s32.totalorder %s16, 0
      %p152 = por %p150, %p151
      %p153 = scmp.ne.s32.totalorder %s139, %s140
      %p154 = scmp.eq.s32.totalorder %s17, 1
      %p155 = por %p153, %p154
      %p157 = scmp.ne.s32.totalorder %s140, %s156
      %p158 = scmp.eq.s32.totalorder %s17, 0
      %p159 = por %p157, %p158
      %p160 = scmp.le.s32.totalorder 1, %s11
      %p161 = scmp.lt.s32.totalorder %s11, 3
      %p162 = pnand %p160, %p161
      %p163 = pneg %p162
      // Predicated region
      $region9: #{tpu_custom_call.1} parent=5 // pred_check
        _
      $region10: #{tpu_custom_call.1} parent=5 // pred_check_branch
        %165 = sbr.rel (%p162) target = $region12
      $region11: #{tpu_custom_call.1} parent=5 // pred_region
        %s166 = ssub.s32 %s11, 1
        // Predicated region
        $region13: #{tpu_custom_call.1} parent=11 // pred_check
          %p167 = pneg %p105
        $region14: #{tpu_custom_call.1} parent=11 // pred_check_branch
          %169 = sbr.rel (%p167) target = $region16
        $region15: #{tpu_custom_call.1} parent=11 // pred_region
          %p170 = scmp.lt.s32.totalorder %s20, 0
          %s171 = scalar_select %p170, %s20, 0
          %s172 = smul.addr %s171, 8
          %s173 = scalar_lea.vmem %s2, %s172
        $region16: #{tpu_custom_call.1} parent=11 // pred_fallthru
          _
        // Predicated region
        $region17: #{tpu_custom_call.1} parent=11 // pred_check
          %p174 = pneg %p126
        $region18: #{tpu_custom_call.1} parent=11 // pred_check_branch
          %176 = sbr.rel (%p174) target = $region20
        $region19: #{tpu_custom_call.1} parent=11 // pred_region
          _
        $region20: #{tpu_custom_call.1} parent=11 // pred_fallthru
          _
      $region12: #{tpu_custom_call.1} parent=5 // pred_fallthru
        _
      %p177 = scmp.lt.s32.totalorder %s11, 2
      // Predicated region
      $region21: #{tpu_custom_call.1} parent=5 // pred_check
        %p178 = pneg %p177
      $region22: #{tpu_custom_call.1} parent=5 // pred_check_branch
        %180 = sbr.rel (%p178) target = $region24
      $region23: #{tpu_custom_call.1} parent=5 // pred_region
        // Predicated region
        $region25: #{tpu_custom_call.1} parent=23 // pred_check
          %p181 = pneg %p45
        $region26: #{tpu_custom_call.1} parent=23 // pred_check_branch
          %183 = sbr.rel (%p181) target = $region28
        $region27: #{tpu_custom_call.1} parent=23 // pred_region
          %p184 = scmp.lt.s32.totalorder %s19, 1
          %s185 = scalar_select %p184, %s19, 1
          %p186 = scmp.lt.s32.totalorder %s18, 0
          %s187 = scalar_select %p186, %s18, 0
          %s188 = smul.addr %s185, 32
          %s189 = sadd.s32 %s187, %s188
          %s190 = smul.addr %s189, 4
          %s191 = scalar_lea.vmem %s0, %s190
        $region28: #{tpu_custom_call.1} parent=23 // pred_fallthru
          _
        // Predicated region
        $region29: #{tpu_custom_call.1} parent=23 // pred_check
          %p192 = pneg %p73
        $region30: #{tpu_custom_call.1} parent=23 // pred_check_branch
          %194 = sbr.rel (%p192) target = $region32
        $region31: #{tpu_custom_call.1} parent=23 // pred_region
          %p195 = scmp.lt.s32.totalorder %s19, 1
          %s196 = scalar_select %p195, %s19, 1
          %p197 = scmp.lt.s32.totalorder %s18, 0
          %s198 = scalar_select %p197, %s18, 0
          %s199 = smul.addr %s196, 32
          %s200 = sadd.s32 %s198, %s199
          %s201 = smul.addr %s200, 8
          %s202 = scalar_lea.vmem %s1, %s201
        $region32: #{tpu_custom_call.1} parent=23 // pred_fallthru
          _
      $region24: #{tpu_custom_call.1} parent=5 // pred_fallthru
        _
      %p203 = scmp.le.s32.totalorder 1, %s11
      %p204 = scmp.lt.s32.totalorder %s11, 3
      %p205 = pnand %p203, %p204
      %p206 = pneg %p205
      // Predicated region
      $region33: #{tpu_custom_call.1} parent=5 // pred_check
        _
      $region34: #{tpu_custom_call.1} parent=5 // pred_check_branch
        %208 = sbr.rel (%p205) target = $region36
      $region35: #{tpu_custom_call.1} parent=5 // pred_region
        %s209 = ssub.s32 %s11, 1
        %p210 = scmp.lt.s32.totalorder %s21, 1
        %s211 = scalar_select %p210, %s21, 1
        %p212 = scmp.lt.s32.totalorder %s20, 0
        %s213 = scalar_select %p212, %s20, 0
        %s214 = smul.addr %s211, 32
        %s215 = sadd.s32 %s213, %s214
        %s216 = smul.addr %s215, 4
        %s217 = scalar_lea.vmem %s0, %s216
        %p218 = pneg %p51
        %p219 = pneg %p48
        %p220 = scmp.lt.s32.totalorder %s21, 1
        %s221 = scalar_select %p220, %s21, 1
        %p222 = scmp.lt.s32.totalorder %s20, 0
        %s223 = scalar_select %p222, %s20, 0
        %s224 = smul.addr %s221, 32
        %s225 = sadd.s32 %s223, %s224
        %s226 = smul.addr %s225, 8
        %s227 = scalar_lea.vmem %s1, %s226
        %p228 = pneg %p79
        %p229 = pneg %p76
        %p230 = scmp.lt.s32.totalorder %s20, 0
        %s231 = scalar_select %p230, %s20, 0
        %s232 = smul.addr %s231, 8
        %s233 = scalar_lea.vmem %s2, %s232
        %p234 = pneg %p105
        %p235 = pneg %p102
        %p236 = pneg %p126
        %p237 = pneg %p123
        %p238 = pneg %p152
        %p239 = pneg %p149
        %p240 = scmp.lt.s32.totalorder %s21, 1
        %s241 = scalar_select %p240, %s21, 1
        %p242 = scmp.lt.s32.totalorder %s20, 0
        %s243 = scalar_select %p242, %s20, 0
        %s244 = smul.addr %s241, 32
        %s245 = sadd.s32 %s243, %s244
        %s246 = smul.addr %s245, 4
        %s247 = scalar_lea.vmem %s0, %s246
        %p248 = scmp.lt.s32.totalorder %s21, 1
        %s249 = scalar_select %p248, %s21, 1
        %p250 = scmp.lt.s32.totalorder %s20, 0
        %s251 = scalar_select %p250, %s20, 0
        %s252 = smul.addr %s249, 32
        %s253 = sadd.s32 %s251, %s252
        %s254 = smul.addr %s253, 8
        %s255 = scalar_lea.vmem %s1, %s254
        %p256 = scmp.lt.s32.totalorder %s20, 0
        %s257 = scalar_select %p256, %s20, 0
        %s258 = smul.addr %s257, 8
        %s259 = scalar_lea.vmem %s2, %s258
        %v261 = vld [vmem:[%s3] sm:$0xf]
        %v262 = vld [vmem:[%s3 + $0x4] sm:$0xf]
        %v263 = vld [vmem:[%s3 + $0x8] sm:$0xf]
        %v264 = vld [vmem:[%s3 + $0xc] sm:$0xf]
        %v265 = vld [vmem:[%s3 + $0x10] sm:$0xf]
        %v266 = vld [vmem:[%s3 + $0x14] sm:$0xf]
        %v267 = vld [vmem:[%s3 + $0x18] sm:$0xf]
        %v268 = vld [vmem:[%s3 + $0x1c] sm:$0xf]
        %v269 = vld [vmem:[%s3 + $0x20] sm:$0xf]
        %v270 = vld [vmem:[%s3 + $0x24] sm:$0xf]
        %v271 = vld [vmem:[%s3 + $0x28] sm:$0xf]
        %v272 = vld [vmem:[%s3 + $0x2c] sm:$0xf]
        %v273 = vld [vmem:[%s3 + $0x30] sm:$0xf]
        %v274 = vld [vmem:[%s3 + $0x34] sm:$0xf]
        %v275 = vld [vmem:[%s3 + $0x38] sm:$0xf]
        %v276 = vld [vmem:[%s3 + $0x3c] sm:$0xf]
        %p277 = scmp.eq.s32.totalorder %s21, 0
        // Predicated region
        $region37: #{tpu_custom_call.1} parent=35 // pred_check
          %p278 = pneg %p277
        $region38: #{tpu_custom_call.1} parent=35 // pred_check_branch
          %280 = sbr.rel (%p278) target = $region40
        $region39: #{tpu_custom_call.1} parent=35 // pred_region
          %v281 = vld [vmem:[%s259] sm:$0xff]
          %v282 = vpack.c.bf16 %v281, %v281
          %v299 = vunpack.c.l.b16 %v261
          %v300 = vunpack.c.l.b16 %v262
          %v301 = vunpack.c.l.b16 %v263
          %v302 = vunpack.c.l.b16 %v264
          %v303 = vunpack.c.l.b16 %v265
          %v304 = vunpack.c.l.b16 %v266
          %v305 = vunpack.c.l.b16 %v267
          %v306 = vunpack.c.l.b16 %v268
          %v307 = vunpack.c.l.b16 %v269
          %v308 = vunpack.c.l.b16 %v270
          %v309 = vunpack.c.l.b16 %v271
          %v310 = vunpack.c.l.b16 %v272
          %v311 = vunpack.c.l.b16 %v273
          %v312 = vunpack.c.l.b16 %v274
          %v313 = vunpack.c.l.b16 %v275
          %v314 = vunpack.c.l.b16 %v276
          %v315 = vpack.c.b16 %v300, %v299
          %v316 = vpack.c.b16 %v302, %v301
          %v317 = vpack.c.b16 %v304, %v303
          %v318 = vpack.c.b16 %v306, %v305
          %v319 = vpack.c.b16 %v308, %v307
          %v320 = vpack.c.b16 %v310, %v309
          %v321 = vpack.c.b16 %v312, %v311
          %v322 = vpack.c.b16 %v314, %v313
          %331 = vmatprep.subr.bf16.mxu0 0
          %332 = vmatpush1.bf16.msra.mxu0 %v315
          %333 = vmatprep.subr.bf16.mxu0 0
          %334 = vmatpush1.bf16.msra.mxu0 %v316
          %335 = vmatprep.subr.bf16.mxu0 0
          %336 = vmatpush1.bf16.msra.mxu0 %v317
          %337 = vmatprep.subr.bf16.mxu0 0
          %338 = vmatpush1.bf16.msra.mxu0 %v318
          %339 = vmatprep.subr.bf16.mxu0 0
          %340 = vmatpush1.bf16.msra.mxu0 %v319
          %341 = vmatprep.subr.bf16.mxu0 0
          %342 = vmatpush1.bf16.msra.mxu0 %v320
          %343 = vmatprep.subr.bf16.mxu0 0
          %344 = vmatpush1.bf16.msra.mxu0 %v321
          %345 = vmatprep.subr.bf16.mxu0 0
          %346 = vmatpush1.bf16.msra.mxu0 %v322
          %347 = vmatprep.subr.bf16.mxu0 0
          %348 = vmatpush1.bf16.msra.mxu0 0
          %349 = vmatprep.subr.bf16.mxu0 0
          %350 = vmatpush1.bf16.msra.mxu0 0
          %351 = vmatprep.subr.bf16.mxu0 0
          %352 = vmatpush1.bf16.msra.mxu0 0
          %353 = vmatprep.subr.bf16.mxu0 0
          %354 = vmatpush1.bf16.msra.mxu0 0
          %355 = vmatprep.subr.bf16.mxu0 0
          %356 = vmatpush1.bf16.msra.mxu0 0
          %357 = vmatprep.subr.bf16.mxu0 0
          %358 = vmatpush1.bf16.msra.mxu0 0
          %359 = vmatprep.subr.bf16.mxu0 0
          %360 = vmatpush1.bf16.msra.mxu0 0
          %361 = vmatprep.subr.bf16.mxu0 0
          %362 = vmatpush1.bf16.msra.mxu0 0
          %363 = vmatprep.mubr.bf16.mxu0 0
          %364 = vmatmul.mubr.bf16.gmra.mrb[0].mxu0 %v282
          %v365 = vpop.f32.mrb[0].mxu0
          %v366 = vadd.f32 0.0, %v365
          %v367 = vpop.f32.mrb[0].mxu0
          %v368 = vpop.f32.mrb[0].mxu0
          %v369 = vpop.f32.mrb[0].mxu0
          %370 = vdwg.mxu0
          %371 = vst [vmem:[#allocation4] sm:$0xff] %v281
          %372 = vst [vmem:[#allocation2] sm:$0xff] %v366
          %v373 = vmul.f32 %v366, %v366
          %374 = vadd.xlane.f32.xlu0 %v373
          %v375 = vpop.xlane.xlu0 %374
          %vm376 = vcmask 7168
          %377 = vst.msk [vmem:[#allocation3] sm:$0xff] %vm376, %v375
        $region40: #{tpu_custom_call.1} parent=35 // pred_fallthru
          _
        %v378 = vld [vmem:[#allocation4] sm:$0xff]
        %v379 = vld [vmem:[#allocation2] sm:$0xff]
        %v380 = vld [vmem:[#allocation3] sm:$0xff]
        %v381 = vmul.f32 %v379, 0.01
        %v382 = vsub.f32 %v378, %v381
        %v383 = vld [vmem:[%s247] sm:$0xf]
        %v384 = vunpack.c.l.bf16 %v383
        %v385 = vadd.f32 %v382, %v384
        %v386 = vpack.c.bf16 %v385, %v385
        %v403 = vunpack.c.l.b16 %v261
        %v404 = vunpack.c.l.b16 %v262
        %v405 = vunpack.c.l.b16 %v263
        %v406 = vunpack.c.l.b16 %v264
        %v407 = vunpack.c.l.b16 %v265
        %v408 = vunpack.c.l.b16 %v266
        %v409 = vunpack.c.l.b16 %v267
        %v410 = vunpack.c.l.b16 %v268
        %v411 = vunpack.c.l.b16 %v269
        %v412 = vunpack.c.l.b16 %v270
        %v413 = vunpack.c.l.b16 %v271
        %v414 = vunpack.c.l.b16 %v272
        %v415 = vunpack.c.l.b16 %v273
        %v416 = vunpack.c.l.b16 %v274
        %v417 = vunpack.c.l.b16 %v275
        %v418 = vunpack.c.l.b16 %v276
        %v419 = vpack.c.b16 %v404, %v403
        %v420 = vpack.c.b16 %v406, %v405
        %v421 = vpack.c.b16 %v408, %v407
        %v422 = vpack.c.b16 %v410, %v409
        %v423 = vpack.c.b16 %v412, %v411
        %v424 = vpack.c.b16 %v414, %v413
        %v425 = vpack.c.b16 %v416, %v415
        %v426 = vpack.c.b16 %v418, %v417
        %435 = vmatprep.subr.bf16.mxu0 0
        %436 = vmatpush1.bf16.msra.mxu0 %v419
        %437 = vmatprep.subr.bf16.mxu0 0
        %438 = vmatpush1.bf16.msra.mxu0 %v420
        %439 = vmatprep.subr.bf16.mxu0 0
        %440 = vmatpush1.bf16.msra.mxu0 %v421
        %441 = vmatprep.subr.bf16.mxu0 0
        %442 = vmatpush1.bf16.msra.mxu0 %v422
        %443 = vmatprep.subr.bf16.mxu0 0
        %444 = vmatpush1.bf16.msra.mxu0 %v423
        %445 = vmatprep.subr.bf16.mxu0 0
        %446 = vmatpush1.bf16.msra.mxu0 %v424
        %447 = vmatprep.subr.bf16.mxu0 0
        %448 = vmatpush1.bf16.msra.mxu0 %v425
        %449 = vmatprep.subr.bf16.mxu0 0
        %450 = vmatpush1.bf16.msra.mxu0 %v426
        %451 = vmatprep.subr.bf16.mxu0 0
        %452 = vmatpush1.bf16.msra.mxu0 0
        %453 = vmatprep.subr.bf16.mxu0 0
        %454 = vmatpush1.bf16.msra.mxu0 0
        %455 = vmatprep.subr.bf16.mxu0 0
        %456 = vmatpush1.bf16.msra.mxu0 0
        %457 = vmatprep.subr.bf16.mxu0 0
        %458 = vmatpush1.bf16.msra.mxu0 0
        %459 = vmatprep.subr.bf16.mxu0 0
        %460 = vmatpush1.bf16.msra.mxu0 0
        %461 = vmatprep.subr.bf16.mxu0 0
        %462 = vmatpush1.bf16.msra.mxu0 0
        %463 = vmatprep.subr.bf16.mxu0 0
        %464 = vmatpush1.bf16.msra.mxu0 0
        %465 = vmatprep.subr.bf16.mxu0 0
        %466 = vmatpush1.bf16.msra.mxu0 0
        %467 = vmatprep.mubr.bf16.mxu0 0
        %468 = vmatmul.mubr.bf16.gmra.mrb[0].mxu0 %v386
        %v469 = vpop.f32.mrb[0].mxu0
        %v470 = vadd.f32 0.0, %v469
        %v471 = vpop.f32.mrb[0].mxu0
        %v472 = vpop.f32.mrb[0].mxu0
        %v473 = vpop.f32.mrb[0].mxu0
        %474 = vdwg.mxu0
        %v475 = vmul.f32 %v470, %v470
        %476 = vadd.xlane.f32.xlu0 %v475
        %v477 = vpop.xlane.xlu0 %476
        %v478 = vsub.f32 %v477, %v380
        %v479 = vmul.f32 %v478, -0.0025
        %v480 = vld [vmem:[%s255] sm:$0xff]
        %vm481 = vcmp.le.f32.partialorder %v480, %v479
        %v482 = vsel %vm481, 1, 0
        %483 = vset.pattern.permute.xlu0 0
        %484 = vperm.xlu0 %483, %v482
        %v485 = vpop.permute.xlu0 %484
        %vm486 = vcmp.eq.s32.totalorder %v485, 1
        %v487 = vsel %vm486, %v385, %v378
        %v488 = vsel %vm486, %v470, %v379
        %v489 = vsel %vm481, %v477, %v380
        %v490 = vmul.f32 %v488, 0.01
        %v491 = vsub.f32 %v487, %v490
        %s492 = scalar_lea.vmem %s247, 4
        %v493 = vld [vmem:[%s492] sm:$0xf]
        %v494 = vunpack.c.l.bf16 %v493
        %v495 = vadd.f32 %v491, %v494
        %v496 = vpack.c.bf16 %v495, %v495
        %497 = vmatprep.subr.bf16.mxu0 0
        %498 = vmatpush1.bf16.msra.mxu0 %v419
        %499 = vmatprep.subr.bf16.mxu0 0
        %500 = vmatpush1.bf16.msra.mxu0 %v420
        %501 = vmatprep.subr.bf16.mxu0 0
        %502 = vmatpush1.bf16.msra.mxu0 %v421
        %503 = vmatprep.subr.bf16.mxu0 0
        %504 = vmatpush1.bf16.msra.mxu0 %v422
        %505 = vmatprep.subr.bf16.mxu0 0
        %506 = vmatpush1.bf16.msra.mxu0 %v423
        %507 = vmatprep.subr.bf16.mxu0 0
        %508 = vmatpush1.bf16.msra.mxu0 %v424
        %509 = vmatprep.subr.bf16.mxu0 0
        %510 = vmatpush1.bf16.msra.mxu0 %v425
        %511 = vmatprep.subr.bf16.mxu0 0
        %512 = vmatpush1.bf16.msra.mxu0 %v426
        %513 = vmatprep.subr.bf16.mxu0 0
        %514 = vmatpush1.bf16.msra.mxu0 0
        %515 = vmatprep.subr.bf16.mxu0 0
        %516 = vmatpush1.bf16.msra.mxu0 0
        %517 = vmatprep.subr.bf16.mxu0 0
        %518 = vmatpush1.bf16.msra.mxu0 0
        %519 = vmatprep.subr.bf16.mxu0 0
        %520 = vmatpush1.bf16.msra.mxu0 0
        %521 = vmatprep.subr.bf16.mxu0 0
        %522 = vmatpush1.bf16.msra.mxu0 0
        %523 = vmatprep.subr.bf16.mxu0 0
        %524 = vmatpush1.bf16.msra.mxu0 0
        %525 = vmatprep.subr.bf16.mxu0 0
        %526 = vmatpush1.bf16.msra.mxu0 0
        %527 = vmatprep.subr.bf16.mxu0 0
        %528 = vmatpush1.bf16.msra.mxu0 0
        %529 = vmatprep.mubr.bf16.mxu0 0
        %530 = vmatmul.mubr.bf16.gmra.mrb[0].mxu0 %v496
        %v531 = vpop.f32.mrb[0].mxu0
        %v532 = vadd.f32 0.0, %v531
        %v533 = vpop.f32.mrb[0].mxu0
        %v534 = vpop.f32.mrb[0].mxu0
        %v535 = vpop.f32.mrb[0].mxu0
        %536 = vdwg.mxu0
        %v537 = vmul.f32 %v532, %v532
        %538 = vadd.xlane.f32.xlu0 %v537
        %v539 = vpop.xlane.xlu0 %538
        %v540 = vsub.f32 %v539, %v489
        %v541 = vmul.f32 %v540, -0.0025
        %s542 = scalar_lea.vmem %s255, 8
        %v543 = vld [vmem:[%s542] sm:$0xff]
        %vm544 = vcmp.le.f32.partialorder %v543, %v541
        %v545 = vsel %vm544, 1, 0
        %546 = vset.pattern.permute.xlu0 0
        %547 = vperm.xlu0 %546, %v545
        %v548 = vpop.permute.xlu0 %547
        %vm549 = vcmp.eq.s32.totalorder %v548, 1
        %v550 = vsel %vm549, %v495, %v487
        %v551 = vsel %vm549, %v532, %v488
        %v552 = vsel %vm544, %v539, %v489
        %v553 = vmul.f32 %v551, 0.01
        %v554 = vsub.f32 %v550, %v553
        %s555 = scalar_lea.vmem %s247, 8
        %v556 = vld [vmem:[%s555] sm:$0xf]
        %v557 = vunpack.c.l.bf16 %v556
        %v558 = vadd.f32 %v554, %v557
        %v559 = vpack.c.bf16 %v558, %v558
        %560 = vmatprep.subr.bf16.mxu0 0
        %561 = vmatpush1.bf16.msra.mxu0 %v419
        %562 = vmatprep.subr.bf16.mxu0 0
        %563 = vmatpush1.bf16.msra.mxu0 %v420
        %564 = vmatprep.subr.bf16.mxu0 0
        %565 = vmatpush1.bf16.msra.mxu0 %v421
        %566 = vmatprep.subr.bf16.mxu0 0
        %567 = vmatpush1.bf16.msra.mxu0 %v422
        %568 = vmatprep.subr.bf16.mxu0 0
        %569 = vmatpush1.bf16.msra.mxu0 %v423
        %570 = vmatprep.subr.bf16.mxu0 0
        %571 = vmatpush1.bf16.msra.mxu0 %v424
        %572 = vmatprep.subr.bf16.mxu0 0
        %573 = vmatpush1.bf16.msra.mxu0 %v425
        %574 = vmatprep.subr.bf16.mxu0 0
        %575 = vmatpush1.bf16.msra.mxu0 %v426
        %576 = vmatprep.subr.bf16.mxu0 0
        %577 = vmatpush1.bf16.msra.mxu0 0
        %578 = vmatprep.subr.bf16.mxu0 0
        %579 = vmatpush1.bf16.msra.mxu0 0
        %580 = vmatprep.subr.bf16.mxu0 0
        %581 = vmatpush1.bf16.msra.mxu0 0
        %582 = vmatprep.subr.bf16.mxu0 0
        %583 = vmatpush1.bf16.msra.mxu0 0
        %584 = vmatprep.subr.bf16.mxu0 0
        %585 = vmatpush1.bf16.msra.mxu0 0
        %586 = vmatprep.subr.bf16.mxu0 0
        %587 = vmatpush1.bf16.msra.mxu0 0
        %588 = vmatprep.subr.bf16.mxu0 0
        %589 = vmatpush1.bf16.msra.mxu0 0
        %590 = vmatprep.subr.bf16.mxu0 0
        %591 = vmatpush1.bf16.msra.mxu0 0
        %592 = vmatprep.mubr.bf16.mxu0 0
        %593 = vmatmul.mubr.bf16.gmra.mrb[0].mxu0 %v559
        %v594 = vpop.f32.mrb[0].mxu0
        %v595 = vadd.f32 0.0, %v594
        %v596 = vpop.f32.mrb[0].mxu0
        %v597 = vpop.f32.mrb[0].mxu0
        %v598 = vpop.f32.mrb[0].mxu0
        %599 = vdwg.mxu0
        %v600 = vmul.f32 %v595, %v595
        %601 = vadd.xlane.f32.xlu0 %v600
        %v602 = vpop.xlane.xlu0 %601
        %v603 = vsub.f32 %v602, %v552
        %v604 = vmul.f32 %v603, -0.0025
        %s605 = scalar_lea.vmem %s255, 16
        %v606 = vld [vmem:[%s605] sm:$0xff]
        %vm607 = vcmp.le.f32.partialorder %v606, %v604
        %v608 = vsel %vm607, 1, 0
        %609 = vset.pattern.permute.xlu0 0
        %610 = vperm.xlu0 %609, %v608
        %v611 = vpop.permute.xlu0 %610
        %vm612 = vcmp.eq.s32.totalorder %v611, 1
        %v613 = vsel %vm612, %v558, %v550
        %v614 = vsel %vm612, %v595, %v551
        %v615 = vsel %vm607, %v602, %v552
        %v616 = vmul.f32 %v614, 0.01
        %v617 = vsub.f32 %v613, %v616
        %s618 = scalar_lea.vmem %s247, 12
        %v619 = vld [vmem:[%s618] sm:$0xf]
        %v620 = vunpack.c.l.bf16 %v619
        %v621 = vadd.f32 %v617, %v620
        %v622 = vpack.c.bf16 %v621, %v621
        %623 = vmatprep.subr.bf16.mxu0 0
        %624 = vmatpush1.bf16.msra.mxu0 %v419
        %625 = vmatprep.subr.bf16.mxu0 0
        %626 = vmatpush1.bf16.msra.mxu0 %v420
        %627 = vmatprep.subr.bf16.mxu0 0
        %628 = vmatpush1.bf16.msra.mxu0 %v421
        %629 = vmatprep.subr.bf16.mxu0 0
        %630 = vmatpush1.bf16.msra.mxu0 %v422
        %631 = vmatprep.subr.bf16.mxu0 0
        %632 = vmatpush1.bf16.msra.mxu0 %v423
        %633 = vmatprep.subr.bf16.mxu0 0
        %634 = vmatpush1.bf16.msra.mxu0 %v424
        %635 = vmatprep.subr.bf16.mxu0 0
        %636 = vmatpush1.bf16.msra.mxu0 %v425
        %637 = vmatprep.subr.bf16.mxu0 0
        %638 = vmatpush1.bf16.msra.mxu0 %v426
        %639 = vmatprep.subr.bf16.mxu0 0
        %640 = vmatpush1.bf16.msra.mxu0 0
        %641 = vmatprep.subr.bf16.mxu0 0
        %642 = vmatpush1.bf16.msra.mxu0 0
        %643 = vmatprep.subr.bf16.mxu0 0
        %644 = vmatpush1.bf16.msra.mxu0 0
        %645 = vmatprep.subr.bf16.mxu0 0
        %646 = vmatpush1.bf16.msra.mxu0 0
        %647 = vmatprep.subr.bf16.mxu0 0
        %648 = vmatpush1.bf16.msra.mxu0 0
        %649 = vmatprep.subr.bf16.mxu0 0
        %650 = vmatpush1.bf16.msra.mxu0 0
        %651 = vmatprep.subr.bf16.mxu0 0
        %652 = vmatpush1.bf16.msra.mxu0 0
        %653 = vmatprep.subr.bf16.mxu0 0
        %654 = vmatpush1.bf16.msra.mxu0 0
        %655 = vmatprep.mubr.bf16.mxu0 0
        %656 = vmatmul.mubr.bf16.gmra.mrb[0].mxu0 %v622
        %v657 = vpop.f32.mrb[0].mxu0
        %v658 = vadd.f32 0.0, %v657
        %v659 = vpop.f32.mrb[0].mxu0
        %v660 = vpop.f32.mrb[0].mxu0
        %v661 = vpop.f32.mrb[0].mxu0
        %662 = vdwg.mxu0
        %v663 = vmul.f32 %v658, %v658
        %664 = vadd.xlane.f32.xlu0 %v663
        %v665 = vpop.xlane.xlu0 %664
        %v666 = vsub.f32 %v665, %v615
        %v667 = vmul.f32 %v666, -0.0025
        %s668 = scalar_lea.vmem %s255, 24
        %v669 = vld [vmem:[%s668] sm:$0xff]
        %vm670 = vcmp.le.f32.partialorder %v669, %v667
        %v671 = vsel %vm670, 1, 0
        %672 = vset.pattern.permute.xlu0 0
        %673 = vperm.xlu0 %672, %v671
        %v674 = vpop.permute.xlu0 %673
        %vm675 = vcmp.eq.s32.totalorder %v674, 1
        %v676 = vsel %vm675, %v621, %v613
        %v677 = vsel %vm675, %v658, %v614
        %v678 = vsel %vm670, %v665, %v615
        %v679 = vmul.f32 %v677, 0.01
        %v680 = vsub.f32 %v676, %v679
        %s681 = scalar_lea.vmem %s247, 16
        %v682 = vld [vmem:[%s681] sm:$0xf]
        %v683 = vunpack.c.l.bf16 %v682
        %v684 = vadd.f32 %v680, %v683
        %v685 = vpack.c.bf16 %v684, %v684
        %686 = vmatprep.subr.bf16.mxu0 0
        %687 = vmatpush1.bf16.msra.mxu0 %v419
        %688 = vmatprep.subr.bf16.mxu0 0
        %689 = vmatpush1.bf16.msra.mxu0 %v420
        %690 = vmatprep.subr.bf16.mxu0 0
        %691 = vmatpush1.bf16.msra.mxu0 %v421
        %692 = vmatprep.subr.bf16.mxu0 0
        %693 = vmatpush1.bf16.msra.mxu0 %v422
        %694 = vmatprep.subr.bf16.mxu0 0
        %695 = vmatpush1.bf16.msra.mxu0 %v423
        %696 = vmatprep.subr.bf16.mxu0 0
        %697 = vmatpush1.bf16.msra.mxu0 %v424
        %698 = vmatprep.subr.bf16.mxu0 0
        %699 = vmatpush1.bf16.msra.mxu0 %v425
        %700 = vmatprep.subr.bf16.mxu0 0
        %701 = vmatpush1.bf16.msra.mxu0 %v426
        %702 = vmatprep.subr.bf16.mxu0 0
        %703 = vmatpush1.bf16.msra.mxu0 0
        %704 = vmatprep.subr.bf16.mxu0 0
        %705 = vmatpush1.bf16.msra.mxu0 0
        %706 = vmatprep.subr.bf16.mxu0 0
        %707 = vmatpush1.bf16.msra.mxu0 0
        %708 = vmatprep.subr.bf16.mxu0 0
        %709 = vmatpush1.bf16.msra.mxu0 0
        %710 = vmatprep.subr.bf16.mxu0 0
        %711 = vmatpush1.bf16.msra.mxu0 0
        %712 = vmatprep.subr.bf16.mxu0 0
        %713 = vmatpush1.bf16.msra.mxu0 0
        %714 = vmatprep.subr.bf16.mxu0 0
        %715 = vmatpush1.bf16.msra.mxu0 0
        %716 = vmatprep.subr.bf16.mxu0 0
        %717 = vmatpush1.bf16.msra.mxu0 0
        %718 = vmatprep.mubr.bf16.mxu0 0
        %719 = vmatmul.mubr.bf16.gmra.mrb[0].mxu0 %v685
        %v720 = vpop.f32.mrb[0].mxu0
        %v721 = vadd.f32 0.0, %v720
        %v722 = vpop.f32.mrb[0].mxu0
        %v723 = vpop.f32.mrb[0].mxu0
        %v724 = vpop.f32.mrb[0].mxu0
        %725 = vdwg.mxu0
        %v726 = vmul.f32 %v721, %v721
        %727 = vadd.xlane.f32.xlu0 %v726
        %v728 = vpop.xlane.xlu0 %727
        %v729 = vsub.f32 %v728, %v678
        %v730 = vmul.f32 %v729, -0.0025
        %s731 = scalar_lea.vmem %s255, 32
        %v732 = vld [vmem:[%s731] sm:$0xff]
        %vm733 = vcmp.le.f32.partialorder %v732, %v730
        %v734 = vsel %vm733, 1, 0
        %735 = vset.pattern.permute.xlu0 0
        %736 = vperm.xlu0 %735, %v734
        %v737 = vpop.permute.xlu0 %736
        %vm738 = vcmp.eq.s32.totalorder %v737, 1
        %v739 = vsel %vm738, %v684, %v676
        %v740 = vsel %vm738, %v721, %v677
        %v741 = vsel %vm733, %v728, %v678
        %v742 = vmul.f32 %v740, 0.01
        %v743 = vsub.f32 %v739, %v742
        %s744 = scalar_lea.vmem %s247, 20
        %v745 = vld [vmem:[%s744] sm:$0xf]
        %v746 = vunpack.c.l.bf16 %v745
        %v747 = vadd.f32 %v743, %v746
        %v748 = vpack.c.bf16 %v747, %v747
        %749 = vmatprep.subr.bf16.mxu0 0
        %750 = vmatpush1.bf16.msra.mxu0 %v419
        %751 = vmatprep.subr.bf16.mxu0 0
        %752 = vmatpush1.bf16.msra.mxu0 %v420
        %753 = vmatprep.subr.bf16.mxu0 0
        %754 = vmatpush1.bf16.msra.mxu0 %v421
        %755 = vmatprep.subr.bf16.mxu0 0
        %756 = vmatpush1.bf16.msra.mxu0 %v422
        %757 = vmatprep.subr.bf16.mxu0 0
        %758 = vmatpush1.bf16.msra.mxu0 %v423
        %759 = vmatprep.subr.bf16.mxu0 0
        %760 = vmatpush1.bf16.msra.mxu0 %v424
        %761 = vmatprep.subr.bf16.mxu0 0
        %762 = vmatpush1.bf16.msra.mxu0 %v425
        %763 = vmatprep.subr.bf16.mxu0 0
        %764 = vmatpush1.bf16.msra.mxu0 %v426
        %765 = vmatprep.subr.bf16.mxu0 0
        %766 = vmatpush1.bf16.msra.mxu0 0
        %767 = vmatprep.subr.bf16.mxu0 0
        %768 = vmatpush1.bf16.msra.mxu0 0
        %769 = vmatprep.subr.bf16.mxu0 0
        %770 = vmatpush1.bf16.msra.mxu0 0
        %771 = vmatprep.subr.bf16.mxu0 0
        %772 = vmatpush1.bf16.msra.mxu0 0
        %773 = vmatprep.subr.bf16.mxu0 0
        %774 = vmatpush1.bf16.msra.mxu0 0
        %775 = vmatprep.subr.bf16.mxu0 0
        %776 = vmatpush1.bf16.msra.mxu0 0
        %777 = vmatprep.subr.bf16.mxu0 0
        %778 = vmatpush1.bf16.msra.mxu0 0
        %779 = vmatprep.subr.bf16.mxu0 0
        %780 = vmatpush1.bf16.msra.mxu0 0
        %781 = vmatprep.mubr.bf16.mxu0 0
        %782 = vmatmul.mubr.bf16.gmra.mrb[0].mxu0 %v748
        %v783 = vpop.f32.mrb[0].mxu0
        %v784 = vadd.f32 0.0, %v783
        %v785 = vpop.f32.mrb[0].mxu0
        %v786 = vpop.f32.mrb[0].mxu0
        %v787 = vpop.f32.mrb[0].mxu0
        %788 = vdwg.mxu0
        %v789 = vmul.f32 %v784, %v784
        %790 = vadd.xlane.f32.xlu0 %v789
        %v791 = vpop.xlane.xlu0 %790
        %v792 = vsub.f32 %v791, %v741
        %v793 = vmul.f32 %v792, -0.0025
        %s794 = scalar_lea.vmem %s255, 40
        %v795 = vld [vmem:[%s794] sm:$0xff]
        %vm796 = vcmp.le.f32.partialorder %v795, %v793
        %v797 = vsel %vm796, 1, 0
        %798 = vset.pattern.permute.xlu0 0
        %799 = vperm.xlu0 %798, %v797
        %v800 = vpop.permute.xlu0 %799
        %vm801 = vcmp.eq.s32.totalorder %v800, 1
        %v802 = vsel %vm801, %v747, %v739
        %v803 = vsel %vm801, %v784, %v740
        %v804 = vsel %vm796, %v791, %v741
        %v805 = vmul.f32 %v803, 0.01
        %v806 = vsub.f32 %v802, %v805
        %s807 = scalar_lea.vmem %s247, 24
        %v808 = vld [vmem:[%s807] sm:$0xf]
        %v809 = vunpack.c.l.bf16 %v808
        %v810 = vadd.f32 %v806, %v809
        %v811 = vpack.c.bf16 %v810, %v810
        %812 = vmatprep.subr.bf16.mxu0 0
        %813 = vmatpush1.bf16.msra.mxu0 %v419
        %814 = vmatprep.subr.bf16.mxu0 0
        %815 = vmatpush1.bf16.msra.mxu0 %v420
        %816 = vmatprep.subr.bf16.mxu0 0
        %817 = vmatpush1.bf16.msra.mxu0 %v421
        %818 = vmatprep.subr.bf16.mxu0 0
        %819 = vmatpush1.bf16.msra.mxu0 %v422
        %820 = vmatprep.subr.bf16.mxu0 0
        %821 = vmatpush1.bf16.msra.mxu0 %v423
        %822 = vmatprep.subr.bf16.mxu0 0
        %823 = vmatpush1.bf16.msra.mxu0 %v424
        %824 = vmatprep.subr.bf16.mxu0 0
        %825 = vmatpush1.bf16.msra.mxu0 %v425
        %826 = vmatprep.subr.bf16.mxu0 0
        %827 = vmatpush1.bf16.msra.mxu0 %v426
        %828 = vmatprep.subr.bf16.mxu0 0
        %829 = vmatpush1.bf16.msra.mxu0 0
        %830 = vmatprep.subr.bf16.mxu0 0
        %831 = vmatpush1.bf16.msra.mxu0 0
        %832 = vmatprep.subr.bf16.mxu0 0
        %833 = vmatpush1.bf16.msra.mxu0 0
        %834 = vmatprep.subr.bf16.mxu0 0
        %835 = vmatpush1.bf16.msra.mxu0 0
        %836 = vmatprep.subr.bf16.mxu0 0
        %837 = vmatpush1.bf16.msra.mxu0 0
        %838 = vmatprep.subr.bf16.mxu0 0
        %839 = vmatpush1.bf16.msra.mxu0 0
        %840 = vmatprep.subr.bf16.mxu0 0
        %841 = vmatpush1.bf16.msra.mxu0 0
        %842 = vmatprep.subr.bf16.mxu0 0
        %843 = vmatpush1.bf16.msra.mxu0 0
        %844 = vmatprep.mubr.bf16.mxu0 0
        %845 = vmatmul.mubr.bf16.gmra.mrb[0].mxu0 %v811
        %v846 = vpop.f32.mrb[0].mxu0
        %v847 = vadd.f32 0.0, %v846
        %v848 = vpop.f32.mrb[0].mxu0
        %v849 = vpop.f32.mrb[0].mxu0
        %v850 = vpop.f32.mrb[0].mxu0
        %851 = vdwg.mxu0
        %v852 = vmul.f32 %v847, %v847
        %853 = vadd.xlane.f32.xlu0 %v852
        %v854 = vpop.xlane.xlu0 %853
        %v855 = vsub.f32 %v854, %v804
        %v856 = vmul.f32 %v855, -0.0025
        %s857 = scalar_lea.vmem %s255, 48
        %v858 = vld [vmem:[%s857] sm:$0xff]
        %vm859 = vcmp.le.f32.partialorder %v858, %v856
        %v860 = vsel %vm859, 1, 0
        %861 = vset.pattern.permute.xlu0 0
        %862 = vperm.xlu0 %861, %v860
        %v863 = vpop.permute.xlu0 %862
        %vm864 = vcmp.eq.s32.totalorder %v863, 1
        %v865 = vsel %vm864, %v810, %v802
        %v866 = vsel %vm864, %v847, %v803
        %v867 = vsel %vm859, %v854, %v804
        %v868 = vmul.f32 %v866, 0.01
        %v869 = vsub.f32 %v865, %v868
        %s870 = scalar_lea.vmem %s247, 28
        %v871 = vld [vmem:[%s870] sm:$0xf]
        %v872 = vunpack.c.l.bf16 %v871
        %v873 = vadd.f32 %v869, %v872
        %v874 = vpack.c.bf16 %v873, %v873
        %875 = vmatprep.subr.bf16.mxu0 0
        %876 = vmatpush1.bf16.msra.mxu0 %v419
        %877 = vmatprep.subr.bf16.mxu0 0
        %878 = vmatpush1.bf16.msra.mxu0 %v420
        %879 = vmatprep.subr.bf16.mxu0 0
        %880 = vmatpush1.bf16.msra.mxu0 %v421
        %881 = vmatprep.subr.bf16.mxu0 0
        %882 = vmatpush1.bf16.msra.mxu0 %v422
        %883 = vmatprep.subr.bf16.mxu0 0
        %884 = vmatpush1.bf16.msra.mxu0 %v423
        %885 = vmatprep.subr.bf16.mxu0 0
        %886 = vmatpush1.bf16.msra.mxu0 %v424
        %887 = vmatprep.subr.bf16.mxu0 0
        %888 = vmatpush1.bf16.msra.mxu0 %v425
        %889 = vmatprep.subr.bf16.mxu0 0
        %890 = vmatpush1.bf16.msra.mxu0 %v426
        %891 = vmatprep.subr.bf16.mxu0 0
        %892 = vmatpush1.bf16.msra.mxu0 0
        %893 = vmatprep.subr.bf16.mxu0 0
        %894 = vmatpush1.bf16.msra.mxu0 0
        %895 = vmatprep.subr.bf16.mxu0 0
        %896 = vmatpush1.bf16.msra.mxu0 0
        %897 = vmatprep.subr.bf16.mxu0 0
        %898 = vmatpush1.bf16.msra.mxu0 0
        %899 = vmatprep.subr.bf16.mxu0 0
        %900 = vmatpush1.bf16.msra.mxu0 0
        %901 = vmatprep.subr.bf16.mxu0 0
        %902 = vmatpush1.bf16.msra.mxu0 0
        %903 = vmatprep.subr.bf16.mxu0 0
        %904 = vmatpush1.bf16.msra.mxu0 0
        %905 = vmatprep.subr.bf16.mxu0 0
        %906 = vmatpush1.bf16.msra.mxu0 0
        %907 = vmatprep.mubr.bf16.mxu0 0
        %908 = vmatmul.mubr.bf16.gmra.mrb[0].mxu0 %v874
        %v909 = vpop.f32.mrb[0].mxu0
        %v910 = vadd.f32 0.0, %v909
        %v911 = vpop.f32.mrb[0].mxu0
        %v912 = vpop.f32.mrb[0].mxu0
        %v913 = vpop.f32.mrb[0].mxu0
        %914 = vdwg.mxu0
        %v915 = vmul.f32 %v910, %v910
        %916 = vadd.xlane.f32.xlu0 %v915
        %v917 = vpop.xlane.xlu0 %916
        %v918 = vsub.f32 %v917, %v867
        %v919 = vmul.f32 %v918, -0.0025
        %s920 = scalar_lea.vmem %s255, 56
        %v921 = vld [vmem:[%s920] sm:$0xff]
        %vm922 = vcmp.le.f32.partialorder %v921, %v919
        %v923 = vsel %vm922, 1, 0
        %924 = vset.pattern.permute.xlu0 0
        %925 = vperm.xlu0 %924, %v923
        %v926 = vpop.permute.xlu0 %925
        %vm927 = vcmp.eq.s32.totalorder %v926, 1
        %v928 = vsel %vm927, %v873, %v865
        %v929 = vsel %vm927, %v910, %v866
        %v930 = vsel %vm922, %v917, %v867
        %v931 = vmul.f32 %v929, 0.01
        %v932 = vsub.f32 %v928, %v931
        %s933 = scalar_lea.vmem %s247, 32
        %v934 = vld [vmem:[%s933] sm:$0xf]
        %v935 = vunpack.c.l.bf16 %v934
        %v936 = vadd.f32 %v932, %v935
        %v937 = vpack.c.bf16 %v936, %v936
        %938 = vmatprep.subr.bf16.mxu0 0
        %939 = vmatpush1.bf16.msra.mxu0 %v419
        %940 = vmatprep.subr.bf16.mxu0 0
        %941 = vmatpush1.bf16.msra.mxu0 %v420
        %942 = vmatprep.subr.bf16.mxu0 0
        %943 = vmatpush1.bf16.msra.mxu0 %v421
        %944 = vmatprep.subr.bf16.mxu0 0
        %945 = vmatpush1.bf16.msra.mxu0 %v422
        %946 = vmatprep.subr.bf16.mxu0 0
        %947 = vmatpush1.bf16.msra.mxu0 %v423
        %948 = vmatprep.subr.bf16.mxu0 0
        %949 = vmatpush1.bf16.msra.mxu0 %v424
        %950 = vmatprep.subr.bf16.mxu0 0
        %951 = vmatpush1.bf16.msra.mxu0 %v425
        %952 = vmatprep.subr.bf16.mxu0 0
        %953 = vmatpush1.bf16.msra.mxu0 %v426
        %954 = vmatprep.subr.bf16.mxu0 0
        %955 = vmatpush1.bf16.msra.mxu0 0
        %956 = vmatprep.subr.bf16.mxu0 0
        %957 = vmatpush1.bf16.msra.mxu0 0
        %958 = vmatprep.subr.bf16.mxu0 0
        %959 = vmatpush1.bf16.msra.mxu0 0
        %960 = vmatprep.subr.bf16.mxu0 0
        %961 = vmatpush1.bf16.msra.mxu0 0
        %962 = vmatprep.subr.bf16.mxu0 0
        %963 = vmatpush1.bf16.msra.mxu0 0
        %964 = vmatprep.subr.bf16.mxu0 0
        %965 = vmatpush1.bf16.msra.mxu0 0
        %966 = vmatprep.subr.bf16.mxu0 0
        %967 = vmatpush1.bf16.msra.mxu0 0
        %968 = vmatprep.subr.bf16.mxu0 0
        %969 = vmatpush1.bf16.msra.mxu0 0
        %970 = vmatprep.mubr.bf16.mxu0 0
        %971 = vmatmul.mubr.bf16.gmra.mrb[0].mxu0 %v937
        %v972 = vpop.f32.mrb[0].mxu0
        %v973 = vadd.f32 0.0, %v972
        %v974 = vpop.f32.mrb[0].mxu0
        %v975 = vpop.f32.mrb[0].mxu0
        %v976 = vpop.f32.mrb[0].mxu0
        %977 = vdwg.mxu0
        %v978 = vmul.f32 %v973, %v973
        %979 = vadd.xlane.f32.xlu0 %v978
        %v980 = vpop.xlane.xlu0 %979
        %v981 = vsub.f32 %v980, %v930
        %v982 = vmul.f32 %v981, -0.0025
        %s983 = scalar_lea.vmem %s255, 64
        %v984 = vld [vmem:[%s983] sm:$0xff]
        %vm985 = vcmp.le.f32.partialorder %v984, %v982
        %v986 = vsel %vm985, 1, 0
        %987 = vset.pattern.permute.xlu0 0
        %988 = vperm.xlu0 %987, %v986
        %v989 = vpop.permute.xlu0 %988
        %vm990 = vcmp.eq.s32.totalorder %v989, 1
        %v991 = vsel %vm990, %v936, %v928
        %v992 = vsel %vm990, %v973, %v929
        %v993 = vsel %vm985, %v980, %v930
        %v994 = vmul.f32 %v992, 0.01
        %v995 = vsub.f32 %v991, %v994
        %s996 = scalar_lea.vmem %s247, 36
        %v997 = vld [vmem:[%s996] sm:$0xf]
        %v998 = vunpack.c.l.bf16 %v997
        %v999 = vadd.f32 %v995, %v998
        %v1000 = vpack.c.bf16 %v999, %v999
        %1001 = vmatprep.subr.bf16.mxu0 0
        %1002 = vmatpush1.bf16.msra.mxu0 %v419
        %1003 = vmatprep.subr.bf16.mxu0 0
        %1004 = vmatpush1.bf16.msra.mxu0 %v420
        %1005 = vmatprep.subr.bf16.mxu0 0
        %1006 = vmatpush1.bf16.msra.mxu0 %v421
        %1007 = vmatprep.subr.bf16.mxu0 0
        %1008 = vmatpush1.bf16.msra.mxu0 %v422
        %1009 = vmatprep.subr.bf16.mxu0 0
        %1010 = vmatpush1.bf16.msra.mxu0 %v423
        %1011 = vmatprep.subr.bf16.mxu0 0
        %1012 = vmatpush1.bf16.msra.mxu0 %v424
        %1013 = vmatprep.subr.bf16.mxu0 0
        %1014 = vmatpush1.bf16.msra.mxu0 %v425
        %1015 = vmatprep.subr.bf16.mxu0 0
        %1016 = vmatpush1.bf16.msra.mxu0 %v426
        %1017 = vmatprep.subr.bf16.mxu0 0
        %1018 = vmatpush1.bf16.msra.mxu0 0
        %1019 = vmatprep.subr.bf16.mxu0 0
        %1020 = vmatpush1.bf16.msra.mxu0 0
        %1021 = vmatprep.subr.bf16.mxu0 0
        %1022 = vmatpush1.bf16.msra.mxu0 0
        %1023 = vmatprep.subr.bf16.mxu0 0
        %1024 = vmatpush1.bf16.msra.mxu0 0
        %1025 = vmatprep.subr.bf16.mxu0 0
        %1026 = vmatpush1.bf16.msra.mxu0 0
        %1027 = vmatprep.subr.bf16.mxu0 0
        %1028 = vmatpush1.bf16.msra.mxu0 0
        %1029 = vmatprep.subr.bf16.mxu0 0
        %1030 = vmatpush1.bf16.msra.mxu0 0
        %1031 = vmatprep.subr.bf16.mxu0 0
        %1032 = vmatpush1.bf16.msra.mxu0 0
        %1033 = vmatprep.mubr.bf16.mxu0 0
        %1034 = vmatmul.mubr.bf16.gmra.mrb[0].mxu0 %v1000
        %v1035 = vpop.f32.mrb[0].mxu0
        %v1036 = vadd.f32 0.0, %v1035
        %v1037 = vpop.f32.mrb[0].mxu0
        %v1038 = vpop.f32.mrb[0].mxu0
        %v1039 = vpop.f32.mrb[0].mxu0
        %1040 = vdwg.mxu0
        %v1041 = vmul.f32 %v1036, %v1036
        %1042 = vadd.xlane.f32.xlu0 %v1041
        %v1043 = vpop.xlane.xlu0 %1042
        %v1044 = vsub.f32 %v1043, %v993
        %v1045 = vmul.f32 %v1044, -0.0025
        %s1046 = scalar_lea.vmem %s255, 72
        %v1047 = vld [vmem:[%s1046] sm:$0xff]
        %vm1048 = vcmp.le.f32.partialorder %v1047, %v1045
        %v1049 = vsel %vm1048, 1, 0
        %1050 = vset.pattern.permute.xlu0 0
        %1051 = vperm.xlu0 %1050, %v1049
        %v1052 = vpop.permute.xlu0 %1051
        %vm1053 = vcmp.eq.s32.totalorder %v1052, 1
        %v1054 = vsel %vm1053, %v999, %v991
        %v1055 = vsel %vm1053, %v1036, %v992
        %v1056 = vsel %vm1048, %v1043, %v993
        %v1057 = vmul.f32 %v1055, 0.01
        %v1058 = vsub.f32 %v1054, %v1057
        %s1059 = scalar_lea.vmem %s247, 40
        %v1060 = vld [vmem:[%s1059] sm:$0xf]
        %v1061 = vunpack.c.l.bf16 %v1060
        %v1062 = vadd.f32 %v1058, %v1061
        %v1063 = vpack.c.bf16 %v1062, %v1062
        %1064 = vmatprep.subr.bf16.mxu0 0
        %1065 = vmatpush1.bf16.msra.mxu0 %v419
        %1066 = vmatprep.subr.bf16.mxu0 0
        %1067 = vmatpush1.bf16.msra.mxu0 %v420
        %1068 = vmatprep.subr.bf16.mxu0 0
        %1069 = vmatpush1.bf16.msra.mxu0 %v421
        %1070 = vmatprep.subr.bf16.mxu0 0
        %1071 = vmatpush1.bf16.msra.mxu0 %v422
        %1072 = vmatprep.subr.bf16.mxu0 0
        %1073 = vmatpush1.bf16.msra.mxu0 %v423
        %1074 = vmatprep.subr.bf16.mxu0 0
        %1075 = vmatpush1.bf16.msra.mxu0 %v424
        %1076 = vmatprep.subr.bf16.mxu0 0
        %1077 = vmatpush1.bf16.msra.mxu0 %v425
        %1078 = vmatprep.subr.bf16.mxu0 0
        %1079 = vmatpush1.bf16.msra.mxu0 %v426
        %1080 = vmatprep.subr.bf16.mxu0 0
        %1081 = vmatpush1.bf16.msra.mxu0 0
        %1082 = vmatprep.subr.bf16.mxu0 0
        %1083 = vmatpush1.bf16.msra.mxu0 0
        %1084 = vmatprep.subr.bf16.mxu0 0
        %1085 = vmatpush1.bf16.msra.mxu0 0
        %1086 = vmatprep.subr.bf16.mxu0 0
        %1087 = vmatpush1.bf16.msra.mxu0 0
        %1088 = vmatprep.subr.bf16.mxu0 0
        %1089 = vmatpush1.bf16.msra.mxu0 0
        %1090 = vmatprep.subr.bf16.mxu0 0
        %1091 = vmatpush1.bf16.msra.mxu0 0
        %1092 = vmatprep.subr.bf16.mxu0 0
        %1093 = vmatpush1.bf16.msra.mxu0 0
        %1094 = vmatprep.subr.bf16.mxu0 0
        %1095 = vmatpush1.bf16.msra.mxu0 0
        %1096 = vmatprep.mubr.bf16.mxu0 0
        %1097 = vmatmul.mubr.bf16.gmra.mrb[0].mxu0 %v1063
        %v1098 = vpop.f32.mrb[0].mxu0
        %v1099 = vadd.f32 0.0, %v1098
        %v1100 = vpop.f32.mrb[0].mxu0
        %v1101 = vpop.f32.mrb[0].mxu0
        %v1102 = vpop.f32.mrb[0].mxu0
        %1103 = vdwg.mxu0
        %v1104 = vmul.f32 %v1099, %v1099
        %1105 = vadd.xlane.f32.xlu0 %v1104
        %v1106 = vpop.xlane.xlu0 %1105
        %v1107 = vsub.f32 %v1106, %v1056
        %v1108 = vmul.f32 %v1107, -0.0025
        %s1109 = scalar_lea.vmem %s255, 80
        %v1110 = vld [vmem:[%s1109] sm:$0xff]
        %vm1111 = vcmp.le.f32.partialorder %v1110, %v1108
        %v1112 = vsel %vm1111, 1, 0
        %1113 = vset.pattern.permute.xlu0 0
        %1114 = vperm.xlu0 %1113, %v1112
        %v1115 = vpop.permute.xlu0 %1114
        %vm1116 = vcmp.eq.s32.totalorder %v1115, 1
        %v1117 = vsel %vm1116, %v1062, %v1054
        %v1118 = vsel %vm1116, %v1099, %v1055
        %v1119 = vsel %vm1111, %v1106, %v1056
        %v1120 = vmul.f32 %v1118, 0.01
        %v1121 = vsub.f32 %v1117, %v1120
        %s1122 = scalar_lea.vmem %s247, 44
        %v1123 = vld [vmem:[%s1122] sm:$0xf]
        %v1124 = vunpack.c.l.bf16 %v1123
        %v1125 = vadd.f32 %v1121, %v1124
        %v1126 = vpack.c.bf16 %v1125, %v1125
        %1127 = vmatprep.subr.bf16.mxu0 0
        %1128 = vmatpush1.bf16.msra.mxu0 %v419
        %1129 = vmatprep.subr.bf16.mxu0 0
        %1130 = vmatpush1.bf16.msra.mxu0 %v420
        %1131 = vmatprep.subr.bf16.mxu0 0
        %1132 = vmatpush1.bf16.msra.mxu0 %v421
        %1133 = vmatprep.subr.bf16.mxu0 0
        %1134 = vmatpush1.bf16.msra.mxu0 %v422
        %1135 = vmatprep.subr.bf16.mxu0 0
        %1136 = vmatpush1.bf16.msra.mxu0 %v423
        %1137 = vmatprep.subr.bf16.mxu0 0
        %1138 = vmatpush1.bf16.msra.mxu0 %v424
        %1139 = vmatprep.subr.bf16.mxu0 0
        %1140 = vmatpush1.bf16.msra.mxu0 %v425
        %1141 = vmatprep.subr.bf16.mxu0 0
        %1142 = vmatpush1.bf16.msra.mxu0 %v426
        %1143 = vmatprep.subr.bf16.mxu0 0
        %1144 = vmatpush1.bf16.msra.mxu0 0
        %1145 = vmatprep.subr.bf16.mxu0 0
        %1146 = vmatpush1.bf16.msra.mxu0 0
        %1147 = vmatprep.subr.bf16.mxu0 0
        %1148 = vmatpush1.bf16.msra.mxu0 0
        %1149 = vmatprep.subr.bf16.mxu0 0
        %1150 = vmatpush1.bf16.msra.mxu0 0
        %1151 = vmatprep.subr.bf16.mxu0 0
        %1152 = vmatpush1.bf16.msra.mxu0 0
        %1153 = vmatprep.subr.bf16.mxu0 0
        %1154 = vmatpush1.bf16.msra.mxu0 0
        %1155 = vmatprep.subr.bf16.mxu0 0
        %1156 = vmatpush1.bf16.msra.mxu0 0
        %1157 = vmatprep.subr.bf16.mxu0 0
        %1158 = vmatpush1.bf16.msra.mxu0 0
        %1159 = vmatprep.mubr.bf16.mxu0 0
        %1160 = vmatmul.mubr.bf16.gmra.mrb[0].mxu0 %v1126
        %v1161 = vpop.f32.mrb[0].mxu0
        %v1162 = vadd.f32 0.0, %v1161
        %v1163 = vpop.f32.mrb[0].mxu0
        %v1164 = vpop.f32.mrb[0].mxu0
        %v1165 = vpop.f32.mrb[0].mxu0
        %1166 = vdwg.mxu0
        %v1167 = vmul.f32 %v1162, %v1162
        %1168 = vadd.xlane.f32.xlu0 %v1167
        %v1169 = vpop.xlane.xlu0 %1168
        %v1170 = vsub.f32 %v1169, %v1119
        %v1171 = vmul.f32 %v1170, -0.0025
        %s1172 = scalar_lea.vmem %s255, 88
        %v1173 = vld [vmem:[%s1172] sm:$0xff]
        %vm1174 = vcmp.le.f32.partialorder %v1173, %v1171
        %v1175 = vsel %vm1174, 1, 0
        %1176 = vset.pattern.permute.xlu0 0
        %1177 = vperm.xlu0 %1176, %v1175
        %v1178 = vpop.permute.xlu0 %1177
        %vm1179 = vcmp.eq.s32.totalorder %v1178, 1
        %v1180 = vsel %vm1179, %v1125, %v1117
        %v1181 = vsel %vm1179, %v1162, %v1118
        %v1182 = vsel %vm1174, %v1169, %v1119
        %v1183 = vmul.f32 %v1181, 0.01
        %v1184 = vsub.f32 %v1180, %v1183
        %s1185 = scalar_lea.vmem %s247, 48
        %v1186 = vld [vmem:[%s1185] sm:$0xf]
        %v1187 = vunpack.c.l.bf16 %v1186
        %v1188 = vadd.f32 %v1184, %v1187
        %v1189 = vpack.c.bf16 %v1188, %v1188
        %1190 = vmatprep.subr.bf16.mxu0 0
        %1191 = vmatpush1.bf16.msra.mxu0 %v419
        %1192 = vmatprep.subr.bf16.mxu0 0
        %1193 = vmatpush1.bf16.msra.mxu0 %v420
        %1194 = vmatprep.subr.bf16.mxu0 0
        %1195 = vmatpush1.bf16.msra.mxu0 %v421
        %1196 = vmatprep.subr.bf16.mxu0 0
        %1197 = vmatpush1.bf16.msra.mxu0 %v422
        %1198 = vmatprep.subr.bf16.mxu0 0
        %1199 = vmatpush1.bf16.msra.mxu0 %v423
        %1200 = vmatprep.subr.bf16.mxu0 0
        %1201 = vmatpush1.bf16.msra.mxu0 %v424
        %1202 = vmatprep.subr.bf16.mxu0 0
        %1203 = vmatpush1.bf16.msra.mxu0 %v425
        %1204 = vmatprep.subr.bf16.mxu0 0
        %1205 = vmatpush1.bf16.msra.mxu0 %v426
        %1206 = vmatprep.subr.bf16.mxu0 0
        %1207 = vmatpush1.bf16.msra.mxu0 0
        %1208 = vmatprep.subr.bf16.mxu0 0
        %1209 = vmatpush1.bf16.msra.mxu0 0
        %1210 = vmatprep.subr.bf16.mxu0 0
        %1211 = vmatpush1.bf16.msra.mxu0 0
        %1212 = vmatprep.subr.bf16.mxu0 0
        %1213 = vmatpush1.bf16.msra.mxu0 0
        %1214 = vmatprep.subr.bf16.mxu0 0
        %1215 = vmatpush1.bf16.msra.mxu0 0
        %1216 = vmatprep.subr.bf16.mxu0 0
        %1217 = vmatpush1.bf16.msra.mxu0 0
        %1218 = vmatprep.subr.bf16.mxu0 0
        %1219 = vmatpush1.bf16.msra.mxu0 0
        %1220 = vmatprep.subr.bf16.mxu0 0
        %1221 = vmatpush1.bf16.msra.mxu0 0
        %1222 = vmatprep.mubr.bf16.mxu0 0
        %1223 = vmatmul.mubr.bf16.gmra.mrb[0].mxu0 %v1189
        %v1224 = vpop.f32.mrb[0].mxu0
        %v1225 = vadd.f32 0.0, %v1224
        %v1226 = vpop.f32.mrb[0].mxu0
        %v1227 = vpop.f32.mrb[0].mxu0
        %v1228 = vpop.f32.mrb[0].mxu0
        %1229 = vdwg.mxu0
        %v1230 = vmul.f32 %v1225, %v1225
        %1231 = vadd.xlane.f32.xlu0 %v1230
        %v1232 = vpop.xlane.xlu0 %1231
        %v1233 = vsub.f32 %v1232, %v1182
        %v1234 = vmul.f32 %v1233, -0.0025
        %s1235 = scalar_lea.vmem %s255, 96
        %v1236 = vld [vmem:[%s1235] sm:$0xff]
        %vm1237 = vcmp.le.f32.partialorder %v1236, %v1234
        %v1238 = vsel %vm1237, 1, 0
        %1239 = vset.pattern.permute.xlu0 0
        %1240 = vperm.xlu0 %1239, %v1238
        %v1241 = vpop.permute.xlu0 %1240
        %vm1242 = vcmp.eq.s32.totalorder %v1241, 1
        %v1243 = vsel %vm1242, %v1188, %v1180
        %v1244 = vsel %vm1242, %v1225, %v1181
        %v1245 = vsel %vm1237, %v1232, %v1182
        %v1246 = vmul.f32 %v1244, 0.01
        %v1247 = vsub.f32 %v1243, %v1246
        %s1248 = scalar_lea.vmem %s247, 52
        %v1249 = vld [vmem:[%s1248] sm:$0xf]
        %v1250 = vunpack.c.l.bf16 %v1249
        %v1251 = vadd.f32 %v1247, %v1250
        %v1252 = vpack.c.bf16 %v1251, %v1251
        %1253 = vmatprep.subr.bf16.mxu0 0
        %1254 = vmatpush1.bf16.msra.mxu0 %v419
        %1255 = vmatprep.subr.bf16.mxu0 0
        %1256 = vmatpush1.bf16.msra.mxu0 %v420
        %1257 = vmatprep.subr.bf16.mxu0 0
        %1258 = vmatpush1.bf16.msra.mxu0 %v421
        %1259 = vmatprep.subr.bf16.mxu0 0
        %1260 = vmatpush1.bf16.msra.mxu0 %v422
        %1261 = vmatprep.subr.bf16.mxu0 0
        %1262 = vmatpush1.bf16.msra.mxu0 %v423
        %1263 = vmatprep.subr.bf16.mxu0 0
        %1264 = vmatpush1.bf16.msra.mxu0 %v424
        %1265 = vmatprep.subr.bf16.mxu0 0
        %1266 = vmatpush1.bf16.msra.mxu0 %v425
        %1267 = vmatprep.subr.bf16.mxu0 0
        %1268 = vmatpush1.bf16.msra.mxu0 %v426
        %1269 = vmatprep.subr.bf16.mxu0 0
        %1270 = vmatpush1.bf16.msra.mxu0 0
        %1271 = vmatprep.subr.bf16.mxu0 0
        %1272 = vmatpush1.bf16.msra.mxu0 0
        %1273 = vmatprep.subr.bf16.mxu0 0
        %1274 = vmatpush1.bf16.msra.mxu0 0
        %1275 = vmatprep.subr.bf16.mxu0 0
        %1276 = vmatpush1.bf16.msra.mxu0 0
        %1277 = vmatprep.subr.bf16.mxu0 0
        %1278 = vmatpush1.bf16.msra.mxu0 0
        %1279 = vmatprep.subr.bf16.mxu0 0
        %1280 = vmatpush1.bf16.msra.mxu0 0
        %1281 = vmatprep.subr.bf16.mxu0 0
        %1282 = vmatpush1.bf16.msra.mxu0 0
        %1283 = vmatprep.subr.bf16.mxu0 0
        %1284 = vmatpush1.bf16.msra.mxu0 0
        %1285 = vmatprep.mubr.bf16.mxu0 0
        %1286 = vmatmul.mubr.bf16.gmra.mrb[0].mxu0 %v1252
        %v1287 = vpop.f32.mrb[0].mxu0
        %v1288 = vadd.f32 0.0, %v1287
        %v1289 = vpop.f32.mrb[0].mxu0
        %v1290 = vpop.f32.mrb[0].mxu0
        %v1291 = vpop.f32.mrb[0].mxu0
        %1292 = vdwg.mxu0
        %v1293 = vmul.f32 %v1288, %v1288
        %1294 = vadd.xlane.f32.xlu0 %v1293
        %v1295 = vpop.xlane.xlu0 %1294
        %v1296 = vsub.f32 %v1295, %v1245
        %v1297 = vmul.f32 %v1296, -0.0025
        %s1298 = scalar_lea.vmem %s255, 104
        %v1299 = vld [vmem:[%s1298] sm:$0xff]
        %vm1300 = vcmp.le.f32.partialorder %v1299, %v1297
        %v1301 = vsel %vm1300, 1, 0
        %1302 = vset.pattern.permute.xlu0 0
        %1303 = vperm.xlu0 %1302, %v1301
        %v1304 = vpop.permute.xlu0 %1303
        %vm1305 = vcmp.eq.s32.totalorder %v1304, 1
        %v1306 = vsel %vm1305, %v1251, %v1243
        %v1307 = vsel %vm1305, %v1288, %v1244
        %v1308 = vsel %vm1300, %v1295, %v1245
        %v1309 = vmul.f32 %v1307, 0.01
        %v1310 = vsub.f32 %v1306, %v1309
        %s1311 = scalar_lea.vmem %s247, 56
        %v1312 = vld [vmem:[%s1311] sm:$0xf]
        %v1313 = vunpack.c.l.bf16 %v1312
        %v1314 = vadd.f32 %v1310, %v1313
        %v1315 = vpack.c.bf16 %v1314, %v1314
        %1316 = vmatprep.subr.bf16.mxu0 0
        %1317 = vmatpush1.bf16.msra.mxu0 %v419
        %1318 = vmatprep.subr.bf16.mxu0 0
        %1319 = vmatpush1.bf16.msra.mxu0 %v420
        %1320 = vmatprep.subr.bf16.mxu0 0
        %1321 = vmatpush1.bf16.msra.mxu0 %v421
        %1322 = vmatprep.subr.bf16.mxu0 0
        %1323 = vmatpush1.bf16.msra.mxu0 %v422
        %1324 = vmatprep.subr.bf16.mxu0 0
        %1325 = vmatpush1.bf16.msra.mxu0 %v423
        %1326 = vmatprep.subr.bf16.mxu0 0
        %1327 = vmatpush1.bf16.msra.mxu0 %v424
        %1328 = vmatprep.subr.bf16.mxu0 0
        %1329 = vmatpush1.bf16.msra.mxu0 %v425
        %1330 = vmatprep.subr.bf16.mxu0 0
        %1331 = vmatpush1.bf16.msra.mxu0 %v426
        %1332 = vmatprep.subr.bf16.mxu0 0
        %1333 = vmatpush1.bf16.msra.mxu0 0
        %1334 = vmatprep.subr.bf16.mxu0 0
        %1335 = vmatpush1.bf16.msra.mxu0 0
        %1336 = vmatprep.subr.bf16.mxu0 0
        %1337 = vmatpush1.bf16.msra.mxu0 0
        %1338 = vmatprep.subr.bf16.mxu0 0
        %1339 = vmatpush1.bf16.msra.mxu0 0
        %1340 = vmatprep.subr.bf16.mxu0 0
        %1341 = vmatpush1.bf16.msra.mxu0 0
        %1342 = vmatprep.subr.bf16.mxu0 0
        %1343 = vmatpush1.bf16.msra.mxu0 0
        %1344 = vmatprep.subr.bf16.mxu0 0
        %1345 = vmatpush1.bf16.msra.mxu0 0
        %1346 = vmatprep.subr.bf16.mxu0 0
        %1347 = vmatpush1.bf16.msra.mxu0 0
        %1348 = vmatprep.mubr.bf16.mxu0 0
        %1349 = vmatmul.mubr.bf16.gmra.mrb[0].mxu0 %v1315
        %v1350 = vpop.f32.mrb[0].mxu0
        %v1351 = vadd.f32 0.0, %v1350
        %v1352 = vpop.f32.mrb[0].mxu0
        %v1353 = vpop.f32.mrb[0].mxu0
        %v1354 = vpop.f32.mrb[0].mxu0
        %1355 = vdwg.mxu0
        %v1356 = vmul.f32 %v1351, %v1351
        %1357 = vadd.xlane.f32.xlu0 %v1356
        %v1358 = vpop.xlane.xlu0 %1357
        %v1359 = vsub.f32 %v1358, %v1308
        %v1360 = vmul.f32 %v1359, -0.0025
        %s1361 = scalar_lea.vmem %s255, 112
        %v1362 = vld [vmem:[%s1361] sm:$0xff]
        %vm1363 = vcmp.le.f32.partialorder %v1362, %v1360
        %v1364 = vsel %vm1363, 1, 0
        %1365 = vset.pattern.permute.xlu0 0
        %1366 = vperm.xlu0 %1365, %v1364
        %v1367 = vpop.permute.xlu0 %1366
        %vm1368 = vcmp.eq.s32.totalorder %v1367, 1
        %v1369 = vsel %vm1368, %v1314, %v1306
        %v1370 = vsel %vm1368, %v1351, %v1307
        %v1371 = vsel %vm1363, %v1358, %v1308
        %v1372 = vmul.f32 %v1370, 0.01
        %v1373 = vsub.f32 %v1369, %v1372
        %s1374 = scalar_lea.vmem %s247, 60
        %v1375 = vld [vmem:[%s1374] sm:$0xf]
        %v1376 = vunpack.c.l.bf16 %v1375
        %v1377 = vadd.f32 %v1373, %v1376
        %v1378 = vpack.c.bf16 %v1377, %v1377
        %1379 = vmatprep.subr.bf16.mxu0 0
        %1380 = vmatpush1.bf16.msra.mxu0 %v419
        %1381 = vmatprep.subr.bf16.mxu0 0
        %1382 = vmatpush1.bf16.msra.mxu0 %v420
        %1383 = vmatprep.subr.bf16.mxu0 0
        %1384 = vmatpush1.bf16.msra.mxu0 %v421
        %1385 = vmatprep.subr.bf16.mxu0 0
        %1386 = vmatpush1.bf16.msra.mxu0 %v422
        %1387 = vmatprep.subr.bf16.mxu0 0
        %1388 = vmatpush1.bf16.msra.mxu0 %v423
        %1389 = vmatprep.subr.bf16.mxu0 0
        %1390 = vmatpush1.bf16.msra.mxu0 %v424
        %1391 = vmatprep.subr.bf16.mxu0 0
        %1392 = vmatpush1.bf16.msra.mxu0 %v425
        %1393 = vmatprep.subr.bf16.mxu0 0
        %1394 = vmatpush1.bf16.msra.mxu0 %v426
        %1395 = vmatprep.subr.bf16.mxu0 0
        %1396 = vmatpush1.bf16.msra.mxu0 0
        %1397 = vmatprep.subr.bf16.mxu0 0
        %1398 = vmatpush1.bf16.msra.mxu0 0
        %1399 = vmatprep.subr.bf16.mxu0 0
        %1400 = vmatpush1.bf16.msra.mxu0 0
        %1401 = vmatprep.subr.bf16.mxu0 0
        %1402 = vmatpush1.bf16.msra.mxu0 0
        %1403 = vmatprep.subr.bf16.mxu0 0
        %1404 = vmatpush1.bf16.msra.mxu0 0
        %1405 = vmatprep.subr.bf16.mxu0 0
        %1406 = vmatpush1.bf16.msra.mxu0 0
        %1407 = vmatprep.subr.bf16.mxu0 0
        %1408 = vmatpush1.bf16.msra.mxu0 0
        %1409 = vmatprep.subr.bf16.mxu0 0
        %1410 = vmatpush1.bf16.msra.mxu0 0
        %1411 = vmatprep.mubr.bf16.mxu0 0
        %1412 = vmatmul.mubr.bf16.gmra.mrb[0].mxu0 %v1378
        %v1413 = vpop.f32.mrb[0].mxu0
        %v1414 = vadd.f32 0.0, %v1413
        %v1415 = vpop.f32.mrb[0].mxu0
        %v1416 = vpop.f32.mrb[0].mxu0
        %v1417 = vpop.f32.mrb[0].mxu0
        %1418 = vdwg.mxu0
        %v1419 = vmul.f32 %v1414, %v1414
        %1420 = vadd.xlane.f32.xlu0 %v1419
        %v1421 = vpop.xlane.xlu0 %1420
        %v1422 = vsub.f32 %v1421, %v1371
        %v1423 = vmul.f32 %v1422, -0.0025
        %s1424 = scalar_lea.vmem %s255, 120
        %v1425 = vld [vmem:[%s1424] sm:$0xff]
        %vm1426 = vcmp.le.f32.partialorder %v1425, %v1423
        %v1427 = vsel %vm1426, 1, 0
        %1428 = vset.pattern.permute.xlu0 0
        %1429 = vperm.xlu0 %1428, %v1427
        %v1430 = vpop.permute.xlu0 %1429
        %vm1431 = vcmp.eq.s32.totalorder %v1430, 1
        %v1432 = vsel %vm1431, %v1377, %v1369
        %v1433 = vsel %vm1431, %v1414, %v1370
        %v1434 = vsel %vm1426, %v1421, %v1371
        %v1435 = vmul.f32 %v1433, 0.01
        %v1436 = vsub.f32 %v1432, %v1435
        %s1437 = scalar_lea.vmem %s247, 64
        %v1438 = vld [vmem:[%s1437] sm:$0xf]
        %v1439 = vunpack.c.l.bf16 %v1438
        %v1440 = vadd.f32 %v1436, %v1439
        %v1441 = vpack.c.bf16 %v1440, %v1440
        %1442 = vmatprep.subr.bf16.mxu0 0
        %1443 = vmatpush1.bf16.msra.mxu0 %v419
        %1444 = vmatprep.subr.bf16.mxu0 0
        %1445 = vmatpush1.bf16.msra.mxu0 %v420
        %1446 = vmatprep.subr.bf16.mxu0 0
        %1447 = vmatpush1.bf16.msra.mxu0 %v421
        %1448 = vmatprep.subr.bf16.mxu0 0
        %1449 = vmatpush1.bf16.msra.mxu0 %v422
        %1450 = vmatprep.subr.bf16.mxu0 0
        %1451 = vmatpush1.bf16.msra.mxu0 %v423
        %1452 = vmatprep.subr.bf16.mxu0 0
        %1453 = vmatpush1.bf16.msra.mxu0 %v424
        %1454 = vmatprep.subr.bf16.mxu0 0
        %1455 = vmatpush1.bf16.msra.mxu0 %v425
        %1456 = vmatprep.subr.bf16.mxu0 0
        %1457 = vmatpush1.bf16.msra.mxu0 %v426
        %1458 = vmatprep.subr.bf16.mxu0 0
        %1459 = vmatpush1.bf16.msra.mxu0 0
        %1460 = vmatprep.subr.bf16.mxu0 0
        %1461 = vmatpush1.bf16.msra.mxu0 0
        %1462 = vmatprep.subr.bf16.mxu0 0
        %1463 = vmatpush1.bf16.msra.mxu0 0
        %1464 = vmatprep.subr.bf16.mxu0 0
        %1465 = vmatpush1.bf16.msra.mxu0 0
        %1466 = vmatprep.subr.bf16.mxu0 0
        %1467 = vmatpush1.bf16.msra.mxu0 0
        %1468 = vmatprep.subr.bf16.mxu0 0
        %1469 = vmatpush1.bf16.msra.mxu0 0
        %1470 = vmatprep.subr.bf16.mxu0 0
        %1471 = vmatpush1.bf16.msra.mxu0 0
        %1472 = vmatprep.subr.bf16.mxu0 0
        %1473 = vmatpush1.bf16.msra.mxu0 0
        %1474 = vmatprep.mubr.bf16.mxu0 0
        %1475 = vmatmul.mubr.bf16.gmra.mrb[0].mxu0 %v1441
        %v1476 = vpop.f32.mrb[0].mxu0
        %v1477 = vadd.f32 0.0, %v1476
        %v1478 = vpop.f32.mrb[0].mxu0
        %v1479 = vpop.f32.mrb[0].mxu0
        %v1480 = vpop.f32.mrb[0].mxu0
        %1481 = vdwg.mxu0
        %v1482 = vmul.f32 %v1477, %v1477
        %1483 = vadd.xlane.f32.xlu0 %v1482
        %v1484 = vpop.xlane.xlu0 %1483
        %v1485 = vsub.f32 %v1484, %v1434
        %v1486 = vmul.f32 %v1485, -0.0025
        %s1487 = scalar_lea.vmem %s255, 128
        %v1488 = vld [vmem:[%s1487] sm:$0xff]
        %vm1489 = vcmp.le.f32.partialorder %v1488, %v1486
        %v1490 = vsel %vm1489, 1, 0
        %1491 = vset.pattern.permute.xlu0 0
        %1492 = vperm.xlu0 %1491, %v1490
        %v1493 = vpop.permute.xlu0 %1492
        %vm1494 = vcmp.eq.s32.totalorder %v1493, 1
        %v1495 = vsel %vm1494, %v1440, %v1432
        %v1496 = vsel %vm1494, %v1477, %v1433
        %v1497 = vsel %vm1489, %v1484, %v1434
        %v1498 = vmul.f32 %v1496, 0.01
        %v1499 = vsub.f32 %v1495, %v1498
        %s1500 = scalar_lea.vmem %s247, 68
        %v1501 = vld [vmem:[%s1500] sm:$0xf]
        %v1502 = vunpack.c.l.bf16 %v1501
        %v1503 = vadd.f32 %v1499, %v1502
        %v1504 = vpack.c.bf16 %v1503, %v1503
        %1505 = vmatprep.subr.bf16.mxu0 0
        %1506 = vmatpush1.bf16.msra.mxu0 %v419
        %1507 = vmatprep.subr.bf16.mxu0 0
        %1508 = vmatpush1.bf16.msra.mxu0 %v420
        %1509 = vmatprep.subr.bf16.mxu0 0
        %1510 = vmatpush1.bf16.msra.mxu0 %v421
        %1511 = vmatprep.subr.bf16.mxu0 0
        %1512 = vmatpush1.bf16.msra.mxu0 %v422
        %1513 = vmatprep.subr.bf16.mxu0 0
        %1514 = vmatpush1.bf16.msra.mxu0 %v423
        %1515 = vmatprep.subr.bf16.mxu0 0
        %1516 = vmatpush1.bf16.msra.mxu0 %v424
        %1517 = vmatprep.subr.bf16.mxu0 0
        %1518 = vmatpush1.bf16.msra.mxu0 %v425
        %1519 = vmatprep.subr.bf16.mxu0 0
        %1520 = vmatpush1.bf16.msra.mxu0 %v426
        %1521 = vmatprep.subr.bf16.mxu0 0
        %1522 = vmatpush1.bf16.msra.mxu0 0
        %1523 = vmatprep.subr.bf16.mxu0 0
        %1524 = vmatpush1.bf16.msra.mxu0 0
        %1525 = vmatprep.subr.bf16.mxu0 0
        %1526 = vmatpush1.bf16.msra.mxu0 0
        %1527 = vmatprep.subr.bf16.mxu0 0
        %1528 = vmatpush1.bf16.msra.mxu0 0
        %1529 = vmatprep.subr.bf16.mxu0 0
        %1530 = vmatpush1.bf16.msra.mxu0 0
        %1531 = vmatprep.subr.bf16.mxu0 0
        %1532 = vmatpush1.bf16.msra.mxu0 0
        %1533 = vmatprep.subr.bf16.mxu0 0
        %1534 = vmatpush1.bf16.msra.mxu0 0
        %1535 = vmatprep.subr.bf16.mxu0 0
        %1536 = vmatpush1.bf16.msra.mxu0 0
        %1537 = vmatprep.mubr.bf16.mxu0 0
        %1538 = vmatmul.mubr.bf16.gmra.mrb[0].mxu0 %v1504
        %v1539 = vpop.f32.mrb[0].mxu0
        %v1540 = vadd.f32 0.0, %v1539
        %v1541 = vpop.f32.mrb[0].mxu0
        %v1542 = vpop.f32.mrb[0].mxu0
        %v1543 = vpop.f32.mrb[0].mxu0
        %1544 = vdwg.mxu0
        %v1545 = vmul.f32 %v1540, %v1540
        %1546 = vadd.xlane.f32.xlu0 %v1545
        %v1547 = vpop.xlane.xlu0 %1546
        %v1548 = vsub.f32 %v1547, %v1497
        %v1549 = vmul.f32 %v1548, -0.0025
        %s1550 = scalar_lea.vmem %s255, 136
        %v1551 = vld [vmem:[%s1550] sm:$0xff]
        %vm1552 = vcmp.le.f32.partialorder %v1551, %v1549
        %v1553 = vsel %vm1552, 1, 0
        %1554 = vset.pattern.permute.xlu0 0
        %1555 = vperm.xlu0 %1554, %v1553
        %v1556 = vpop.permute.xlu0 %1555
        %vm1557 = vcmp.eq.s32.totalorder %v1556, 1
        %v1558 = vsel %vm1557, %v1503, %v1495
        %v1559 = vsel %vm1557, %v1540, %v1496
        %v1560 = vsel %vm1552, %v1547, %v1497
        %v1561 = vmul.f32 %v1559, 0.01
        %v1562 = vsub.f32 %v1558, %v1561
        %s1563 = scalar_lea.vmem %s247, 72
        %v1564 = vld [vmem:[%s1563] sm:$0xf]
        %v1565 = vunpack.c.l.bf16 %v1564
        %v1566 = vadd.f32 %v1562, %v1565
        %v1567 = vpack.c.bf16 %v1566, %v1566
        %1568 = vmatprep.subr.bf16.mxu0 0
        %1569 = vmatpush1.bf16.msra.mxu0 %v419
        %1570 = vmatprep.subr.bf16.mxu0 0
        %1571 = vmatpush1.bf16.msra.mxu0 %v420
        %1572 = vmatprep.subr.bf16.mxu0 0
        %1573 = vmatpush1.bf16.msra.mxu0 %v421
        %1574 = vmatprep.subr.bf16.mxu0 0
        %1575 = vmatpush1.bf16.msra.mxu0 %v422
        %1576 = vmatprep.subr.bf16.mxu0 0
        %1577 = vmatpush1.bf16.msra.mxu0 %v423
        %1578 = vmatprep.subr.bf16.mxu0 0
        %1579 = vmatpush1.bf16.msra.mxu0 %v424
        %1580 = vmatprep.subr.bf16.mxu0 0
        %1581 = vmatpush1.bf16.msra.mxu0 %v425
        %1582 = vmatprep.subr.bf16.mxu0 0
        %1583 = vmatpush1.bf16.msra.mxu0 %v426
        %1584 = vmatprep.subr.bf16.mxu0 0
        %1585 = vmatpush1.bf16.msra.mxu0 0
        %1586 = vmatprep.subr.bf16.mxu0 0
        %1587 = vmatpush1.bf16.msra.mxu0 0
        %1588 = vmatprep.subr.bf16.mxu0 0
        %1589 = vmatpush1.bf16.msra.mxu0 0
        %1590 = vmatprep.subr.bf16.mxu0 0
        %1591 = vmatpush1.bf16.msra.mxu0 0
        %1592 = vmatprep.subr.bf16.mxu0 0
        %1593 = vmatpush1.bf16.msra.mxu0 0
        %1594 = vmatprep.subr.bf16.mxu0 0
        %1595 = vmatpush1.bf16.msra.mxu0 0
        %1596 = vmatprep.subr.bf16.mxu0 0
        %1597 = vmatpush1.bf16.msra.mxu0 0
        %1598 = vmatprep.subr.bf16.mxu0 0
        %1599 = vmatpush1.bf16.msra.mxu0 0
        %1600 = vmatprep.mubr.bf16.mxu0 0
        %1601 = vmatmul.mubr.bf16.gmra.mrb[0].mxu0 %v1567
        %v1602 = vpop.f32.mrb[0].mxu0
        %v1603 = vadd.f32 0.0, %v1602
        %v1604 = vpop.f32.mrb[0].mxu0
        %v1605 = vpop.f32.mrb[0].mxu0
        %v1606 = vpop.f32.mrb[0].mxu0
        %1607 = vdwg.mxu0
        %v1608 = vmul.f32 %v1603, %v1603
        %1609 = vadd.xlane.f32.xlu0 %v1608
        %v1610 = vpop.xlane.xlu0 %1609
        %v1611 = vsub.f32 %v1610, %v1560
        %v1612 = vmul.f32 %v1611, -0.0025
        %s1613 = scalar_lea.vmem %s255, 144
        %v1614 = vld [vmem:[%s1613] sm:$0xff]
        %vm1615 = vcmp.le.f32.partialorder %v1614, %v1612
        %v1616 = vsel %vm1615, 1, 0
        %1617 = vset.pattern.permute.xlu0 0
        %1618 = vperm.xlu0 %1617, %v1616
        %v1619 = vpop.permute.xlu0 %1618
        %vm1620 = vcmp.eq.s32.totalorder %v1619, 1
        %v1621 = vsel %vm1620, %v1566, %v1558
        %v1622 = vsel %vm1620, %v1603, %v1559
        %v1623 = vsel %vm1615, %v1610, %v1560
        %v1624 = vmul.f32 %v1622, 0.01
        %v1625 = vsub.f32 %v1621, %v1624
        %s1626 = scalar_lea.vmem %s247, 76
        %v1627 = vld [vmem:[%s1626] sm:$0xf]
        %v1628 = vunpack.c.l.bf16 %v1627
        %v1629 = vadd.f32 %v1625, %v1628
        %v1630 = vpack.c.bf16 %v1629, %v1629
        %1631 = vmatprep.subr.bf16.mxu0 0
        %1632 = vmatpush1.bf16.msra.mxu0 %v419
        %1633 = vmatprep.subr.bf16.mxu0 0
        %1634 = vmatpush1.bf16.msra.mxu0 %v420
        %1635 = vmatprep.subr.bf16.mxu0 0
        %1636 = vmatpush1.bf16.msra.mxu0 %v421
        %1637 = vmatprep.subr.bf16.mxu0 0
        %1638 = vmatpush1.bf16.msra.mxu0 %v422
        %1639 = vmatprep.subr.bf16.mxu0 0
        %1640 = vmatpush1.bf16.msra.mxu0 %v423
        %1641 = vmatprep.subr.bf16.mxu0 0
        %1642 = vmatpush1.bf16.msra.mxu0 %v424
        %1643 = vmatprep.subr.bf16.mxu0 0
        %1644 = vmatpush1.bf16.msra.mxu0 %v425
        %1645 = vmatprep.subr.bf16.mxu0 0
        %1646 = vmatpush1.bf16.msra.mxu0 %v426
        %1647 = vmatprep.subr.bf16.mxu0 0
        %1648 = vmatpush1.bf16.msra.mxu0 0
        %1649 = vmatprep.subr.bf16.mxu0 0
        %1650 = vmatpush1.bf16.msra.mxu0 0
        %1651 = vmatprep.subr.bf16.mxu0 0
        %1652 = vmatpush1.bf16.msra.mxu0 0
        %1653 = vmatprep.subr.bf16.mxu0 0
        %1654 = vmatpush1.bf16.msra.mxu0 0
        %1655 = vmatprep.subr.bf16.mxu0 0
        %1656 = vmatpush1.bf16.msra.mxu0 0
        %1657 = vmatprep.subr.bf16.mxu0 0
        %1658 = vmatpush1.bf16.msra.mxu0 0
        %1659 = vmatprep.subr.bf16.mxu0 0
        %1660 = vmatpush1.bf16.msra.mxu0 0
        %1661 = vmatprep.subr.bf16.mxu0 0
        %1662 = vmatpush1.bf16.msra.mxu0 0
        %1663 = vmatprep.mubr.bf16.mxu0 0
        %1664 = vmatmul.mubr.bf16.gmra.mrb[0].mxu0 %v1630
        %v1665 = vpop.f32.mrb[0].mxu0
        %v1666 = vadd.f32 0.0, %v1665
        %v1667 = vpop.f32.mrb[0].mxu0
        %v1668 = vpop.f32.mrb[0].mxu0
        %v1669 = vpop.f32.mrb[0].mxu0
        %1670 = vdwg.mxu0
        %v1671 = vmul.f32 %v1666, %v1666
        %1672 = vadd.xlane.f32.xlu0 %v1671
        %v1673 = vpop.xlane.xlu0 %1672
        %v1674 = vsub.f32 %v1673, %v1623
        %v1675 = vmul.f32 %v1674, -0.0025
        %s1676 = scalar_lea.vmem %s255, 152
        %v1677 = vld [vmem:[%s1676] sm:$0xff]
        %vm1678 = vcmp.le.f32.partialorder %v1677, %v1675
        %v1679 = vsel %vm1678, 1, 0
        %1680 = vset.pattern.permute.xlu0 0
        %1681 = vperm.xlu0 %1680, %v1679
        %v1682 = vpop.permute.xlu0 %1681
        %vm1683 = vcmp.eq.s32.totalorder %v1682, 1
        %v1684 = vsel %vm1683, %v1629, %v1621
        %v1685 = vsel %vm1683, %v1666, %v1622
        %v1686 = vsel %vm1678, %v1673, %v1623
        %v1687 = vmul.f32 %v1685, 0.01
        %v1688 = vsub.f32 %v1684, %v1687
        %s1689 = scalar_lea.vmem %s247, 80
        %v1690 = vld [vmem:[%s1689] sm:$0xf]
        %v1691 = vunpack.c.l.bf16 %v1690
        %v1692 = vadd.f32 %v1688, %v1691
        %v1693 = vpack.c.bf16 %v1692, %v1692
        %1694 = vmatprep.subr.bf16.mxu0 0
        %1695 = vmatpush1.bf16.msra.mxu0 %v419
        %1696 = vmatprep.subr.bf16.mxu0 0
        %1697 = vmatpush1.bf16.msra.mxu0 %v420
        %1698 = vmatprep.subr.bf16.mxu0 0
        %1699 = vmatpush1.bf16.msra.mxu0 %v421
        %1700 = vmatprep.subr.bf16.mxu0 0
        %1701 = vmatpush1.bf16.msra.mxu0 %v422
        %1702 = vmatprep.subr.bf16.mxu0 0
        %1703 = vmatpush1.bf16.msra.mxu0 %v423
        %1704 = vmatprep.subr.bf16.mxu0 0
        %1705 = vmatpush1.bf16.msra.mxu0 %v424
        %1706 = vmatprep.subr.bf16.mxu0 0
        %1707 = vmatpush1.bf16.msra.mxu0 %v425
        %1708 = vmatprep.subr.bf16.mxu0 0
        %1709 = vmatpush1.bf16.msra.mxu0 %v426
        %1710 = vmatprep.subr.bf16.mxu0 0
        %1711 = vmatpush1.bf16.msra.mxu0 0
        %1712 = vmatprep.subr.bf16.mxu0 0
        %1713 = vmatpush1.bf16.msra.mxu0 0
        %1714 = vmatprep.subr.bf16.mxu0 0
        %1715 = vmatpush1.bf16.msra.mxu0 0
        %1716 = vmatprep.subr.bf16.mxu0 0
        %1717 = vmatpush1.bf16.msra.mxu0 0
        %1718 = vmatprep.subr.bf16.mxu0 0
        %1719 = vmatpush1.bf16.msra.mxu0 0
        %1720 = vmatprep.subr.bf16.mxu0 0
        %1721 = vmatpush1.bf16.msra.mxu0 0
        %1722 = vmatprep.subr.bf16.mxu0 0
        %1723 = vmatpush1.bf16.msra.mxu0 0
        %1724 = vmatprep.subr.bf16.mxu0 0
        %1725 = vmatpush1.bf16.msra.mxu0 0
        %1726 = vmatprep.mubr.bf16.mxu0 0
        %1727 = vmatmul.mubr.bf16.gmra.mrb[0].mxu0 %v1693
        %v1728 = vpop.f32.mrb[0].mxu0
        %v1729 = vadd.f32 0.0, %v1728
        %v1730 = vpop.f32.mrb[0].mxu0
        %v1731 = vpop.f32.mrb[0].mxu0
        %v1732 = vpop.f32.mrb[0].mxu0
        %1733 = vdwg.mxu0
        %v1734 = vmul.f32 %v1729, %v1729
        %1735 = vadd.xlane.f32.xlu0 %v1734
        %v1736 = vpop.xlane.xlu0 %1735
        %v1737 = vsub.f32 %v1736, %v1686
        %v1738 = vmul.f32 %v1737, -0.0025
        %s1739 = scalar_lea.vmem %s255, 160
        %v1740 = vld [vmem:[%s1739] sm:$0xff]
        %vm1741 = vcmp.le.f32.partialorder %v1740, %v1738
        %v1742 = vsel %vm1741, 1, 0
        %1743 = vset.pattern.permute.xlu0 0
        %1744 = vperm.xlu0 %1743, %v1742
        %v1745 = vpop.permute.xlu0 %1744
        %vm1746 = vcmp.eq.s32.totalorder %v1745, 1
        %v1747 = vsel %vm1746, %v1692, %v1684
        %v1748 = vsel %vm1746, %v1729, %v1685
        %v1749 = vsel %vm1741, %v1736, %v1686
        %v1750 = vmul.f32 %v1748, 0.01
        %v1751 = vsub.f32 %v1747, %v1750
        %s1752 = scalar_lea.vmem %s247, 84
        %v1753 = vld [vmem:[%s1752] sm:$0xf]
        %v1754 = vunpack.c.l.bf16 %v1753
        %v1755 = vadd.f32 %v1751, %v1754
        %v1756 = vpack.c.bf16 %v1755, %v1755
        %1757 = vmatprep.subr.bf16.mxu0 0
        %1758 = vmatpush1.bf16.msra.mxu0 %v419
        %1759 = vmatprep.subr.bf16.mxu0 0
        %1760 = vmatpush1.bf16.msra.mxu0 %v420
        %1761 = vmatprep.subr.bf16.mxu0 0
        %1762 = vmatpush1.bf16.msra.mxu0 %v421
        %1763 = vmatprep.subr.bf16.mxu0 0
        %1764 = vmatpush1.bf16.msra.mxu0 %v422
        %1765 = vmatprep.subr.bf16.mxu0 0
        %1766 = vmatpush1.bf16.msra.mxu0 %v423
        %1767 = vmatprep.subr.bf16.mxu0 0
        %1768 = vmatpush1.bf16.msra.mxu0 %v424
        %1769 = vmatprep.subr.bf16.mxu0 0
        %1770 = vmatpush1.bf16.msra.mxu0 %v425
        %1771 = vmatprep.subr.bf16.mxu0 0
        %1772 = vmatpush1.bf16.msra.mxu0 %v426
        %1773 = vmatprep.subr.bf16.mxu0 0
        %1774 = vmatpush1.bf16.msra.mxu0 0
        %1775 = vmatprep.subr.bf16.mxu0 0
        %1776 = vmatpush1.bf16.msra.mxu0 0
        %1777 = vmatprep.subr.bf16.mxu0 0
        %1778 = vmatpush1.bf16.msra.mxu0 0
        %1779 = vmatprep.subr.bf16.mxu0 0
        %1780 = vmatpush1.bf16.msra.mxu0 0
        %1781 = vmatprep.subr.bf16.mxu0 0
        %1782 = vmatpush1.bf16.msra.mxu0 0
        %1783 = vmatprep.subr.bf16.mxu0 0
        %1784 = vmatpush1.bf16.msra.mxu0 0
        %1785 = vmatprep.subr.bf16.mxu0 0
        %1786 = vmatpush1.bf16.msra.mxu0 0
        %1787 = vmatprep.subr.bf16.mxu0 0
        %1788 = vmatpush1.bf16.msra.mxu0 0
        %1789 = vmatprep.mubr.bf16.mxu0 0
        %1790 = vmatmul.mubr.bf16.gmra.mrb[0].mxu0 %v1756
        %v1791 = vpop.f32.mrb[0].mxu0
        %v1792 = vadd.f32 0.0, %v1791
        %v1793 = vpop.f32.mrb[0].mxu0
        %v1794 = vpop.f32.mrb[0].mxu0
        %v1795 = vpop.f32.mrb[0].mxu0
        %1796 = vdwg.mxu0
        %v1797 = vmul.f32 %v1792, %v1792
        %1798 = vadd.xlane.f32.xlu0 %v1797
        %v1799 = vpop.xlane.xlu0 %1798
        %v1800 = vsub.f32 %v1799, %v1749
        %v1801 = vmul.f32 %v1800, -0.0025
        %s1802 = scalar_lea.vmem %s255, 168
        %v1803 = vld [vmem:[%s1802] sm:$0xff]
        %vm1804 = vcmp.le.f32.partialorder %v1803, %v1801
        %v1805 = vsel %vm1804, 1, 0
        %1806 = vset.pattern.permute.xlu0 0
        %1807 = vperm.xlu0 %1806, %v1805
        %v1808 = vpop.permute.xlu0 %1807
        %vm1809 = vcmp.eq.s32.totalorder %v1808, 1
        %v1810 = vsel %vm1809, %v1755, %v1747
        %v1811 = vsel %vm1809, %v1792, %v1748
        %v1812 = vsel %vm1804, %v1799, %v1749
        %v1813 = vmul.f32 %v1811, 0.01
        %v1814 = vsub.f32 %v1810, %v1813
        %s1815 = scalar_lea.vmem %s247, 88
        %v1816 = vld [vmem:[%s1815] sm:$0xf]
        %v1817 = vunpack.c.l.bf16 %v1816
        %v1818 = vadd.f32 %v1814, %v1817
        %v1819 = vpack.c.bf16 %v1818, %v1818
        %1820 = vmatprep.subr.bf16.mxu0 0
        %1821 = vmatpush1.bf16.msra.mxu0 %v419
        %1822 = vmatprep.subr.bf16.mxu0 0
        %1823 = vmatpush1.bf16.msra.mxu0 %v420
        %1824 = vmatprep.subr.bf16.mxu0 0
        %1825 = vmatpush1.bf16.msra.mxu0 %v421
        %1826 = vmatprep.subr.bf16.mxu0 0
        %1827 = vmatpush1.bf16.msra.mxu0 %v422
        %1828 = vmatprep.subr.bf16.mxu0 0
        %1829 = vmatpush1.bf16.msra.mxu0 %v423
        %1830 = vmatprep.subr.bf16.mxu0 0
        %1831 = vmatpush1.bf16.msra.mxu0 %v424
        %1832 = vmatprep.subr.bf16.mxu0 0
        %1833 = vmatpush1.bf16.msra.mxu0 %v425
        %1834 = vmatprep.subr.bf16.mxu0 0
        %1835 = vmatpush1.bf16.msra.mxu0 %v426
        %1836 = vmatprep.subr.bf16.mxu0 0
        %1837 = vmatpush1.bf16.msra.mxu0 0
        %1838 = vmatprep.subr.bf16.mxu0 0
        %1839 = vmatpush1.bf16.msra.mxu0 0
        %1840 = vmatprep.subr.bf16.mxu0 0
        %1841 = vmatpush1.bf16.msra.mxu0 0
        %1842 = vmatprep.subr.bf16.mxu0 0
        %1843 = vmatpush1.bf16.msra.mxu0 0
        %1844 = vmatprep.subr.bf16.mxu0 0
        %1845 = vmatpush1.bf16.msra.mxu0 0
        %1846 = vmatprep.subr.bf16.mxu0 0
        %1847 = vmatpush1.bf16.msra.mxu0 0
        %1848 = vmatprep.subr.bf16.mxu0 0
        %1849 = vmatpush1.bf16.msra.mxu0 0
        %1850 = vmatprep.subr.bf16.mxu0 0
        %1851 = vmatpush1.bf16.msra.mxu0 0
        %1852 = vmatprep.mubr.bf16.mxu0 0
        %1853 = vmatmul.mubr.bf16.gmra.mrb[0].mxu0 %v1819
        %v1854 = vpop.f32.mrb[0].mxu0
        %v1855 = vadd.f32 0.0, %v1854
        %v1856 = vpop.f32.mrb[0].mxu0
        %v1857 = vpop.f32.mrb[0].mxu0
        %v1858 = vpop.f32.mrb[0].mxu0
        %1859 = vdwg.mxu0
        %v1860 = vmul.f32 %v1855, %v1855
        %1861 = vadd.xlane.f32.xlu0 %v1860
        %v1862 = vpop.xlane.xlu0 %1861
        %v1863 = vsub.f32 %v1862, %v1812
        %v1864 = vmul.f32 %v1863, -0.0025
        %s1865 = scalar_lea.vmem %s255, 176
        %v1866 = vld [vmem:[%s1865] sm:$0xff]
        %vm1867 = vcmp.le.f32.partialorder %v1866, %v1864
        %v1868 = vsel %vm1867, 1, 0
        %1869 = vset.pattern.permute.xlu0 0
        %1870 = vperm.xlu0 %1869, %v1868
        %v1871 = vpop.permute.xlu0 %1870
        %vm1872 = vcmp.eq.s32.totalorder %v1871, 1
        %v1873 = vsel %vm1872, %v1818, %v1810
        %v1874 = vsel %vm1872, %v1855, %v1811
        %v1875 = vsel %vm1867, %v1862, %v1812
        %v1876 = vmul.f32 %v1874, 0.01
        %v1877 = vsub.f32 %v1873, %v1876
        %s1878 = scalar_lea.vmem %s247, 92
        %v1879 = vld [vmem:[%s1878] sm:$0xf]
        %v1880 = vunpack.c.l.bf16 %v1879
        %v1881 = vadd.f32 %v1877, %v1880
        %v1882 = vpack.c.bf16 %v1881, %v1881
        %1883 = vmatprep.subr.bf16.mxu0 0
        %1884 = vmatpush1.bf16.msra.mxu0 %v419
        %1885 = vmatprep.subr.bf16.mxu0 0
        %1886 = vmatpush1.bf16.msra.mxu0 %v420
        %1887 = vmatprep.subr.bf16.mxu0 0
        %1888 = vmatpush1.bf16.msra.mxu0 %v421
        %1889 = vmatprep.subr.bf16.mxu0 0
        %1890 = vmatpush1.bf16.msra.mxu0 %v422
        %1891 = vmatprep.subr.bf16.mxu0 0
        %1892 = vmatpush1.bf16.msra.mxu0 %v423
        %1893 = vmatprep.subr.bf16.mxu0 0
        %1894 = vmatpush1.bf16.msra.mxu0 %v424
        %1895 = vmatprep.subr.bf16.mxu0 0
        %1896 = vmatpush1.bf16.msra.mxu0 %v425
        %1897 = vmatprep.subr.bf16.mxu0 0
        %1898 = vmatpush1.bf16.msra.mxu0 %v426
        %1899 = vmatprep.subr.bf16.mxu0 0
        %1900 = vmatpush1.bf16.msra.mxu0 0
        %1901 = vmatprep.subr.bf16.mxu0 0
        %1902 = vmatpush1.bf16.msra.mxu0 0
        %1903 = vmatprep.subr.bf16.mxu0 0
        %1904 = vmatpush1.bf16.msra.mxu0 0
        %1905 = vmatprep.subr.bf16.mxu0 0
        %1906 = vmatpush1.bf16.msra.mxu0 0
        %1907 = vmatprep.subr.bf16.mxu0 0
        %1908 = vmatpush1.bf16.msra.mxu0 0
        %1909 = vmatprep.subr.bf16.mxu0 0
        %1910 = vmatpush1.bf16.msra.mxu0 0
        %1911 = vmatprep.subr.bf16.mxu0 0
        %1912 = vmatpush1.bf16.msra.mxu0 0
        %1913 = vmatprep.subr.bf16.mxu0 0
        %1914 = vmatpush1.bf16.msra.mxu0 0
        %1915 = vmatprep.mubr.bf16.mxu0 0
        %1916 = vmatmul.mubr.bf16.gmra.mrb[0].mxu0 %v1882
        %v1917 = vpop.f32.mrb[0].mxu0
        %v1918 = vadd.f32 0.0, %v1917
        %v1919 = vpop.f32.mrb[0].mxu0
        %v1920 = vpop.f32.mrb[0].mxu0
        %v1921 = vpop.f32.mrb[0].mxu0
        %1922 = vdwg.mxu0
        %v1923 = vmul.f32 %v1918, %v1918
        %1924 = vadd.xlane.f32.xlu0 %v1923
        %v1925 = vpop.xlane.xlu0 %1924
        %v1926 = vsub.f32 %v1925, %v1875
        %v1927 = vmul.f32 %v1926, -0.0025
        %s1928 = scalar_lea.vmem %s255, 184
        %v1929 = vld [vmem:[%s1928] sm:$0xff]
        %vm1930 = vcmp.le.f32.partialorder %v1929, %v1927
        %v1931 = vsel %vm1930, 1, 0
        %1932 = vset.pattern.permute.xlu0 0
        %1933 = vperm.xlu0 %1932, %v1931
        %v1934 = vpop.permute.xlu0 %1933
        %vm1935 = vcmp.eq.s32.totalorder %v1934, 1
        %v1936 = vsel %vm1935, %v1881, %v1873
        %v1937 = vsel %vm1935, %v1918, %v1874
        %v1938 = vsel %vm1930, %v1925, %v1875
        %v1939 = vmul.f32 %v1937, 0.01
        %v1940 = vsub.f32 %v1936, %v1939
        %s1941 = scalar_lea.vmem %s247, 96
        %v1942 = vld [vmem:[%s1941] sm:$0xf]
        %v1943 = vunpack.c.l.bf16 %v1942
        %v1944 = vadd.f32 %v1940, %v1943
        %v1945 = vpack.c.bf16 %v1944, %v1944
        %1946 = vmatprep.subr.bf16.mxu0 0
        %1947 = vmatpush1.bf16.msra.mxu0 %v419
        %1948 = vmatprep.subr.bf16.mxu0 0
        %1949 = vmatpush1.bf16.msra.mxu0 %v420
        %1950 = vmatprep.subr.bf16.mxu0 0
        %1951 = vmatpush1.bf16.msra.mxu0 %v421
        %1952 = vmatprep.subr.bf16.mxu0 0
        %1953 = vmatpush1.bf16.msra.mxu0 %v422
        %1954 = vmatprep.subr.bf16.mxu0 0
        %1955 = vmatpush1.bf16.msra.mxu0 %v423
        %1956 = vmatprep.subr.bf16.mxu0 0
        %1957 = vmatpush1.bf16.msra.mxu0 %v424
        %1958 = vmatprep.subr.bf16.mxu0 0
        %1959 = vmatpush1.bf16.msra.mxu0 %v425
        %1960 = vmatprep.subr.bf16.mxu0 0
        %1961 = vmatpush1.bf16.msra.mxu0 %v426
        %1962 = vmatprep.subr.bf16.mxu0 0
        %1963 = vmatpush1.bf16.msra.mxu0 0
        %1964 = vmatprep.subr.bf16.mxu0 0
        %1965 = vmatpush1.bf16.msra.mxu0 0
        %1966 = vmatprep.subr.bf16.mxu0 0
        %1967 = vmatpush1.bf16.msra.mxu0 0
        %1968 = vmatprep.subr.bf16.mxu0 0
        %1969 = vmatpush1.bf16.msra.mxu0 0
        %1970 = vmatprep.subr.bf16.mxu0 0
        %1971 = vmatpush1.bf16.msra.mxu0 0
        %1972 = vmatprep.subr.bf16.mxu0 0
        %1973 = vmatpush1.bf16.msra.mxu0 0
        %1974 = vmatprep.subr.bf16.mxu0 0
        %1975 = vmatpush1.bf16.msra.mxu0 0
        %1976 = vmatprep.subr.bf16.mxu0 0
        %1977 = vmatpush1.bf16.msra.mxu0 0
        %1978 = vmatprep.mubr.bf16.mxu0 0
        %1979 = vmatmul.mubr.bf16.gmra.mrb[0].mxu0 %v1945
        %v1980 = vpop.f32.mrb[0].mxu0
        %v1981 = vadd.f32 0.0, %v1980
        %v1982 = vpop.f32.mrb[0].mxu0
        %v1983 = vpop.f32.mrb[0].mxu0
        %v1984 = vpop.f32.mrb[0].mxu0
        %1985 = vdwg.mxu0
        %v1986 = vmul.f32 %v1981, %v1981
        %1987 = vadd.xlane.f32.xlu0 %v1986
        %v1988 = vpop.xlane.xlu0 %1987
        %v1989 = vsub.f32 %v1988, %v1938
        %v1990 = vmul.f32 %v1989, -0.0025
        %s1991 = scalar_lea.vmem %s255, 192
        %v1992 = vld [vmem:[%s1991] sm:$0xff]
        %vm1993 = vcmp.le.f32.partialorder %v1992, %v1990
        %v1994 = vsel %vm1993, 1, 0
        %1995 = vset.pattern.permute.xlu0 0
        %1996 = vperm.xlu0 %1995, %v1994
        %v1997 = vpop.permute.xlu0 %1996
        %vm1998 = vcmp.eq.s32.totalorder %v1997, 1
        %v1999 = vsel %vm1998, %v1944, %v1936
        %v2000 = vsel %vm1998, %v1981, %v1937
        %v2001 = vsel %vm1993, %v1988, %v1938
        %v2002 = vmul.f32 %v2000, 0.01
        %v2003 = vsub.f32 %v1999, %v2002
        %s2004 = scalar_lea.vmem %s247, 100
        %v2005 = vld [vmem:[%s2004] sm:$0xf]
        %v2006 = vunpack.c.l.bf16 %v2005
        %v2007 = vadd.f32 %v2003, %v2006
        %v2008 = vpack.c.bf16 %v2007, %v2007
        %2009 = vmatprep.subr.bf16.mxu0 0
        %2010 = vmatpush1.bf16.msra.mxu0 %v419
        %2011 = vmatprep.subr.bf16.mxu0 0
        %2012 = vmatpush1.bf16.msra.mxu0 %v420
        %2013 = vmatprep.subr.bf16.mxu0 0
        %2014 = vmatpush1.bf16.msra.mxu0 %v421
        %2015 = vmatprep.subr.bf16.mxu0 0
        %2016 = vmatpush1.bf16.msra.mxu0 %v422
        %2017 = vmatprep.subr.bf16.mxu0 0
        %2018 = vmatpush1.bf16.msra.mxu0 %v423
        %2019 = vmatprep.subr.bf16.mxu0 0
        %2020 = vmatpush1.bf16.msra.mxu0 %v424
        %2021 = vmatprep.subr.bf16.mxu0 0
        %2022 = vmatpush1.bf16.msra.mxu0 %v425
        %2023 = vmatprep.subr.bf16.mxu0 0
        %2024 = vmatpush1.bf16.msra.mxu0 %v426
        %2025 = vmatprep.subr.bf16.mxu0 0
        %2026 = vmatpush1.bf16.msra.mxu0 0
        %2027 = vmatprep.subr.bf16.mxu0 0
        %2028 = vmatpush1.bf16.msra.mxu0 0
        %2029 = vmatprep.subr.bf16.mxu0 0
        %2030 = vmatpush1.bf16.msra.mxu0 0
        %2031 = vmatprep.subr.bf16.mxu0 0
        %2032 = vmatpush1.bf16.msra.mxu0 0
        %2033 = vmatprep.subr.bf16.mxu0 0
        %2034 = vmatpush1.bf16.msra.mxu0 0
        %2035 = vmatprep.subr.bf16.mxu0 0
        %2036 = vmatpush1.bf16.msra.mxu0 0
        %2037 = vmatprep.subr.bf16.mxu0 0
        %2038 = vmatpush1.bf16.msra.mxu0 0
        %2039 = vmatprep.subr.bf16.mxu0 0
        %2040 = vmatpush1.bf16.msra.mxu0 0
        %2041 = vmatprep.mubr.bf16.mxu0 0
        %2042 = vmatmul.mubr.bf16.gmra.mrb[0].mxu0 %v2008
        %v2043 = vpop.f32.mrb[0].mxu0
        %v2044 = vadd.f32 0.0, %v2043
        %v2045 = vpop.f32.mrb[0].mxu0
        %v2046 = vpop.f32.mrb[0].mxu0
        %v2047 = vpop.f32.mrb[0].mxu0
        %2048 = vdwg.mxu0
        %v2049 = vmul.f32 %v2044, %v2044
        %2050 = vadd.xlane.f32.xlu0 %v2049
        %v2051 = vpop.xlane.xlu0 %2050
        %v2052 = vsub.f32 %v2051, %v2001
        %v2053 = vmul.f32 %v2052, -0.0025
        %s2054 = scalar_lea.vmem %s255, 200
        %v2055 = vld [vmem:[%s2054] sm:$0xff]
        %vm2056 = vcmp.le.f32.partialorder %v2055, %v2053
        %v2057 = vsel %vm2056, 1, 0
        %2058 = vset.pattern.permute.xlu0 0
        %2059 = vperm.xlu0 %2058, %v2057
        %v2060 = vpop.permute.xlu0 %2059
        %vm2061 = vcmp.eq.s32.totalorder %v2060, 1
        %v2062 = vsel %vm2061, %v2007, %v1999
        %v2063 = vsel %vm2061, %v2044, %v2000
        %v2064 = vsel %vm2056, %v2051, %v2001
        %v2065 = vmul.f32 %v2063, 0.01
        %v2066 = vsub.f32 %v2062, %v2065
        %s2067 = scalar_lea.vmem %s247, 104
        %v2068 = vld [vmem:[%s2067] sm:$0xf]
        %v2069 = vunpack.c.l.bf16 %v2068
        %v2070 = vadd.f32 %v2066, %v2069
        %v2071 = vpack.c.bf16 %v2070, %v2070
        %2072 = vmatprep.subr.bf16.mxu0 0
        %2073 = vmatpush1.bf16.msra.mxu0 %v419
        %2074 = vmatprep.subr.bf16.mxu0 0
        %2075 = vmatpush1.bf16.msra.mxu0 %v420
        %2076 = vmatprep.subr.bf16.mxu0 0
        %2077 = vmatpush1.bf16.msra.mxu0 %v421
        %2078 = vmatprep.subr.bf16.mxu0 0
        %2079 = vmatpush1.bf16.msra.mxu0 %v422
        %2080 = vmatprep.subr.bf16.mxu0 0
        %2081 = vmatpush1.bf16.msra.mxu0 %v423
        %2082 = vmatprep.subr.bf16.mxu0 0
        %2083 = vmatpush1.bf16.msra.mxu0 %v424
        %2084 = vmatprep.subr.bf16.mxu0 0
        %2085 = vmatpush1.bf16.msra.mxu0 %v425
        %2086 = vmatprep.subr.bf16.mxu0 0
        %2087 = vmatpush1.bf16.msra.mxu0 %v426
        %2088 = vmatprep.subr.bf16.mxu0 0
        %2089 = vmatpush1.bf16.msra.mxu0 0
        %2090 = vmatprep.subr.bf16.mxu0 0
        %2091 = vmatpush1.bf16.msra.mxu0 0
        %2092 = vmatprep.subr.bf16.mxu0 0
        %2093 = vmatpush1.bf16.msra.mxu0 0
        %2094 = vmatprep.subr.bf16.mxu0 0
        %2095 = vmatpush1.bf16.msra.mxu0 0
        %2096 = vmatprep.subr.bf16.mxu0 0
        %2097 = vmatpush1.bf16.msra.mxu0 0
        %2098 = vmatprep.subr.bf16.mxu0 0
        %2099 = vmatpush1.bf16.msra.mxu0 0
        %2100 = vmatprep.subr.bf16.mxu0 0
        %2101 = vmatpush1.bf16.msra.mxu0 0
        %2102 = vmatprep.subr.bf16.mxu0 0
        %2103 = vmatpush1.bf16.msra.mxu0 0
        %2104 = vmatprep.mubr.bf16.mxu0 0
        %2105 = vmatmul.mubr.bf16.gmra.mrb[0].mxu0 %v2071
        %v2106 = vpop.f32.mrb[0].mxu0
        %v2107 = vadd.f32 0.0, %v2106
        %v2108 = vpop.f32.mrb[0].mxu0
        %v2109 = vpop.f32.mrb[0].mxu0
        %v2110 = vpop.f32.mrb[0].mxu0
        %2111 = vdwg.mxu0
        %v2112 = vmul.f32 %v2107, %v2107
        %2113 = vadd.xlane.f32.xlu0 %v2112
        %v2114 = vpop.xlane.xlu0 %2113
        %v2115 = vsub.f32 %v2114, %v2064
        %v2116 = vmul.f32 %v2115, -0.0025
        %s2117 = scalar_lea.vmem %s255, 208
        %v2118 = vld [vmem:[%s2117] sm:$0xff]
        %vm2119 = vcmp.le.f32.partialorder %v2118, %v2116
        %v2120 = vsel %vm2119, 1, 0
        %2121 = vset.pattern.permute.xlu0 0
        %2122 = vperm.xlu0 %2121, %v2120
        %v2123 = vpop.permute.xlu0 %2122
        %vm2124 = vcmp.eq.s32.totalorder %v2123, 1
        %v2125 = vsel %vm2124, %v2070, %v2062
        %v2126 = vsel %vm2124, %v2107, %v2063
        %v2127 = vsel %vm2119, %v2114, %v2064
        %v2128 = vmul.f32 %v2126, 0.01
        %v2129 = vsub.f32 %v2125, %v2128
        %s2130 = scalar_lea.vmem %s247, 108
        %v2131 = vld [vmem:[%s2130] sm:$0xf]
        %v2132 = vunpack.c.l.bf16 %v2131
        %v2133 = vadd.f32 %v2129, %v2132
        %v2134 = vpack.c.bf16 %v2133, %v2133
        %2135 = vmatprep.subr.bf16.mxu0 0
        %2136 = vmatpush1.bf16.msra.mxu0 %v419
        %2137 = vmatprep.subr.bf16.mxu0 0
        %2138 = vmatpush1.bf16.msra.mxu0 %v420
        %2139 = vmatprep.subr.bf16.mxu0 0
        %2140 = vmatpush1.bf16.msra.mxu0 %v421
        %2141 = vmatprep.subr.bf16.mxu0 0
        %2142 = vmatpush1.bf16.msra.mxu0 %v422
        %2143 = vmatprep.subr.bf16.mxu0 0
        %2144 = vmatpush1.bf16.msra.mxu0 %v423
        %2145 = vmatprep.subr.bf16.mxu0 0
        %2146 = vmatpush1.bf16.msra.mxu0 %v424
        %2147 = vmatprep.subr.bf16.mxu0 0
        %2148 = vmatpush1.bf16.msra.mxu0 %v425
        %2149 = vmatprep.subr.bf16.mxu0 0
        %2150 = vmatpush1.bf16.msra.mxu0 %v426
        %2151 = vmatprep.subr.bf16.mxu0 0
        %2152 = vmatpush1.bf16.msra.mxu0 0
        %2153 = vmatprep.subr.bf16.mxu0 0
        %2154 = vmatpush1.bf16.msra.mxu0 0
        %2155 = vmatprep.subr.bf16.mxu0 0
        %2156 = vmatpush1.bf16.msra.mxu0 0
        %2157 = vmatprep.subr.bf16.mxu0 0
        %2158 = vmatpush1.bf16.msra.mxu0 0
        %2159 = vmatprep.subr.bf16.mxu0 0
        %2160 = vmatpush1.bf16.msra.mxu0 0
        %2161 = vmatprep.subr.bf16.mxu0 0
        %2162 = vmatpush1.bf16.msra.mxu0 0
        %2163 = vmatprep.subr.bf16.mxu0 0
        %2164 = vmatpush1.bf16.msra.mxu0 0
        %2165 = vmatprep.subr.bf16.mxu0 0
        %2166 = vmatpush1.bf16.msra.mxu0 0
        %2167 = vmatprep.mubr.bf16.mxu0 0
        %2168 = vmatmul.mubr.bf16.gmra.mrb[0].mxu0 %v2134
        %v2169 = vpop.f32.mrb[0].mxu0
        %v2170 = vadd.f32 0.0, %v2169
        %v2171 = vpop.f32.mrb[0].mxu0
        %v2172 = vpop.f32.mrb[0].mxu0
        %v2173 = vpop.f32.mrb[0].mxu0
        %2174 = vdwg.mxu0
        %v2175 = vmul.f32 %v2170, %v2170
        %2176 = vadd.xlane.f32.xlu0 %v2175
        %v2177 = vpop.xlane.xlu0 %2176
        %v2178 = vsub.f32 %v2177, %v2127
        %v2179 = vmul.f32 %v2178, -0.0025
        %s2180 = scalar_lea.vmem %s255, 216
        %v2181 = vld [vmem:[%s2180] sm:$0xff]
        %vm2182 = vcmp.le.f32.partialorder %v2181, %v2179
        %v2183 = vsel %vm2182, 1, 0
        %2184 = vset.pattern.permute.xlu0 0
        %2185 = vperm.xlu0 %2184, %v2183
        %v2186 = vpop.permute.xlu0 %2185
        %vm2187 = vcmp.eq.s32.totalorder %v2186, 1
        %v2188 = vsel %vm2187, %v2133, %v2125
        %v2189 = vsel %vm2187, %v2170, %v2126
        %v2190 = vsel %vm2182, %v2177, %v2127
        %v2191 = vmul.f32 %v2189, 0.01
        %v2192 = vsub.f32 %v2188, %v2191
        %s2193 = scalar_lea.vmem %s247, 112
        %v2194 = vld [vmem:[%s2193] sm:$0xf]
        %v2195 = vunpack.c.l.bf16 %v2194
        %v2196 = vadd.f32 %v2192, %v2195
        %v2197 = vpack.c.bf16 %v2196, %v2196
        %2198 = vmatprep.subr.bf16.mxu0 0
        %2199 = vmatpush1.bf16.msra.mxu0 %v419
        %2200 = vmatprep.subr.bf16.mxu0 0
        %2201 = vmatpush1.bf16.msra.mxu0 %v420
        %2202 = vmatprep.subr.bf16.mxu0 0
        %2203 = vmatpush1.bf16.msra.mxu0 %v421
        %2204 = vmatprep.subr.bf16.mxu0 0
        %2205 = vmatpush1.bf16.msra.mxu0 %v422
        %2206 = vmatprep.subr.bf16.mxu0 0
        %2207 = vmatpush1.bf16.msra.mxu0 %v423
        %2208 = vmatprep.subr.bf16.mxu0 0
        %2209 = vmatpush1.bf16.msra.mxu0 %v424
        %2210 = vmatprep.subr.bf16.mxu0 0
        %2211 = vmatpush1.bf16.msra.mxu0 %v425
        %2212 = vmatprep.subr.bf16.mxu0 0
        %2213 = vmatpush1.bf16.msra.mxu0 %v426
        %2214 = vmatprep.subr.bf16.mxu0 0
        %2215 = vmatpush1.bf16.msra.mxu0 0
        %2216 = vmatprep.subr.bf16.mxu0 0
        %2217 = vmatpush1.bf16.msra.mxu0 0
        %2218 = vmatprep.subr.bf16.mxu0 0
        %2219 = vmatpush1.bf16.msra.mxu0 0
        %2220 = vmatprep.subr.bf16.mxu0 0
        %2221 = vmatpush1.bf16.msra.mxu0 0
        %2222 = vmatprep.subr.bf16.mxu0 0
        %2223 = vmatpush1.bf16.msra.mxu0 0
        %2224 = vmatprep.subr.bf16.mxu0 0
        %2225 = vmatpush1.bf16.msra.mxu0 0
        %2226 = vmatprep.subr.bf16.mxu0 0
        %2227 = vmatpush1.bf16.msra.mxu0 0
        %2228 = vmatprep.subr.bf16.mxu0 0
        %2229 = vmatpush1.bf16.msra.mxu0 0
        %2230 = vmatprep.mubr.bf16.mxu0 0
        %2231 = vmatmul.mubr.bf16.gmra.mrb[0].mxu0 %v2197
        %v2232 = vpop.f32.mrb[0].mxu0
        %v2233 = vadd.f32 0.0, %v2232
        %v2234 = vpop.f32.mrb[0].mxu0
        %v2235 = vpop.f32.mrb[0].mxu0
        %v2236 = vpop.f32.mrb[0].mxu0
        %2237 = vdwg.mxu0
        %v2238 = vmul.f32 %v2233, %v2233
        %2239 = vadd.xlane.f32.xlu0 %v2238
        %v2240 = vpop.xlane.xlu0 %2239
        %v2241 = vsub.f32 %v2240, %v2190
        %v2242 = vmul.f32 %v2241, -0.0025
        %s2243 = scalar_lea.vmem %s255, 224
        %v2244 = vld [vmem:[%s2243] sm:$0xff]
        %vm2245 = vcmp.le.f32.partialorder %v2244, %v2242
        %v2246 = vsel %vm2245, 1, 0
        %2247 = vset.pattern.permute.xlu0 0
        %2248 = vperm.xlu0 %2247, %v2246
        %v2249 = vpop.permute.xlu0 %2248
        %vm2250 = vcmp.eq.s32.totalorder %v2249, 1
        %v2251 = vsel %vm2250, %v2196, %v2188
        %v2252 = vsel %vm2250, %v2233, %v2189
        %v2253 = vsel %vm2245, %v2240, %v2190
        %v2254 = vmul.f32 %v2252, 0.01
        %v2255 = vsub.f32 %v2251, %v2254
        %s2256 = scalar_lea.vmem %s247, 116
        %v2257 = vld [vmem:[%s2256] sm:$0xf]
        %v2258 = vunpack.c.l.bf16 %v2257
        %v2259 = vadd.f32 %v2255, %v2258
        %v2260 = vpack.c.bf16 %v2259, %v2259
        %2261 = vmatprep.subr.bf16.mxu0 0
        %2262 = vmatpush1.bf16.msra.mxu0 %v419
        %2263 = vmatprep.subr.bf16.mxu0 0
        %2264 = vmatpush1.bf16.msra.mxu0 %v420
        %2265 = vmatprep.subr.bf16.mxu0 0
        %2266 = vmatpush1.bf16.msra.mxu0 %v421
        %2267 = vmatprep.subr.bf16.mxu0 0
        %2268 = vmatpush1.bf16.msra.mxu0 %v422
        %2269 = vmatprep.subr.bf16.mxu0 0
        %2270 = vmatpush1.bf16.msra.mxu0 %v423
        %2271 = vmatprep.subr.bf16.mxu0 0
        %2272 = vmatpush1.bf16.msra.mxu0 %v424
        %2273 = vmatprep.subr.bf16.mxu0 0
        %2274 = vmatpush1.bf16.msra.mxu0 %v425
        %2275 = vmatprep.subr.bf16.mxu0 0
        %2276 = vmatpush1.bf16.msra.mxu0 %v426
        %2277 = vmatprep.subr.bf16.mxu0 0
        %2278 = vmatpush1.bf16.msra.mxu0 0
        %2279 = vmatprep.subr.bf16.mxu0 0
        %2280 = vmatpush1.bf16.msra.mxu0 0
        %2281 = vmatprep.subr.bf16.mxu0 0
        %2282 = vmatpush1.bf16.msra.mxu0 0
        %2283 = vmatprep.subr.bf16.mxu0 0
        %2284 = vmatpush1.bf16.msra.mxu0 0
        %2285 = vmatprep.subr.bf16.mxu0 0
        %2286 = vmatpush1.bf16.msra.mxu0 0
        %2287 = vmatprep.subr.bf16.mxu0 0
        %2288 = vmatpush1.bf16.msra.mxu0 0
        %2289 = vmatprep.subr.bf16.mxu0 0
        %2290 = vmatpush1.bf16.msra.mxu0 0
        %2291 = vmatprep.subr.bf16.mxu0 0
        %2292 = vmatpush1.bf16.msra.mxu0 0
        %2293 = vmatprep.mubr.bf16.mxu0 0
        %2294 = vmatmul.mubr.bf16.gmra.mrb[0].mxu0 %v2260
        %v2295 = vpop.f32.mrb[0].mxu0
        %v2296 = vadd.f32 0.0, %v2295
        %v2297 = vpop.f32.mrb[0].mxu0
        %v2298 = vpop.f32.mrb[0].mxu0
        %v2299 = vpop.f32.mrb[0].mxu0
        %2300 = vdwg.mxu0
        %v2301 = vmul.f32 %v2296, %v2296
        %2302 = vadd.xlane.f32.xlu0 %v2301
        %v2303 = vpop.xlane.xlu0 %2302
        %v2304 = vsub.f32 %v2303, %v2253
        %v2305 = vmul.f32 %v2304, -0.0025
        %s2306 = scalar_lea.vmem %s255, 232
        %v2307 = vld [vmem:[%s2306] sm:$0xff]
        %vm2308 = vcmp.le.f32.partialorder %v2307, %v2305
        %v2309 = vsel %vm2308, 1, 0
        %2310 = vset.pattern.permute.xlu0 0
        %2311 = vperm.xlu0 %2310, %v2309
        %v2312 = vpop.permute.xlu0 %2311
        %vm2313 = vcmp.eq.s32.totalorder %v2312, 1
        %v2314 = vsel %vm2313, %v2259, %v2251
        %v2315 = vsel %vm2313, %v2296, %v2252
        %v2316 = vsel %vm2308, %v2303, %v2253
        %v2317 = vmul.f32 %v2315, 0.01
        %v2318 = vsub.f32 %v2314, %v2317
        %s2319 = scalar_lea.vmem %s247, 120
        %v2320 = vld [vmem:[%s2319] sm:$0xf]
        %v2321 = vunpack.c.l.bf16 %v2320
        %v2322 = vadd.f32 %v2318, %v2321
        %v2323 = vpack.c.bf16 %v2322, %v2322
        %2324 = vmatprep.subr.bf16.mxu0 0
        %2325 = vmatpush1.bf16.msra.mxu0 %v419
        %2326 = vmatprep.subr.bf16.mxu0 0
        %2327 = vmatpush1.bf16.msra.mxu0 %v420
        %2328 = vmatprep.subr.bf16.mxu0 0
        %2329 = vmatpush1.bf16.msra.mxu0 %v421
        %2330 = vmatprep.subr.bf16.mxu0 0
        %2331 = vmatpush1.bf16.msra.mxu0 %v422
        %2332 = vmatprep.subr.bf16.mxu0 0
        %2333 = vmatpush1.bf16.msra.mxu0 %v423
        %2334 = vmatprep.subr.bf16.mxu0 0
        %2335 = vmatpush1.bf16.msra.mxu0 %v424
        %2336 = vmatprep.subr.bf16.mxu0 0
        %2337 = vmatpush1.bf16.msra.mxu0 %v425
        %2338 = vmatprep.subr.bf16.mxu0 0
        %2339 = vmatpush1.bf16.msra.mxu0 %v426
        %2340 = vmatprep.subr.bf16.mxu0 0
        %2341 = vmatpush1.bf16.msra.mxu0 0
        %2342 = vmatprep.subr.bf16.mxu0 0
        %2343 = vmatpush1.bf16.msra.mxu0 0
        %2344 = vmatprep.subr.bf16.mxu0 0
        %2345 = vmatpush1.bf16.msra.mxu0 0
        %2346 = vmatprep.subr.bf16.mxu0 0
        %2347 = vmatpush1.bf16.msra.mxu0 0
        %2348 = vmatprep.subr.bf16.mxu0 0
        %2349 = vmatpush1.bf16.msra.mxu0 0
        %2350 = vmatprep.subr.bf16.mxu0 0
        %2351 = vmatpush1.bf16.msra.mxu0 0
        %2352 = vmatprep.subr.bf16.mxu0 0
        %2353 = vmatpush1.bf16.msra.mxu0 0
        %2354 = vmatprep.subr.bf16.mxu0 0
        %2355 = vmatpush1.bf16.msra.mxu0 0
        %2356 = vmatprep.mubr.bf16.mxu0 0
        %2357 = vmatmul.mubr.bf16.gmra.mrb[0].mxu0 %v2323
        %v2358 = vpop.f32.mrb[0].mxu0
        %v2359 = vadd.f32 0.0, %v2358
        %v2360 = vpop.f32.mrb[0].mxu0
        %v2361 = vpop.f32.mrb[0].mxu0
        %v2362 = vpop.f32.mrb[0].mxu0
        %2363 = vdwg.mxu0
        %v2364 = vmul.f32 %v2359, %v2359
        %2365 = vadd.xlane.f32.xlu0 %v2364
        %v2366 = vpop.xlane.xlu0 %2365
        %v2367 = vsub.f32 %v2366, %v2316
        %v2368 = vmul.f32 %v2367, -0.0025
        %s2369 = scalar_lea.vmem %s255, 240
        %v2370 = vld [vmem:[%s2369] sm:$0xff]
        %vm2371 = vcmp.le.f32.partialorder %v2370, %v2368
        %v2372 = vsel %vm2371, 1, 0
        %2373 = vset.pattern.permute.xlu0 0
        %2374 = vperm.xlu0 %2373, %v2372
        %v2375 = vpop.permute.xlu0 %2374
        %vm2376 = vcmp.eq.s32.totalorder %v2375, 1
        %v2377 = vsel %vm2376, %v2322, %v2314
        %v2378 = vsel %vm2376, %v2359, %v2315
        %v2379 = vsel %vm2371, %v2366, %v2316
        %v2380 = vmul.f32 %v2378, 0.01
        %v2381 = vsub.f32 %v2377, %v2380
        %s2382 = scalar_lea.vmem %s247, 124
        %v2383 = vld [vmem:[%s2382] sm:$0xf]
        %v2384 = vunpack.c.l.bf16 %v2383
        %v2385 = vadd.f32 %v2381, %v2384
        %v2386 = vpack.c.bf16 %v2385, %v2385
        %2387 = vmatprep.subr.bf16.mxu0 0
        %2388 = vmatpush1.bf16.msra.mxu0 %v419
        %2389 = vmatprep.subr.bf16.mxu0 0
        %2390 = vmatpush1.bf16.msra.mxu0 %v420
        %2391 = vmatprep.subr.bf16.mxu0 0
        %2392 = vmatpush1.bf16.msra.mxu0 %v421
        %2393 = vmatprep.subr.bf16.mxu0 0
        %2394 = vmatpush1.bf16.msra.mxu0 %v422
        %2395 = vmatprep.subr.bf16.mxu0 0
        %2396 = vmatpush1.bf16.msra.mxu0 %v423
        %2397 = vmatprep.subr.bf16.mxu0 0
        %2398 = vmatpush1.bf16.msra.mxu0 %v424
        %2399 = vmatprep.subr.bf16.mxu0 0
        %2400 = vmatpush1.bf16.msra.mxu0 %v425
        %2401 = vmatprep.subr.bf16.mxu0 0
        %2402 = vmatpush1.bf16.msra.mxu0 %v426
        %2403 = vmatprep.subr.bf16.mxu0 0
        %2404 = vmatpush1.bf16.msra.mxu0 0
        %2405 = vmatprep.subr.bf16.mxu0 0
        %2406 = vmatpush1.bf16.msra.mxu0 0
        %2407 = vmatprep.subr.bf16.mxu0 0
        %2408 = vmatpush1.bf16.msra.mxu0 0
        %2409 = vmatprep.subr.bf16.mxu0 0
        %2410 = vmatpush1.bf16.msra.mxu0 0
        %2411 = vmatprep.subr.bf16.mxu0 0
        %2412 = vmatpush1.bf16.msra.mxu0 0
        %2413 = vmatprep.subr.bf16.mxu0 0
        %2414 = vmatpush1.bf16.msra.mxu0 0
        %2415 = vmatprep.subr.bf16.mxu0 0
        %2416 = vmatpush1.bf16.msra.mxu0 0
        %2417 = vmatprep.subr.bf16.mxu0 0
        %2418 = vmatpush1.bf16.msra.mxu0 0
        %2419 = vmatprep.mubr.bf16.mxu0 0
        %2420 = vmatmul.mubr.bf16.gmra.mrb[0].mxu0 %v2386
        %v2421 = vpop.f32.mrb[0].mxu0
        %v2422 = vadd.f32 0.0, %v2421
        %v2423 = vpop.f32.mrb[0].mxu0
        %v2424 = vpop.f32.mrb[0].mxu0
        %v2425 = vpop.f32.mrb[0].mxu0
        %2426 = vdwg.mxu0
        %v2427 = vmul.f32 %v2422, %v2422
        %2428 = vadd.xlane.f32.xlu0 %v2427
        %v2429 = vpop.xlane.xlu0 %2428
        %v2430 = vsub.f32 %v2429, %v2379
        %v2431 = vmul.f32 %v2430, -0.0025
        %s2432 = scalar_lea.vmem %s255, 248
        %v2433 = vld [vmem:[%s2432] sm:$0xff]
        %vm2434 = vcmp.le.f32.partialorder %v2433, %v2431
        %v2435 = vsel %vm2434, 1, 0
        %2436 = vset.pattern.permute.xlu0 0
        %2437 = vperm.xlu0 %2436, %v2435
        %v2438 = vpop.permute.xlu0 %2437
        %vm2439 = vcmp.eq.s32.totalorder %v2438, 1
        %v2440 = vsel %vm2439, %v2385, %v2377
        %v2441 = vsel %vm2439, %v2422, %v2378
        %v2442 = vsel %vm2434, %v2429, %v2379
        %2443 = vst [vmem:[#allocation4] sm:$0xff] %v2440
        %2444 = vst [vmem:[#allocation2] sm:$0xff] %v2441
        %vm2445 = vcmask 7168
        %2446 = vst.msk [vmem:[#allocation3] sm:$0xff] %vm2445, %v2442
        // Predicated region
        $region41: #{tpu_custom_call.1} parent=35 // pred_check
          %p2447 = pneg %p149
        $region42: #{tpu_custom_call.1} parent=35 // pred_check_branch
          %2449 = sbr.rel (%p2447) target = $region44
        $region43: #{tpu_custom_call.1} parent=35 // pred_region
          %s2451 = ssub.s32 128, 128
          %2452 = vsyncadd [#allocation5], %s2451
          %s2453 = smul.addr %s20, 128
          %s2454 = scalar_lea.hbm %s4, %s2453
          %s2456 = sshll.u32 [#allocation4], 4
          %s2457 = int_to_ptr.vmem [resolvable:$true] %s2456
          %2459 = dma.vmem_to_hbm [thread:$0]  %s2457, 128, %s2454, [#allocation5]
        $region44: #{tpu_custom_call.1} parent=35 // pred_fallthru
          _
        // Predicated region
        $region45: #{tpu_custom_call.1} parent=35 // pred_check
          %p2460 = pneg %p149
        $region46: #{tpu_custom_call.1} parent=35 // pred_check_branch
          %2462 = sbr.rel (%p2460) target = $region48
        $region47: #{tpu_custom_call.1} parent=35 // pred_region
          %2463 = dma.done [#allocation5], 128
        $region48: #{tpu_custom_call.1} parent=35 // pred_fallthru
          _
      $region36: #{tpu_custom_call.1} parent=5 // pred_fallthru
        _
      %p2464 = scmp.le.s32.totalorder 2, %s11
      // Predicated region
      $region49: #{tpu_custom_call.1} parent=5 // pred_check
        %p2465 = pneg %p2464
      $region50: #{tpu_custom_call.1} parent=5 // pred_check_branch
        %2467 = sbr.rel (%p2465) target = $region52
      $region51: #{tpu_custom_call.1} parent=5 // pred_region
        %s2468 = ssub.s32 %s11, 2
      $region52: #{tpu_custom_call.1} parent=5 // pred_fallthru
        _
    $region6: #{tpu_custom_call.1} parent=1 // loop_footer
      %s15 = sadd.s32 1, %s11
    $region7: #{tpu_custom_call.1} parent=1 // loop_footer_branch
      %10 = sbr.rel target = $region3
    $region8: #{tpu_custom_call.1} parent=1 // loop_exit
      _
    %2469 = vsyncpa [#allocation5], 1
    %s2470 = scalar_lea.sflag [#allocation5], 1
    %2471 = vsyncpa %s2470, 1

</llo_original>
